<compile_context>
chip_gen: v7x
topology: tpu7x:2x2x1
jax: 0.10.0
libtpu: 0.0.40
codegen_flags: <defaults>
</compile_context>

<pallas_src>
import jax
import jax.numpy as jnp
from jax.experimental import pallas as pl
from jax.experimental.pallas import tpu as pltpu


# Uniform spatial zero ring (= largest conv padding in the model, the 5x5 mask
# conv) and flat guard used by every flattened activation buffer.
PM = 2
GUARD = PM
CDT = jnp.bfloat16                     # activation / weight storage dtype
VMEM_LIMIT = 40 * 1024 * 1024          # v7x-safe (64 MiB physical), ample on v5e/v6e
XCOL_BUDGET = 3 * 1024 * 1024          # per-tile in-kernel im2col scratch budget


# -----------------------------------------------------------------------------
# Padded-flat layout helpers (host side)
# -----------------------------------------------------------------------------
def _geom(H, W):
    Hp, Wp = H + 2 * PM, W + 2 * PM
    return Hp, Wp, Hp * Wp + 2 * GUARD


def _pick_chunk_rows(H, Wp, kc_max):
    """Largest divisor of H whose (kc_max x rows*Wp) bf16 xcol tile fits the budget."""
    best = 1
    for rc in range(1, H + 1):
        if H % rc == 0 and kc_max * rc * Wp * 2 <= XCOL_BUDGET:
            best = rc
    return best


def _to_flat(x, H, W):
    """(..., H, W) -> zero-ringed padded-flat (..., Pb) bf16 buffer (~3% inflation)."""
    nb = x.ndim - 2
    Hp, Wp, _ = _geom(H, W)
    xp = jnp.pad(x, [(0, 0)] * nb + [(PM, PM), (PM, PM)])
    flat = xp.reshape(x.shape[:-2] + (Hp * Wp,))
    flat = jnp.pad(flat, [(0, 0)] * nb + [(GUARD, GUARD)])
    return flat.astype(CDT)


def _from_flat(y, H, W):
    """Inverse of _to_flat (drop guard + ring)."""
    Hp, Wp, _ = _geom(H, W)
    y = y[..., GUARD:GUARD + Hp * Wp]
    y = y.reshape(y.shape[:-1] + (Hp, Wp))
    return y[..., PM:PM + H, PM:PM + W]


def _interior_mask(H, W):
    """(1, Pb) f32: 1.0 exactly at true image pixels, 0 in ring / guard."""
    Hp, Wp, _ = _geom(H, W)
    m = jnp.zeros((Hp, Wp), jnp.float32).at[PM:PM + H, PM:PM + W].set(1.0)
    return jnp.pad(m.reshape(1, Hp * Wp), [(0, 0), (GUARD, GUARD)])


# -----------------------------------------------------------------------------
# In-kernel helpers
# -----------------------------------------------------------------------------
def _zero_ring_rows(ref2d, rows, Wp, Pb, dtype):
    """Zero the (never written) ring rows + guards of a padded-flat scratch buffer."""
    z = GUARD + PM * Wp
    ref2d[0:rows, 0:z] = jnp.zeros((rows, z), dtype)
    ref2d[0:rows, Pb - z:Pb] = jnp.zeros((rows, z), dtype)


def _conv_layer(read_src, store_out, w_ref, b_ref, mask_ref, xcol, *,
                K, cin, H, W, Wp, RC, relu, out_dtype):
    """One 'same' KxK conv on the uniform padded-flat grid (in-kernel im2col).

    read_src(start, size)      -> (cin, size) bf16 slice of the layer input
    store_out(start, size, v)  -> store the (cout, size) output tile
    w_ref: (cout, K*K*cin) bf16 ; b_ref: (cout, 1) f32
    mask_ref: (1, Pb) f32 interior mask (zeroes pad columns -> correct zero padding)
    xcol:  (>= K*K*cin, RC*Wp) bf16 VMEM scratch (unused for K == 1)
    """
    p = (K - 1) // 2
    kc = K * K * cin
    tpc = RC * Wp
    wmat = w_ref[...]
    bias = b_ref[...]
    for c in range(H // RC):                      # static in-kernel pixel chunking
        o0 = GUARD + (PM + c * RC) * Wp
        if K == 1:
            xmat = read_src(o0, tpc)
        else:
            r = 0
            for dy in range(K):
                for dx in range(K):
                    xcol[r:r + cin, 0:tpc] = read_src(o0 + (dy - p) * Wp + (dx - p), tpc)
                    r += cin
            xmat = xcol[0:kc, 0:tpc]
        # one wide MXU matmul per tile (f32 accumulation); Kc left ragged
        # (<=234) - only affects the final MXU K-pass, negligible here.
        acc = jnp.dot(wmat, xmat, preferred_element_type=jnp.float32) + bias
        if relu:
            acc = jnp.maximum(acc, 0.0)
        acc = acc * mask_ref[:, pl.ds(o0, tpc)]   # zero the pad columns
        store_out(o0, tpc, acc.astype(out_dtype))


# -----------------------------------------------------------------------------
# Fused conv-chain kernel (s1_ae stack / 5x5 mask conv)
# -----------------------------------------------------------------------------
def _make_chain_kernel(chain, H, W, Wp, Pb, RC, out_dtype):
    """chain: tuple of (K, cin, cout, relu).  refs = x, mask, (w,b)*L, out, inter*, xcol."""
    L = len(chain)
    nw = 2 * L

    def kernel(*refs):
        x_ref, mask_ref = refs[0], refs[1]
        wb = refs[2:2 + nw]
        out_ref = refs[2 + nw]
        inter = refs[3 + nw:3 + nw + L - 1]
        xcol = refs[2 + nw + L]

        z = GUARD + PM * Wp
        for i in range(L - 1):
            _zero_ring_rows(inter[i], chain[i][2], Wp, Pb, CDT)
        cl = chain[-1][2]
        out_ref[0, :, 0:z] = jnp.zeros((cl, z), out_dtype)
        out_ref[0, :, Pb - z:Pb] = jnp.zeros((cl, z), out_dtype)

        def read_src(s, n):
            return x_ref[0, :, pl.ds(s, n)]

        for i, (K, cin, cout, relu) in enumerate(chain):
            if i < L - 1:
                dst = inter[i]

                def store(s, n, v, _d=dst, _c=cout):
                    _d[0:_c, pl.ds(s, n)] = v
                odt = CDT
            else:
                def store(s, n, v):
                    out_ref[0, :, pl.ds(s, n)] = v
                odt = out_dtype

            _conv_layer(read_src, store, wb[2 * i], wb[2 * i + 1], mask_ref, xcol,
                        K=K, cin=cin, H=H, W=W, Wp=Wp, RC=RC, relu=relu, out_dtype=odt)

            if i < L - 1:
                def read_src(s, n, _d=dst):
                    return _d[:, pl.ds(s, n)]

    return kernel


def _run_chain(x_flat, mask_flat, layers, H, W, *, out_dtype=CDT):
    """Fused chain of 'same' convs (ReLU between layers, none after the last)."""
    N, cin0, Pb = x_flat.shape
    _, Wp, _ = _geom(H, W)

    chain, wb_args, kc_max, cin = [], [], 1, cin0
    for i, (w, b) in enumerate(layers):
        cout, K = int(w.shape[0]), int(w.shape[1])
        assert w.shape == (cout, K, K, cin), (w.shape, cin)
        kc = K * K * cin
        kc_max = max(kc_max, kc)
        chain.append((K, cin, cout, i < len(layers) - 1))
        wb_args += [w.reshape(cout, kc).astype(CDT),
                    b.reshape(cout, 1).astype(jnp.float32)]
        cin = cout

    RC = _pick_chunk_rows(H, Wp, kc_max)
    kern = _make_chain_kernel(tuple(chain), H, W, Wp, Pb, RC, out_dtype)

    in_specs = [pl.BlockSpec((1, cin0, Pb), lambda n: (n, 0, 0)),
                pl.BlockSpec((1, Pb), lambda n: (0, 0))]
    in_specs += [pl.BlockSpec(a.shape, lambda n: (0, 0)) for a in wb_args]

    scratch = [pltpu.VMEM((c[2], Pb), CDT) for c in chain[:-1]]
    scratch.append(pltpu.VMEM((kc_max, RC * Wp), CDT))

    cout_last = chain[-1][2]
    return pl.pallas_call(
        kern,
        out_shape=jax.ShapeDtypeStruct((N, cout_last, Pb), out_dtype),
        grid=(N,),
        in_specs=in_specs,
        out_specs=pl.BlockSpec((1, cout_last, Pb), lambda n: (n, 0, 0)),
        scratch_shapes=scratch,
        compiler_params=pltpu.CompilerParams(
            dimension_semantics=("parallel",), vmem_limit_bytes=VMEM_LIMIT),
    )(x_flat, mask_flat, *wb_args)


# -----------------------------------------------------------------------------
# Fused conv_block + last_conv head kernel (all torch.cat's fused in-kernel)
# -----------------------------------------------------------------------------
def _make_head_kernel(cfg, H, W, Wp, Pb, RC):
    c_lai, c_mask = cfg["c_lai"], cfg["c_mask"]
    c_s1, c_glob = cfg["c_s1"], cfg["c_glob"]
    block_cout = cfg["block_cout"]
    nb = len(block_cout)
    nw = 2 * (nb + 1)
    c_in0 = c_lai + 2 * c_mask + 2 * c_s1 + c_glob + c_s1

    def kernel(*refs):
        ilai_ref, me_ref, s1_ref, g_ref, mask_ref = refs[0:5]
        wb = refs[5:5 + nw]
        out_ref = refs[5 + nw]
        in0 = refs[6 + nw]
        acts = refs[7 + nw:7 + nw + nb]
        xcol = refs[7 + nw + nb]

        # ---- fused concat: [in_lai, mask_embed(t c), s1_input(t c), glob, s1_t] ----
        o = 0
        in0[o:o + c_lai, :] = ilai_ref[0]
        o += c_lai
        for t in range(2):
            in0[o:o + c_mask, :] = me_ref[0, t]
            o += c_mask
        for t in range(2):
            in0[o:o + c_s1, :] = s1_ref[0, t]
            o += c_s1
        gvec = g_ref[0]                                            # (c_glob, 1) f32
        in0[o:o + c_glob, :] = (gvec * mask_ref[...]).astype(CDT)  # zero-padded bcast
        o += c_glob
        in0[o:o + c_s1, :] = s1_ref[0, 2]
        o += c_s1
        assert o == c_in0

        # ---- fused per-layer cat([x, in_lai]) + ring init of intermediates ----
        for i in range(nb):
            acts[i][block_cout[i]:block_cout[i] + c_lai, :] = ilai_ref[0]
            _zero_ring_rows(acts[i], block_cout[i], Wp, Pb, CDT)
        z = GUARD + PM * Wp
        out_ref[0, :, 0:z] = jnp.zeros((1, z), jnp.float32)
        out_ref[0, :, Pb - z:Pb] = jnp.zeros((1, z), jnp.float32)

        # ---- conv_block (3x3 + ReLU each) + last 1x1 conv ----
        def read_src(s, n):
            return in0[:, pl.ds(s, n)]

        cin = c_in0
        for i in range(nb):
            cout = block_cout[i]

            def store(s, n, v, _a=acts[i], _c=cout):
                _a[0:_c, pl.ds(s, n)] = v

            _conv_layer(read_src, store, wb[2 * i], wb[2 * i + 1], mask_ref, xcol,
                        K=3, cin=cin, H=H, W=W, Wp=Wp, RC=RC, relu=True, out_dtype=CDT)

            def read_src(s, n, _a=acts[i]):
                return _a[:, pl.ds(s, n)]
            cin = cout + c_lai

        def store_last(s, n, v):
            out_ref[0, :, pl.ds(s, n)] = v

        _conv_layer(read_src, store_last, wb[2 * nb], wb[2 * nb + 1], mask_ref, None,
                    K=1, cin=cin, H=H, W=W, Wp=Wp, RC=RC, relu=False,
                    out_dtype=jnp.float32)

    return kernel


def _run_head(ilai_f, me_f, s1_f, g_feat, mask_f, block_layers, last_layer, H, W):
    B, c_lai, Pb = ilai_f.shape
    c_mask, c_s1, c_glob = me_f.shape[2], s1_f.shape[2], g_feat.shape[1]
    _, Wp, _ = _geom(H, W)

    c_in0 = c_lai + 2 * c_mask + 2 * c_s1 + c_glob + c_s1
    block_cout, wb_args, kc_max, cin = [], [], 1, c_in0
    for (w, b) in block_layers:
        cout = int(w.shape[0])
        assert w.shape == (cout, 3, 3, cin), (w.shape, cin)
        kc_max = max(kc_max, 9 * cin)
        wb_args += [w.reshape(cout, 9 * cin).astype(CDT),
                    b.reshape(cout, 1).astype(jnp.float32)]
        block_cout.append(cout)
        cin = cout + c_lai
    wl, bl = last_layer
    assert wl.shape == (1, 1, 1, cin), (wl.shape, cin)
    wb_args += [wl.reshape(1, cin).astype(CDT), bl.reshape(1, 1).astype(jnp.float32)]

    RC = _pick_chunk_rows(H, Wp, kc_max)
    cfg = dict(c_lai=c_lai, c_mask=c_mask, c_s1=c_s1, c_glob=c_glob,
               block_cout=tuple(block_cout))
    kern = _make_head_kernel(cfg, H, W, Wp, Pb, RC)

    in_specs = [
        pl.BlockSpec((1, c_lai, Pb), lambda b: (b, 0, 0)),
        pl.BlockSpec((1, 2, c_mask, Pb), lambda b: (b, 0, 0, 0)),
        pl.BlockSpec((1, 3, c_s1, Pb), lambda b: (b, 0, 0, 0)),
        pl.BlockSpec((1, c_glob, 1), lambda b: (b, 0, 0)),
        pl.BlockSpec((1, Pb), lambda b: (0, 0)),
    ]
    in_specs += [pl.BlockSpec(a.shape, lambda b: (0, 0)) for a in wb_args]

    scratch = [pltpu.VMEM((c_in0, Pb), CDT)]
    scratch += [pltpu.VMEM((c + c_lai, Pb), CDT) for c in block_cout]
    scratch.append(pltpu.VMEM((kc_max, RC * Wp), CDT))

    # grid=(B,) parallel: with B>=2 both v7x TensorCores get work.
    return pl.pallas_call(
        kern,
        out_shape=jax.ShapeDtypeStruct((B, 1, Pb), jnp.float32),
        grid=(B,),
        in_specs=in_specs,
        out_specs=pl.BlockSpec((1, 1, Pb), lambda b: (b, 0, 0)),
        scratch_shapes=scratch,
        compiler_params=pltpu.CompilerParams(
            dimension_semantics=("parallel",), vmem_limit_bytes=VMEM_LIMIT),
    )(ilai_f, me_f, s1_f, g_feat, mask_f, *wb_args)


# -----------------------------------------------------------------------------
# ScandiumWeather forward
# -----------------------------------------------------------------------------
def scandium_weather_forward(params, s1_data, in_lai, in_mask_lai, glob):
    B = in_lai.shape[0]
    H, W = in_lai.shape[-2:]
    _, _, Pb = _geom(H, W)
    mask_flat = _interior_mask(H, W)

    # --- S1 auto-encoder over (batch*t) ---
    # TODO(synk): AutoEncoder source not provided; approximated as a 3x3 conv
    # stack (in_dim -> layer_channels -> out_dim) preserving spatial size.
    s1 = s1_data.reshape(B * 3, s1_data.shape[2], H, W)
    s1_out = _run_chain(_to_flat(s1, H, W), mask_flat, params["s1_ae"], H, W)
    out_dim = s1_out.shape[1]

    # --- LAI-mask module: single fused 5x5 conv over (batch*t) ---
    m = in_mask_lai.reshape(B * 2, in_mask_lai.shape[2], H, W)
    m_out = _run_chain(_to_flat(m, H, W), mask_flat, [params["conv_lai_mask"]], H, W)
    c_mask = m_out.shape[1]

    # --- global features: 1x1-conv chain == per-batch MLP (plain jnp, tiny) ---
    g = glob.reshape(B, -1).astype(jnp.float32)
    gl = params["conv_glob"]
    for i, (w, b) in enumerate(gl):
        g = g @ w.reshape(w.shape[0], w.shape[-1]).T + b
        if i < len(gl) - 1:
            g = jnp.maximum(g, 0.0)
    g_feat = g[:, :, None]                                  # (B, Cg, 1)

    # --- fused conv_block + last_conv head (concats + appends fused in-kernel) ---
    ilai_f = _to_flat(jnp.squeeze(in_lai, axis=2), H, W)    # (B, 2, Pb)
    lai_flat = _run_head(ilai_f,
                         m_out.reshape(B, 2, c_mask, Pb),
                         s1_out.reshape(B, 3, out_dim, Pb),
                         g_feat, mask_flat,
                         params["conv_block"], params["last_conv"], H, W)

    lai = _from_flat(lai_flat, H, W)                                    # (B,1,H,W) f32
    s1_embed = _from_flat(s1_out, H, W).reshape(B, 3, out_dim, H, W)
    return lai, s1_embed.astype(jnp.float32)


# -----------------------------------------------------------------------------
# Deterministic parameter init (shapes follow the module's __init__)
# -----------------------------------------------------------------------------
def _init_conv(key, k, cin, cout):
    kw, kb = jax.random.split(key)
    bound = (k * k * cin) ** -0.5
    w = jax.random.uniform(kw, (cout, k, k, cin), jnp.float32, -bound, bound)
    b = jax.random.uniform(kb, (cout,), jnp.float32, -bound, bound)
    return w, b


def init_params(key, cfg):
    s1_cfg = cfg["s1_ae_config"]
    mask_in, mask_out = cfg["mask_module_dim"]
    glob_dims = cfg["glob_module_dims"]
    conv_block_dims = cfg["conv_block_dims"]

    keys = iter(jax.random.split(key, 64))
    params = {}

    chans = [s1_cfg["in_dim"]]
    for c in s1_cfg["layer_channels"]:
        chans += [c] * s1_cfg.get("conv_per_layer", 1)
    chans += [s1_cfg["out_dim"]]
    params["s1_ae"] = [_init_conv(next(keys), 3, chans[i], chans[i + 1])
                       for i in range(len(chans) - 1)]

    params["conv_lai_mask"] = _init_conv(next(keys), 5, mask_in, mask_out)

    params["conv_glob"] = [_init_conv(next(keys), 1, glob_dims[i], glob_dims[i + 1])
                           for i in range(len(glob_dims) - 1)]

    first_dim = mask_out * 2 + glob_dims[-1] + s1_cfg["out_dim"] * 3 + 2
    dims = [first_dim] + list(conv_block_dims)
    params["conv_block"] = []
    for i in range(len(dims) - 1):
        cin = dims[i] if i == 0 else dims[i] + 2
        params["conv_block"].append(_init_conv(next(keys), 3, cin, dims[i + 1]))

    params["last_conv"] = _init_conv(next(keys), 1, dims[-1] + 2, 1)
    return params


MODEL_CONFIG = {
    "s1_ae_config": {"in_dim": 2, "out_dim": 4, "layer_channels": [8], "conv_per_layer": 1},
    "mask_module_dim": (2, 4),
    "glob_module_dims": [4, 8, 4],
    "conv_block_dims": [16, 8],
}


# -----------------------------------------------------------------------------
# Plain-XLA reference (f32) for a numerical sanity check
# -----------------------------------------------------------------------------
def _conv_ref(x, w, b, relu=False):
    y = jax.lax.conv_general_dilated(
        x.astype(jnp.float32), w.astype(jnp.float32), (1, 1), "SAME",
        dimension_numbers=("NCHW", "OHWI", "NCHW"))
    y = y + b.reshape(1, -1, 1, 1)
    return jnp.maximum(y, 0.0) if relu else y


def _reference_forward(params, s1_data, in_lai, in_mask_lai, glob):
    B = in_lai.shape[0]
    H, W = in_lai.shape[-2:]
    s1 = s1_data.reshape(B * 3, s1_data.shape[2], H, W)
    h = s1
    ae = params["s1_ae"]
    for i, (w, b) in enumerate(ae):
        h = _conv_ref(h, w, b, relu=i < len(ae) - 1)
    co = h.shape[1]
    s1_embed = h.reshape(B, 3, co, H, W)

    m = in_mask_lai.reshape(B * 2, in_mask_lai.shape[2], H, W)
    wm, bm = params["conv_lai_mask"]
    me = _conv_ref(m, wm, bm)
    mask_lai_embed = me.reshape(B, 2 * me.shape[1], H, W)

    s1_input = s1_embed[:, :2].reshape(B, 2 * co, H, W)
    in_lai_sq = jnp.squeeze(in_lai, axis=2)

    g = glob.reshape(B, -1).astype(jnp.float32)
    gl = params["conv_glob"]
    for i, (w, b) in enumerate(gl):
        g = g @ w.reshape(w.shape[0], w.shape[-1]).T + b
        if i < len(gl) - 1:
            g = jnp.maximum(g, 0.0)
    gb = jnp.broadcast_to(g[:, :, None, None], (B, g.shape[1], H, W))

    x = jnp.concatenate([in_lai_sq, mask_lai_embed, s1_input, gb, s1_embed[:, 2]], axis=1)
    for (w, b) in params["conv_block"]:
        x = _conv_ref(x, w, b, relu=True)
        x = jnp.concatenate([x, in_lai_sq], axis=1)
    wl, bl = params["last_conv"]
    lai = _conv_ref(x, wl, bl)
    return lai, s1_embed


if __name__ == "__main__":
    B, H, W = 2, 16, 16
    cfg = MODEL_CONFIG
    k1, k2, k3, k4 = jax.random.split(jax.random.PRNGKey(0), 4)
    s1_data = jax.random.normal(k1, (B, 3, cfg["s1_ae_config"]["in_dim"], H, W), jnp.float32)
    in_lai = jax.random.normal(k2, (B, 2, 1, H, W), jnp.float32)
    in_mask_lai = jax.random.normal(k3, (B, 2, cfg["mask_module_dim"][0], H, W), jnp.float32)
    glob = jax.random.normal(k4, (B, cfg["glob_module_dims"][0]), jnp.float32)

    params = init_params(jax.random.PRNGKey(42), cfg)

    fwd = jax.jit(scandium_weather_forward)
    lai, s1_embed = fwd(params, s1_data, in_lai, in_mask_lai, glob)
    jax.block_until_ready((lai, s1_embed))

    assert lai.shape == (B, 1, H, W), lai.shape
    assert s1_embed.shape == (B, 3, cfg["s1_ae_config"]["out_dim"], H, W), s1_embed.shape

    # sanity check vs plain-XLA f32 reference (kernel path is bf16 -> loose tol)
    lai_r, s1_r = jax.jit(_reference_forward)(params, s1_data, in_lai, in_mask_lai, glob)
    err_lai = float(jnp.max(jnp.abs(lai - lai_r)))
    err_s1 = float(jnp.max(jnp.abs(s1_embed - s1_r)))
    assert err_lai < 0.15, ("lai mismatch", err_lai)
    assert err_s1 < 0.10, ("s1_embed mismatch", err_s1)
    print("KERNEL_OK")
</pallas_src>

<mosaic_0001>
module attributes {stable_mosaic.version = 11 : i64} {
  func.func @kernel(%arg0: i32, %arg1: memref<1x2x404xbf16, #tpu.memory_space<vmem>>, %arg2: memref<1x404xf32, #tpu.memory_space<vmem>>, %arg3: memref<4x50xbf16, #tpu.memory_space<vmem>>, %arg4: memref<4x1xf32, #tpu.memory_space<vmem>>, %arg5: memref<1x4x404xbf16, #tpu.memory_space<vmem>>, %arg6: memref<50x320xbf16, #tpu.memory_space<vmem>>) attributes {dimension_semantics = [#tpu.dimension_semantics<parallel>], iteration_bounds = array<i64: 4>, scalar_prefetch = 0 : i64, scratch_operands = 1 : i64, tpu.core_type = #tpu.core_type<tc>, window_params = [{transform_indices = @transform_0, window_bounds = array<i64: 1, 2, 404>}, {pipeline_mode = #tpu.pipeline_mode<synchronous>, transform_indices = @transform_1, window_bounds = array<i64: 1, 404>}, {pipeline_mode = #tpu.pipeline_mode<synchronous>, transform_indices = @transform_2, window_bounds = array<i64: 4, 50>}, {pipeline_mode = #tpu.pipeline_mode<synchronous>, transform_indices = @transform_3, window_bounds = array<i64: 4, 1>}, {transform_indices = @transform_4, window_bounds = array<i64: 1, 4, 404>}]} {
    %cst = arith.constant 0.000000e+00 : bf16
    %0 = vector.broadcast %cst : bf16 to vector<4x42xbf16>
    %c0 = arith.constant 0 : index
    %c0_0 = arith.constant 0 : index
    %c0_1 = arith.constant 0 : index
    %1 = vector.load %arg5[%c0, %c0_0, %c0_1] : memref<1x4x404xbf16, #tpu.memory_space<vmem>>, vector<1x4x42xbf16>
    %2 = vector.shape_cast %1 : vector<1x4x42xbf16> to vector<4x42xbf16>
    %3 = vector.shape_cast %0 : vector<4x42xbf16> to vector<1x4x42xbf16>
    tpu.vector_store %arg5[%c0, %c0_0, %c0_1], %3 {strides = array<i32>} : memref<1x4x404xbf16, #tpu.memory_space<vmem>>, vector<1x4x42xbf16>,
    %cst_2 = arith.constant 0.000000e+00 : bf16
    %4 = vector.broadcast %cst_2 : bf16 to vector<4x42xbf16>
    %c0_3 = arith.constant 0 : index
    %c0_4 = arith.constant 0 : index
    %c362 = arith.constant 362 : index
    %5 = vector.load %arg5[%c0_3, %c0_4, %c362] : memref<1x4x404xbf16, #tpu.memory_space<vmem>>, vector<1x4x42xbf16>
    %6 = vector.shape_cast %5 : vector<1x4x42xbf16> to vector<4x42xbf16>
    %7 = vector.shape_cast %4 : vector<4x42xbf16> to vector<1x4x42xbf16>
    tpu.vector_store %arg5[%c0_3, %c0_4, %c362], %7 {strides = array<i32>} : memref<1x4x404xbf16, #tpu.memory_space<vmem>>, vector<1x4x42xbf16>,
    %c0_5 = arith.constant 0 : index
    %c0_6 = arith.constant 0 : index
    %8 = vector.load %arg3[%c0_5, %c0_6] : memref<4x50xbf16, #tpu.memory_space<vmem>>, vector<4x50xbf16>
    %c0_7 = arith.constant 0 : index
    %c0_8 = arith.constant 0 : index
    %9 = vector.load %arg4[%c0_7, %c0_8] : memref<4x1xf32, #tpu.memory_space<vmem>>, vector<4x1xf32>
    %c0_9 = arith.constant 0 : index
    %c0_10 = arith.constant 0 : index
    %c0_11 = arith.constant 0 : index
    %10 = vector.load %arg1[%c0_9, %c0_10, %c0_11] : memref<1x2x404xbf16, #tpu.memory_space<vmem>>, vector<1x2x320xbf16>
    %11 = vector.shape_cast %10 : vector<1x2x320xbf16> to vector<2x320xbf16>
    %c0_12 = arith.constant 0 : index
    %c0_13 = arith.constant 0 : index
    %12 = vector.load %arg6[%c0_12, %c0_13] : memref<50x320xbf16, #tpu.memory_space<vmem>>, vector<2x320xbf16>
    tpu.vector_store %arg6[%c0_12, %c0_13], %11 {strides = array<i32>} : memref<50x320xbf16, #tpu.memory_space<vmem>>, vector<2x320xbf16>,
    %c0_14 = arith.constant 0 : index
    %c0_15 = arith.constant 0 : index
    %c1 = arith.constant 1 : index
    %13 = vector.load %arg1[%c0_14, %c0_15, %c1] : memref<1x2x404xbf16, #tpu.memory_space<vmem>>, vector<1x2x320xbf16>
    %14 = vector.shape_cast %13 : vector<1x2x320xbf16> to vector<2x320xbf16>
    %c2 = arith.constant 2 : index
    %c0_16 = arith.constant 0 : index
    %15 = vector.load %arg6[%c2, %c0_16] : memref<50x320xbf16, #tpu.memory_space<vmem>>, vector<2x320xbf16>
    tpu.vector_store %arg6[%c2, %c0_16], %14 {strides = array<i32>} : memref<50x320xbf16, #tpu.memory_space<vmem>>, vector<2x320xbf16>,
    %c0_17 = arith.constant 0 : index
    %c0_18 = arith.constant 0 : index
    %c2_19 = arith.constant 2 : index
    %16 = vector.load %arg1[%c0_17, %c0_18, %c2_19] : memref<1x2x404xbf16, #tpu.memory_space<vmem>>, vector<1x2x320xbf16>
    %17 = vector.shape_cast %16 : vector<1x2x320xbf16> to vector<2x320xbf16>
    %c4 = arith.constant 4 : index
    %c0_20 = arith.constant 0 : index
    %18 = vector.load %arg6[%c4, %c0_20] : memref<50x320xbf16, #tpu.memory_space<vmem>>, vector<2x320xbf16>
    tpu.vector_store %arg6[%c4, %c0_20], %17 {strides = array<i32>} : memref<50x320xbf16, #tpu.memory_space<vmem>>, vector<2x320xbf16>,
    %c0_21 = arith.constant 0 : index
    %c0_22 = arith.constant 0 : index
    %c3 = arith.constant 3 : index
    %19 = vector.load %arg1[%c0_21, %c0_22, %c3] : memref<1x2x404xbf16, #tpu.memory_space<vmem>>, vector<1x2x320xbf16>
    %20 = vector.shape_cast %19 : vector<1x2x320xbf16> to vector<2x320xbf16>
    %c6 = arith.constant 6 : index
    %c0_23 = arith.constant 0 : index
    %21 = vector.load %arg6[%c6, %c0_23] : memref<50x320xbf16, #tpu.memory_space<vmem>>, vector<2x320xbf16>
    tpu.vector_store %arg6[%c6, %c0_23], %20 {strides = array<i32>} : memref<50x320xbf16, #tpu.memory_space<vmem>>, vector<2x320xbf16>,
    %c0_24 = arith.constant 0 : index
    %c0_25 = arith.constant 0 : index
    %c4_26 = arith.constant 4 : index
    %22 = vector.load %arg1[%c0_24, %c0_25, %c4_26] : memref<1x2x404xbf16, #tpu.memory_space<vmem>>, vector<1x2x320xbf16>
    %23 = vector.shape_cast %22 : vector<1x2x320xbf16> to vector<2x320xbf16>
    %c8 = arith.constant 8 : index
    %c0_27 = arith.constant 0 : index
    %24 = vector.load %arg6[%c8, %c0_27] : memref<50x320xbf16, #tpu.memory_space<vmem>>, vector<2x320xbf16>
    tpu.vector_store %arg6[%c8, %c0_27], %23 {strides = array<i32>} : memref<50x320xbf16, #tpu.memory_space<vmem>>, vector<2x320xbf16>,
    %c0_28 = arith.constant 0 : index
    %c0_29 = arith.constant 0 : index
    %c20 = arith.constant 20 : index
    %25 = vector.load %arg1[%c0_28, %c0_29, %c20] : memref<1x2x404xbf16, #tpu.memory_space<vmem>>, vector<1x2x320xbf16>
    %26 = vector.shape_cast %25 : vector<1x2x320xbf16> to vector<2x320xbf16>
    %c10 = arith.constant 10 : index
    %c0_30 = arith.constant 0 : index
    %27 = vector.load %arg6[%c10, %c0_30] : memref<50x320xbf16, #tpu.memory_space<vmem>>, vector<2x320xbf16>
    tpu.vector_store %arg6[%c10, %c0_30], %26 {strides = array<i32>} : memref<50x320xbf16, #tpu.memory_space<vmem>>, vector<2x320xbf16>,
    %c0_31 = arith.constant 0 : index
    %c0_32 = arith.constant 0 : index
    %c21 = arith.constant 21 : index
    %28 = vector.load %arg1[%c0_31, %c0_32, %c21] : memref<1x2x404xbf16, #tpu.memory_space<vmem>>, vector<1x2x320xbf16>
    %29 = vector.shape_cast %28 : vector<1x2x320xbf16> to vector<2x320xbf16>
    %c12 = arith.constant 12 : index
    %c0_33 = arith.constant 0 : index
    %30 = vector.load %arg6[%c12, %c0_33] : memref<50x320xbf16, #tpu.memory_space<vmem>>, vector<2x320xbf16>
    tpu.vector_store %arg6[%c12, %c0_33], %29 {strides = array<i32>} : memref<50x320xbf16, #tpu.memory_space<vmem>>, vector<2x320xbf16>,
    %c0_34 = arith.constant 0 : index
    %c0_35 = arith.constant 0 : index
    %c22 = arith.constant 22 : index
    %31 = vector.load %arg1[%c0_34, %c0_35, %c22] : memref<1x2x404xbf16, #tpu.memory_space<vmem>>, vector<1x2x320xbf16>
    %32 = vector.shape_cast %31 : vector<1x2x320xbf16> to vector<2x320xbf16>
    %c14 = arith.constant 14 : index
    %c0_36 = arith.constant 0 : index
    %33 = vector.load %arg6[%c14, %c0_36] : memref<50x320xbf16, #tpu.memory_space<vmem>>, vector<2x320xbf16>
    tpu.vector_store %arg6[%c14, %c0_36], %32 {strides = array<i32>} : memref<50x320xbf16, #tpu.memory_space<vmem>>, vector<2x320xbf16>,
    %c0_37 = arith.constant 0 : index
    %c0_38 = arith.constant 0 : index
    %c23 = arith.constant 23 : index
    %34 = vector.load %arg1[%c0_37, %c0_38, %c23] : memref<1x2x404xbf16, #tpu.memory_space<vmem>>, vector<1x2x320xbf16>
    %35 = vector.shape_cast %34 : vector<1x2x320xbf16> to vector<2x320xbf16>
    %c16 = arith.constant 16 : index
    %c0_39 = arith.constant 0 : index
    %36 = vector.load %arg6[%c16, %c0_39] : memref<50x320xbf16, #tpu.memory_space<vmem>>, vector<2x320xbf16>
    tpu.vector_store %arg6[%c16, %c0_39], %35 {strides = array<i32>} : memref<50x320xbf16, #tpu.memory_space<vmem>>, vector<2x320xbf16>,
    %c0_40 = arith.constant 0 : index
    %c0_41 = arith.constant 0 : index
    %c24 = arith.constant 24 : index
    %37 = vector.load %arg1[%c0_40, %c0_41, %c24] : memref<1x2x404xbf16, #tpu.memory_space<vmem>>, vector<1x2x320xbf16>
    %38 = vector.shape_cast %37 : vector<1x2x320xbf16> to vector<2x320xbf16>
    %c18 = arith.constant 18 : index
    %c0_42 = arith.constant 0 : index
    %39 = vector.load %arg6[%c18, %c0_42] : memref<50x320xbf16, #tpu.memory_space<vmem>>, vector<2x320xbf16>
    tpu.vector_store %arg6[%c18, %c0_42], %38 {strides = array<i32>} : memref<50x320xbf16, #tpu.memory_space<vmem>>, vector<2x320xbf16>,
    %c0_43 = arith.constant 0 : index
    %c0_44 = arith.constant 0 : index
    %c40 = arith.constant 40 : index
    %40 = vector.load %arg1[%c0_43, %c0_44, %c40] : memref<1x2x404xbf16, #tpu.memory_space<vmem>>, vector<1x2x320xbf16>
    %41 = vector.shape_cast %40 : vector<1x2x320xbf16> to vector<2x320xbf16>
    %c20_45 = arith.constant 20 : index
    %c0_46 = arith.constant 0 : index
    %42 = vector.load %arg6[%c20_45, %c0_46] : memref<50x320xbf16, #tpu.memory_space<vmem>>, vector<2x320xbf16>
    tpu.vector_store %arg6[%c20_45, %c0_46], %41 {strides = array<i32>} : memref<50x320xbf16, #tpu.memory_space<vmem>>, vector<2x320xbf16>,
    %c0_47 = arith.constant 0 : index
    %c0_48 = arith.constant 0 : index
    %c41 = arith.constant 41 : index
    %43 = vector.load %arg1[%c0_47, %c0_48, %c41] : memref<1x2x404xbf16, #tpu.memory_space<vmem>>, vector<1x2x320xbf16>
    %44 = vector.shape_cast %43 : vector<1x2x320xbf16> to vector<2x320xbf16>
    %c22_49 = arith.constant 22 : index
    %c0_50 = arith.constant 0 : index
    %45 = vector.load %arg6[%c22_49, %c0_50] : memref<50x320xbf16, #tpu.memory_space<vmem>>, vector<2x320xbf16>
    tpu.vector_store %arg6[%c22_49, %c0_50], %44 {strides = array<i32>} : memref<50x320xbf16, #tpu.memory_space<vmem>>, vector<2x320xbf16>,
    %c0_51 = arith.constant 0 : index
    %c0_52 = arith.constant 0 : index
    %c42 = arith.constant 42 : index
    %46 = vector.load %arg1[%c0_51, %c0_52, %c42] : memref<1x2x404xbf16, #tpu.memory_space<vmem>>, vector<1x2x320xbf16>
    %47 = vector.shape_cast %46 : vector<1x2x320xbf16> to vector<2x320xbf16>
    %c24_53 = arith.constant 24 : index
    %c0_54 = arith.constant 0 : index
    %48 = vector.load %arg6[%c24_53, %c0_54] : memref<50x320xbf16, #tpu.memory_space<vmem>>, vector<2x320xbf16>
    tpu.vector_store %arg6[%c24_53, %c0_54], %47 {strides = array<i32>} : memref<50x320xbf16, #tpu.memory_space<vmem>>, vector<2x320xbf16>,
    %c0_55 = arith.constant 0 : index
    %c0_56 = arith.constant 0 : index
    %c43 = arith.constant 43 : index
    %49 = vector.load %arg1[%c0_55, %c0_56, %c43] : memref<1x2x404xbf16, #tpu.memory_space<vmem>>, vector<1x2x320xbf16>
    %50 = vector.shape_cast %49 : vector<1x2x320xbf16> to vector<2x320xbf16>
    %c26 = arith.constant 26 : index
    %c0_57 = arith.constant 0 : index
    %51 = vector.load %arg6[%c26, %c0_57] : memref<50x320xbf16, #tpu.memory_space<vmem>>, vector<2x320xbf16>
    tpu.vector_store %arg6[%c26, %c0_57], %50 {strides = array<i32>} : memref<50x320xbf16, #tpu.memory_space<vmem>>, vector<2x320xbf16>,
    %c0_58 = arith.constant 0 : index
    %c0_59 = arith.constant 0 : index
    %c44 = arith.constant 44 : index
    %52 = vector.load %arg1[%c0_58, %c0_59, %c44] : memref<1x2x404xbf16, #tpu.memory_space<vmem>>, vector<1x2x320xbf16>
    %53 = vector.shape_cast %52 : vector<1x2x320xbf16> to vector<2x320xbf16>
    %c28 = arith.constant 28 : index
    %c0_60 = arith.constant 0 : index
    %54 = vector.load %arg6[%c28, %c0_60] : memref<50x320xbf16, #tpu.memory_space<vmem>>, vector<2x320xbf16>
    tpu.vector_store %arg6[%c28, %c0_60], %53 {strides = array<i32>} : memref<50x320xbf16, #tpu.memory_space<vmem>>, vector<2x320xbf16>,
    %c0_61 = arith.constant 0 : index
    %c0_62 = arith.constant 0 : index
    %c60 = arith.constant 60 : index
    %55 = vector.load %arg1[%c0_61, %c0_62, %c60] : memref<1x2x404xbf16, #tpu.memory_space<vmem>>, vector<1x2x320xbf16>
    %56 = vector.shape_cast %55 : vector<1x2x320xbf16> to vector<2x320xbf16>
    %c30 = arith.constant 30 : index
    %c0_63 = arith.constant 0 : index
    %57 = vector.load %arg6[%c30, %c0_63] : memref<50x320xbf16, #tpu.memory_space<vmem>>, vector<2x320xbf16>
    tpu.vector_store %arg6[%c30, %c0_63], %56 {strides = array<i32>} : memref<50x320xbf16, #tpu.memory_space<vmem>>, vector<2x320xbf16>,
    %c0_64 = arith.constant 0 : index
    %c0_65 = arith.constant 0 : index
    %c61 = arith.constant 61 : index
    %58 = vector.load %arg1[%c0_64, %c0_65, %c61] : memref<1x2x404xbf16, #tpu.memory_space<vmem>>, vector<1x2x320xbf16>
    %59 = vector.shape_cast %58 : vector<1x2x320xbf16> to vector<2x320xbf16>
    %c32 = arith.constant 32 : index
    %c0_66 = arith.constant 0 : index
    %60 = vector.load %arg6[%c32, %c0_66] : memref<50x320xbf16, #tpu.memory_space<vmem>>, vector<2x320xbf16>
    tpu.vector_store %arg6[%c32, %c0_66], %59 {strides = array<i32>} : memref<50x320xbf16, #tpu.memory_space<vmem>>, vector<2x320xbf16>,
    %c0_67 = arith.constant 0 : index
    %c0_68 = arith.constant 0 : index
    %c62 = arith.constant 62 : index
    %61 = vector.load %arg1[%c0_67, %c0_68, %c62] : memref<1x2x404xbf16, #tpu.memory_space<vmem>>, vector<1x2x320xbf16>
    %62 = vector.shape_cast %61 : vector<1x2x320xbf16> to vector<2x320xbf16>
    %c34 = arith.constant 34 : index
    %c0_69 = arith.constant 0 : index
    %63 = vector.load %arg6[%c34, %c0_69] : memref<50x320xbf16, #tpu.memory_space<vmem>>, vector<2x320xbf16>
    tpu.vector_store %arg6[%c34, %c0_69], %62 {strides = array<i32>} : memref<50x320xbf16, #tpu.memory_space<vmem>>, vector<2x320xbf16>,
    %c0_70 = arith.constant 0 : index
    %c0_71 = arith.constant 0 : index
    %c63 = arith.constant 63 : index
    %64 = vector.load %arg1[%c0_70, %c0_71, %c63] : memref<1x2x404xbf16, #tpu.memory_space<vmem>>, vector<1x2x320xbf16>
    %65 = vector.shape_cast %64 : vector<1x2x320xbf16> to vector<2x320xbf16>
    %c36 = arith.constant 36 : index
    %c0_72 = arith.constant 0 : index
    %66 = vector.load %arg6[%c36, %c0_72] : memref<50x320xbf16, #tpu.memory_space<vmem>>, vector<2x320xbf16>
    tpu.vector_store %arg6[%c36, %c0_72], %65 {strides = array<i32>} : memref<50x320xbf16, #tpu.memory_space<vmem>>, vector<2x320xbf16>,
    %c0_73 = arith.constant 0 : index
    %c0_74 = arith.constant 0 : index
    %c64 = arith.constant 64 : index
    %67 = vector.load %arg1[%c0_73, %c0_74, %c64] : memref<1x2x404xbf16, #tpu.memory_space<vmem>>, vector<1x2x320xbf16>
    %68 = vector.shape_cast %67 : vector<1x2x320xbf16> to vector<2x320xbf16>
    %c38 = arith.constant 38 : index
    %c0_75 = arith.constant 0 : index
    %69 = vector.load %arg6[%c38, %c0_75] : memref<50x320xbf16, #tpu.memory_space<vmem>>, vector<2x320xbf16>
    tpu.vector_store %arg6[%c38, %c0_75], %68 {strides = array<i32>} : memref<50x320xbf16, #tpu.memory_space<vmem>>, vector<2x320xbf16>,
    %c0_76 = arith.constant 0 : index
    %c0_77 = arith.constant 0 : index
    %c80 = arith.constant 80 : index
    %70 = vector.load %arg1[%c0_76, %c0_77, %c80] : memref<1x2x404xbf16, #tpu.memory_space<vmem>>, vector<1x2x320xbf16>
    %71 = vector.shape_cast %70 : vector<1x2x320xbf16> to vector<2x320xbf16>
    %c40_78 = arith.constant 40 : index
    %c0_79 = arith.constant 0 : index
    %72 = vector.load %arg6[%c40_78, %c0_79] : memref<50x320xbf16, #tpu.memory_space<vmem>>, vector<2x320xbf16>
    tpu.vector_store %arg6[%c40_78, %c0_79], %71 {strides = array<i32>} : memref<50x320xbf16, #tpu.memory_space<vmem>>, vector<2x320xbf16>,
    %c0_80 = arith.constant 0 : index
    %c0_81 = arith.constant 0 : index
    %c81 = arith.constant 81 : index
    %73 = vector.load %arg1[%c0_80, %c0_81, %c81] : memref<1x2x404xbf16, #tpu.memory_space<vmem>>, vector<1x2x320xbf16>
    %74 = vector.shape_cast %73 : vector<1x2x320xbf16> to vector<2x320xbf16>
    %c42_82 = arith.constant 42 : index
    %c0_83 = arith.constant 0 : index
    %75 = vector.load %arg6[%c42_82, %c0_83] : memref<50x320xbf16, #tpu.memory_space<vmem>>, vector<2x320xbf16>
    tpu.vector_store %arg6[%c42_82, %c0_83], %74 {strides = array<i32>} : memref<50x320xbf16, #tpu.memory_space<vmem>>, vector<2x320xbf16>,
    %c0_84 = arith.constant 0 : index
    %c0_85 = arith.constant 0 : index
    %c82 = arith.constant 82 : index
    %76 = vector.load %arg1[%c0_84, %c0_85, %c82] : memref<1x2x404xbf16, #tpu.memory_space<vmem>>, vector<1x2x320xbf16>
    %77 = vector.shape_cast %76 : vector<1x2x320xbf16> to vector<2x320xbf16>
    %c44_86 = arith.constant 44 : index
    %c0_87 = arith.constant 0 : index
    %78 = vector.load %arg6[%c44_86, %c0_87] : memref<50x320xbf16, #tpu.memory_space<vmem>>, vector<2x320xbf16>
    tpu.vector_store %arg6[%c44_86, %c0_87], %77 {strides = array<i32>} : memref<50x320xbf16, #tpu.memory_space<vmem>>, vector<2x320xbf16>,
    %c0_88 = arith.constant 0 : index
    %c0_89 = arith.constant 0 : index
    %c83 = arith.constant 83 : index
    %79 = vector.load %arg1[%c0_88, %c0_89, %c83] : memref<1x2x404xbf16, #tpu.memory_space<vmem>>, vector<1x2x320xbf16>
    %80 = vector.shape_cast %79 : vector<1x2x320xbf16> to vector<2x320xbf16>
    %c46 = arith.constant 46 : index
    %c0_90 = arith.constant 0 : index
    %81 = vector.load %arg6[%c46, %c0_90] : memref<50x320xbf16, #tpu.memory_space<vmem>>, vector<2x320xbf16>
    tpu.vector_store %arg6[%c46, %c0_90], %80 {strides = array<i32>} : memref<50x320xbf16, #tpu.memory_space<vmem>>, vector<2x320xbf16>,
    %c0_91 = arith.constant 0 : index
    %c0_92 = arith.constant 0 : index
    %c84 = arith.constant 84 : index
    %82 = vector.load %arg1[%c0_91, %c0_92, %c84] : memref<1x2x404xbf16, #tpu.memory_space<vmem>>, vector<1x2x320xbf16>
    %83 = vector.shape_cast %82 : vector<1x2x320xbf16> to vector<2x320xbf16>
    %c48 = arith.constant 48 : index
    %c0_93 = arith.constant 0 : index
    %84 = vector.load %arg6[%c48, %c0_93] : memref<50x320xbf16, #tpu.memory_space<vmem>>, vector<2x320xbf16>
    tpu.vector_store %arg6[%c48, %c0_93], %83 {strides = array<i32>} : memref<50x320xbf16, #tpu.memory_space<vmem>>, vector<2x320xbf16>,
    %c0_94 = arith.constant 0 : index
    %c0_95 = arith.constant 0 : index
    %85 = vector.load %arg6[%c0_94, %c0_95] : memref<50x320xbf16, #tpu.memory_space<vmem>>, vector<50x320xbf16>
    %cst_96 = arith.constant dense<0.000000e+00> : vector<4x320xf32>
    %86 = tpu.matmul %8, %85, %cst_96 {dimension_numbers = #tpu.dot_dimension_numbers<[1], [0], [0], [1], [0, 0, 1, 1], [], []>} : vector<4x50xbf16>, vector<50x320xbf16>, vector<4x320xf32> -> vector<4x320xf32>
    %87 = vector.broadcast %9 : vector<4x1xf32> to vector<4x320xf32>
    %88 = arith.addf %86, %87 : vector<4x320xf32>
    %c0_97 = arith.constant 0 : index
    %c42_98 = arith.constant 42 : index
    %89 = vector.load %arg2[%c0_97, %c42_98] : memref<1x404xf32, #tpu.memory_space<vmem>>, vector<1x320xf32>
    %90 = vector.broadcast %89 : vector<1x320xf32> to vector<4x320xf32>
    %91 = arith.mulf %88, %90 : vector<4x320xf32>
    %92 = arith.truncf %91 : vector<4x320xf32> to vector<4x320xbf16>
    %c0_99 = arith.constant 0 : index
    %c0_100 = arith.constant 0 : index
    %c42_101 = arith.constant 42 : index
    %93 = vector.load %arg5[%c0_99, %c0_100, %c42_101] : memref<1x4x404xbf16, #tpu.memory_space<vmem>>, vector<1x4x320xbf16>
    %94 = vector.shape_cast %93 : vector<1x4x320xbf16> to vector<4x320xbf16>
    %95 = vector.shape_cast %92 : vector<4x320xbf16> to vector<1x4x320xbf16>
    tpu.vector_store %arg5[%c0_99, %c0_100, %c42_101], %95 {strides = array<i32>} : memref<1x4x404xbf16, #tpu.memory_space<vmem>>, vector<1x4x320xbf16>,
    return
  }
  func.func @transform_0(%arg0: i32) -> (i32, i32, i32) {
    %c0_i32 = arith.constant 0 : i32
    %c0_i32_0 = arith.constant 0 : i32
    %c0_i32_1 = arith.constant 0 : i32
    return %arg0, %c0_i32, %c0_i32_0 : i32, i32, i32
  }
  func.func @transform_1(%arg0: i32) -> (i32, i32) {
    %c0_i32 = arith.constant 0 : i32
    %c0_i32_0 = arith.constant 0 : i32
    %c0_i32_1 = arith.constant 0 : i32
    return %c0_i32, %c0_i32_0 : i32, i32
  }
  func.func @transform_2(%arg0: i32) -> (i32, i32) {
    %c0_i32 = arith.constant 0 : i32
    %c0_i32_0 = arith.constant 0 : i32
    %c0_i32_1 = arith.constant 0 : i32
    return %c0_i32, %c0_i32_0 : i32, i32
  }
  func.func @transform_3(%arg0: i32) -> (i32, i32) {
    %c0_i32 = arith.constant 0 : i32
    %c0_i32_0 = arith.constant 0 : i32
    %c0_i32_1 = arith.constant 0 : i32
    return %c0_i32, %c0_i32_0 : i32, i32
  }
  func.func @transform_4(%arg0: i32) -> (i32, i32, i32) {
    %c0_i32 = arith.constant 0 : i32
    %c0_i32_0 = arith.constant 0 : i32
    %c0_i32_1 = arith.constant 0 : i32
    return %arg0, %c0_i32, %c0_i32_0 : i32, i32, i32
  }
}

module attributes {stable_mosaic.version = 11 : i64} {
  func.func @kernel(%arg0: i32, %arg1: memref<1x2x404xbf16, #tpu.memory_space<vmem>>, %arg2: memref<1x404xf32, #tpu.memory_space<vmem>>, %arg3: memref<8x18xbf16, #tpu.memory_space<vmem>>, %arg4: memref<8x1xf32, #tpu.memory_space<vmem>>, %arg5: memref<4x72xbf16, #tpu.memory_space<vmem>>, %arg6: memref<4x1xf32, #tpu.memory_space<vmem>>, %arg7: memref<1x4x404xbf16, #tpu.memory_space<vmem>>, %arg8: memref<8x404xbf16, #tpu.memory_space<vmem>>, %arg9: memref<72x320xbf16, #tpu.memory_space<vmem>>) attributes {dimension_semantics = [#tpu.dimension_semantics<parallel>], iteration_bounds = array<i64: 6>, scalar_prefetch = 0 : i64, scratch_operands = 2 : i64, tpu.core_type = #tpu.core_type<tc>, window_params = [{transform_indices = @transform_0, window_bounds = array<i64: 1, 2, 404>}, {pipeline_mode = #tpu.pipeline_mode<synchronous>, transform_indices = @transform_1, window_bounds = array<i64: 1, 404>}, {pipeline_mode = #tpu.pipeline_mode<synchronous>, transform_indices = @transform_2, window_bounds = array<i64: 8, 18>}, {pipeline_mode = #tpu.pipeline_mode<synchronous>, transform_indices = @transform_3, window_bounds = array<i64: 8, 1>}, {pipeline_mode = #tpu.pipeline_mode<synchronous>, transform_indices = @transform_4, window_bounds = array<i64: 4, 72>}, {pipeline_mode = #tpu.pipeline_mode<synchronous>, transform_indices = @transform_5, window_bounds = array<i64: 4, 1>}, {transform_indices = @transform_6, window_bounds = array<i64: 1, 4, 404>}]} {
    %cst = arith.constant 0.000000e+00 : bf16
    %0 = vector.broadcast %cst : bf16 to vector<8x42xbf16>
    %c0 = arith.constant 0 : index
    %c0_0 = arith.constant 0 : index
    %1 = vector.load %arg8[%c0, %c0_0] : memref<8x404xbf16, #tpu.memory_space<vmem>>, vector<8x42xbf16>
    tpu.vector_store %arg8[%c0, %c0_0], %0 {strides = array<i32>} : memref<8x404xbf16, #tpu.memory_space<vmem>>, vector<8x42xbf16>,
    %cst_1 = arith.constant 0.000000e+00 : bf16
    %2 = vector.broadcast %cst_1 : bf16 to vector<8x42xbf16>
    %c0_2 = arith.constant 0 : index
    %c362 = arith.constant 362 : index
    %3 = vector.load %arg8[%c0_2, %c362] : memref<8x404xbf16, #tpu.memory_space<vmem>>, vector<8x42xbf16>
    tpu.vector_store %arg8[%c0_2, %c362], %2 {strides = array<i32>} : memref<8x404xbf16, #tpu.memory_space<vmem>>, vector<8x42xbf16>,
    %cst_3 = arith.constant 0.000000e+00 : bf16
    %4 = vector.broadcast %cst_3 : bf16 to vector<4x42xbf16>
    %c0_4 = arith.constant 0 : index
    %c0_5 = arith.constant 0 : index
    %c0_6 = arith.constant 0 : index
    %5 = vector.load %arg7[%c0_4, %c0_5, %c0_6] : memref<1x4x404xbf16, #tpu.memory_space<vmem>>, vector<1x4x42xbf16>
    %6 = vector.shape_cast %5 : vector<1x4x42xbf16> to vector<4x42xbf16>
    %7 = vector.shape_cast %4 : vector<4x42xbf16> to vector<1x4x42xbf16>
    tpu.vector_store %arg7[%c0_4, %c0_5, %c0_6], %7 {strides = array<i32>} : memref<1x4x404xbf16, #tpu.memory_space<vmem>>, vector<1x4x42xbf16>,
    %cst_7 = arith.constant 0.000000e+00 : bf16
    %8 = vector.broadcast %cst_7 : bf16 to vector<4x42xbf16>
    %c0_8 = arith.constant 0 : index
    %c0_9 = arith.constant 0 : index
    %c362_10 = arith.constant 362 : index
    %9 = vector.load %arg7[%c0_8, %c0_9, %c362_10] : memref<1x4x404xbf16, #tpu.memory_space<vmem>>, vector<1x4x42xbf16>
    %10 = vector.shape_cast %9 : vector<1x4x42xbf16> to vector<4x42xbf16>
    %11 = vector.shape_cast %8 : vector<4x42xbf16> to vector<1x4x42xbf16>
    tpu.vector_store %arg7[%c0_8, %c0_9, %c362_10], %11 {strides = array<i32>} : memref<1x4x404xbf16, #tpu.memory_space<vmem>>, vector<1x4x42xbf16>,
    %c0_11 = arith.constant 0 : index
    %c0_12 = arith.constant 0 : index
    %12 = vector.load %arg3[%c0_11, %c0_12] : memref<8x18xbf16, #tpu.memory_space<vmem>>, vector<8x18xbf16>
    %c0_13 = arith.constant 0 : index
    %c0_14 = arith.constant 0 : index
    %13 = vector.load %arg4[%c0_13, %c0_14] : memref<8x1xf32, #tpu.memory_space<vmem>>, vector<8x1xf32>
    %c0_15 = arith.constant 0 : index
    %c0_16 = arith.constant 0 : index
    %c21 = arith.constant 21 : index
    %14 = vector.load %arg1[%c0_15, %c0_16, %c21] : memref<1x2x404xbf16, #tpu.memory_space<vmem>>, vector<1x2x320xbf16>
    %15 = vector.shape_cast %14 : vector<1x2x320xbf16> to vector<2x320xbf16>
    %c0_17 = arith.constant 0 : index
    %c0_18 = arith.constant 0 : index
    %16 = vector.load %arg9[%c0_17, %c0_18] : memref<72x320xbf16, #tpu.memory_space<vmem>>, vector<2x320xbf16>
    tpu.vector_store %arg9[%c0_17, %c0_18], %15 {strides = array<i32>} : memref<72x320xbf16, #tpu.memory_space<vmem>>, vector<2x320xbf16>,
    %c0_19 = arith.constant 0 : index
    %c0_20 = arith.constant 0 : index
    %c22 = arith.constant 22 : index
    %17 = vector.load %arg1[%c0_19, %c0_20, %c22] : memref<1x2x404xbf16, #tpu.memory_space<vmem>>, vector<1x2x320xbf16>
    %18 = vector.shape_cast %17 : vector<1x2x320xbf16> to vector<2x320xbf16>
    %c2 = arith.constant 2 : index
    %c0_21 = arith.constant 0 : index
    %19 = vector.load %arg9[%c2, %c0_21] : memref<72x320xbf16, #tpu.memory_space<vmem>>, vector<2x320xbf16>
    tpu.vector_store %arg9[%c2, %c0_21], %18 {strides = array<i32>} : memref<72x320xbf16, #tpu.memory_space<vmem>>, vector<2x320xbf16>,
    %c0_22 = arith.constant 0 : index
    %c0_23 = arith.constant 0 : index
    %c23 = arith.constant 23 : index
    %20 = vector.load %arg1[%c0_22, %c0_23, %c23] : memref<1x2x404xbf16, #tpu.memory_space<vmem>>, vector<1x2x320xbf16>
    %21 = vector.shape_cast %20 : vector<1x2x320xbf16> to vector<2x320xbf16>
    %c4 = arith.constant 4 : index
    %c0_24 = arith.constant 0 : index
    %22 = vector.load %arg9[%c4, %c0_24] : memref<72x320xbf16, #tpu.memory_space<vmem>>, vector<2x320xbf16>
    tpu.vector_store %arg9[%c4, %c0_24], %21 {strides = array<i32>} : memref<72x320xbf16, #tpu.memory_space<vmem>>, vector<2x320xbf16>,
    %c0_25 = arith.constant 0 : index
    %c0_26 = arith.constant 0 : index
    %c41 = arith.constant 41 : index
    %23 = vector.load %arg1[%c0_25, %c0_26, %c41] : memref<1x2x404xbf16, #tpu.memory_space<vmem>>, vector<1x2x320xbf16>
    %24 = vector.shape_cast %23 : vector<1x2x320xbf16> to vector<2x320xbf16>
    %c6 = arith.constant 6 : index
    %c0_27 = arith.constant 0 : index
    %25 = vector.load %arg9[%c6, %c0_27] : memref<72x320xbf16, #tpu.memory_space<vmem>>, vector<2x320xbf16>
    tpu.vector_store %arg9[%c6, %c0_27], %24 {strides = array<i32>} : memref<72x320xbf16, #tpu.memory_space<vmem>>, vector<2x320xbf16>,
    %c0_28 = arith.constant 0 : index
    %c0_29 = arith.constant 0 : index
    %c42 = arith.constant 42 : index
    %26 = vector.load %arg1[%c0_28, %c0_29, %c42] : memref<1x2x404xbf16, #tpu.memory_space<vmem>>, vector<1x2x320xbf16>
    %27 = vector.shape_cast %26 : vector<1x2x320xbf16> to vector<2x320xbf16>
    %c8 = arith.constant 8 : index
    %c0_30 = arith.constant 0 : index
    %28 = vector.load %arg9[%c8, %c0_30] : memref<72x320xbf16, #tpu.memory_space<vmem>>, vector<2x320xbf16>
    tpu.vector_store %arg9[%c8, %c0_30], %27 {strides = array<i32>} : memref<72x320xbf16, #tpu.memory_space<vmem>>, vector<2x320xbf16>,
    %c0_31 = arith.constant 0 : index
    %c0_32 = arith.constant 0 : index
    %c43 = arith.constant 43 : index
    %29 = vector.load %arg1[%c0_31, %c0_32, %c43] : memref<1x2x404xbf16, #tpu.memory_space<vmem>>, vector<1x2x320xbf16>
    %30 = vector.shape_cast %29 : vector<1x2x320xbf16> to vector<2x320xbf16>
    %c10 = arith.constant 10 : index
    %c0_33 = arith.constant 0 : index
    %31 = vector.load %arg9[%c10, %c0_33] : memref<72x320xbf16, #tpu.memory_space<vmem>>, vector<2x320xbf16>
    tpu.vector_store %arg9[%c10, %c0_33], %30 {strides = array<i32>} : memref<72x320xbf16, #tpu.memory_space<vmem>>, vector<2x320xbf16>,
    %c0_34 = arith.constant 0 : index
    %c0_35 = arith.constant 0 : index
    %c61 = arith.constant 61 : index
    %32 = vector.load %arg1[%c0_34, %c0_35, %c61] : memref<1x2x404xbf16, #tpu.memory_space<vmem>>, vector<1x2x320xbf16>
    %33 = vector.shape_cast %32 : vector<1x2x320xbf16> to vector<2x320xbf16>
    %c12 = arith.constant 12 : index
    %c0_36 = arith.constant 0 : index
    %34 = vector.load %arg9[%c12, %c0_36] : memref<72x320xbf16, #tpu.memory_space<vmem>>, vector<2x320xbf16>
    tpu.vector_store %arg9[%c12, %c0_36], %33 {strides = array<i32>} : memref<72x320xbf16, #tpu.memory_space<vmem>>, vector<2x320xbf16>,
    %c0_37 = arith.constant 0 : index
    %c0_38 = arith.constant 0 : index
    %c62 = arith.constant 62 : index
    %35 = vector.load %arg1[%c0_37, %c0_38, %c62] : memref<1x2x404xbf16, #tpu.memory_space<vmem>>, vector<1x2x320xbf16>
    %36 = vector.shape_cast %35 : vector<1x2x320xbf16> to vector<2x320xbf16>
    %c14 = arith.constant 14 : index
    %c0_39 = arith.constant 0 : index
    %37 = vector.load %arg9[%c14, %c0_39] : memref<72x320xbf16, #tpu.memory_space<vmem>>, vector<2x320xbf16>
    tpu.vector_store %arg9[%c14, %c0_39], %36 {strides = array<i32>} : memref<72x320xbf16, #tpu.memory_space<vmem>>, vector<2x320xbf16>,
    %c0_40 = arith.constant 0 : index
    %c0_41 = arith.constant 0 : index
    %c63 = arith.constant 63 : index
    %38 = vector.load %arg1[%c0_40, %c0_41, %c63] : memref<1x2x404xbf16, #tpu.memory_space<vmem>>, vector<1x2x320xbf16>
    %39 = vector.shape_cast %38 : vector<1x2x320xbf16> to vector<2x320xbf16>
    %c16 = arith.constant 16 : index
    %c0_42 = arith.constant 0 : index
    %40 = vector.load %arg9[%c16, %c0_42] : memref<72x320xbf16, #tpu.memory_space<vmem>>, vector<2x320xbf16>
    tpu.vector_store %arg9[%c16, %c0_42], %39 {strides = array<i32>} : memref<72x320xbf16, #tpu.memory_space<vmem>>, vector<2x320xbf16>,
    %c0_43 = arith.constant 0 : index
    %c0_44 = arith.constant 0 : index
    %41 = vector.load %arg9[%c0_43, %c0_44] : memref<72x320xbf16, #tpu.memory_space<vmem>>, vector<18x320xbf16>
    %cst_45 = arith.constant dense<0.000000e+00> : vector<8x320xf32>
    %42 = tpu.matmul %12, %41, %cst_45 {dimension_numbers = #tpu.dot_dimension_numbers<[1], [0], [0], [1], [0, 0, 1, 1], [], []>} : vector<8x18xbf16>, vector<18x320xbf16>, vector<8x320xf32> -> vector<8x320xf32>
    %43 = vector.broadcast %13 : vector<8x1xf32> to vector<8x320xf32>
    %44 = arith.addf %42, %43 : vector<8x320xf32>
    %cst_46 = arith.constant 0.000000e+00 : f32
    %45 = vector.broadcast %cst_46 : f32 to vector<8x320xf32>
    %46 = arith.maximumf %44, %45 : vector<8x320xf32>
    %c0_47 = arith.constant 0 : index
    %c42_48 = arith.constant 42 : index
    %47 = vector.load %arg2[%c0_47, %c42_48] : memref<1x404xf32, #tpu.memory_space<vmem>>, vector<1x320xf32>
    %48 = vector.broadcast %47 : vector<1x320xf32> to vector<8x320xf32>
    %49 = arith.mulf %46, %48 : vector<8x320xf32>
    %50 = arith.truncf %49 : vector<8x320xf32> to vector<8x320xbf16>
    %c0_49 = arith.constant 0 : index
    %c42_50 = arith.constant 42 : index
    %51 = vector.load %arg8[%c0_49, %c42_50] : memref<8x404xbf16, #tpu.memory_space<vmem>>, vector<8x320xbf16>
    tpu.vector_store %arg8[%c0_49, %c42_50], %50 {strides = array<i32>} : memref<8x404xbf16, #tpu.memory_space<vmem>>, vector<8x320xbf16>,
    %c0_51 = arith.constant 0 : index
    %c0_52 = arith.constant 0 : index
    %52 = vector.load %arg5[%c0_51, %c0_52] : memref<4x72xbf16, #tpu.memory_space<vmem>>, vector<4x72xbf16>
    %c0_53 = arith.constant 0 : index
    %c0_54 = arith.constant 0 : index
    %53 = vector.load %arg6[%c0_53, %c0_54] : memref<4x1xf32, #tpu.memory_space<vmem>>, vector<4x1xf32>
    %c0_55 = arith.constant 0 : index
    %c21_56 = arith.constant 21 : index
    %54 = vector.load %arg8[%c0_55, %c21_56] : memref<8x404xbf16, #tpu.memory_space<vmem>>, vector<8x320xbf16>
    %c0_57 = arith.constant 0 : index
    %c0_58 = arith.constant 0 : index
    %55 = vector.load %arg9[%c0_57, %c0_58] : memref<72x320xbf16, #tpu.memory_space<vmem>>, vector<8x320xbf16>
    tpu.vector_store %arg9[%c0_57, %c0_58], %54 {strides = array<i32>} : memref<72x320xbf16, #tpu.memory_space<vmem>>, vector<8x320xbf16>,
    %c0_59 = arith.constant 0 : index
    %c22_60 = arith.constant 22 : index
    %56 = vector.load %arg8[%c0_59, %c22_60] : memref<8x404xbf16, #tpu.memory_space<vmem>>, vector<8x320xbf16>
    %c8_61 = arith.constant 8 : index
    %c0_62 = arith.constant 0 : index
    %57 = vector.load %arg9[%c8_61, %c0_62] : memref<72x320xbf16, #tpu.memory_space<vmem>>, vector<8x320xbf16>
    tpu.vector_store %arg9[%c8_61, %c0_62], %56 {strides = array<i32>} : memref<72x320xbf16, #tpu.memory_space<vmem>>, vector<8x320xbf16>,
    %c0_63 = arith.constant 0 : index
    %c23_64 = arith.constant 23 : index
    %58 = vector.load %arg8[%c0_63, %c23_64] : memref<8x404xbf16, #tpu.memory_space<vmem>>, vector<8x320xbf16>
    %c16_65 = arith.constant 16 : index
    %c0_66 = arith.constant 0 : index
    %59 = vector.load %arg9[%c16_65, %c0_66] : memref<72x320xbf16, #tpu.memory_space<vmem>>, vector<8x320xbf16>
    tpu.vector_store %arg9[%c16_65, %c0_66], %58 {strides = array<i32>} : memref<72x320xbf16, #tpu.memory_space<vmem>>, vector<8x320xbf16>,
    %c0_67 = arith.constant 0 : index
    %c41_68 = arith.constant 41 : index
    %60 = vector.load %arg8[%c0_67, %c41_68] : memref<8x404xbf16, #tpu.memory_space<vmem>>, vector<8x320xbf16>
    %c24 = arith.constant 24 : index
    %c0_69 = arith.constant 0 : index
    %61 = vector.load %arg9[%c24, %c0_69] : memref<72x320xbf16, #tpu.memory_space<vmem>>, vector<8x320xbf16>
    tpu.vector_store %arg9[%c24, %c0_69], %60 {strides = array<i32>} : memref<72x320xbf16, #tpu.memory_space<vmem>>, vector<8x320xbf16>,
    %c0_70 = arith.constant 0 : index
    %c42_71 = arith.constant 42 : index
    %62 = vector.load %arg8[%c0_70, %c42_71] : memref<8x404xbf16, #tpu.memory_space<vmem>>, vector<8x320xbf16>
    %c32 = arith.constant 32 : index
    %c0_72 = arith.constant 0 : index
    %63 = vector.load %arg9[%c32, %c0_72] : memref<72x320xbf16, #tpu.memory_space<vmem>>, vector<8x320xbf16>
    tpu.vector_store %arg9[%c32, %c0_72], %62 {strides = array<i32>} : memref<72x320xbf16, #tpu.memory_space<vmem>>, vector<8x320xbf16>,
    %c0_73 = arith.constant 0 : index
    %c43_74 = arith.constant 43 : index
    %64 = vector.load %arg8[%c0_73, %c43_74] : memref<8x404xbf16, #tpu.memory_space<vmem>>, vector<8x320xbf16>
    %c40 = arith.constant 40 : index
    %c0_75 = arith.constant 0 : index
    %65 = vector.load %arg9[%c40, %c0_75] : memref<72x320xbf16, #tpu.memory_space<vmem>>, vector<8x320xbf16>
    tpu.vector_store %arg9[%c40, %c0_75], %64 {strides = array<i32>} : memref<72x320xbf16, #tpu.memory_space<vmem>>, vector<8x320xbf16>,
    %c0_76 = arith.constant 0 : index
    %c61_77 = arith.constant 61 : index
    %66 = vector.load %arg8[%c0_76, %c61_77] : memref<8x404xbf16, #tpu.memory_space<vmem>>, vector<8x320xbf16>
    %c48 = arith.constant 48 : index
    %c0_78 = arith.constant 0 : index
    %67 = vector.load %arg9[%c48, %c0_78] : memref<72x320xbf16, #tpu.memory_space<vmem>>, vector<8x320xbf16>
    tpu.vector_store %arg9[%c48, %c0_78], %66 {strides = array<i32>} : memref<72x320xbf16, #tpu.memory_space<vmem>>, vector<8x320xbf16>,
    %c0_79 = arith.constant 0 : index
    %c62_80 = arith.constant 62 : index
    %68 = vector.load %arg8[%c0_79, %c62_80] : memref<8x404xbf16, #tpu.memory_space<vmem>>, vector<8x320xbf16>
    %c56 = arith.constant 56 : index
    %c0_81 = arith.constant 0 : index
    %69 = vector.load %arg9[%c56, %c0_81] : memref<72x320xbf16, #tpu.memory_space<vmem>>, vector<8x320xbf16>
    tpu.vector_store %arg9[%c56, %c0_81], %68 {strides = array<i32>} : memref<72x320xbf16, #tpu.memory_space<vmem>>, vector<8x320xbf16>,
    %c0_82 = arith.constant 0 : index
    %c63_83 = arith.constant 63 : index
    %70 = vector.load %arg8[%c0_82, %c63_83] : memref<8x404xbf16, #tpu.memory_space<vmem>>, vector<8x320xbf16>
    %c64 = arith.constant 64 : index
    %c0_84 = arith.constant 0 : index
    %71 = vector.load %arg9[%c64, %c0_84] : memref<72x320xbf16, #tpu.memory_space<vmem>>, vector<8x320xbf16>
    tpu.vector_store %arg9[%c64, %c0_84], %70 {strides = array<i32>} : memref<72x320xbf16, #tpu.memory_space<vmem>>, vector<8x320xbf16>,
    %c0_85 = arith.constant 0 : index
    %c0_86 = arith.constant 0 : index
    %72 = vector.load %arg9[%c0_85, %c0_86] : memref<72x320xbf16, #tpu.memory_space<vmem>>, vector<72x320xbf16>
    %cst_87 = arith.constant dense<0.000000e+00> : vector<4x320xf32>
    %73 = tpu.matmul %52, %72, %cst_87 {dimension_numbers = #tpu.dot_dimension_numbers<[1], [0], [0], [1], [0, 0, 1, 1], [], []>} : vector<4x72xbf16>, vector<72x320xbf16>, vector<4x320xf32> -> vector<4x320xf32>
    %74 = vector.broadcast %53 : vector<4x1xf32> to vector<4x320xf32>
    %75 = arith.addf %73, %74 : vector<4x320xf32>
    %c0_88 = arith.constant 0 : index
    %c42_89 = arith.constant 42 : index
    %76 = vector.load %arg2[%c0_88, %c42_89] : memref<1x404xf32, #tpu.memory_space<vmem>>, vector<1x320xf32>
    %77 = vector.broadcast %76 : vector<1x320xf32> to vector<4x320xf32>
    %78 = arith.mulf %75, %77 : vector<4x320xf32>
    %79 = arith.truncf %78 : vector<4x320xf32> to vector<4x320xbf16>
    %c0_90 = arith.constant 0 : index
    %c0_91 = arith.constant 0 : index
    %c42_92 = arith.constant 42 : index
    %80 = vector.load %arg7[%c0_90, %c0_91, %c42_92] : memref<1x4x404xbf16, #tpu.memory_space<vmem>>, vector<1x4x320xbf16>
    %81 = vector.shape_cast %80 : vector<1x4x320xbf16> to vector<4x320xbf16>
    %82 = vector.shape_cast %79 : vector<4x320xbf16> to vector<1x4x320xbf16>
    tpu.vector_store %arg7[%c0_90, %c0_91, %c42_92], %82 {strides = array<i32>} : memref<1x4x404xbf16, #tpu.memory_space<vmem>>, vector<1x4x320xbf16>,
    return
  }
  func.func @transform_0(%arg0: i32) -> (i32, i32, i32) {
    %c0_i32 = arith.constant 0 : i32
    %c0_i32_0 = arith.constant 0 : i32
    %c0_i32_1 = arith.constant 0 : i32
    return %arg0, %c0_i32, %c0_i32_0 : i32, i32, i32
  }
  func.func @transform_1(%arg0: i32) -> (i32, i32) {
    %c0_i32 = arith.constant 0 : i32
    %c0_i32_0 = arith.constant 0 : i32
    %c0_i32_1 = arith.constant 0 : i32
    return %c0_i32, %c0_i32_0 : i32, i32
  }
  func.func @transform_2(%arg0: i32) -> (i32, i32) {
    %c0_i32 = arith.constant 0 : i32
    %c0_i32_0 = arith.constant 0 : i32
    %c0_i32_1 = arith.constant 0 : i32
    return %c0_i32, %c0_i32_0 : i32, i32
  }
  func.func @transform_3(%arg0: i32) -> (i32, i32) {
    %c0_i32 = arith.constant 0 : i32
    %c0_i32_0 = arith.constant 0 : i32
    %c0_i32_1 = arith.constant 0 : i32
    return %c0_i32, %c0_i32_0 : i32, i32
  }
  func.func @transform_4(%arg0: i32) -> (i32, i32) {
    %c0_i32 = arith.constant 0 : i32
    %c0_i32_0 = arith.constant 0 : i32
    %c0_i32_1 = arith.constant 0 : i32
    return %c0_i32, %c0_i32_0 : i32, i32
  }
  func.func @transform_5(%arg0: i32) -> (i32, i32) {
    %c0_i32 = arith.constant 0 : i32
    %c0_i32_0 = arith.constant 0 : i32
    %c0_i32_1 = arith.constant 0 : i32
    return %c0_i32, %c0_i32_0 : i32, i32
  }
  func.func @transform_6(%arg0: i32) -> (i32, i32, i32) {
    %c0_i32 = arith.constant 0 : i32
    %c0_i32_0 = arith.constant 0 : i32
    %c0_i32_1 = arith.constant 0 : i32
    return %arg0, %c0_i32, %c0_i32_0 : i32, i32, i32
  }
}

module attributes {stable_mosaic.version = 11 : i64} {
  func.func @kernel(%arg0: i32, %arg1: memref<1x2x404xbf16, #tpu.memory_space<vmem>>, %arg2: memref<1x2x4x404xbf16, #tpu.memory_space<vmem>>, %arg3: memref<1x3x4x404xbf16, #tpu.memory_space<vmem>>, %arg4: memref<1x4x1xf32, #tpu.memory_space<vmem>>, %arg5: memref<1x404xf32, #tpu.memory_space<vmem>>, %arg6: memref<16x234xbf16, #tpu.memory_space<vmem>>, %arg7: memref<16x1xf32, #tpu.memory_space<vmem>>, %arg8: memref<8x162xbf16, #tpu.memory_space<vmem>>, %arg9: memref<8x1xf32, #tpu.memory_space<vmem>>, %arg10: memref<1x10xbf16, #tpu.memory_space<vmem>>, %arg11: memref<1x1xf32, #tpu.memory_space<vmem>>, %arg12: memref<1x1x404xf32, #tpu.memory_space<vmem>>, %arg13: memref<26x404xbf16, #tpu.memory_space<vmem>>, %arg14: memref<18x404xbf16, #tpu.memory_space<vmem>>, %arg15: memref<10x404xbf16, #tpu.memory_space<vmem>>, %arg16: memref<234x320xbf16, #tpu.memory_space<vmem>>) attributes {dimension_semantics = [#tpu.dimension_semantics<parallel>], iteration_bounds = array<i64: 2>, scalar_prefetch = 0 : i64, scratch_operands = 4 : i64, tpu.core_type = #tpu.core_type<tc>, window_params = [{transform_indices = @transform_0, window_bounds = array<i64: 1, 2, 404>}, {transform_indices = @transform_1, window_bounds = array<i64: 1, 2, 4, 404>}, {transform_indices = @transform_2, window_bounds = array<i64: 1, 3, 4, 404>}, {transform_indices = @transform_3, window_bounds = array<i64: 1, 4, 1>}, {pipeline_mode = #tpu.pipeline_mode<synchronous>, transform_indices = @transform_4, window_bounds = array<i64: 1, 404>}, {pipeline_mode = #tpu.pipeline_mode<synchronous>, transform_indices = @transform_5, window_bounds = array<i64: 16, 234>}, {pipeline_mode = #tpu.pipeline_mode<synchronous>, transform_indices = @transform_6, window_bounds = array<i64: 16, 1>}, {pipeline_mode = #tpu.pipeline_mode<synchronous>, transform_indices = @transform_7, window_bounds = array<i64: 8, 162>}, {pipeline_mode = #tpu.pipeline_mode<synchronous>, transform_indices = @transform_8, window_bounds = array<i64: 8, 1>}, {pipeline_mode = #tpu.pipeline_mode<synchronous>, transform_indices = @transform_9, window_bounds = array<i64: 1, 10>}, {pipeline_mode = #tpu.pipeline_mode<synchronous>, transform_indices = @transform_10, window_bounds = array<i64: 1, 1>}, {transform_indices = @transform_11, window_bounds = array<i64: 1, 1, 404>}]} {
    %c0 = arith.constant 0 : index
    %c0_0 = arith.constant 0 : index
    %c0_1 = arith.constant 0 : index
    %0 = vector.load %arg1[%c0, %c0_0, %c0_1] : memref<1x2x404xbf16, #tpu.memory_space<vmem>>, vector<1x2x404xbf16>
    %1 = vector.shape_cast %0 : vector<1x2x404xbf16> to vector<2x404xbf16>
    %c0_2 = arith.constant 0 : index
    %c0_3 = arith.constant 0 : index
    %2 = vector.load %arg13[%c0_2, %c0_3] : memref<26x404xbf16, #tpu.memory_space<vmem>>, vector<2x404xbf16>
    tpu.vector_store %arg13[%c0_2, %c0_3], %1 {strides = array<i32>} : memref<26x404xbf16, #tpu.memory_space<vmem>>, vector<2x404xbf16>,
    %c0_4 = arith.constant 0 : index
    %c0_5 = arith.constant 0 : index
    %c0_6 = arith.constant 0 : index
    %c0_7 = arith.constant 0 : index
    %3 = vector.load %arg2[%c0_4, %c0_5, %c0_6, %c0_7] : memref<1x2x4x404xbf16, #tpu.memory_space<vmem>>, vector<1x1x4x404xbf16>
    %4 = vector.shape_cast %3 : vector<1x1x4x404xbf16> to vector<4x404xbf16>
    %c2 = arith.constant 2 : index
    %c0_8 = arith.constant 0 : index
    %5 = vector.load %arg13[%c2, %c0_8] : memref<26x404xbf16, #tpu.memory_space<vmem>>, vector<4x404xbf16>
    tpu.vector_store %arg13[%c2, %c0_8], %4 {strides = array<i32>} : memref<26x404xbf16, #tpu.memory_space<vmem>>, vector<4x404xbf16>,
    %c0_9 = arith.constant 0 : index
    %c1 = arith.constant 1 : index
    %c0_10 = arith.constant 0 : index
    %c0_11 = arith.constant 0 : index
    %6 = vector.load %arg2[%c0_9, %c1, %c0_10, %c0_11] : memref<1x2x4x404xbf16, #tpu.memory_space<vmem>>, vector<1x1x4x404xbf16>
    %7 = vector.shape_cast %6 : vector<1x1x4x404xbf16> to vector<4x404xbf16>
    %c6 = arith.constant 6 : index
    %c0_12 = arith.constant 0 : index
    %8 = vector.load %arg13[%c6, %c0_12] : memref<26x404xbf16, #tpu.memory_space<vmem>>, vector<4x404xbf16>
    tpu.vector_store %arg13[%c6, %c0_12], %7 {strides = array<i32>} : memref<26x404xbf16, #tpu.memory_space<vmem>>, vector<4x404xbf16>,
    %c0_13 = arith.constant 0 : index
    %c0_14 = arith.constant 0 : index
    %c0_15 = arith.constant 0 : index
    %c0_16 = arith.constant 0 : index
    %9 = vector.load %arg3[%c0_13, %c0_14, %c0_15, %c0_16] : memref<1x3x4x404xbf16, #tpu.memory_space<vmem>>, vector<1x1x4x404xbf16>
    %10 = vector.shape_cast %9 : vector<1x1x4x404xbf16> to vector<4x404xbf16>
    %c10 = arith.constant 10 : index
    %c0_17 = arith.constant 0 : index
    %11 = vector.load %arg13[%c10, %c0_17] : memref<26x404xbf16, #tpu.memory_space<vmem>>, vector<4x404xbf16>
    tpu.vector_store %arg13[%c10, %c0_17], %10 {strides = array<i32>} : memref<26x404xbf16, #tpu.memory_space<vmem>>, vector<4x404xbf16>,
    %c0_18 = arith.constant 0 : index
    %c1_19 = arith.constant 1 : index
    %c0_20 = arith.constant 0 : index
    %c0_21 = arith.constant 0 : index
    %12 = vector.load %arg3[%c0_18, %c1_19, %c0_20, %c0_21] : memref<1x3x4x404xbf16, #tpu.memory_space<vmem>>, vector<1x1x4x404xbf16>
    %13 = vector.shape_cast %12 : vector<1x1x4x404xbf16> to vector<4x404xbf16>
    %c14 = arith.constant 14 : index
    %c0_22 = arith.constant 0 : index
    %14 = vector.load %arg13[%c14, %c0_22] : memref<26x404xbf16, #tpu.memory_space<vmem>>, vector<4x404xbf16>
    tpu.vector_store %arg13[%c14, %c0_22], %13 {strides = array<i32>} : memref<26x404xbf16, #tpu.memory_space<vmem>>, vector<4x404xbf16>,
    %c0_23 = arith.constant 0 : index
    %c0_24 = arith.constant 0 : index
    %c0_25 = arith.constant 0 : index
    %15 = vector.load %arg4[%c0_23, %c0_24, %c0_25] : memref<1x4x1xf32, #tpu.memory_space<vmem>>, vector<1x4x1xf32>
    %16 = vector.shape_cast %15 : vector<1x4x1xf32> to vector<4x1xf32>
    %c0_26 = arith.constant 0 : index
    %c0_27 = arith.constant 0 : index
    %17 = vector.load %arg5[%c0_26, %c0_27] : memref<1x404xf32, #tpu.memory_space<vmem>>, vector<1x404xf32>
    %18 = vector.broadcast %16 : vector<4x1xf32> to vector<4x404xf32>
    %19 = vector.broadcast %17 : vector<1x404xf32> to vector<4x404xf32>
    %20 = arith.mulf %18, %19 : vector<4x404xf32>
    %21 = arith.truncf %20 : vector<4x404xf32> to vector<4x404xbf16>
    %c18 = arith.constant 18 : index
    %c0_28 = arith.constant 0 : index
    %22 = vector.load %arg13[%c18, %c0_28] : memref<26x404xbf16, #tpu.memory_space<vmem>>, vector<4x404xbf16>
    tpu.vector_store %arg13[%c18, %c0_28], %21 {strides = array<i32>} : memref<26x404xbf16, #tpu.memory_space<vmem>>, vector<4x404xbf16>,
    %c0_29 = arith.constant 0 : index
    %c2_30 = arith.constant 2 : index
    %c0_31 = arith.constant 0 : index
    %c0_32 = arith.constant 0 : index
    %23 = vector.load %arg3[%c0_29, %c2_30, %c0_31, %c0_32] : memref<1x3x4x404xbf16, #tpu.memory_space<vmem>>, vector<1x1x4x404xbf16>
    %24 = vector.shape_cast %23 : vector<1x1x4x404xbf16> to vector<4x404xbf16>
    %c22 = arith.constant 22 : index
    %c0_33 = arith.constant 0 : index
    %25 = vector.load %arg13[%c22, %c0_33] : memref<26x404xbf16, #tpu.memory_space<vmem>>, vector<4x404xbf16>
    tpu.vector_store %arg13[%c22, %c0_33], %24 {strides = array<i32>} : memref<26x404xbf16, #tpu.memory_space<vmem>>, vector<4x404xbf16>,
    %c0_34 = arith.constant 0 : index
    %c0_35 = arith.constant 0 : index
    %c0_36 = arith.constant 0 : index
    %26 = vector.load %arg1[%c0_34, %c0_35, %c0_36] : memref<1x2x404xbf16, #tpu.memory_space<vmem>>, vector<1x2x404xbf16>
    %27 = vector.shape_cast %26 : vector<1x2x404xbf16> to vector<2x404xbf16>
    %c16 = arith.constant 16 : index
    %c0_37 = arith.constant 0 : index
    %28 = vector.load %arg14[%c16, %c0_37] : memref<18x404xbf16, #tpu.memory_space<vmem>>, vector<2x404xbf16>
    tpu.vector_store %arg14[%c16, %c0_37], %27 {strides = array<i32>} : memref<18x404xbf16, #tpu.memory_space<vmem>>, vector<2x404xbf16>,
    %cst = arith.constant 0.000000e+00 : bf16
    %29 = vector.broadcast %cst : bf16 to vector<16x42xbf16>
    %c0_38 = arith.constant 0 : index
    %c0_39 = arith.constant 0 : index
    %30 = vector.load %arg14[%c0_38, %c0_39] : memref<18x404xbf16, #tpu.memory_space<vmem>>, vector<16x42xbf16>
    tpu.vector_store %arg14[%c0_38, %c0_39], %29 {strides = array<i32>} : memref<18x404xbf16, #tpu.memory_space<vmem>>, vector<16x42xbf16>,
    %cst_40 = arith.constant 0.000000e+00 : bf16
    %31 = vector.broadcast %cst_40 : bf16 to vector<16x42xbf16>
    %c0_41 = arith.constant 0 : index
    %c362 = arith.constant 362 : index
    %32 = vector.load %arg14[%c0_41, %c362] : memref<18x404xbf16, #tpu.memory_space<vmem>>, vector<16x42xbf16>
    tpu.vector_store %arg14[%c0_41, %c362], %31 {strides = array<i32>} : memref<18x404xbf16, #tpu.memory_space<vmem>>, vector<16x42xbf16>,
    %c0_42 = arith.constant 0 : index
    %c0_43 = arith.constant 0 : index
    %c0_44 = arith.constant 0 : index
    %33 = vector.load %arg1[%c0_42, %c0_43, %c0_44] : memref<1x2x404xbf16, #tpu.memory_space<vmem>>, vector<1x2x404xbf16>
    %34 = vector.shape_cast %33 : vector<1x2x404xbf16> to vector<2x404xbf16>
    %c8 = arith.constant 8 : index
    %c0_45 = arith.constant 0 : index
    %35 = vector.load %arg15[%c8, %c0_45] : memref<10x404xbf16, #tpu.memory_space<vmem>>, vector<2x404xbf16>
    tpu.vector_store %arg15[%c8, %c0_45], %34 {strides = array<i32>} : memref<10x404xbf16, #tpu.memory_space<vmem>>, vector<2x404xbf16>,
    %cst_46 = arith.constant 0.000000e+00 : bf16
    %36 = vector.broadcast %cst_46 : bf16 to vector<8x42xbf16>
    %c0_47 = arith.constant 0 : index
    %c0_48 = arith.constant 0 : index
    %37 = vector.load %arg15[%c0_47, %c0_48] : memref<10x404xbf16, #tpu.memory_space<vmem>>, vector<8x42xbf16>
    tpu.vector_store %arg15[%c0_47, %c0_48], %36 {strides = array<i32>} : memref<10x404xbf16, #tpu.memory_space<vmem>>, vector<8x42xbf16>,
    %cst_49 = arith.constant 0.000000e+00 : bf16
    %38 = vector.broadcast %cst_49 : bf16 to vector<8x42xbf16>
    %c0_50 = arith.constant 0 : index
    %c362_51 = arith.constant 362 : index
    %39 = vector.load %arg15[%c0_50, %c362_51] : memref<10x404xbf16, #tpu.memory_space<vmem>>, vector<8x42xbf16>
    tpu.vector_store %arg15[%c0_50, %c362_51], %38 {strides = array<i32>} : memref<10x404xbf16, #tpu.memory_space<vmem>>, vector<8x42xbf16>,
    %cst_52 = arith.constant 0.000000e+00 : f32
    %40 = vector.broadcast %cst_52 : f32 to vector<1x42xf32>
    %c0_53 = arith.constant 0 : index
    %c0_54 = arith.constant 0 : index
    %c0_55 = arith.constant 0 : index
    %41 = vector.load %arg12[%c0_53, %c0_54, %c0_55] : memref<1x1x404xf32, #tpu.memory_space<vmem>>, vector<1x1x42xf32>
    %42 = vector.shape_cast %41 : vector<1x1x42xf32> to vector<1x42xf32>
    %43 = vector.shape_cast %40 : vector<1x42xf32> to vector<1x1x42xf32>
    tpu.vector_store %arg12[%c0_53, %c0_54, %c0_55], %43 {strides = array<i32>} : memref<1x1x404xf32, #tpu.memory_space<vmem>>, vector<1x1x42xf32>,
    %cst_56 = arith.constant 0.000000e+00 : f32
    %44 = vector.broadcast %cst_56 : f32 to vector<1x42xf32>
    %c0_57 = arith.constant 0 : index
    %c0_58 = arith.constant 0 : index
    %c362_59 = arith.constant 362 : index
    %45 = vector.load %arg12[%c0_57, %c0_58, %c362_59] : memref<1x1x404xf32, #tpu.memory_space<vmem>>, vector<1x1x42xf32>
    %46 = vector.shape_cast %45 : vector<1x1x42xf32> to vector<1x42xf32>
    %47 = vector.shape_cast %44 : vector<1x42xf32> to vector<1x1x42xf32>
    tpu.vector_store %arg12[%c0_57, %c0_58, %c362_59], %47 {strides = array<i32>} : memref<1x1x404xf32, #tpu.memory_space<vmem>>, vector<1x1x42xf32>,
    %c0_60 = arith.constant 0 : index
    %c0_61 = arith.constant 0 : index
    %48 = vector.load %arg6[%c0_60, %c0_61] : memref<16x234xbf16, #tpu.memory_space<vmem>>, vector<16x234xbf16>
    %c0_62 = arith.constant 0 : index
    %c0_63 = arith.constant 0 : index
    %49 = vector.load %arg7[%c0_62, %c0_63] : memref<16x1xf32, #tpu.memory_space<vmem>>, vector<16x1xf32>
    %c0_64 = arith.constant 0 : index
    %c21 = arith.constant 21 : index
    %50 = vector.load %arg13[%c0_64, %c21] : memref<26x404xbf16, #tpu.memory_space<vmem>>, vector<26x320xbf16>
    %c0_65 = arith.constant 0 : index
    %c0_66 = arith.constant 0 : index
    %51 = vector.load %arg16[%c0_65, %c0_66] : memref<234x320xbf16, #tpu.memory_space<vmem>>, vector<26x320xbf16>
    tpu.vector_store %arg16[%c0_65, %c0_66], %50 {strides = array<i32>} : memref<234x320xbf16, #tpu.memory_space<vmem>>, vector<26x320xbf16>,
    %c0_67 = arith.constant 0 : index
    %c22_68 = arith.constant 22 : index
    %52 = vector.load %arg13[%c0_67, %c22_68] : memref<26x404xbf16, #tpu.memory_space<vmem>>, vector<26x320xbf16>
    %c26 = arith.constant 26 : index
    %c0_69 = arith.constant 0 : index
    %53 = vector.load %arg16[%c26, %c0_69] : memref<234x320xbf16, #tpu.memory_space<vmem>>, vector<26x320xbf16>
    tpu.vector_store %arg16[%c26, %c0_69], %52 {strides = array<i32>} : memref<234x320xbf16, #tpu.memory_space<vmem>>, vector<26x320xbf16>,
    %c0_70 = arith.constant 0 : index
    %c23 = arith.constant 23 : index
    %54 = vector.load %arg13[%c0_70, %c23] : memref<26x404xbf16, #tpu.memory_space<vmem>>, vector<26x320xbf16>
    %c52 = arith.constant 52 : index
    %c0_71 = arith.constant 0 : index
    %55 = vector.load %arg16[%c52, %c0_71] : memref<234x320xbf16, #tpu.memory_space<vmem>>, vector<26x320xbf16>
    tpu.vector_store %arg16[%c52, %c0_71], %54 {strides = array<i32>} : memref<234x320xbf16, #tpu.memory_space<vmem>>, vector<26x320xbf16>,
    %c0_72 = arith.constant 0 : index
    %c41 = arith.constant 41 : index
    %56 = vector.load %arg13[%c0_72, %c41] : memref<26x404xbf16, #tpu.memory_space<vmem>>, vector<26x320xbf16>
    %c78 = arith.constant 78 : index
    %c0_73 = arith.constant 0 : index
    %57 = vector.load %arg16[%c78, %c0_73] : memref<234x320xbf16, #tpu.memory_space<vmem>>, vector<26x320xbf16>
    tpu.vector_store %arg16[%c78, %c0_73], %56 {strides = array<i32>} : memref<234x320xbf16, #tpu.memory_space<vmem>>, vector<26x320xbf16>,
    %c0_74 = arith.constant 0 : index
    %c42 = arith.constant 42 : index
    %58 = vector.load %arg13[%c0_74, %c42] : memref<26x404xbf16, #tpu.memory_space<vmem>>, vector<26x320xbf16>
    %c104 = arith.constant 104 : index
    %c0_75 = arith.constant 0 : index
    %59 = vector.load %arg16[%c104, %c0_75] : memref<234x320xbf16, #tpu.memory_space<vmem>>, vector<26x320xbf16>
    tpu.vector_store %arg16[%c104, %c0_75], %58 {strides = array<i32>} : memref<234x320xbf16, #tpu.memory_space<vmem>>, vector<26x320xbf16>,
    %c0_76 = arith.constant 0 : index
    %c43 = arith.constant 43 : index
    %60 = vector.load %arg13[%c0_76, %c43] : memref<26x404xbf16, #tpu.memory_space<vmem>>, vector<26x320xbf16>
    %c130 = arith.constant 130 : index
    %c0_77 = arith.constant 0 : index
    %61 = vector.load %arg16[%c130, %c0_77] : memref<234x320xbf16, #tpu.memory_space<vmem>>, vector<26x320xbf16>
    tpu.vector_store %arg16[%c130, %c0_77], %60 {strides = array<i32>} : memref<234x320xbf16, #tpu.memory_space<vmem>>, vector<26x320xbf16>,
    %c0_78 = arith.constant 0 : index
    %c61 = arith.constant 61 : index
    %62 = vector.load %arg13[%c0_78, %c61] : memref<26x404xbf16, #tpu.memory_space<vmem>>, vector<26x320xbf16>
    %c156 = arith.constant 156 : index
    %c0_79 = arith.constant 0 : index
    %63 = vector.load %arg16[%c156, %c0_79] : memref<234x320xbf16, #tpu.memory_space<vmem>>, vector<26x320xbf16>
    tpu.vector_store %arg16[%c156, %c0_79], %62 {strides = array<i32>} : memref<234x320xbf16, #tpu.memory_space<vmem>>, vector<26x320xbf16>,
    %c0_80 = arith.constant 0 : index
    %c62 = arith.constant 62 : index
    %64 = vector.load %arg13[%c0_80, %c62] : memref<26x404xbf16, #tpu.memory_space<vmem>>, vector<26x320xbf16>
    %c182 = arith.constant 182 : index
    %c0_81 = arith.constant 0 : index
    %65 = vector.load %arg16[%c182, %c0_81] : memref<234x320xbf16, #tpu.memory_space<vmem>>, vector<26x320xbf16>
    tpu.vector_store %arg16[%c182, %c0_81], %64 {strides = array<i32>} : memref<234x320xbf16, #tpu.memory_space<vmem>>, vector<26x320xbf16>,
    %c0_82 = arith.constant 0 : index
    %c63 = arith.constant 63 : index
    %66 = vector.load %arg13[%c0_82, %c63] : memref<26x404xbf16, #tpu.memory_space<vmem>>, vector<26x320xbf16>
    %c208 = arith.constant 208 : index
    %c0_83 = arith.constant 0 : index
    %67 = vector.load %arg16[%c208, %c0_83] : memref<234x320xbf16, #tpu.memory_space<vmem>>, vector<26x320xbf16>
    tpu.vector_store %arg16[%c208, %c0_83], %66 {strides = array<i32>} : memref<234x320xbf16, #tpu.memory_space<vmem>>, vector<26x320xbf16>,
    %c0_84 = arith.constant 0 : index
    %c0_85 = arith.constant 0 : index
    %68 = vector.load %arg16[%c0_84, %c0_85] : memref<234x320xbf16, #tpu.memory_space<vmem>>, vector<234x320xbf16>
    %cst_86 = arith.constant dense<0.000000e+00> : vector<16x320xf32>
    %69 = tpu.matmul %48, %68, %cst_86 {dimension_numbers = #tpu.dot_dimension_numbers<[1], [0], [0], [1], [0, 0, 1, 1], [], []>} : vector<16x234xbf16>, vector<234x320xbf16>, vector<16x320xf32> -> vector<16x320xf32>
    %70 = vector.broadcast %49 : vector<16x1xf32> to vector<16x320xf32>
    %71 = arith.addf %69, %70 : vector<16x320xf32>
    %cst_87 = arith.constant 0.000000e+00 : f32
    %72 = vector.broadcast %cst_87 : f32 to vector<16x320xf32>
    %73 = arith.maximumf %71, %72 : vector<16x320xf32>
    %c0_88 = arith.constant 0 : index
    %c42_89 = arith.constant 42 : index
    %74 = vector.load %arg5[%c0_88, %c42_89] : memref<1x404xf32, #tpu.memory_space<vmem>>, vector<1x320xf32>
    %75 = vector.broadcast %74 : vector<1x320xf32> to vector<16x320xf32>
    %76 = arith.mulf %73, %75 : vector<16x320xf32>
    %77 = arith.truncf %76 : vector<16x320xf32> to vector<16x320xbf16>
    %c0_90 = arith.constant 0 : index
    %c42_91 = arith.constant 42 : index
    %78 = vector.load %arg14[%c0_90, %c42_91] : memref<18x404xbf16, #tpu.memory_space<vmem>>, vector<16x320xbf16>
    tpu.vector_store %arg14[%c0_90, %c42_91], %77 {strides = array<i32>} : memref<18x404xbf16, #tpu.memory_space<vmem>>, vector<16x320xbf16>,
    %c0_92 = arith.constant 0 : index
    %c0_93 = arith.constant 0 : index
    %79 = vector.load %arg8[%c0_92, %c0_93] : memref<8x162xbf16, #tpu.memory_space<vmem>>, vector<8x162xbf16>
    %c0_94 = arith.constant 0 : index
    %c0_95 = arith.constant 0 : index
    %80 = vector.load %arg9[%c0_94, %c0_95] : memref<8x1xf32, #tpu.memory_space<vmem>>, vector<8x1xf32>
    %c0_96 = arith.constant 0 : index
    %c21_97 = arith.constant 21 : index
    %81 = vector.load %arg14[%c0_96, %c21_97] : memref<18x404xbf16, #tpu.memory_space<vmem>>, vector<18x320xbf16>
    %c0_98 = arith.constant 0 : index
    %c0_99 = arith.constant 0 : index
    %82 = vector.load %arg16[%c0_98, %c0_99] : memref<234x320xbf16, #tpu.memory_space<vmem>>, vector<18x320xbf16>
    tpu.vector_store %arg16[%c0_98, %c0_99], %81 {strides = array<i32>} : memref<234x320xbf16, #tpu.memory_space<vmem>>, vector<18x320xbf16>,
    %c0_100 = arith.constant 0 : index
    %c22_101 = arith.constant 22 : index
    %83 = vector.load %arg14[%c0_100, %c22_101] : memref<18x404xbf16, #tpu.memory_space<vmem>>, vector<18x320xbf16>
    %c18_102 = arith.constant 18 : index
    %c0_103 = arith.constant 0 : index
    %84 = vector.load %arg16[%c18_102, %c0_103] : memref<234x320xbf16, #tpu.memory_space<vmem>>, vector<18x320xbf16>
    tpu.vector_store %arg16[%c18_102, %c0_103], %83 {strides = array<i32>} : memref<234x320xbf16, #tpu.memory_space<vmem>>, vector<18x320xbf16>,
    %c0_104 = arith.constant 0 : index
    %c23_105 = arith.constant 23 : index
    %85 = vector.load %arg14[%c0_104, %c23_105] : memref<18x404xbf16, #tpu.memory_space<vmem>>, vector<18x320xbf16>
    %c36 = arith.constant 36 : index
    %c0_106 = arith.constant 0 : index
    %86 = vector.load %arg16[%c36, %c0_106] : memref<234x320xbf16, #tpu.memory_space<vmem>>, vector<18x320xbf16>
    tpu.vector_store %arg16[%c36, %c0_106], %85 {strides = array<i32>} : memref<234x320xbf16, #tpu.memory_space<vmem>>, vector<18x320xbf16>,
    %c0_107 = arith.constant 0 : index
    %c41_108 = arith.constant 41 : index
    %87 = vector.load %arg14[%c0_107, %c41_108] : memref<18x404xbf16, #tpu.memory_space<vmem>>, vector<18x320xbf16>
    %c54 = arith.constant 54 : index
    %c0_109 = arith.constant 0 : index
    %88 = vector.load %arg16[%c54, %c0_109] : memref<234x320xbf16, #tpu.memory_space<vmem>>, vector<18x320xbf16>
    tpu.vector_store %arg16[%c54, %c0_109], %87 {strides = array<i32>} : memref<234x320xbf16, #tpu.memory_space<vmem>>, vector<18x320xbf16>,
    %c0_110 = arith.constant 0 : index
    %c42_111 = arith.constant 42 : index
    %89 = vector.load %arg14[%c0_110, %c42_111] : memref<18x404xbf16, #tpu.memory_space<vmem>>, vector<18x320xbf16>
    %c72 = arith.constant 72 : index
    %c0_112 = arith.constant 0 : index
    %90 = vector.load %arg16[%c72, %c0_112] : memref<234x320xbf16, #tpu.memory_space<vmem>>, vector<18x320xbf16>
    tpu.vector_store %arg16[%c72, %c0_112], %89 {strides = array<i32>} : memref<234x320xbf16, #tpu.memory_space<vmem>>, vector<18x320xbf16>,
    %c0_113 = arith.constant 0 : index
    %c43_114 = arith.constant 43 : index
    %91 = vector.load %arg14[%c0_113, %c43_114] : memref<18x404xbf16, #tpu.memory_space<vmem>>, vector<18x320xbf16>
    %c90 = arith.constant 90 : index
    %c0_115 = arith.constant 0 : index
    %92 = vector.load %arg16[%c90, %c0_115] : memref<234x320xbf16, #tpu.memory_space<vmem>>, vector<18x320xbf16>
    tpu.vector_store %arg16[%c90, %c0_115], %91 {strides = array<i32>} : memref<234x320xbf16, #tpu.memory_space<vmem>>, vector<18x320xbf16>,
    %c0_116 = arith.constant 0 : index
    %c61_117 = arith.constant 61 : index
    %93 = vector.load %arg14[%c0_116, %c61_117] : memref<18x404xbf16, #tpu.memory_space<vmem>>, vector<18x320xbf16>
    %c108 = arith.constant 108 : index
    %c0_118 = arith.constant 0 : index
    %94 = vector.load %arg16[%c108, %c0_118] : memref<234x320xbf16, #tpu.memory_space<vmem>>, vector<18x320xbf16>
    tpu.vector_store %arg16[%c108, %c0_118], %93 {strides = array<i32>} : memref<234x320xbf16, #tpu.memory_space<vmem>>, vector<18x320xbf16>,
    %c0_119 = arith.constant 0 : index
    %c62_120 = arith.constant 62 : index
    %95 = vector.load %arg14[%c0_119, %c62_120] : memref<18x404xbf16, #tpu.memory_space<vmem>>, vector<18x320xbf16>
    %c126 = arith.constant 126 : index
    %c0_121 = arith.constant 0 : index
    %96 = vector.load %arg16[%c126, %c0_121] : memref<234x320xbf16, #tpu.memory_space<vmem>>, vector<18x320xbf16>
    tpu.vector_store %arg16[%c126, %c0_121], %95 {strides = array<i32>} : memref<234x320xbf16, #tpu.memory_space<vmem>>, vector<18x320xbf16>,
    %c0_122 = arith.constant 0 : index
    %c63_123 = arith.constant 63 : index
    %97 = vector.load %arg14[%c0_122, %c63_123] : memref<18x404xbf16, #tpu.memory_space<vmem>>, vector<18x320xbf16>
    %c144 = arith.constant 144 : index
    %c0_124 = arith.constant 0 : index
    %98 = vector.load %arg16[%c144, %c0_124] : memref<234x320xbf16, #tpu.memory_space<vmem>>, vector<18x320xbf16>
    tpu.vector_store %arg16[%c144, %c0_124], %97 {strides = array<i32>} : memref<234x320xbf16, #tpu.memory_space<vmem>>, vector<18x320xbf16>,
    %c0_125 = arith.constant 0 : index
    %c0_126 = arith.constant 0 : index
    %99 = vector.load %arg16[%c0_125, %c0_126] : memref<234x320xbf16, #tpu.memory_space<vmem>>, vector<162x320xbf16>
    %cst_127 = arith.constant dense<0.000000e+00> : vector<8x320xf32>
    %100 = tpu.matmul %79, %99, %cst_127 {dimension_numbers = #tpu.dot_dimension_numbers<[1], [0], [0], [1], [0, 0, 1, 1], [], []>} : vector<8x162xbf16>, vector<162x320xbf16>, vector<8x320xf32> -> vector<8x320xf32>
    %101 = vector.broadcast %80 : vector<8x1xf32> to vector<8x320xf32>
    %102 = arith.addf %100, %101 : vector<8x320xf32>
    %cst_128 = arith.constant 0.000000e+00 : f32
    %103 = vector.broadcast %cst_128 : f32 to vector<8x320xf32>
    %104 = arith.maximumf %102, %103 : vector<8x320xf32>
    %c0_129 = arith.constant 0 : index
    %c42_130 = arith.constant 42 : index
    %105 = vector.load %arg5[%c0_129, %c42_130] : memref<1x404xf32, #tpu.memory_space<vmem>>, vector<1x320xf32>
    %106 = vector.broadcast %105 : vector<1x320xf32> to vector<8x320xf32>
    %107 = arith.mulf %104, %106 : vector<8x320xf32>
    %108 = arith.truncf %107 : vector<8x320xf32> to vector<8x320xbf16>
    %c0_131 = arith.constant 0 : index
    %c42_132 = arith.constant 42 : index
    %109 = vector.load %arg15[%c0_131, %c42_132] : memref<10x404xbf16, #tpu.memory_space<vmem>>, vector<8x320xbf16>
    tpu.vector_store %arg15[%c0_131, %c42_132], %108 {strides = array<i32>} : memref<10x404xbf16, #tpu.memory_space<vmem>>, vector<8x320xbf16>,
    %c0_133 = arith.constant 0 : index
    %c0_134 = arith.constant 0 : index
    %110 = vector.load %arg10[%c0_133, %c0_134] : memref<1x10xbf16, #tpu.memory_space<vmem>>, vector<1x10xbf16>
    %c0_135 = arith.constant 0 : index
    %c0_136 = arith.constant 0 : index
    %111 = vector.load %arg11[%c0_135, %c0_136] : memref<1x1xf32, #tpu.memory_space<vmem>>, vector<1x1xf32>
    %c0_137 = arith.constant 0 : index
    %c42_138 = arith.constant 42 : index
    %112 = vector.load %arg15[%c0_137, %c42_138] : memref<10x404xbf16, #tpu.memory_space<vmem>>, vector<10x320xbf16>
    %cst_139 = arith.constant dense<0.000000e+00> : vector<1x320xf32>
    %113 = tpu.matmul %110, %112, %cst_139 {dimension_numbers = #tpu.dot_dimension_numbers<[1], [0], [0], [1], [0, 0, 1, 1], [], []>} : vector<1x10xbf16>, vector<10x320xbf16>, vector<1x320xf32> -> vector<1x320xf32>
    %114 = vector.broadcast %111 : vector<1x1xf32> to vector<1x320xf32>
    %115 = arith.addf %113, %114 : vector<1x320xf32>
    %c0_140 = arith.constant 0 : index
    %c42_141 = arith.constant 42 : index
    %116 = vector.load %arg5[%c0_140, %c42_141] : memref<1x404xf32, #tpu.memory_space<vmem>>, vector<1x320xf32>
    %117 = arith.mulf %115, %116 : vector<1x320xf32>
    %c0_142 = arith.constant 0 : index
    %c0_143 = arith.constant 0 : index
    %c42_144 = arith.constant 42 : index
    %118 = vector.load %arg12[%c0_142, %c0_143, %c42_144] : memref<1x1x404xf32, #tpu.memory_space<vmem>>, vector<1x1x320xf32>
    %119 = vector.shape_cast %118 : vector<1x1x320xf32> to vector<1x320xf32>
    %120 = vector.shape_cast %117 : vector<1x320xf32> to vector<1x1x320xf32>
    tpu.vector_store %arg12[%c0_142, %c0_143, %c42_144], %120 {strides = array<i32>} : memref<1x1x404xf32, #tpu.memory_space<vmem>>, vector<1x1x320xf32>,
    return
  }
  func.func @transform_0(%arg0: i32) -> (i32, i32, i32) {
    %c0_i32 = arith.constant 0 : i32
    %c0_i32_0 = arith.constant 0 : i32
    %c0_i32_1 = arith.constant 0 : i32
    return %arg0, %c0_i32, %c0_i32_0 : i32, i32, i32
  }
  func.func @transform_1(%arg0: i32) -> (i32, i32, i32, i32) {
    %c0_i32 = arith.constant 0 : i32
    %c0_i32_0 = arith.constant 0 : i32
    %c0_i32_1 = arith.constant 0 : i32
    %c0_i32_2 = arith.constant 0 : i32
    return %arg0, %c0_i32, %c0_i32_0, %c0_i32_1 : i32, i32, i32, i32
  }
  func.func @transform_2(%arg0: i32) -> (i32, i32, i32, i32) {
    %c0_i32 = arith.constant 0 : i32
    %c0_i32_0 = arith.constant 0 : i32
    %c0_i32_1 = arith.constant 0 : i32
    %c0_i32_2 = arith.constant 0 : i32
    return %arg0, %c0_i32, %c0_i32_0, %c0_i32_1 : i32, i32, i32, i32
  }
  func.func @transform_3(%arg0: i32) -> (i32, i32, i32) {
    %c0_i32 = arith.constant 0 : i32
    %c0_i32_0 = arith.constant 0 : i32
    %c0_i32_1 = arith.constant 0 : i32
    return %arg0, %c0_i32, %c0_i32_0 : i32, i32, i32
  }
  func.func @transform_4(%arg0: i32) -> (i32, i32) {
    %c0_i32 = arith.constant 0 : i32
    %c0_i32_0 = arith.constant 0 : i32
    %c0_i32_1 = arith.constant 0 : i32
    return %c0_i32, %c0_i32_0 : i32, i32
  }
  func.func @transform_5(%arg0: i32) -> (i32, i32) {
    %c0_i32 = arith.constant 0 : i32
    %c0_i32_0 = arith.constant 0 : i32
    %c0_i32_1 = arith.constant 0 : i32
    return %c0_i32, %c0_i32_0 : i32, i32
  }
  func.func @transform_6(%arg0: i32) -> (i32, i32) {
    %c0_i32 = arith.constant 0 : i32
    %c0_i32_0 = arith.constant 0 : i32
    %c0_i32_1 = arith.constant 0 : i32
    return %c0_i32, %c0_i32_0 : i32, i32
  }
  func.func @transform_7(%arg0: i32) -> (i32, i32) {
    %c0_i32 = arith.constant 0 : i32
    %c0_i32_0 = arith.constant 0 : i32
    %c0_i32_1 = arith.constant 0 : i32
    return %c0_i32, %c0_i32_0 : i32, i32
  }
  func.func @transform_8(%arg0: i32) -> (i32, i32) {
    %c0_i32 = arith.constant 0 : i32
    %c0_i32_0 = arith.constant 0 : i32
    %c0_i32_1 = arith.constant 0 : i32
    return %c0_i32, %c0_i32_0 : i32, i32
  }
  func.func @transform_9(%arg0: i32) -> (i32, i32) {
    %c0_i32 = arith.constant 0 : i32
    %c0_i32_0 = arith.constant 0 : i32
    %c0_i32_1 = arith.constant 0 : i32
    return %c0_i32, %c0_i32_0 : i32, i32
  }
  func.func @transform_10(%arg0: i32) -> (i32, i32) {
    %c0_i32 = arith.constant 0 : i32
    %c0_i32_0 = arith.constant 0 : i32
    %c0_i32_1 = arith.constant 0 : i32
    return %c0_i32, %c0_i32_0 : i32, i32
  }
  func.func @transform_11(%arg0: i32) -> (i32, i32, i32) {
    %c0_i32 = arith.constant 0 : i32
    %c0_i32_0 = arith.constant 0 : i32
    %c0_i32_1 = arith.constant 0 : i32
    return %arg0, %c0_i32, %c0_i32_0 : i32, i32, i32
  }
}

</mosaic_0001>

<llo_original>
// kernel: scandium_weather_forward.4
$region0: #{scandium_weather_forward.4}
  #allocation0 [shape = 'u32[]', space=smem, size = 0x4, offset = 0x4, fixed_abs, tag = 'smem constant byte address 0x4 - core index']
  #allocation1 [shape = 'u32[144,128]{1,0:T(1,128)}', space=vmem, size = 0x12000, scoped, tag = 'internal scratch']
  #allocation2 [shape = 'bf16[50,320]{1,0:T(8,128)(2,1)}', space=vmem, size = 0xa800, scoped, tag = 'scratch operand']
  %s0 = inlined_call_operand.vmem [shape: bf16[4,2,404], index: 0, kind: input, shape index: {}]
  %s1 = inlined_call_operand.vmem [shape: f32[1,404], index: 1, kind: input, shape index: {}]
  %s2 = inlined_call_operand.vmem [shape: bf16[4,50], index: 2, kind: input, shape index: {}]
  %s3 = inlined_call_operand.vmem [shape: f32[4,1], index: 3, kind: input, shape index: {}]
  %s4 = inlined_call_operand.vmem [shape: bf16[4,4,404], index: 4, kind: output, shape index: {}]
  %s5 = sld [smem:[#allocation0]]
  $region49: #{scandium_weather_forward.4} parent=0
    _
  %s7 = ssub.s32 1, %s5
  %s8 = scalar_select 0, %s7, %s5
  loop: start=0, step=1, limit=6
  $region2: #{scandium_weather_forward.4} parent=0 // loop_pre_header
    _
  $region3: #{scandium_weather_forward.4} parent=0 // loop_header
    %s10 = sphi 0, %s14
    %p11 = scmp.ge.s32.totalorder %s10, 6
    %s20 = sphi 0, %s22
    %s23 = sphi 0, %s20
    %s24 = sphi 0, %s23
    %s40 = sphi 0, %s24
    %s44 = sphi 0, %s44
    %s46 = sphi 0, %s44
    %s47 = sphi 0, %s46
    %s61 = sphi 0, %s47
    %s65 = sphi 0, %s65
    %s67 = sphi 0, %s65
    %s68 = sphi 0, %s67
    %s82 = sphi 0, %s68
    %s86 = sphi 0, %s86
    %s88 = sphi 0, %s86
    %s89 = sphi 0, %s88
    %s103 = sphi 0, %s89
    %s109 = sphi 0, %s111
    %s112 = sphi 0, %s109
    %s113 = sphi 0, %s112
    %s129 = sphi 0, %s113
  $region4: #{scandium_weather_forward.4} parent=0 // loop_header_branch
    %13 = sbr.rel (%p11) target = $region8
  $region5: #{scandium_weather_forward.4} parent=0 // loop_body
    %s15 = ssub.s32 %s10, 1
    %s16 = ssub.s32 %s10, 2
    %s17 = sadd.s32 %s10, 1
    %s18 = ssub.s32 %s10, %s17
    %p19 = scmp.eq.s32.totalorder %s18, 0
    %s21 = sadd.s32 %s20, 1
    %s22 = scalar_select %p19, %s20, %s21
    %p25 = pneg %p19
    %p26 = scmp.eq.s32.totalorder %s10, 3
    %p27 = por %p25, %p26
    %p28 = scmp.ne.s32.totalorder %s20, %s23
    %p29 = scmp.eq.s32.totalorder %s10, 0
    %p30 = por %p28, %p29
    %p31 = scmp.ne.s32.totalorder %s20, %s23
    %p32 = scmp.eq.s32.totalorder %s15, 3
    %p33 = por %p31, %p32
    %p34 = scmp.ne.s32.totalorder %s23, %s24
    %p35 = scmp.eq.s32.totalorder %s15, 0
    %p36 = por %p34, %p35
    %p37 = scmp.ne.s32.totalorder %s23, %s24
    %p38 = scmp.eq.s32.totalorder %s16, 3
    %p39 = por %p37, %p38
    %p41 = scmp.ne.s32.totalorder %s24, %s40
    %p42 = scmp.eq.s32.totalorder %s16, 0
    %p43 = por %p41, %p42
    %s45 = sadd.s32 %s44, 1
    %p48 = scmp.eq.s32.totalorder %s10, 3
    %p49 = scmp.ne.s32.totalorder %s44, %s46
    %p50 = scmp.eq.s32.totalorder %s10, 0
    %p51 = por %p49, %p50
    %p52 = scmp.ne.s32.totalorder %s44, %s46
    %p53 = scmp.eq.s32.totalorder %s15, 3
    %p54 = por %p52, %p53
    %p55 = scmp.ne.s32.totalorder %s46, %s47
    %p56 = scmp.eq.s32.totalorder %s15, 0
    %p57 = por %p55, %p56
    %p58 = scmp.ne.s32.totalorder %s46, %s47
    %p59 = scmp.eq.s32.totalorder %s16, 3
    %p60 = por %p58, %p59
    %p62 = scmp.ne.s32.totalorder %s47, %s61
    %p63 = scmp.eq.s32.totalorder %s16, 0
    %p64 = por %p62, %p63
    %s66 = sadd.s32 %s65, 1
    %p69 = scmp.eq.s32.totalorder %s10, 3
    %p70 = scmp.ne.s32.totalorder %s65, %s67
    %p71 = scmp.eq.s32.totalorder %s10, 0
    %p72 = por %p70, %p71
    %p73 = scmp.ne.s32.totalorder %s65, %s67
    %p74 = scmp.eq.s32.totalorder %s15, 3
    %p75 = por %p73, %p74
    %p76 = scmp.ne.s32.totalorder %s67, %s68
    %p77 = scmp.eq.s32.totalorder %s15, 0
    %p78 = por %p76, %p77
    %p79 = scmp.ne.s32.totalorder %s67, %s68
    %p80 = scmp.eq.s32.totalorder %s16, 3
    %p81 = por %p79, %p80
    %p83 = scmp.ne.s32.totalorder %s68, %s82
    %p84 = scmp.eq.s32.totalorder %s16, 0
    %p85 = por %p83, %p84
    %s87 = sadd.s32 %s86, 1
    %p90 = scmp.eq.s32.totalorder %s10, 3
    %p91 = scmp.ne.s32.totalorder %s86, %s88
    %p92 = scmp.eq.s32.totalorder %s10, 0
    %p93 = por %p91, %p92
    %p94 = scmp.ne.s32.totalorder %s86, %s88
    %p95 = scmp.eq.s32.totalorder %s15, 3
    %p96 = por %p94, %p95
    %p97 = scmp.ne.s32.totalorder %s88, %s89
    %p98 = scmp.eq.s32.totalorder %s15, 0
    %p99 = por %p97, %p98
    %p100 = scmp.ne.s32.totalorder %s88, %s89
    %p101 = scmp.eq.s32.totalorder %s16, 3
    %p102 = por %p100, %p101
    %p104 = scmp.ne.s32.totalorder %s89, %s103
    %p105 = scmp.eq.s32.totalorder %s16, 0
    %p106 = por %p104, %p105
    %s107 = ssub.s32 %s10, %s17
    %p108 = scmp.eq.s32.totalorder %s107, 0
    %s110 = sadd.s32 %s109, 1
    %s111 = scalar_select %p108, %s109, %s110
    %p114 = pneg %p108
    %p115 = scmp.eq.s32.totalorder %s10, 3
    %p116 = por %p114, %p115
    %p117 = scmp.ne.s32.totalorder %s109, %s112
    %p118 = scmp.eq.s32.totalorder %s10, 0
    %p119 = por %p117, %p118
    %p120 = scmp.ne.s32.totalorder %s109, %s112
    %p121 = scmp.eq.s32.totalorder %s15, 3
    %p122 = por %p120, %p121
    %p123 = scmp.ne.s32.totalorder %s112, %s113
    %p124 = scmp.eq.s32.totalorder %s15, 0
    %p125 = por %p123, %p124
    %p126 = scmp.ne.s32.totalorder %s112, %s113
    %p127 = scmp.eq.s32.totalorder %s16, 3
    %p128 = por %p126, %p127
    %p130 = scmp.ne.s32.totalorder %s113, %s129
    %p131 = scmp.eq.s32.totalorder %s16, 0
    %p132 = por %p130, %p131
    %p133 = scmp.le.s32.totalorder 1, %s10
    %p134 = scmp.lt.s32.totalorder %s10, 5
    %p135 = pnand %p133, %p134
    %p136 = pneg %p135
    // Predicated region
    $region9: #{scandium_weather_forward.4} parent=5 // pred_check
      _
    $region10: #{scandium_weather_forward.4} parent=5 // pred_check_branch
      %138 = sbr.rel (%p135) target = $region12
    $region11: #{scandium_weather_forward.4} parent=5 // pred_region
      %s139 = ssub.s32 %s10, 1
      // Predicated region
      $region13: #{scandium_weather_forward.4} parent=11 // pred_check
        %p140 = pneg %p57
      $region14: #{scandium_weather_forward.4} parent=11 // pred_check_branch
        %142 = sbr.rel (%p140) target = $region16
      $region15: #{scandium_weather_forward.4} parent=11 // pred_region
        _
      $region16: #{scandium_weather_forward.4} parent=11 // pred_fallthru
        _
      // Predicated region
      $region17: #{scandium_weather_forward.4} parent=11 // pred_check
        %p143 = pneg %p78
      $region18: #{scandium_weather_forward.4} parent=11 // pred_check_branch
        %145 = sbr.rel (%p143) target = $region20
      $region19: #{scandium_weather_forward.4} parent=11 // pred_region
        _
      $region20: #{scandium_weather_forward.4} parent=11 // pred_fallthru
        _
      // Predicated region
      $region21: #{scandium_weather_forward.4} parent=11 // pred_check
        %p146 = pneg %p99
      $region22: #{scandium_weather_forward.4} parent=11 // pred_check_branch
        %148 = sbr.rel (%p146) target = $region24
      $region23: #{scandium_weather_forward.4} parent=11 // pred_region
        _
      $region24: #{scandium_weather_forward.4} parent=11 // pred_fallthru
        _
    $region12: #{scandium_weather_forward.4} parent=5 // pred_fallthru
      _
    %p149 = scmp.lt.s32.totalorder %s10, 4
    // Predicated region
    $region25: #{scandium_weather_forward.4} parent=5 // pred_check
      %p150 = pneg %p149
    $region26: #{scandium_weather_forward.4} parent=5 // pred_check_branch
      %152 = sbr.rel (%p150) target = $region28
    $region27: #{scandium_weather_forward.4} parent=5 // pred_region
      // Predicated region
      $region29: #{scandium_weather_forward.4} parent=27 // pred_check
        %p153 = pneg %p30
      $region30: #{scandium_weather_forward.4} parent=27 // pred_check_branch
        %155 = sbr.rel (%p153) target = $region32
      $region31: #{scandium_weather_forward.4} parent=27 // pred_region
        %p156 = scmp.lt.s32.totalorder %s10, 3
        %s157 = scalar_select %p156, %s10, 3
        %s158 = smul.addr %s157, 4
        %s159 = scalar_lea.vmem %s0, %s158
      $region32: #{scandium_weather_forward.4} parent=27 // pred_fallthru
        _
    $region28: #{scandium_weather_forward.4} parent=5 // pred_fallthru
      _
    %p160 = scmp.le.s32.totalorder 1, %s10
    %p161 = scmp.lt.s32.totalorder %s10, 5
    %p162 = pnand %p160, %p161
    %p163 = pneg %p162
    // Predicated region
    $region33: #{scandium_weather_forward.4} parent=5 // pred_check
      _
    $region34: #{scandium_weather_forward.4} parent=5 // pred_check_branch
      %165 = sbr.rel (%p162) target = $region36
    $region35: #{scandium_weather_forward.4} parent=5 // pred_region
      %s166 = ssub.s32 %s10, 1
      %p167 = scmp.lt.s32.totalorder %s15, 3
      %s168 = scalar_select %p167, %s15, 3
      %s169 = smul.addr %s168, 4
      %s170 = scalar_lea.vmem %s0, %s169
      %p171 = pneg %p36
      %p172 = pneg %p33
      %p173 = pneg %p57
      %p174 = pneg %p54
      %p175 = pneg %p78
      %p176 = pneg %p75
      %p177 = pneg %p99
      %p178 = pneg %p96
      %p179 = pneg %p125
      %p180 = pneg %p122
      %p181 = scmp.lt.s32.totalorder %s15, 3
      %s182 = scalar_select %p181, %s15, 3
      %s183 = smul.addr %s182, 4
      %s184 = smul.addr %s183, 2
      %s185 = scalar_lea.vmem %s4, %s184
      %p186 = scmp.lt.s32.totalorder %s15, 3
      %s187 = scalar_select %p186, %s15, 3
      %s188 = smul.addr %s187, 4
      %s189 = scalar_lea.vmem %s0, %s188
      %p190 = scmp.lt.s32.totalorder %s15, 3
      %s191 = scalar_select %p190, %s15, 3
      %s192 = smul.addr %s191, 4
      %s193 = smul.addr %s192, 2
      %s194 = scalar_lea.vmem %s4, %s193
      %vm196 = vcmask 336896
      %197 = vst.msk [vmem:[%s194] sm:$0x3] %vm196, 0
      %vm198 = vcmask 1042256
      %vm199 = vcmask 158722
      %vm200 = vmor %vm199, %vm198
      %201 = vst.msk [vmem:[%s194 + $0x4] sm:$0xf] %vm200, 0
      %v202 = vld [vmem:[%s2] sm:$0x3]
      %v203 = vld [vmem:[%s3] sm:$0xf]
      %v204 = vld [vmem:[%s189] sm:$0x7]
      %v207 = vunpack.c.l.s4 1935823168
      %v208 = vunpack.c.0.s8 %v207
      %v209 = vlaneseq
      %v210 = vshrl.u32 %v209, 7
      %v211 = vsub.s32 %v208, %v210
      %v212 = vrot.slane %v204, %v211
      %v213 = vcombine.high %v212, %v212
      %v215 = vunpack.c.l.s4 1935823168
      %v216 = vunpack.c.0.s8 %v215
      %v217 = vlaneseq
      %v218 = vshrl.u32 %v217, 7
      %v219 = vsub.s32 %v216, %v218
      %v220 = vrot.slane %v212, %v219
      %v222 = vunpack.c.l.s4 1935823168
      %v223 = vunpack.c.0.s8 %v222
      %v224 = vlaneseq
      %v225 = vshrl.u32 %v224, 7
      %v226 = vsub.s32 %v223, %v225
      %v227 = vrot.slane %v213, %v226
      %230 = vst [vmem:[#allocation2] sm:$0x11] %v220
      %vm231 = vcmask 516096
      %232 = vst.msk [vmem:[#allocation2 + $0x8] sm:$0x1] %vm231, %v227
      %v233 = vld [vmem:[%s189] sm:$0x7]
      %v236 = vunpack.c.l.s4 1935823168
      %v237 = vunpack.c.0.s8 %v236
      %v238 = vlaneseq
      %v239 = vshrl.u32 %v238, 7
      %v240 = vsub.s32 %v237, %v239
      %v241 = vrot.slane %v233, %v240
      %v242 = vcombine.low %v241, %v241
      %v244 = vunpack.c.l.s4 1935823168
      %v245 = vunpack.c.0.s8 %v244
      %v246 = vlaneseq
      %v247 = vshrl.u32 %v246, 7
      %v248 = vsub.s32 %v245, %v247
      %v249 = vrot.slane %v242, %v248
      %v251 = vunpack.c.l.s4 1935823168
      %v252 = vunpack.c.0.s8 %v251
      %v253 = vlaneseq
      %v254 = vshrl.u32 %v253, 7
      %v255 = vsub.s32 %v252, %v254
      %v256 = vrot.slane %v241, %v255
      %257 = vrot.lane.b32.xlu0 %v249, 127
      %v258 = vpop.permute.xlu0 %257
      %259 = vrot.lane.b32.xlu0 %v256, 127
      %v260 = vpop.permute.xlu0 %259
      %v261 = vrot.slane %v258, 4
      %v262 = vrot.slane %v260, 4
      %vm263 = vcmask 1043456
      %v264 = vsel %vm263, %v261, %v262
      %vm265 = vcmask 1039360
      %v266 = vsel %vm265, %v258, %v264
      %269 = vst [vmem:[#allocation2] sm:$0x22] %v266
      %vm270 = vcmask 517121
      %271 = vst.msk [vmem:[#allocation2 + $0x8] sm:$0x2] %vm270, %v260
      %v272 = vld [vmem:[%s189] sm:$0x7]
      %v274 = vcombine.low %v272, %v272
      %v276 = vunpack.c.l.s4 1935823168
      %v277 = vunpack.c.0.s8 %v276
      %v278 = vlaneseq
      %v279 = vshrl.u32 %v278, 7
      %v280 = vsub.s32 %v277, %v279
      %v281 = vrot.slane %v274, %v280
      %v282 = vcombine.high %v281, %v281
      %v284 = vunpack.c.l.s4 1935823168
      %v285 = vunpack.c.0.s8 %v284
      %v286 = vlaneseq
      %v287 = vshrl.u32 %v286, 7
      %v288 = vsub.s32 %v285, %v287
      %v289 = vrot.slane %v281, %v288
      %v291 = vunpack.c.l.s4 1935823168
      %v292 = vunpack.c.0.s8 %v291
      %v293 = vlaneseq
      %v294 = vshrl.u32 %v293, 7
      %v295 = vsub.s32 %v292, %v294
      %v296 = vrot.slane %v282, %v295
      %297 = vrot.lane.b32.xlu0 %v289, 126
      %v298 = vpop.permute.xlu0 %297
      %299 = vrot.lane.b32.xlu0 %v296, 126
      %v300 = vpop.permute.xlu0 %299
      %v301 = vrot.slane %v298, 4
      %v302 = vrot.slane %v300, 4
      %v303 = vsel %vm263, %v301, %v302
      %vm304 = vcmask 1031168
      %v305 = vsel %vm304, %v298, %v303
      %308 = vst [vmem:[#allocation2] sm:$0x44] %v305
      %vm309 = vcmask 518146
      %310 = vst.msk [vmem:[#allocation2 + $0x8] sm:$0x4] %vm309, %v300
      %v311 = vld [vmem:[%s189] sm:$0x7]
      %v313 = vcombine.low %v311, %v311
      %v315 = vunpack.c.l.s4 1935823168
      %v316 = vunpack.c.0.s8 %v315
      %v317 = vlaneseq
      %v318 = vshrl.u32 %v317, 7
      %v319 = vsub.s32 %v316, %v318
      %v320 = vrot.slane %v313, %v319
      %v321 = vcombine.low %v320, %v320
      %v323 = vunpack.c.l.s4 1935823168
      %v324 = vunpack.c.0.s8 %v323
      %v325 = vlaneseq
      %v326 = vshrl.u32 %v325, 7
      %v327 = vsub.s32 %v324, %v326
      %v328 = vrot.slane %v321, %v327
      %v330 = vunpack.c.l.s4 1935823168
      %v331 = vunpack.c.0.s8 %v330
      %v332 = vlaneseq
      %v333 = vshrl.u32 %v332, 7
      %v334 = vsub.s32 %v331, %v333
      %v335 = vrot.slane %v320, %v334
      %336 = vrot.lane.b32.xlu0 %v328, 125
      %v337 = vpop.permute.xlu0 %336
      %338 = vrot.lane.b32.xlu0 %v335, 125
      %v339 = vpop.permute.xlu0 %338
      %v340 = vrot.slane %v337, 4
      %v341 = vrot.slane %v339, 4
      %v342 = vsel %vm263, %v340, %v341
      %vm343 = vcmask 1022976
      %v344 = vsel %vm343, %v337, %v342
      %347 = vst [vmem:[#allocation2] sm:$0x88] %v344
      %vm348 = vcmask 519171
      %349 = vst.msk [vmem:[#allocation2 + $0x8] sm:$0x8] %vm348, %v339
      %v350 = vld [vmem:[%s189] sm:$0x7]
      %v353 = vunpack.c.l.s4 1935823168
      %v354 = vunpack.c.0.s8 %v353
      %v355 = vlaneseq
      %v356 = vshrl.u32 %v355, 7
      %v357 = vsub.s32 %v354, %v356
      %v358 = vrot.slane %v350, %v357
      %v359 = vcombine.high %v358, %v358
      %v361 = vunpack.c.l.s4 1935823168
      %v362 = vunpack.c.0.s8 %v361
      %v363 = vlaneseq
      %v364 = vshrl.u32 %v363, 7
      %v365 = vsub.s32 %v362, %v364
      %v366 = vrot.slane %v358, %v365
      %v368 = vunpack.c.l.s4 1935823168
      %v369 = vunpack.c.0.s8 %v368
      %v370 = vlaneseq
      %v371 = vshrl.u32 %v370, 7
      %v372 = vsub.s32 %v369, %v371
      %v373 = vrot.slane %v359, %v372
      %374 = vrot.lane.b32.xlu0 %v366, 124
      %v375 = vpop.permute.xlu0 %374
      %376 = vrot.lane.b32.xlu0 %v373, 124
      %v377 = vpop.permute.xlu0 %376
      %v378 = vrot.slane %v375, 4
      %v379 = vrot.slane %v377, 4
      %v380 = vsel %vm263, %v378, %v379
      %vm381 = vcmask 1014784
      %v382 = vsel %vm381, %v375, %v380
      %385 = vst [vmem:[#allocation2 + $0xc] sm:$0x11] %v382
      %386 = vst.msk [vmem:[#allocation2 + $0x14] sm:$0x1] %vm231, %v377
      %v387 = vld [vmem:[%s189] sm:$0x7]
      %v390 = vunpack.c.l.s4 1935823168
      %v391 = vunpack.c.0.s8 %v390
      %v392 = vlaneseq
      %v393 = vshrl.u32 %v392, 7
      %v394 = vsub.s32 %v391, %v393
      %v395 = vrot.slane %v387, %v394
      %v396 = vcombine.low %v395, %v395
      %v398 = vunpack.c.l.s4 1935823168
      %v399 = vunpack.c.0.s8 %v398
      %v400 = vlaneseq
      %v401 = vshrl.u32 %v400, 7
      %v402 = vsub.s32 %v399, %v401
      %v403 = vrot.slane %v396, %v402
      %v405 = vunpack.c.l.s4 1935823168
      %v406 = vunpack.c.0.s8 %v405
      %v407 = vlaneseq
      %v408 = vshrl.u32 %v407, 7
      %v409 = vsub.s32 %v406, %v408
      %v410 = vrot.slane %v395, %v409
      %411 = vrot.lane.b32.xlu0 %v403, 108
      %v412 = vpop.permute.xlu0 %411
      %413 = vrot.lane.b32.xlu0 %v410, 108
      %v414 = vpop.permute.xlu0 %413
      %v415 = vrot.slane %v412, 4
      %v416 = vrot.slane %v414, 4
      %v417 = vsel %vm263, %v415, %v416
      %vm418 = vcmask 883712
      %v419 = vsel %vm418, %v412, %v417
      %422 = vst [vmem:[#allocation2 + $0xc] sm:$0x22] %v419
      %423 = vst.msk [vmem:[#allocation2 + $0x14] sm:$0x2] %vm270, %v414
      %v424 = vld [vmem:[%s189] sm:$0x7]
      %v426 = vcombine.low %v424, %v424
      %v428 = vunpack.c.l.s4 1935823168
      %v429 = vunpack.c.0.s8 %v428
      %v430 = vlaneseq
      %v431 = vshrl.u32 %v430, 7
      %v432 = vsub.s32 %v429, %v431
      %v433 = vrot.slane %v426, %v432
      %v434 = vcombine.high %v433, %v433
      %v436 = vunpack.c.l.s4 1935823168
      %v437 = vunpack.c.0.s8 %v436
      %v438 = vlaneseq
      %v439 = vshrl.u32 %v438, 7
      %v440 = vsub.s32 %v437, %v439
      %v441 = vrot.slane %v433, %v440
      %v443 = vunpack.c.l.s4 1935823168
      %v444 = vunpack.c.0.s8 %v443
      %v445 = vlaneseq
      %v446 = vshrl.u32 %v445, 7
      %v447 = vsub.s32 %v444, %v446
      %v448 = vrot.slane %v434, %v447
      %449 = vrot.lane.b32.xlu0 %v441, 107
      %v450 = vpop.permute.xlu0 %449
      %451 = vrot.lane.b32.xlu0 %v448, 107
      %v452 = vpop.permute.xlu0 %451
      %v453 = vrot.slane %v450, 4
      %v454 = vrot.slane %v452, 4
      %v455 = vsel %vm263, %v453, %v454
      %vm456 = vcmask 875520
      %v457 = vsel %vm456, %v450, %v455
      %460 = vst [vmem:[#allocation2 + $0xc] sm:$0x44] %v457
      %461 = vst.msk [vmem:[#allocation2 + $0x14] sm:$0x4] %vm309, %v452
      %v462 = vld [vmem:[%s189] sm:$0x7]
      %v464 = vcombine.low %v462, %v462
      %v466 = vunpack.c.l.s4 1935823168
      %v467 = vunpack.c.0.s8 %v466
      %v468 = vlaneseq
      %v469 = vshrl.u32 %v468, 7
      %v470 = vsub.s32 %v467, %v469
      %v471 = vrot.slane %v464, %v470
      %v472 = vcombine.low %v471, %v471
      %v474 = vunpack.c.l.s4 1935823168
      %v475 = vunpack.c.0.s8 %v474
      %v476 = vlaneseq
      %v477 = vshrl.u32 %v476, 7
      %v478 = vsub.s32 %v475, %v477
      %v479 = vrot.slane %v472, %v478
      %v481 = vunpack.c.l.s4 1935823168
      %v482 = vunpack.c.0.s8 %v481
      %v483 = vlaneseq
      %v484 = vshrl.u32 %v483, 7
      %v485 = vsub.s32 %v482, %v484
      %v486 = vrot.slane %v471, %v485
      %487 = vrot.lane.b32.xlu0 %v479, 106
      %v488 = vpop.permute.xlu0 %487
      %489 = vrot.lane.b32.xlu0 %v486, 106
      %v490 = vpop.permute.xlu0 %489
      %v491 = vrot.slane %v488, 4
      %v492 = vrot.slane %v490, 4
      %v493 = vsel %vm263, %v491, %v492
      %vm494 = vcmask 867328
      %v495 = vsel %vm494, %v488, %v493
      %498 = vst [vmem:[#allocation2 + $0xc] sm:$0x88] %v495
      %499 = vst.msk [vmem:[#allocation2 + $0x14] sm:$0x8] %vm348, %v490
      %v500 = vld [vmem:[%s189] sm:$0x7]
      %v503 = vunpack.c.l.s4 1935823168
      %v504 = vunpack.c.0.s8 %v503
      %v505 = vlaneseq
      %v506 = vshrl.u32 %v505, 7
      %v507 = vsub.s32 %v504, %v506
      %v508 = vrot.slane %v500, %v507
      %v509 = vcombine.high %v508, %v508
      %v511 = vunpack.c.l.s4 1935823168
      %v512 = vunpack.c.0.s8 %v511
      %v513 = vlaneseq
      %v514 = vshrl.u32 %v513, 7
      %v515 = vsub.s32 %v512, %v514
      %v516 = vrot.slane %v508, %v515
      %v518 = vunpack.c.l.s4 1935823168
      %v519 = vunpack.c.0.s8 %v518
      %v520 = vlaneseq
      %v521 = vshrl.u32 %v520, 7
      %v522 = vsub.s32 %v519, %v521
      %v523 = vrot.slane %v509, %v522
      %524 = vrot.lane.b32.xlu0 %v516, 105
      %v525 = vpop.permute.xlu0 %524
      %526 = vrot.lane.b32.xlu0 %v523, 105
      %v527 = vpop.permute.xlu0 %526
      %v528 = vrot.slane %v525, 4
      %v529 = vrot.slane %v527, 4
      %v530 = vsel %vm263, %v528, %v529
      %vm531 = vcmask 859136
      %v532 = vsel %vm531, %v525, %v530
      %535 = vst [vmem:[#allocation2 + $0x18] sm:$0x11] %v532
      %536 = vst.msk [vmem:[#allocation2 + $0x20] sm:$0x1] %vm231, %v527
      %v537 = vld [vmem:[%s189] sm:$0x7]
      %v540 = vunpack.c.l.s4 1935823168
      %v541 = vunpack.c.0.s8 %v540
      %v542 = vlaneseq
      %v543 = vshrl.u32 %v542, 7
      %v544 = vsub.s32 %v541, %v543
      %v545 = vrot.slane %v537, %v544
      %v546 = vcombine.low %v545, %v545
      %v548 = vunpack.c.l.s4 1935823168
      %v549 = vunpack.c.0.s8 %v548
      %v550 = vlaneseq
      %v551 = vshrl.u32 %v550, 7
      %v552 = vsub.s32 %v549, %v551
      %v553 = vrot.slane %v546, %v552
      %v555 = vunpack.c.l.s4 1935823168
      %v556 = vunpack.c.0.s8 %v555
      %v557 = vlaneseq
      %v558 = vshrl.u32 %v557, 7
      %v559 = vsub.s32 %v556, %v558
      %v560 = vrot.slane %v545, %v559
      %561 = vrot.lane.b32.xlu0 %v553, 104
      %v562 = vpop.permute.xlu0 %561
      %563 = vrot.lane.b32.xlu0 %v560, 104
      %v564 = vpop.permute.xlu0 %563
      %v565 = vrot.slane %v562, 4
      %v566 = vrot.slane %v564, 4
      %v567 = vsel %vm263, %v565, %v566
      %vm568 = vcmask 850944
      %v569 = vsel %vm568, %v562, %v567
      %572 = vst [vmem:[#allocation2 + $0x18] sm:$0x22] %v569
      %573 = vst.msk [vmem:[#allocation2 + $0x20] sm:$0x2] %vm270, %v564
      %v574 = vld [vmem:[%s189] sm:$0x7]
      %v576 = vcombine.low %v574, %v574
      %v578 = vunpack.c.l.s4 1935823168
      %v579 = vunpack.c.0.s8 %v578
      %v580 = vlaneseq
      %v581 = vshrl.u32 %v580, 7
      %v582 = vsub.s32 %v579, %v581
      %v583 = vrot.slane %v576, %v582
      %v584 = vcombine.high %v583, %v583
      %v586 = vunpack.c.l.s4 1935823168
      %v587 = vunpack.c.0.s8 %v586
      %v588 = vlaneseq
      %v589 = vshrl.u32 %v588, 7
      %v590 = vsub.s32 %v587, %v589
      %v591 = vrot.slane %v583, %v590
      %v593 = vunpack.c.l.s4 1935823168
      %v594 = vunpack.c.0.s8 %v593
      %v595 = vlaneseq
      %v596 = vshrl.u32 %v595, 7
      %v597 = vsub.s32 %v594, %v596
      %v598 = vrot.slane %v584, %v597
      %599 = vrot.lane.b32.xlu0 %v591, 88
      %v600 = vpop.permute.xlu0 %599
      %601 = vrot.lane.b32.xlu0 %v598, 88
      %v602 = vpop.permute.xlu0 %601
      %v603 = vrot.slane %v600, 4
      %v604 = vrot.slane %v602, 4
      %v605 = vsel %vm263, %v603, %v604
      %vm606 = vcmask 719872
      %v607 = vsel %vm606, %v600, %v605
      %610 = vst [vmem:[#allocation2 + $0x18] sm:$0x44] %v607
      %611 = vst.msk [vmem:[#allocation2 + $0x20] sm:$0x4] %vm309, %v602
      %v612 = vld [vmem:[%s189] sm:$0x7]
      %v614 = vcombine.low %v612, %v612
      %v616 = vunpack.c.l.s4 1935823168
      %v617 = vunpack.c.0.s8 %v616
      %v618 = vlaneseq
      %v619 = vshrl.u32 %v618, 7
      %v620 = vsub.s32 %v617, %v619
      %v621 = vrot.slane %v614, %v620
      %v622 = vcombine.low %v621, %v621
      %v624 = vunpack.c.l.s4 1935823168
      %v625 = vunpack.c.0.s8 %v624
      %v626 = vlaneseq
      %v627 = vshrl.u32 %v626, 7
      %v628 = vsub.s32 %v625, %v627
      %v629 = vrot.slane %v622, %v628
      %v631 = vunpack.c.l.s4 1935823168
      %v632 = vunpack.c.0.s8 %v631
      %v633 = vlaneseq
      %v634 = vshrl.u32 %v633, 7
      %v635 = vsub.s32 %v632, %v634
      %v636 = vrot.slane %v621, %v635
      %637 = vrot.lane.b32.xlu0 %v629, 87
      %v638 = vpop.permute.xlu0 %637
      %639 = vrot.lane.b32.xlu0 %v636, 87
      %v640 = vpop.permute.xlu0 %639
      %v641 = vrot.slane %v638, 4
      %v642 = vrot.slane %v640, 4
      %v643 = vsel %vm263, %v641, %v642
      %vm644 = vcmask 711680
      %v645 = vsel %vm644, %v638, %v643
      %648 = vst [vmem:[#allocation2 + $0x18] sm:$0x88] %v645
      %649 = vst.msk [vmem:[#allocation2 + $0x20] sm:$0x8] %vm348, %v640
      %v650 = vld [vmem:[%s189] sm:$0x7]
      %v653 = vunpack.c.l.s4 1935823168
      %v654 = vunpack.c.0.s8 %v653
      %v655 = vlaneseq
      %v656 = vshrl.u32 %v655, 7
      %v657 = vsub.s32 %v654, %v656
      %v658 = vrot.slane %v650, %v657
      %v659 = vcombine.high %v658, %v658
      %v661 = vunpack.c.l.s4 1935823168
      %v662 = vunpack.c.0.s8 %v661
      %v663 = vlaneseq
      %v664 = vshrl.u32 %v663, 7
      %v665 = vsub.s32 %v662, %v664
      %v666 = vrot.slane %v658, %v665
      %v668 = vunpack.c.l.s4 1935823168
      %v669 = vunpack.c.0.s8 %v668
      %v670 = vlaneseq
      %v671 = vshrl.u32 %v670, 7
      %v672 = vsub.s32 %v669, %v671
      %v673 = vrot.slane %v659, %v672
      %674 = vrot.lane.b32.xlu0 %v666, 86
      %v675 = vpop.permute.xlu0 %674
      %676 = vrot.lane.b32.xlu0 %v673, 86
      %v677 = vpop.permute.xlu0 %676
      %v678 = vrot.slane %v675, 4
      %v679 = vrot.slane %v677, 4
      %v680 = vsel %vm263, %v678, %v679
      %vm681 = vcmask 703488
      %v682 = vsel %vm681, %v675, %v680
      %685 = vst [vmem:[#allocation2 + $0x24] sm:$0x11] %v682
      %686 = vst.msk [vmem:[#allocation2 + $0x2c] sm:$0x1] %vm231, %v677
      %v687 = vld [vmem:[%s189] sm:$0x7]
      %v690 = vunpack.c.l.s4 1935823168
      %v691 = vunpack.c.0.s8 %v690
      %v692 = vlaneseq
      %v693 = vshrl.u32 %v692, 7
      %v694 = vsub.s32 %v691, %v693
      %v695 = vrot.slane %v687, %v694
      %v696 = vcombine.low %v695, %v695
      %v698 = vunpack.c.l.s4 1935823168
      %v699 = vunpack.c.0.s8 %v698
      %v700 = vlaneseq
      %v701 = vshrl.u32 %v700, 7
      %v702 = vsub.s32 %v699, %v701
      %v703 = vrot.slane %v696, %v702
      %v705 = vunpack.c.l.s4 1935823168
      %v706 = vunpack.c.0.s8 %v705
      %v707 = vlaneseq
      %v708 = vshrl.u32 %v707, 7
      %v709 = vsub.s32 %v706, %v708
      %v710 = vrot.slane %v695, %v709
      %711 = vrot.lane.b32.xlu0 %v703, 85
      %v712 = vpop.permute.xlu0 %711
      %713 = vrot.lane.b32.xlu0 %v710, 85
      %v714 = vpop.permute.xlu0 %713
      %v715 = vrot.slane %v712, 4
      %v716 = vrot.slane %v714, 4
      %v717 = vsel %vm263, %v715, %v716
      %vm718 = vcmask 695296
      %v719 = vsel %vm718, %v712, %v717
      %722 = vst [vmem:[#allocation2 + $0x24] sm:$0x22] %v719
      %723 = vst.msk [vmem:[#allocation2 + $0x2c] sm:$0x2] %vm270, %v714
      %v724 = vld [vmem:[%s189] sm:$0x7]
      %v726 = vcombine.low %v724, %v724
      %v728 = vunpack.c.l.s4 1935823168
      %v729 = vunpack.c.0.s8 %v728
      %v730 = vlaneseq
      %v731 = vshrl.u32 %v730, 7
      %v732 = vsub.s32 %v729, %v731
      %v733 = vrot.slane %v726, %v732
      %v734 = vcombine.high %v733, %v733
      %v736 = vunpack.c.l.s4 1935823168
      %v737 = vunpack.c.0.s8 %v736
      %v738 = vlaneseq
      %v739 = vshrl.u32 %v738, 7
      %v740 = vsub.s32 %v737, %v739
      %v741 = vrot.slane %v733, %v740
      %v743 = vunpack.c.l.s4 1935823168
      %v744 = vunpack.c.0.s8 %v743
      %v745 = vlaneseq
      %v746 = vshrl.u32 %v745, 7
      %v747 = vsub.s32 %v744, %v746
      %v748 = vrot.slane %v734, %v747
      %749 = vrot.lane.b32.xlu0 %v741, 84
      %v750 = vpop.permute.xlu0 %749
      %751 = vrot.lane.b32.xlu0 %v748, 84
      %v752 = vpop.permute.xlu0 %751
      %v753 = vrot.slane %v750, 4
      %v754 = vrot.slane %v752, 4
      %v755 = vsel %vm263, %v753, %v754
      %vm756 = vcmask 687104
      %v757 = vsel %vm756, %v750, %v755
      %760 = vst [vmem:[#allocation2 + $0x24] sm:$0x44] %v757
      %761 = vst.msk [vmem:[#allocation2 + $0x2c] sm:$0x4] %vm309, %v752
      %v762 = vld [vmem:[%s189] sm:$0x7]
      %v764 = vcombine.low %v762, %v762
      %v766 = vunpack.c.l.s4 1935823168
      %v767 = vunpack.c.0.s8 %v766
      %v768 = vlaneseq
      %v769 = vshrl.u32 %v768, 7
      %v770 = vsub.s32 %v767, %v769
      %v771 = vrot.slane %v764, %v770
      %v772 = vcombine.low %v771, %v771
      %v774 = vunpack.c.l.s4 1935823168
      %v775 = vunpack.c.0.s8 %v774
      %v776 = vlaneseq
      %v777 = vshrl.u32 %v776, 7
      %v778 = vsub.s32 %v775, %v777
      %v779 = vrot.slane %v772, %v778
      %v781 = vunpack.c.l.s4 1935823168
      %v782 = vunpack.c.0.s8 %v781
      %v783 = vlaneseq
      %v784 = vshrl.u32 %v783, 7
      %v785 = vsub.s32 %v782, %v784
      %v786 = vrot.slane %v771, %v785
      %787 = vrot.lane.b32.xlu0 %v779, 68
      %v788 = vpop.permute.xlu0 %787
      %789 = vrot.lane.b32.xlu0 %v786, 68
      %v790 = vpop.permute.xlu0 %789
      %v791 = vrot.slane %v788, 4
      %v792 = vrot.slane %v790, 4
      %v793 = vsel %vm263, %v791, %v792
      %vm794 = vcmask 556032
      %v795 = vsel %vm794, %v788, %v793
      %798 = vst [vmem:[#allocation2 + $0x24] sm:$0x88] %v795
      %799 = vst.msk [vmem:[#allocation2 + $0x2c] sm:$0x8] %vm348, %v790
      %v800 = vld [vmem:[%s189] sm:$0x7]
      %v803 = vunpack.c.l.s4 1935823168
      %v804 = vunpack.c.0.s8 %v803
      %v805 = vlaneseq
      %v806 = vshrl.u32 %v805, 7
      %v807 = vsub.s32 %v804, %v806
      %v808 = vrot.slane %v800, %v807
      %v809 = vcombine.high %v808, %v808
      %v811 = vunpack.c.l.s4 1935823168
      %v812 = vunpack.c.0.s8 %v811
      %v813 = vlaneseq
      %v814 = vshrl.u32 %v813, 7
      %v815 = vsub.s32 %v812, %v814
      %v816 = vrot.slane %v808, %v815
      %v818 = vunpack.c.l.s4 1935823168
      %v819 = vunpack.c.0.s8 %v818
      %v820 = vlaneseq
      %v821 = vshrl.u32 %v820, 7
      %v822 = vsub.s32 %v819, %v821
      %v823 = vrot.slane %v809, %v822
      %824 = vrot.lane.b32.xlu0 %v816, 67
      %v825 = vpop.permute.xlu0 %824
      %826 = vrot.lane.b32.xlu0 %v823, 67
      %v827 = vpop.permute.xlu0 %826
      %v828 = vrot.slane %v825, 4
      %v829 = vrot.slane %v827, 4
      %v830 = vsel %vm263, %v828, %v829
      %vm831 = vcmask 547840
      %v832 = vsel %vm831, %v825, %v830
      %835 = vst [vmem:[#allocation2 + $0x30] sm:$0x11] %v832
      %836 = vst.msk [vmem:[#allocation2 + $0x38] sm:$0x1] %vm231, %v827
      %v837 = vld [vmem:[%s189] sm:$0x7]
      %v840 = vunpack.c.l.s4 1935823168
      %v841 = vunpack.c.0.s8 %v840
      %v842 = vlaneseq
      %v843 = vshrl.u32 %v842, 7
      %v844 = vsub.s32 %v841, %v843
      %v845 = vrot.slane %v837, %v844
      %v846 = vcombine.low %v845, %v845
      %v848 = vunpack.c.l.s4 1935823168
      %v849 = vunpack.c.0.s8 %v848
      %v850 = vlaneseq
      %v851 = vshrl.u32 %v850, 7
      %v852 = vsub.s32 %v849, %v851
      %v853 = vrot.slane %v846, %v852
      %v855 = vunpack.c.l.s4 1935823168
      %v856 = vunpack.c.0.s8 %v855
      %v857 = vlaneseq
      %v858 = vshrl.u32 %v857, 7
      %v859 = vsub.s32 %v856, %v858
      %v860 = vrot.slane %v845, %v859
      %861 = vrot.lane.b32.xlu0 %v853, 66
      %v862 = vpop.permute.xlu0 %861
      %863 = vrot.lane.b32.xlu0 %v860, 66
      %v864 = vpop.permute.xlu0 %863
      %v865 = vrot.slane %v862, 4
      %v866 = vrot.slane %v864, 4
      %v867 = vsel %vm263, %v865, %v866
      %vm868 = vcmask 539648
      %v869 = vsel %vm868, %v862, %v867
      %872 = vst [vmem:[#allocation2 + $0x30] sm:$0x22] %v869
      %873 = vst.msk [vmem:[#allocation2 + $0x38] sm:$0x2] %vm270, %v864
      %v874 = vld [vmem:[%s189] sm:$0x7]
      %v876 = vcombine.low %v874, %v874
      %v878 = vunpack.c.l.s4 1935823168
      %v879 = vunpack.c.0.s8 %v878
      %v880 = vlaneseq
      %v881 = vshrl.u32 %v880, 7
      %v882 = vsub.s32 %v879, %v881
      %v883 = vrot.slane %v876, %v882
      %v884 = vcombine.high %v883, %v883
      %v886 = vunpack.c.l.s4 1935823168
      %v887 = vunpack.c.0.s8 %v886
      %v888 = vlaneseq
      %v889 = vshrl.u32 %v888, 7
      %v890 = vsub.s32 %v887, %v889
      %v891 = vrot.slane %v883, %v890
      %v893 = vunpack.c.l.s4 1935823168
      %v894 = vunpack.c.0.s8 %v893
      %v895 = vlaneseq
      %v896 = vshrl.u32 %v895, 7
      %v897 = vsub.s32 %v894, %v896
      %v898 = vrot.slane %v884, %v897
      %899 = vrot.lane.b32.xlu0 %v891, 65
      %v900 = vpop.permute.xlu0 %899
      %901 = vrot.lane.b32.xlu0 %v898, 65
      %v902 = vpop.permute.xlu0 %901
      %v903 = vrot.slane %v900, 4
      %v904 = vrot.slane %v902, 4
      %v905 = vsel %vm263, %v903, %v904
      %vm906 = vcmask 531456
      %v907 = vsel %vm906, %v900, %v905
      %910 = vst [vmem:[#allocation2 + $0x30] sm:$0x44] %v907
      %911 = vst.msk [vmem:[#allocation2 + $0x38] sm:$0x4] %vm309, %v902
      %v912 = vld [vmem:[%s189] sm:$0x7]
      %v914 = vcombine.low %v912, %v912
      %v916 = vunpack.c.l.s4 1935823168
      %v917 = vunpack.c.0.s8 %v916
      %v918 = vlaneseq
      %v919 = vshrl.u32 %v918, 7
      %v920 = vsub.s32 %v917, %v919
      %v921 = vrot.slane %v914, %v920
      %v922 = vcombine.low %v921, %v921
      %v924 = vunpack.c.l.s4 1935823168
      %v925 = vunpack.c.0.s8 %v924
      %v926 = vlaneseq
      %v927 = vshrl.u32 %v926, 7
      %v928 = vsub.s32 %v925, %v927
      %v929 = vrot.slane %v922, %v928
      %v931 = vunpack.c.l.s4 1935823168
      %v932 = vunpack.c.0.s8 %v931
      %v933 = vlaneseq
      %v934 = vshrl.u32 %v933, 7
      %v935 = vsub.s32 %v932, %v934
      %v936 = vrot.slane %v921, %v935
      %937 = vrot.lane.b32.xlu0 %v929, 64
      %v938 = vpop.permute.xlu0 %937
      %939 = vrot.lane.b32.xlu0 %v936, 64
      %v940 = vpop.permute.xlu0 %939
      %v941 = vrot.slane %v938, 4
      %v942 = vrot.slane %v940, 4
      %v943 = vsel %vm263, %v941, %v942
      %vm944 = vcmask 523264
      %v945 = vsel %vm944, %v938, %v943
      %948 = vst [vmem:[#allocation2 + $0x30] sm:$0x88] %v945
      %949 = vst.msk [vmem:[#allocation2 + $0x38] sm:$0x8] %vm348, %v940
      %v950 = vld [vmem:[%s189] sm:$0xf]
      %v953 = vunpack.c.l.s4 1935823168
      %v954 = vunpack.c.0.s8 %v953
      %v955 = vlaneseq
      %v956 = vshrl.u32 %v955, 7
      %v957 = vsub.s32 %v954, %v956
      %v958 = vrot.slane %v950, %v957
      %v959 = vcombine.high %v958, %v958
      %v961 = vunpack.c.l.s4 1935823168
      %v962 = vunpack.c.0.s8 %v961
      %v963 = vlaneseq
      %v964 = vshrl.u32 %v963, 7
      %v965 = vsub.s32 %v962, %v964
      %v966 = vrot.slane %v958, %v965
      %v968 = vunpack.c.l.s4 1935823168
      %v969 = vunpack.c.0.s8 %v968
      %v970 = vlaneseq
      %v971 = vshrl.u32 %v970, 7
      %v972 = vsub.s32 %v969, %v971
      %v973 = vrot.slane %v959, %v972
      %974 = vrot.lane.b32.xlu0 %v966, 48
      %v975 = vpop.permute.xlu0 %974
      %976 = vrot.lane.b32.xlu0 %v973, 48
      %v977 = vpop.permute.xlu0 %976
      %v978 = vrot.slane %v975, 4
      %v979 = vrot.slane %v977, 4
      %v980 = vsel %vm263, %v978, %v979
      %vm981 = vcmask 392192
      %v982 = vsel %vm981, %v975, %v980
      %v983 = vsel %vm981, %v977, %v979
      %986 = vst [vmem:[#allocation2 + $0x3c] sm:$0x11] %v982
      %987 = vst.msk [vmem:[#allocation2 + $0x44] sm:$0x1] %vm231, %v983
      %v988 = vld [vmem:[%s189] sm:$0xf]
      %v991 = vunpack.c.l.s4 1935823168
      %v992 = vunpack.c.0.s8 %v991
      %v993 = vlaneseq
      %v994 = vshrl.u32 %v993, 7
      %v995 = vsub.s32 %v992, %v994
      %v996 = vrot.slane %v988, %v995
      %v997 = vcombine.low %v996, %v996
      %v999 = vunpack.c.l.s4 1935823168
      %v1000 = vunpack.c.0.s8 %v999
      %v1001 = vlaneseq
      %v1002 = vshrl.u32 %v1001, 7
      %v1003 = vsub.s32 %v1000, %v1002
      %v1004 = vrot.slane %v997, %v1003
      %v1006 = vunpack.c.l.s4 1935823168
      %v1007 = vunpack.c.0.s8 %v1006
      %v1008 = vlaneseq
      %v1009 = vshrl.u32 %v1008, 7
      %v1010 = vsub.s32 %v1007, %v1009
      %v1011 = vrot.slane %v996, %v1010
      %1012 = vrot.lane.b32.xlu0 %v1004, 47
      %v1013 = vpop.permute.xlu0 %1012
      %1014 = vrot.lane.b32.xlu0 %v1011, 47
      %v1015 = vpop.permute.xlu0 %1014
      %v1016 = vrot.slane %v1013, 4
      %v1017 = vrot.slane %v1015, 4
      %v1018 = vsel %vm263, %v1016, %v1017
      %vm1019 = vcmask 384000
      %v1020 = vsel %vm1019, %v1013, %v1018
      %v1021 = vsel %vm1019, %v1015, %v1017
      %1024 = vst [vmem:[#allocation2 + $0x3c] sm:$0x22] %v1020
      %1025 = vst.msk [vmem:[#allocation2 + $0x44] sm:$0x2] %vm270, %v1021
      %v1026 = vld [vmem:[%s189] sm:$0xf]
      %v1028 = vcombine.low %v1026, %v1026
      %v1030 = vunpack.c.l.s4 1935823168
      %v1031 = vunpack.c.0.s8 %v1030
      %v1032 = vlaneseq
      %v1033 = vshrl.u32 %v1032, 7
      %v1034 = vsub.s32 %v1031, %v1033
      %v1035 = vrot.slane %v1028, %v1034
      %v1036 = vcombine.high %v1035, %v1035
      %v1038 = vunpack.c.l.s4 1935823168
      %v1039 = vunpack.c.0.s8 %v1038
      %v1040 = vlaneseq
      %v1041 = vshrl.u32 %v1040, 7
      %v1042 = vsub.s32 %v1039, %v1041
      %v1043 = vrot.slane %v1035, %v1042
      %v1045 = vunpack.c.l.s4 1935823168
      %v1046 = vunpack.c.0.s8 %v1045
      %v1047 = vlaneseq
      %v1048 = vshrl.u32 %v1047, 7
      %v1049 = vsub.s32 %v1046, %v1048
      %v1050 = vrot.slane %v1036, %v1049
      %1051 = vrot.lane.b32.xlu0 %v1043, 46
      %v1052 = vpop.permute.xlu0 %1051
      %1053 = vrot.lane.b32.xlu0 %v1050, 46
      %v1054 = vpop.permute.xlu0 %1053
      %v1055 = vrot.slane %v1052, 4
      %v1056 = vrot.slane %v1054, 4
      %v1057 = vsel %vm263, %v1055, %v1056
      %vm1058 = vcmask 375808
      %v1059 = vsel %vm1058, %v1052, %v1057
      %v1060 = vsel %vm1058, %v1054, %v1056
      %1063 = vst [vmem:[#allocation2 + $0x3c] sm:$0x44] %v1059
      %1064 = vst.msk [vmem:[#allocation2 + $0x44] sm:$0x4] %vm309, %v1060
      %v1065 = vld [vmem:[%s189] sm:$0xf]
      %v1067 = vcombine.low %v1065, %v1065
      %v1069 = vunpack.c.l.s4 1935823168
      %v1070 = vunpack.c.0.s8 %v1069
      %v1071 = vlaneseq
      %v1072 = vshrl.u32 %v1071, 7
      %v1073 = vsub.s32 %v1070, %v1072
      %v1074 = vrot.slane %v1067, %v1073
      %v1075 = vcombine.low %v1074, %v1074
      %v1077 = vunpack.c.l.s4 1935823168
      %v1078 = vunpack.c.0.s8 %v1077
      %v1079 = vlaneseq
      %v1080 = vshrl.u32 %v1079, 7
      %v1081 = vsub.s32 %v1078, %v1080
      %v1082 = vrot.slane %v1075, %v1081
      %v1084 = vunpack.c.l.s4 1935823168
      %v1085 = vunpack.c.0.s8 %v1084
      %v1086 = vlaneseq
      %v1087 = vshrl.u32 %v1086, 7
      %v1088 = vsub.s32 %v1085, %v1087
      %v1089 = vrot.slane %v1074, %v1088
      %1090 = vrot.lane.b32.xlu0 %v1082, 45
      %v1091 = vpop.permute.xlu0 %1090
      %1092 = vrot.lane.b32.xlu0 %v1089, 45
      %v1093 = vpop.permute.xlu0 %1092
      %v1094 = vrot.slane %v1091, 4
      %v1095 = vrot.slane %v1093, 4
      %v1096 = vsel %vm263, %v1094, %v1095
      %vm1097 = vcmask 367616
      %v1098 = vsel %vm1097, %v1091, %v1096
      %v1099 = vsel %vm1097, %v1093, %v1095
      %1102 = vst [vmem:[#allocation2 + $0x3c] sm:$0x88] %v1098
      %1103 = vst.msk [vmem:[#allocation2 + $0x44] sm:$0x8] %vm348, %v1099
      %v1104 = vld [vmem:[%s189] sm:$0xf]
      %v1107 = vunpack.c.l.s4 1935823168
      %v1108 = vunpack.c.0.s8 %v1107
      %v1109 = vlaneseq
      %v1110 = vshrl.u32 %v1109, 7
      %v1111 = vsub.s32 %v1108, %v1110
      %v1112 = vrot.slane %v1104, %v1111
      %v1113 = vcombine.high %v1112, %v1112
      %v1115 = vunpack.c.l.s4 1935823168
      %v1116 = vunpack.c.0.s8 %v1115
      %v1117 = vlaneseq
      %v1118 = vshrl.u32 %v1117, 7
      %v1119 = vsub.s32 %v1116, %v1118
      %v1120 = vrot.slane %v1112, %v1119
      %v1122 = vunpack.c.l.s4 1935823168
      %v1123 = vunpack.c.0.s8 %v1122
      %v1124 = vlaneseq
      %v1125 = vshrl.u32 %v1124, 7
      %v1126 = vsub.s32 %v1123, %v1125
      %v1127 = vrot.slane %v1113, %v1126
      %1128 = vrot.lane.b32.xlu0 %v1120, 44
      %v1129 = vpop.permute.xlu0 %1128
      %1130 = vrot.lane.b32.xlu0 %v1127, 44
      %v1131 = vpop.permute.xlu0 %1130
      %v1132 = vrot.slane %v1129, 4
      %v1133 = vrot.slane %v1131, 4
      %v1134 = vsel %vm263, %v1132, %v1133
      %vm1135 = vcmask 359424
      %v1136 = vsel %vm1135, %v1129, %v1134
      %v1137 = vsel %vm1135, %v1131, %v1133
      %1140 = vst [vmem:[#allocation2 + $0x48] sm:$0x11] %v1136
      %1141 = vst.msk [vmem:[#allocation2 + $0x50] sm:$0x1] %vm231, %v1137
      %v1142 = vld [vmem:[#allocation2] sm:$0xff]
      %v1143 = vld [vmem:[#allocation2 + $0x8] sm:$0xf]
      %v1144 = vld [vmem:[#allocation2 + $0xc] sm:$0xff]
      %v1145 = vld [vmem:[#allocation2 + $0x14] sm:$0xf]
      %v1146 = vld [vmem:[#allocation2 + $0x18] sm:$0xff]
      %v1147 = vld [vmem:[#allocation2 + $0x20] sm:$0xf]
      %v1148 = vld [vmem:[#allocation2 + $0x24] sm:$0xff]
      %v1149 = vld [vmem:[#allocation2 + $0x2c] sm:$0xf]
      %v1150 = vld [vmem:[#allocation2 + $0x30] sm:$0xff]
      %v1151 = vld [vmem:[#allocation2 + $0x38] sm:$0xf]
      %v1152 = vld [vmem:[#allocation2 + $0x3c] sm:$0xff]
      %v1153 = vld [vmem:[#allocation2 + $0x44] sm:$0xf]
      %v1154 = vld [vmem:[#allocation2 + $0x48] sm:$0x11]
      %v1155 = vld [vmem:[#allocation2 + $0x50] sm:$0x1]
      %1157 = vset.pattern.permute.xlu0 0
      %1158 = vperm.xlu0 %1157, %v203
      %v1159 = vpop.permute.xlu0 %1158
      %v1175 = vunpack.c.l.b16 %v1142
      %v1176 = vunpack.c.h.b16 %v1142
      %v1177 = vunpack.c.l.b16 %v1143
      %v1178 = vunpack.c.l.b16 %v1144
      %v1179 = vunpack.c.h.b16 %v1144
      %v1180 = vunpack.c.l.b16 %v1145
      %v1181 = vunpack.c.l.b16 %v1146
      %v1182 = vunpack.c.h.b16 %v1146
      %v1183 = vunpack.c.l.b16 %v1147
      %v1184 = vunpack.c.l.b16 %v1148
      %v1185 = vunpack.c.h.b16 %v1148
      %v1186 = vunpack.c.l.b16 %v1149
      %v1187 = vunpack.c.l.b16 %v1150
      %v1188 = vunpack.c.h.b16 %v1150
      %v1189 = vunpack.c.l.b16 %v1151
      %v1190 = vunpack.c.l.b16 %v1152
      %v1191 = vunpack.c.h.b16 %v1152
      %v1192 = vunpack.c.l.b16 %v1153
      %v1193 = vunpack.c.l.b16 %v1154
      %v1194 = vunpack.c.h.b16 %v1154
      %v1195 = vunpack.c.l.b16 %v1155
      %v1196 = vpack.c.b16 %v1178, %v1175
      %v1197 = vpack.c.b16 %v1179, %v1176
      %v1198 = vpack.c.b16 %v1180, %v1177
      %v1199 = vpack.c.b16 %v1184, %v1181
      %v1200 = vpack.c.b16 %v1185, %v1182
      %v1201 = vpack.c.b16 %v1186, %v1183
      %v1202 = vpack.c.b16 %v1190, %v1187
      %v1203 = vpack.c.b16 %v1191, %v1188
      %v1204 = vpack.c.b16 %v1192, %v1189
      %v1205 = vpack.c.b16 %v1193, %v1193
      %v1206 = vpack.c.b16 %v1194, %v1194
      %v1207 = vpack.c.b16 %v1195, %v1195
      %vm1217 = vcmask 408576
      %v1219 = vsel %vm1217, %v202, 0
      %vm1221 = vcmask 1040384
      %v1223 = vsel %vm1221, %v1205, 0
      %v1226 = vsel %vm1221, %v1206, 0
      %v1229 = vsel %vm1221, %v1207, 0
      %1231 = vmatprep.subr.bf16.mxu0 %v1197
      %1232 = vmatpush1.bf16.msra.mxu0 %v1196
      %1233 = vmatprep.subr.bf16.mxu0 %v1200
      %1234 = vmatpush1.bf16.msra.mxu0 %v1199
      %1235 = vmatprep.subr.bf16.mxu0 %v1203
      %1236 = vmatpush1.bf16.msra.mxu0 %v1202
      %1237 = vmatprep.subr.bf16.mxu0 %v1226
      %1238 = vmatpush1.bf16.msra.mxu0 %v1223
      %1239 = vmatprep.subr.bf16.mxu0 0
      %1240 = vmatpush1.bf16.msra.mxu0 0
      %1241 = vmatprep.subr.bf16.mxu0 0
      %1242 = vmatpush1.bf16.msra.mxu0 0
      %1243 = vmatprep.subr.bf16.mxu0 0
      %1244 = vmatpush1.bf16.msra.mxu0 0
      %1245 = vmatprep.subr.bf16.mxu0 0
      %1246 = vmatpush1.bf16.msra.mxu0 0
      %1247 = vmatprep.subr.bf16.mxu0 0
      %1248 = vmatpush1.bf16.msra.mxu0 0
      %1249 = vmatprep.subr.bf16.mxu0 0
      %1250 = vmatpush1.bf16.msra.mxu0 0
      %1251 = vmatprep.subr.bf16.mxu0 0
      %1252 = vmatpush1.bf16.msra.mxu0 0
      %1253 = vmatprep.subr.bf16.mxu0 0
      %1254 = vmatpush1.bf16.msra.mxu0 0
      %1255 = vmatprep.subr.bf16.mxu0 0
      %1256 = vmatpush1.bf16.msra.mxu0 0
      %1257 = vmatprep.subr.bf16.mxu0 0
      %1258 = vmatpush1.bf16.msra.mxu0 0
      %1259 = vmatprep.subr.bf16.mxu0 0
      %1260 = vmatpush1.bf16.msra.mxu0 0
      %1261 = vmatprep.subr.bf16.mxu0 0
      %1262 = vmatpush1.bf16.msra.mxu0 0
      %1263 = vmatprep.mubr.bf16.mxu0 0
      %1264 = vmatmul.mubr.bf16.gmra.mrb[0].mxu0 %v1219
      %v1265 = vpop.f32.mrb[0].mxu0
      %v1266 = vadd.f32 %v1159, %v1265
      %v1267 = vpop.f32.mrb[0].mxu0
      %v1268 = vadd.f32 %v1159, %v1267
      %v1269 = vpop.f32.mrb[0].mxu0
      %v1270 = vpop.f32.mrb[0].mxu0
      %1271 = vdwg.mxu0
      %1272 = vmatprep.subr.bf16.mxu0 0
      %1273 = vmatpush1.bf16.msra.mxu0 %v1198
      %1274 = vmatprep.subr.bf16.mxu0 0
      %1275 = vmatpush1.bf16.msra.mxu0 %v1201
      %1276 = vmatprep.subr.bf16.mxu0 0
      %1277 = vmatpush1.bf16.msra.mxu0 %v1204
      %1278 = vmatprep.subr.bf16.mxu0 0
      %1279 = vmatpush1.bf16.msra.mxu0 %v1229
      %1280 = vmatprep.subr.bf16.mxu0 0
      %1281 = vmatpush1.bf16.msra.mxu0 0
      %1282 = vmatprep.subr.bf16.mxu0 0
      %1283 = vmatpush1.bf16.msra.mxu0 0
      %1284 = vmatprep.subr.bf16.mxu0 0
      %1285 = vmatpush1.bf16.msra.mxu0 0
      %1286 = vmatprep.subr.bf16.mxu0 0
      %1287 = vmatpush1.bf16.msra.mxu0 0
      %1288 = vmatprep.subr.bf16.mxu0 0
      %1289 = vmatpush1.bf16.msra.mxu0 0
      %1290 = vmatprep.subr.bf16.mxu0 0
      %1291 = vmatpush1.bf16.msra.mxu0 0
      %1292 = vmatprep.subr.bf16.mxu0 0
      %1293 = vmatpush1.bf16.msra.mxu0 0
      %1294 = vmatprep.subr.bf16.mxu0 0
      %1295 = vmatpush1.bf16.msra.mxu0 0
      %1296 = vmatprep.subr.bf16.mxu0 0
      %1297 = vmatpush1.bf16.msra.mxu0 0
      %1298 = vmatprep.subr.bf16.mxu0 0
      %1299 = vmatpush1.bf16.msra.mxu0 0
      %1300 = vmatprep.subr.bf16.mxu0 0
      %1301 = vmatpush1.bf16.msra.mxu0 0
      %1302 = vmatprep.subr.bf16.mxu0 0
      %1303 = vmatpush1.bf16.msra.mxu0 0
      %1304 = vmatprep.mubr.bf16.mxu0 0
      %1305 = vmatmul.mubr.bf16.gmra.mrb[0].mxu0 %v1219
      %v1306 = vpop.f32.mrb[0].mxu0
      %v1307 = vadd.f32 %v1159, %v1306
      %v1308 = vpop.f32.mrb[0].mxu0
      %v1309 = vpop.f32.mrb[0].mxu0
      %v1310 = vpop.f32.mrb[0].mxu0
      %1311 = vdwg.mxu0
      %v1312 = vld [vmem:[%s1] sm:$0x7]
      %v1314 = vlaneseq
      %v1315 = vshrl.u32 %v1314, 7
      %v1316 = vsub.s32 0, %v1315
      %v1317 = vrot.slane %v1312, %v1316
      %v1318 = vlaneseq
      %v1319 = vshrl.u32 %v1318, 7
      %v1320 = vsub.s32 1, %v1319
      %v1321 = vrot.slane %v1312, %v1320
      %v1322 = vlaneseq
      %v1323 = vshrl.u32 %v1322, 7
      %v1324 = vsub.s32 2, %v1323
      %v1325 = vrot.slane %v1312, %v1324
      %1326 = vrot.lane.b32.xlu0 %v1317, 86
      %v1327 = vpop.permute.xlu0 %1326
      %1328 = vrot.lane.b32.xlu0 %v1321, 86
      %v1329 = vpop.permute.xlu0 %1328
      %1330 = vrot.lane.b32.xlu0 %v1325, 86
      %v1331 = vpop.permute.xlu0 %1330
      %vm1332 = vcmask 703488
      %v1333 = vsel %vm1332, %v1327, %v1329
      %v1334 = vsel %vm1332, %v1329, %v1331
      %v1338 = vmul.f32 %v1266, %v1333
      %v1339 = vmul.f32 %v1268, %v1334
      %v1340 = vmul.f32 %v1307, %v1331
      %v1341 = vpack.c.bf16 %v1338, %v1338
      %v1342 = vpack.c.bf16 %v1339, %v1339
      %v1343 = vpack.c.bf16 %v1340, %v1340
      %v1347 = vcombine.low %v1341, %v1342
      %v1349 = vunpack.c.l.s4 1983009808
      %v1350 = vunpack.c.0.s8 %v1349
      %v1351 = vlaneseq
      %v1352 = vshrl.u32 %v1351, 7
      %v1353 = vsub.s32 %v1350, %v1352
      %v1354 = vrot.slane %v1347, %v1353
      %v1356 = vunpack.c.l.s4 1983009808
      %v1357 = vunpack.c.0.s8 %v1356
      %v1358 = vlaneseq
      %v1359 = vshrl.u32 %v1358, 7
      %v1360 = vsub.s32 %v1357, %v1359
      %v1361 = vrot.slane %v1343, %v1360
      %v1362 = vcombine.low %v1354, %v1361
      %1363 = vrot.lane.b32.xlu0 %v1362, 42
      %v1364 = vpop.permute.xlu0 %1363
      %v1365 = vrot.slane %v1364, 6
      %vm1366 = vcmask 343040
      %v1367 = vsel %vm1366, %v1365, %v1364
      %vm1369 = vcmask 1041744
      %vm1370 = vcmask 1043458
      %vm1371 = vmor %vm1370, %vm1369
      %vm1372 = vcmask 865284
      %vm1373 = vmor %vm1372, %vm1371
      %1374 = vst.msk [vmem:[%s194] sm:$0x3f] %vm1373, %v1367
      %p1375 = scmp.lt.s32.totalorder %s15, 3
      %s1376 = scalar_select %p1375, %s15, 3
      %s1377 = smul.addr %s1376, 4
      %s1378 = smul.addr %s1377, 2
      %s1379 = scalar_lea.vmem %s4, %s1378
      // Predicated region
      $region37: #{scandium_weather_forward.4} parent=35 // pred_check
        %p1380 = pneg %p122
      $region38: #{scandium_weather_forward.4} parent=35 // pred_check_branch
        %1382 = sbr.rel (%p1380) target = $region40
      $region39: #{scandium_weather_forward.4} parent=35 // pred_region
        _
      $region40: #{scandium_weather_forward.4} parent=35 // pred_fallthru
        _
    $region36: #{scandium_weather_forward.4} parent=5 // pred_fallthru
      _
    %p1383 = scmp.le.s32.totalorder 2, %s10
    // Predicated region
    $region41: #{scandium_weather_forward.4} parent=5 // pred_check
      %p1384 = pneg %p1383
    $region42: #{scandium_weather_forward.4} parent=5 // pred_check_branch
      %1386 = sbr.rel (%p1384) target = $region44
    $region43: #{scandium_weather_forward.4} parent=5 // pred_region
      %s1387 = ssub.s32 %s10, 2
      // Predicated region
      $region45: #{scandium_weather_forward.4} parent=43 // pred_check
        %p1388 = pneg %p128
      $region46: #{scandium_weather_forward.4} parent=43 // pred_check_branch
        %1390 = sbr.rel (%p1388) target = $region48
      $region47: #{scandium_weather_forward.4} parent=43 // pred_region
        %p1391 = scmp.lt.s32.totalorder %s16, 3
        %s1392 = scalar_select %p1391, %s16, 3
        %s1393 = smul.addr %s1392, 4
        %s1394 = smul.addr %s1393, 2
        %s1395 = scalar_lea.vmem %s4, %s1394
      $region48: #{scandium_weather_forward.4} parent=43 // pred_fallthru
        _
    $region44: #{scandium_weather_forward.4} parent=5 // pred_fallthru
      _
  $region6: #{scandium_weather_forward.4} parent=0 // loop_footer
    %s14 = sadd.s32 1, %s10
  $region7: #{scandium_weather_forward.4} parent=0 // loop_footer_branch
    %9 = sbr.rel target = $region3
  $region8: #{scandium_weather_forward.4} parent=0 // loop_exit
    _

// kernel: scandium_weather_forward.3
$region0: #{scandium_weather_forward.3}
  #allocation0 [shape = 'u32[]', space=smem, size = 0x4, offset = 0x4, fixed_abs, tag = 'smem constant byte address 0x4 - core index']
  #allocation1 [shape = 'u32[144,128]{1,0:T(1,128)}', space=vmem, size = 0x12000, scoped, tag = 'internal scratch']
  #allocation2 [shape = 'bf16[8,404]{1,0:T(8,128)(2,1)}', space=vmem, size = 0x2000, scoped, tag = 'scratch operand']
  #allocation3 [shape = 'bf16[72,320]{1,0:T(8,128)(2,1)}', space=vmem, size = 0xd800, scoped, tag = 'scratch operand']
  %s0 = inlined_call_operand.vmem [shape: bf16[6,2,404], index: 0, kind: input, shape index: {}]
  %s1 = inlined_call_operand.vmem [shape: f32[1,404], index: 1, kind: input, shape index: {}]
  %s2 = inlined_call_operand.vmem [shape: bf16[8,18], index: 2, kind: input, shape index: {}]
  %s3 = inlined_call_operand.vmem [shape: f32[8,1], index: 3, kind: input, shape index: {}]
  %s4 = inlined_call_operand.vmem [shape: bf16[4,72], index: 4, kind: input, shape index: {}]
  %s5 = inlined_call_operand.vmem [shape: f32[4,1], index: 5, kind: input, shape index: {}]
  %s6 = inlined_call_operand.vmem [shape: bf16[6,4,404], index: 6, kind: output, shape index: {}]
  %s7 = sld [smem:[#allocation0]]
  $region57: #{scandium_weather_forward.3} parent=0
    _
  %s9 = ssub.s32 1, %s7
  %s10 = scalar_select 0, %s9, %s7
  loop: start=0, step=1, limit=8
  $region2: #{scandium_weather_forward.3} parent=0 // loop_pre_header
    _
  $region3: #{scandium_weather_forward.3} parent=0 // loop_header
    %s12 = sphi 0, %s16
    %p13 = scmp.ge.s32.totalorder %s12, 8
    %s22 = sphi 0, %s24
    %s25 = sphi 0, %s22
    %s26 = sphi 0, %s25
    %s42 = sphi 0, %s26
    %s46 = sphi 0, %s46
    %s48 = sphi 0, %s46
    %s49 = sphi 0, %s48
    %s63 = sphi 0, %s49
    %s67 = sphi 0, %s67
    %s69 = sphi 0, %s67
    %s70 = sphi 0, %s69
    %s84 = sphi 0, %s70
    %s88 = sphi 0, %s88
    %s90 = sphi 0, %s88
    %s91 = sphi 0, %s90
    %s105 = sphi 0, %s91
    %s109 = sphi 0, %s109
    %s111 = sphi 0, %s109
    %s112 = sphi 0, %s111
    %s126 = sphi 0, %s112
    %s130 = sphi 0, %s130
    %s132 = sphi 0, %s130
    %s133 = sphi 0, %s132
    %s147 = sphi 0, %s133
    %s153 = sphi 0, %s155
    %s156 = sphi 0, %s153
    %s157 = sphi 0, %s156
    %s173 = sphi 0, %s157
  $region4: #{scandium_weather_forward.3} parent=0 // loop_header_branch
    %15 = sbr.rel (%p13) target = $region8
  $region5: #{scandium_weather_forward.3} parent=0 // loop_body
    %s17 = ssub.s32 %s12, 1
    %s18 = ssub.s32 %s12, 2
    %s19 = sadd.s32 %s12, 1
    %s20 = ssub.s32 %s12, %s19
    %p21 = scmp.eq.s32.totalorder %s20, 0
    %s23 = sadd.s32 %s22, 1
    %s24 = scalar_select %p21, %s22, %s23
    %p27 = pneg %p21
    %p28 = scmp.eq.s32.totalorder %s12, 5
    %p29 = por %p27, %p28
    %p30 = scmp.ne.s32.totalorder %s22, %s25
    %p31 = scmp.eq.s32.totalorder %s12, 0
    %p32 = por %p30, %p31
    %p33 = scmp.ne.s32.totalorder %s22, %s25
    %p34 = scmp.eq.s32.totalorder %s17, 5
    %p35 = por %p33, %p34
    %p36 = scmp.ne.s32.totalorder %s25, %s26
    %p37 = scmp.eq.s32.totalorder %s17, 0
    %p38 = por %p36, %p37
    %p39 = scmp.ne.s32.totalorder %s25, %s26
    %p40 = scmp.eq.s32.totalorder %s18, 5
    %p41 = por %p39, %p40
    %p43 = scmp.ne.s32.totalorder %s26, %s42
    %p44 = scmp.eq.s32.totalorder %s18, 0
    %p45 = por %p43, %p44
    %s47 = sadd.s32 %s46, 1
    %p50 = scmp.eq.s32.totalorder %s12, 5
    %p51 = scmp.ne.s32.totalorder %s46, %s48
    %p52 = scmp.eq.s32.totalorder %s12, 0
    %p53 = por %p51, %p52
    %p54 = scmp.ne.s32.totalorder %s46, %s48
    %p55 = scmp.eq.s32.totalorder %s17, 5
    %p56 = por %p54, %p55
    %p57 = scmp.ne.s32.totalorder %s48, %s49
    %p58 = scmp.eq.s32.totalorder %s17, 0
    %p59 = por %p57, %p58
    %p60 = scmp.ne.s32.totalorder %s48, %s49
    %p61 = scmp.eq.s32.totalorder %s18, 5
    %p62 = por %p60, %p61
    %p64 = scmp.ne.s32.totalorder %s49, %s63
    %p65 = scmp.eq.s32.totalorder %s18, 0
    %p66 = por %p64, %p65
    %s68 = sadd.s32 %s67, 1
    %p71 = scmp.eq.s32.totalorder %s12, 5
    %p72 = scmp.ne.s32.totalorder %s67, %s69
    %p73 = scmp.eq.s32.totalorder %s12, 0
    %p74 = por %p72, %p73
    %p75 = scmp.ne.s32.totalorder %s67, %s69
    %p76 = scmp.eq.s32.totalorder %s17, 5
    %p77 = por %p75, %p76
    %p78 = scmp.ne.s32.totalorder %s69, %s70
    %p79 = scmp.eq.s32.totalorder %s17, 0
    %p80 = por %p78, %p79
    %p81 = scmp.ne.s32.totalorder %s69, %s70
    %p82 = scmp.eq.s32.totalorder %s18, 5
    %p83 = por %p81, %p82
    %p85 = scmp.ne.s32.totalorder %s70, %s84
    %p86 = scmp.eq.s32.totalorder %s18, 0
    %p87 = por %p85, %p86
    %s89 = sadd.s32 %s88, 1
    %p92 = scmp.eq.s32.totalorder %s12, 5
    %p93 = scmp.ne.s32.totalorder %s88, %s90
    %p94 = scmp.eq.s32.totalorder %s12, 0
    %p95 = por %p93, %p94
    %p96 = scmp.ne.s32.totalorder %s88, %s90
    %p97 = scmp.eq.s32.totalorder %s17, 5
    %p98 = por %p96, %p97
    %p99 = scmp.ne.s32.totalorder %s90, %s91
    %p100 = scmp.eq.s32.totalorder %s17, 0
    %p101 = por %p99, %p100
    %p102 = scmp.ne.s32.totalorder %s90, %s91
    %p103 = scmp.eq.s32.totalorder %s18, 5
    %p104 = por %p102, %p103
    %p106 = scmp.ne.s32.totalorder %s91, %s105
    %p107 = scmp.eq.s32.totalorder %s18, 0
    %p108 = por %p106, %p107
    %s110 = sadd.s32 %s109, 1
    %p113 = scmp.eq.s32.totalorder %s12, 5
    %p114 = scmp.ne.s32.totalorder %s109, %s111
    %p115 = scmp.eq.s32.totalorder %s12, 0
    %p116 = por %p114, %p115
    %p117 = scmp.ne.s32.totalorder %s109, %s111
    %p118 = scmp.eq.s32.totalorder %s17, 5
    %p119 = por %p117, %p118
    %p120 = scmp.ne.s32.totalorder %s111, %s112
    %p121 = scmp.eq.s32.totalorder %s17, 0
    %p122 = por %p120, %p121
    %p123 = scmp.ne.s32.totalorder %s111, %s112
    %p124 = scmp.eq.s32.totalorder %s18, 5
    %p125 = por %p123, %p124
    %p127 = scmp.ne.s32.totalorder %s112, %s126
    %p128 = scmp.eq.s32.totalorder %s18, 0
    %p129 = por %p127, %p128
    %s131 = sadd.s32 %s130, 1
    %p134 = scmp.eq.s32.totalorder %s12, 5
    %p135 = scmp.ne.s32.totalorder %s130, %s132
    %p136 = scmp.eq.s32.totalorder %s12, 0
    %p137 = por %p135, %p136
    %p138 = scmp.ne.s32.totalorder %s130, %s132
    %p139 = scmp.eq.s32.totalorder %s17, 5
    %p140 = por %p138, %p139
    %p141 = scmp.ne.s32.totalorder %s132, %s133
    %p142 = scmp.eq.s32.totalorder %s17, 0
    %p143 = por %p141, %p142
    %p144 = scmp.ne.s32.totalorder %s132, %s133
    %p145 = scmp.eq.s32.totalorder %s18, 5
    %p146 = por %p144, %p145
    %p148 = scmp.ne.s32.totalorder %s133, %s147
    %p149 = scmp.eq.s32.totalorder %s18, 0
    %p150 = por %p148, %p149
    %s151 = ssub.s32 %s12, %s19
    %p152 = scmp.eq.s32.totalorder %s151, 0
    %s154 = sadd.s32 %s153, 1
    %s155 = scalar_select %p152, %s153, %s154
    %p158 = pneg %p152
    %p159 = scmp.eq.s32.totalorder %s12, 5
    %p160 = por %p158, %p159
    %p161 = scmp.ne.s32.totalorder %s153, %s156
    %p162 = scmp.eq.s32.totalorder %s12, 0
    %p163 = por %p161, %p162
    %p164 = scmp.ne.s32.totalorder %s153, %s156
    %p165 = scmp.eq.s32.totalorder %s17, 5
    %p166 = por %p164, %p165
    %p167 = scmp.ne.s32.totalorder %s156, %s157
    %p168 = scmp.eq.s32.totalorder %s17, 0
    %p169 = por %p167, %p168
    %p170 = scmp.ne.s32.totalorder %s156, %s157
    %p171 = scmp.eq.s32.totalorder %s18, 5
    %p172 = por %p170, %p171
    %p174 = scmp.ne.s32.totalorder %s157, %s173
    %p175 = scmp.eq.s32.totalorder %s18, 0
    %p176 = por %p174, %p175
    %p177 = scmp.le.s32.totalorder 1, %s12
    %p178 = scmp.lt.s32.totalorder %s12, 7
    %p179 = pnand %p177, %p178
    %p180 = pneg %p179
    // Predicated region
    $region9: #{scandium_weather_forward.3} parent=5 // pred_check
      _
    $region10: #{scandium_weather_forward.3} parent=5 // pred_check_branch
      %182 = sbr.rel (%p179) target = $region12
    $region11: #{scandium_weather_forward.3} parent=5 // pred_region
      %s183 = ssub.s32 %s12, 1
      // Predicated region
      $region13: #{scandium_weather_forward.3} parent=11 // pred_check
        %p184 = pneg %p59
      $region14: #{scandium_weather_forward.3} parent=11 // pred_check_branch
        %186 = sbr.rel (%p184) target = $region16
      $region15: #{scandium_weather_forward.3} parent=11 // pred_region
        _
      $region16: #{scandium_weather_forward.3} parent=11 // pred_fallthru
        _
      // Predicated region
      $region17: #{scandium_weather_forward.3} parent=11 // pred_check
        %p187 = pneg %p80
      $region18: #{scandium_weather_forward.3} parent=11 // pred_check_branch
        %189 = sbr.rel (%p187) target = $region20
      $region19: #{scandium_weather_forward.3} parent=11 // pred_region
        _
      $region20: #{scandium_weather_forward.3} parent=11 // pred_fallthru
        _
      // Predicated region
      $region21: #{scandium_weather_forward.3} parent=11 // pred_check
        %p190 = pneg %p101
      $region22: #{scandium_weather_forward.3} parent=11 // pred_check_branch
        %192 = sbr.rel (%p190) target = $region24
      $region23: #{scandium_weather_forward.3} parent=11 // pred_region
        _
      $region24: #{scandium_weather_forward.3} parent=11 // pred_fallthru
        _
      // Predicated region
      $region25: #{scandium_weather_forward.3} parent=11 // pred_check
        %p193 = pneg %p122
      $region26: #{scandium_weather_forward.3} parent=11 // pred_check_branch
        %195 = sbr.rel (%p193) target = $region28
      $region27: #{scandium_weather_forward.3} parent=11 // pred_region
        _
      $region28: #{scandium_weather_forward.3} parent=11 // pred_fallthru
        _
      // Predicated region
      $region29: #{scandium_weather_forward.3} parent=11 // pred_check
        %p196 = pneg %p143
      $region30: #{scandium_weather_forward.3} parent=11 // pred_check_branch
        %198 = sbr.rel (%p196) target = $region32
      $region31: #{scandium_weather_forward.3} parent=11 // pred_region
        _
      $region32: #{scandium_weather_forward.3} parent=11 // pred_fallthru
        _
    $region12: #{scandium_weather_forward.3} parent=5 // pred_fallthru
      _
    %p199 = scmp.lt.s32.totalorder %s12, 6
    // Predicated region
    $region33: #{scandium_weather_forward.3} parent=5 // pred_check
      %p200 = pneg %p199
    $region34: #{scandium_weather_forward.3} parent=5 // pred_check_branch
      %202 = sbr.rel (%p200) target = $region36
    $region35: #{scandium_weather_forward.3} parent=5 // pred_region
      // Predicated region
      $region37: #{scandium_weather_forward.3} parent=35 // pred_check
        %p203 = pneg %p32
      $region38: #{scandium_weather_forward.3} parent=35 // pred_check_branch
        %205 = sbr.rel (%p203) target = $region40
      $region39: #{scandium_weather_forward.3} parent=35 // pred_region
        %p206 = scmp.lt.s32.totalorder %s12, 5
        %s207 = scalar_select %p206, %s12, 5
        %s208 = smul.addr %s207, 4
        %s209 = scalar_lea.vmem %s0, %s208
      $region40: #{scandium_weather_forward.3} parent=35 // pred_fallthru
        _
    $region36: #{scandium_weather_forward.3} parent=5 // pred_fallthru
      _
    %p210 = scmp.le.s32.totalorder 1, %s12
    %p211 = scmp.lt.s32.totalorder %s12, 7
    %p212 = pnand %p210, %p211
    %p213 = pneg %p212
    // Predicated region
    $region41: #{scandium_weather_forward.3} parent=5 // pred_check
      _
    $region42: #{scandium_weather_forward.3} parent=5 // pred_check_branch
      %215 = sbr.rel (%p212) target = $region44
    $region43: #{scandium_weather_forward.3} parent=5 // pred_region
      %s216 = ssub.s32 %s12, 1
      %p217 = scmp.lt.s32.totalorder %s17, 5
      %s218 = scalar_select %p217, %s17, 5
      %s219 = smul.addr %s218, 4
      %s220 = scalar_lea.vmem %s0, %s219
      %p221 = pneg %p38
      %p222 = pneg %p35
      %p223 = pneg %p59
      %p224 = pneg %p56
      %p225 = pneg %p80
      %p226 = pneg %p77
      %p227 = pneg %p101
      %p228 = pneg %p98
      %p229 = pneg %p122
      %p230 = pneg %p119
      %p231 = pneg %p143
      %p232 = pneg %p140
      %p233 = pneg %p169
      %p234 = pneg %p166
      %p235 = scmp.lt.s32.totalorder %s17, 5
      %s236 = scalar_select %p235, %s17, 5
      %s237 = smul.addr %s236, 4
      %s238 = smul.addr %s237, 2
      %s239 = scalar_lea.vmem %s6, %s238
      %p240 = scmp.lt.s32.totalorder %s17, 5
      %s241 = scalar_select %p240, %s17, 5
      %s242 = smul.addr %s241, 4
      %s243 = scalar_lea.vmem %s0, %s242
      %p244 = scmp.lt.s32.totalorder %s17, 5
      %s245 = scalar_select %p244, %s17, 5
      %s246 = smul.addr %s245, 4
      %s247 = smul.addr %s246, 2
      %s248 = scalar_lea.vmem %s6, %s247
      %vm250 = vcmask 338944
      %251 = vst.msk [vmem:[#allocation2] sm:$0xf] %vm250, 0
      %vm252 = vcmask 1044304
      %vm253 = vcmask 162820
      %vm254 = vmor %vm253, %vm252
      %255 = vst.msk [vmem:[#allocation2 + $0x8] sm:$0xff] %vm254, 0
      %vm256 = vcmask 336896
      %257 = vst.msk [vmem:[%s248] sm:$0x3] %vm256, 0
      %vm258 = vcmask 1042256
      %vm259 = vcmask 158722
      %vm260 = vmor %vm259, %vm258
      %261 = vst.msk [vmem:[%s248 + $0x4] sm:$0xf] %vm260, 0
      %v262 = vld [vmem:[%s2] sm:$0xf]
      %v263 = vld [vmem:[%s3] sm:$0xff]
      %v264 = vld [vmem:[%s243] sm:$0x7]
      %v267 = vunpack.c.l.s4 1935823168
      %v268 = vunpack.c.0.s8 %v267
      %v269 = vlaneseq
      %v270 = vshrl.u32 %v269, 7
      %v271 = vsub.s32 %v268, %v270
      %v272 = vrot.slane %v264, %v271
      %v273 = vcombine.high %v272, %v272
      %v275 = vunpack.c.l.s4 1935823168
      %v276 = vunpack.c.0.s8 %v275
      %v277 = vlaneseq
      %v278 = vshrl.u32 %v277, 7
      %v279 = vsub.s32 %v276, %v278
      %v280 = vrot.slane %v272, %v279
      %v282 = vunpack.c.l.s4 1935823168
      %v283 = vunpack.c.0.s8 %v282
      %v284 = vlaneseq
      %v285 = vshrl.u32 %v284, 7
      %v286 = vsub.s32 %v283, %v285
      %v287 = vrot.slane %v273, %v286
      %288 = vrot.lane.b32.xlu0 %v280, 107
      %v289 = vpop.permute.xlu0 %288
      %290 = vrot.lane.b32.xlu0 %v287, 107
      %v291 = vpop.permute.xlu0 %290
      %v292 = vrot.slane %v289, 4
      %v293 = vrot.slane %v291, 4
      %vm294 = vcmask 1043456
      %v295 = vsel %vm294, %v292, %v293
      %vm296 = vcmask 875520
      %v297 = vsel %vm296, %v289, %v295
      %300 = vst [vmem:[#allocation3] sm:$0x11] %v297
      %vm301 = vcmask 516096
      %302 = vst.msk [vmem:[#allocation3 + $0x8] sm:$0x1] %vm301, %v291
      %v303 = vld [vmem:[%s243] sm:$0x7]
      %v306 = vunpack.c.l.s4 1935823168
      %v307 = vunpack.c.0.s8 %v306
      %v308 = vlaneseq
      %v309 = vshrl.u32 %v308, 7
      %v310 = vsub.s32 %v307, %v309
      %v311 = vrot.slane %v303, %v310
      %v312 = vcombine.low %v311, %v311
      %v314 = vunpack.c.l.s4 1935823168
      %v315 = vunpack.c.0.s8 %v314
      %v316 = vlaneseq
      %v317 = vshrl.u32 %v316, 7
      %v318 = vsub.s32 %v315, %v317
      %v319 = vrot.slane %v312, %v318
      %v321 = vunpack.c.l.s4 1935823168
      %v322 = vunpack.c.0.s8 %v321
      %v323 = vlaneseq
      %v324 = vshrl.u32 %v323, 7
      %v325 = vsub.s32 %v322, %v324
      %v326 = vrot.slane %v311, %v325
      %327 = vrot.lane.b32.xlu0 %v319, 106
      %v328 = vpop.permute.xlu0 %327
      %329 = vrot.lane.b32.xlu0 %v326, 106
      %v330 = vpop.permute.xlu0 %329
      %v331 = vrot.slane %v328, 4
      %v332 = vrot.slane %v330, 4
      %v333 = vsel %vm294, %v331, %v332
      %vm334 = vcmask 867328
      %v335 = vsel %vm334, %v328, %v333
      %338 = vst [vmem:[#allocation3] sm:$0x22] %v335
      %vm339 = vcmask 517121
      %340 = vst.msk [vmem:[#allocation3 + $0x8] sm:$0x2] %vm339, %v330
      %v341 = vld [vmem:[%s243] sm:$0x7]
      %v343 = vcombine.low %v341, %v341
      %v345 = vunpack.c.l.s4 1935823168
      %v346 = vunpack.c.0.s8 %v345
      %v347 = vlaneseq
      %v348 = vshrl.u32 %v347, 7
      %v349 = vsub.s32 %v346, %v348
      %v350 = vrot.slane %v343, %v349
      %v351 = vcombine.high %v350, %v350
      %v353 = vunpack.c.l.s4 1935823168
      %v354 = vunpack.c.0.s8 %v353
      %v355 = vlaneseq
      %v356 = vshrl.u32 %v355, 7
      %v357 = vsub.s32 %v354, %v356
      %v358 = vrot.slane %v350, %v357
      %v360 = vunpack.c.l.s4 1935823168
      %v361 = vunpack.c.0.s8 %v360
      %v362 = vlaneseq
      %v363 = vshrl.u32 %v362, 7
      %v364 = vsub.s32 %v361, %v363
      %v365 = vrot.slane %v351, %v364
      %366 = vrot.lane.b32.xlu0 %v358, 105
      %v367 = vpop.permute.xlu0 %366
      %368 = vrot.lane.b32.xlu0 %v365, 105
      %v369 = vpop.permute.xlu0 %368
      %v370 = vrot.slane %v367, 4
      %v371 = vrot.slane %v369, 4
      %v372 = vsel %vm294, %v370, %v371
      %vm373 = vcmask 859136
      %v374 = vsel %vm373, %v367, %v372
      %377 = vst [vmem:[#allocation3] sm:$0x44] %v374
      %vm378 = vcmask 518146
      %379 = vst.msk [vmem:[#allocation3 + $0x8] sm:$0x4] %vm378, %v369
      %v380 = vld [vmem:[%s243] sm:$0x7]
      %v382 = vcombine.low %v380, %v380
      %v384 = vunpack.c.l.s4 1935823168
      %v385 = vunpack.c.0.s8 %v384
      %v386 = vlaneseq
      %v387 = vshrl.u32 %v386, 7
      %v388 = vsub.s32 %v385, %v387
      %v389 = vrot.slane %v382, %v388
      %v390 = vcombine.low %v389, %v389
      %v392 = vunpack.c.l.s4 1935823168
      %v393 = vunpack.c.0.s8 %v392
      %v394 = vlaneseq
      %v395 = vshrl.u32 %v394, 7
      %v396 = vsub.s32 %v393, %v395
      %v397 = vrot.slane %v390, %v396
      %v399 = vunpack.c.l.s4 1935823168
      %v400 = vunpack.c.0.s8 %v399
      %v401 = vlaneseq
      %v402 = vshrl.u32 %v401, 7
      %v403 = vsub.s32 %v400, %v402
      %v404 = vrot.slane %v389, %v403
      %405 = vrot.lane.b32.xlu0 %v397, 87
      %v406 = vpop.permute.xlu0 %405
      %407 = vrot.lane.b32.xlu0 %v404, 87
      %v408 = vpop.permute.xlu0 %407
      %v409 = vrot.slane %v406, 4
      %v410 = vrot.slane %v408, 4
      %v411 = vsel %vm294, %v409, %v410
      %vm412 = vcmask 711680
      %v413 = vsel %vm412, %v406, %v411
      %416 = vst [vmem:[#allocation3] sm:$0x88] %v413
      %vm417 = vcmask 519171
      %418 = vst.msk [vmem:[#allocation3 + $0x8] sm:$0x8] %vm417, %v408
      %v419 = vld [vmem:[%s243] sm:$0x7]
      %v422 = vunpack.c.l.s4 1935823168
      %v423 = vunpack.c.0.s8 %v422
      %v424 = vlaneseq
      %v425 = vshrl.u32 %v424, 7
      %v426 = vsub.s32 %v423, %v425
      %v427 = vrot.slane %v419, %v426
      %v428 = vcombine.high %v427, %v427
      %v430 = vunpack.c.l.s4 1935823168
      %v431 = vunpack.c.0.s8 %v430
      %v432 = vlaneseq
      %v433 = vshrl.u32 %v432, 7
      %v434 = vsub.s32 %v431, %v433
      %v435 = vrot.slane %v427, %v434
      %v437 = vunpack.c.l.s4 1935823168
      %v438 = vunpack.c.0.s8 %v437
      %v439 = vlaneseq
      %v440 = vshrl.u32 %v439, 7
      %v441 = vsub.s32 %v438, %v440
      %v442 = vrot.slane %v428, %v441
      %443 = vrot.lane.b32.xlu0 %v435, 86
      %v444 = vpop.permute.xlu0 %443
      %445 = vrot.lane.b32.xlu0 %v442, 86
      %v446 = vpop.permute.xlu0 %445
      %v447 = vrot.slane %v444, 4
      %v448 = vrot.slane %v446, 4
      %v449 = vsel %vm294, %v447, %v448
      %vm450 = vcmask 703488
      %v451 = vsel %vm450, %v444, %v449
      %454 = vst [vmem:[#allocation3 + $0xc] sm:$0x11] %v451
      %455 = vst.msk [vmem:[#allocation3 + $0x14] sm:$0x1] %vm301, %v446
      %v456 = vld [vmem:[%s243] sm:$0x7]
      %v459 = vunpack.c.l.s4 1935823168
      %v460 = vunpack.c.0.s8 %v459
      %v461 = vlaneseq
      %v462 = vshrl.u32 %v461, 7
      %v463 = vsub.s32 %v460, %v462
      %v464 = vrot.slane %v456, %v463
      %v465 = vcombine.low %v464, %v464
      %v467 = vunpack.c.l.s4 1935823168
      %v468 = vunpack.c.0.s8 %v467
      %v469 = vlaneseq
      %v470 = vshrl.u32 %v469, 7
      %v471 = vsub.s32 %v468, %v470
      %v472 = vrot.slane %v465, %v471
      %v474 = vunpack.c.l.s4 1935823168
      %v475 = vunpack.c.0.s8 %v474
      %v476 = vlaneseq
      %v477 = vshrl.u32 %v476, 7
      %v478 = vsub.s32 %v475, %v477
      %v479 = vrot.slane %v464, %v478
      %480 = vrot.lane.b32.xlu0 %v472, 85
      %v481 = vpop.permute.xlu0 %480
      %482 = vrot.lane.b32.xlu0 %v479, 85
      %v483 = vpop.permute.xlu0 %482
      %v484 = vrot.slane %v481, 4
      %v485 = vrot.slane %v483, 4
      %v486 = vsel %vm294, %v484, %v485
      %vm487 = vcmask 695296
      %v488 = vsel %vm487, %v481, %v486
      %491 = vst [vmem:[#allocation3 + $0xc] sm:$0x22] %v488
      %492 = vst.msk [vmem:[#allocation3 + $0x14] sm:$0x2] %vm339, %v483
      %v493 = vld [vmem:[%s243] sm:$0x7]
      %v495 = vcombine.low %v493, %v493
      %v497 = vunpack.c.l.s4 1935823168
      %v498 = vunpack.c.0.s8 %v497
      %v499 = vlaneseq
      %v500 = vshrl.u32 %v499, 7
      %v501 = vsub.s32 %v498, %v500
      %v502 = vrot.slane %v495, %v501
      %v503 = vcombine.high %v502, %v502
      %v505 = vunpack.c.l.s4 1935823168
      %v506 = vunpack.c.0.s8 %v505
      %v507 = vlaneseq
      %v508 = vshrl.u32 %v507, 7
      %v509 = vsub.s32 %v506, %v508
      %v510 = vrot.slane %v502, %v509
      %v512 = vunpack.c.l.s4 1935823168
      %v513 = vunpack.c.0.s8 %v512
      %v514 = vlaneseq
      %v515 = vshrl.u32 %v514, 7
      %v516 = vsub.s32 %v513, %v515
      %v517 = vrot.slane %v503, %v516
      %518 = vrot.lane.b32.xlu0 %v510, 67
      %v519 = vpop.permute.xlu0 %518
      %520 = vrot.lane.b32.xlu0 %v517, 67
      %v521 = vpop.permute.xlu0 %520
      %v522 = vrot.slane %v519, 4
      %v523 = vrot.slane %v521, 4
      %v524 = vsel %vm294, %v522, %v523
      %vm525 = vcmask 547840
      %v526 = vsel %vm525, %v519, %v524
      %529 = vst [vmem:[#allocation3 + $0xc] sm:$0x44] %v526
      %530 = vst.msk [vmem:[#allocation3 + $0x14] sm:$0x4] %vm378, %v521
      %v531 = vld [vmem:[%s243] sm:$0x7]
      %v533 = vcombine.low %v531, %v531
      %v535 = vunpack.c.l.s4 1935823168
      %v536 = vunpack.c.0.s8 %v535
      %v537 = vlaneseq
      %v538 = vshrl.u32 %v537, 7
      %v539 = vsub.s32 %v536, %v538
      %v540 = vrot.slane %v533, %v539
      %v541 = vcombine.low %v540, %v540
      %v543 = vunpack.c.l.s4 1935823168
      %v544 = vunpack.c.0.s8 %v543
      %v545 = vlaneseq
      %v546 = vshrl.u32 %v545, 7
      %v547 = vsub.s32 %v544, %v546
      %v548 = vrot.slane %v541, %v547
      %v550 = vunpack.c.l.s4 1935823168
      %v551 = vunpack.c.0.s8 %v550
      %v552 = vlaneseq
      %v553 = vshrl.u32 %v552, 7
      %v554 = vsub.s32 %v551, %v553
      %v555 = vrot.slane %v540, %v554
      %556 = vrot.lane.b32.xlu0 %v548, 66
      %v557 = vpop.permute.xlu0 %556
      %558 = vrot.lane.b32.xlu0 %v555, 66
      %v559 = vpop.permute.xlu0 %558
      %v560 = vrot.slane %v557, 4
      %v561 = vrot.slane %v559, 4
      %v562 = vsel %vm294, %v560, %v561
      %vm563 = vcmask 539648
      %v564 = vsel %vm563, %v557, %v562
      %567 = vst [vmem:[#allocation3 + $0xc] sm:$0x88] %v564
      %568 = vst.msk [vmem:[#allocation3 + $0x14] sm:$0x8] %vm417, %v559
      %v569 = vld [vmem:[%s243] sm:$0x7]
      %v572 = vunpack.c.l.s4 1935823168
      %v573 = vunpack.c.0.s8 %v572
      %v574 = vlaneseq
      %v575 = vshrl.u32 %v574, 7
      %v576 = vsub.s32 %v573, %v575
      %v577 = vrot.slane %v569, %v576
      %v578 = vcombine.high %v577, %v577
      %v580 = vunpack.c.l.s4 1935823168
      %v581 = vunpack.c.0.s8 %v580
      %v582 = vlaneseq
      %v583 = vshrl.u32 %v582, 7
      %v584 = vsub.s32 %v581, %v583
      %v585 = vrot.slane %v577, %v584
      %v587 = vunpack.c.l.s4 1935823168
      %v588 = vunpack.c.0.s8 %v587
      %v589 = vlaneseq
      %v590 = vshrl.u32 %v589, 7
      %v591 = vsub.s32 %v588, %v590
      %v592 = vrot.slane %v578, %v591
      %593 = vrot.lane.b32.xlu0 %v585, 65
      %v594 = vpop.permute.xlu0 %593
      %595 = vrot.lane.b32.xlu0 %v592, 65
      %v596 = vpop.permute.xlu0 %595
      %v597 = vrot.slane %v594, 4
      %v598 = vrot.slane %v596, 4
      %v599 = vsel %vm294, %v597, %v598
      %vm600 = vcmask 531456
      %v601 = vsel %vm600, %v594, %v599
      %604 = vst [vmem:[#allocation3 + $0x18] sm:$0x11] %v601
      %605 = vst.msk [vmem:[#allocation3 + $0x20] sm:$0x1] %vm301, %v596
      %v606 = vld [vmem:[#allocation3] sm:$0xff]
      %v607 = vld [vmem:[#allocation3 + $0x8] sm:$0xf]
      %v608 = vld [vmem:[#allocation3 + $0xc] sm:$0xff]
      %v609 = vld [vmem:[#allocation3 + $0x14] sm:$0xf]
      %v610 = vld [vmem:[#allocation3 + $0x18] sm:$0x11]
      %v611 = vld [vmem:[#allocation3 + $0x20] sm:$0x1]
      %613 = vset.pattern.permute.xlu0 0
      %614 = vperm.xlu0 %613, %v263
      %v615 = vpop.permute.xlu0 %614
      %v623 = vunpack.c.l.b16 %v606
      %v624 = vunpack.c.h.b16 %v606
      %v625 = vunpack.c.l.b16 %v607
      %v626 = vunpack.c.l.b16 %v608
      %v627 = vunpack.c.h.b16 %v608
      %v628 = vunpack.c.l.b16 %v609
      %v629 = vunpack.c.l.b16 %v610
      %v630 = vunpack.c.h.b16 %v610
      %v631 = vunpack.c.l.b16 %v611
      %v632 = vpack.c.b16 %v626, %v623
      %v633 = vpack.c.b16 %v627, %v624
      %v634 = vpack.c.b16 %v628, %v625
      %v635 = vpack.c.b16 %v629, %v629
      %v636 = vpack.c.b16 %v630, %v630
      %v637 = vpack.c.b16 %v631, %v631
      %vm641 = vcmask 146432
      %v643 = vsel %vm641, %v262, 0
      %vm645 = vcmask 1040384
      %v647 = vsel %vm645, %v635, 0
      %v650 = vsel %vm645, %v636, 0
      %v653 = vsel %vm645, %v637, 0
      %655 = vmatprep.subr.bf16.mxu0 %v633
      %656 = vmatpush1.bf16.msra.mxu0 %v632
      %657 = vmatprep.subr.bf16.mxu0 %v650
      %658 = vmatpush1.bf16.msra.mxu0 %v647
      %659 = vmatprep.subr.bf16.mxu0 0
      %660 = vmatpush1.bf16.msra.mxu0 0
      %661 = vmatprep.subr.bf16.mxu0 0
      %662 = vmatpush1.bf16.msra.mxu0 0
      %663 = vmatprep.subr.bf16.mxu0 0
      %664 = vmatpush1.bf16.msra.mxu0 0
      %665 = vmatprep.subr.bf16.mxu0 0
      %666 = vmatpush1.bf16.msra.mxu0 0
      %667 = vmatprep.subr.bf16.mxu0 0
      %668 = vmatpush1.bf16.msra.mxu0 0
      %669 = vmatprep.subr.bf16.mxu0 0
      %670 = vmatpush1.bf16.msra.mxu0 0
      %671 = vmatprep.subr.bf16.mxu0 0
      %672 = vmatpush1.bf16.msra.mxu0 0
      %673 = vmatprep.subr.bf16.mxu0 0
      %674 = vmatpush1.bf16.msra.mxu0 0
      %675 = vmatprep.subr.bf16.mxu0 0
      %676 = vmatpush1.bf16.msra.mxu0 0
      %677 = vmatprep.subr.bf16.mxu0 0
      %678 = vmatpush1.bf16.msra.mxu0 0
      %679 = vmatprep.subr.bf16.mxu0 0
      %680 = vmatpush1.bf16.msra.mxu0 0
      %681 = vmatprep.subr.bf16.mxu0 0
      %682 = vmatpush1.bf16.msra.mxu0 0
      %683 = vmatprep.subr.bf16.mxu0 0
      %684 = vmatpush1.bf16.msra.mxu0 0
      %685 = vmatprep.subr.bf16.mxu0 0
      %686 = vmatpush1.bf16.msra.mxu0 0
      %687 = vmatprep.mubr.bf16.mxu0 0
      %688 = vmatmul.mubr.bf16.gmra.mrb[0].mxu0 %v643
      %v689 = vpop.f32.mrb[0].mxu0
      %v690 = vadd.f32 %v615, %v689
      %v691 = vpop.f32.mrb[0].mxu0
      %v692 = vadd.f32 %v615, %v691
      %v693 = vpop.f32.mrb[0].mxu0
      %v694 = vpop.f32.mrb[0].mxu0
      %695 = vdwg.mxu0
      %696 = vmatprep.subr.bf16.mxu0 0
      %697 = vmatpush1.bf16.msra.mxu0 %v634
      %698 = vmatprep.subr.bf16.mxu0 0
      %699 = vmatpush1.bf16.msra.mxu0 %v653
      %700 = vmatprep.subr.bf16.mxu0 0
      %701 = vmatpush1.bf16.msra.mxu0 0
      %702 = vmatprep.subr.bf16.mxu0 0
      %703 = vmatpush1.bf16.msra.mxu0 0
      %704 = vmatprep.subr.bf16.mxu0 0
      %705 = vmatpush1.bf16.msra.mxu0 0
      %706 = vmatprep.subr.bf16.mxu0 0
      %707 = vmatpush1.bf16.msra.mxu0 0
      %708 = vmatprep.subr.bf16.mxu0 0
      %709 = vmatpush1.bf16.msra.mxu0 0
      %710 = vmatprep.subr.bf16.mxu0 0
      %711 = vmatpush1.bf16.msra.mxu0 0
      %712 = vmatprep.subr.bf16.mxu0 0
      %713 = vmatpush1.bf16.msra.mxu0 0
      %714 = vmatprep.subr.bf16.mxu0 0
      %715 = vmatpush1.bf16.msra.mxu0 0
      %716 = vmatprep.subr.bf16.mxu0 0
      %717 = vmatpush1.bf16.msra.mxu0 0
      %718 = vmatprep.subr.bf16.mxu0 0
      %719 = vmatpush1.bf16.msra.mxu0 0
      %720 = vmatprep.subr.bf16.mxu0 0
      %721 = vmatpush1.bf16.msra.mxu0 0
      %722 = vmatprep.subr.bf16.mxu0 0
      %723 = vmatpush1.bf16.msra.mxu0 0
      %724 = vmatprep.subr.bf16.mxu0 0
      %725 = vmatpush1.bf16.msra.mxu0 0
      %726 = vmatprep.subr.bf16.mxu0 0
      %727 = vmatpush1.bf16.msra.mxu0 0
      %728 = vmatprep.mubr.bf16.mxu0 0
      %729 = vmatmul.mubr.bf16.gmra.mrb[0].mxu0 %v643
      %v730 = vpop.f32.mrb[0].mxu0
      %v731 = vadd.f32 %v615, %v730
      %v732 = vpop.f32.mrb[0].mxu0
      %v733 = vpop.f32.mrb[0].mxu0
      %v734 = vpop.f32.mrb[0].mxu0
      %735 = vdwg.mxu0
      %v736 = vmax.f32 %v690, 0.0
      %v737 = vmax.f32 %v692, 0.0
      %v738 = vmax.f32 %v731, 0.0
      %v739 = vld [vmem:[%s1] sm:$0x7]
      %v741 = vlaneseq
      %v742 = vshrl.u32 %v741, 7
      %v743 = vsub.s32 0, %v742
      %v744 = vrot.slane %v739, %v743
      %v745 = vlaneseq
      %v746 = vshrl.u32 %v745, 7
      %v747 = vsub.s32 1, %v746
      %v748 = vrot.slane %v739, %v747
      %v749 = vlaneseq
      %v750 = vshrl.u32 %v749, 7
      %v751 = vsub.s32 2, %v750
      %v752 = vrot.slane %v739, %v751
      %753 = vrot.lane.b32.xlu0 %v744, 86
      %v754 = vpop.permute.xlu0 %753
      %755 = vrot.lane.b32.xlu0 %v748, 86
      %v756 = vpop.permute.xlu0 %755
      %757 = vrot.lane.b32.xlu0 %v752, 86
      %v758 = vpop.permute.xlu0 %757
      %vm759 = vcmask 703488
      %v760 = vsel %vm759, %v754, %v756
      %v761 = vsel %vm759, %v756, %v758
      %v765 = vmul.f32 %v736, %v760
      %v766 = vmul.f32 %v737, %v761
      %v767 = vmul.f32 %v738, %v758
      %v768 = vpack.c.bf16 %v765, %v765
      %v769 = vpack.c.bf16 %v766, %v766
      %v770 = vpack.c.bf16 %v767, %v767
      %v774 = vunpack.c.l.b16 %v768
      %v775 = vunpack.c.l.b16 %v769
      %v776 = vunpack.c.l.b16 %v770
      %v777 = vpack.c.b16 %v775, %v774
      %v778 = vpack.c.b16 %v776, %v776
      %779 = vrot.lane.b32.xlu0 %v777, 42
      %v780 = vpop.permute.xlu0 %779
      %781 = vrot.lane.b32.xlu0 %v778, 42
      %v782 = vpop.permute.xlu0 %781
      %v783 = vrot.slane %v780, 4
      %vm784 = vcmask 343040
      %v785 = vsel %vm784, %v783, %v780
      %v786 = vsel %vm784, %v783, %v782
      %vm789 = vcmask 1043792
      %vm790 = vcmask 1047556
      %vm791 = vmor %vm790, %vm789
      %792 = vst.msk [vmem:[#allocation2] sm:$0xff] %vm791, %v785
      %vm793 = vcmask 863232
      %794 = vst.msk [vmem:[#allocation2 + $0x8] sm:$0xf] %vm793, %v786
      %v795 = vld [vmem:[%s4] sm:$0x3]
      %v796 = vld [vmem:[%s5] sm:$0xf]
      %v797 = vld [vmem:[#allocation2] sm:$0xff]
      %v798 = vld [vmem:[#allocation2 + $0x8] sm:$0xf]
      %801 = vrot.lane.b32.xlu0 %v797, 107
      %v802 = vpop.permute.xlu0 %801
      %803 = vrot.lane.b32.xlu0 %v798, 107
      %v804 = vpop.permute.xlu0 %803
      %v805 = vrot.slane %v802, 4
      %v806 = vrot.slane %v804, 4
      %v807 = vsel %vm294, %v805, %v806
      %v808 = vsel %vm296, %v802, %v807
      %811 = vst [vmem:[#allocation3] sm:$0xff] %v808
      %vm812 = vcmask 519168
      %813 = vst.msk [vmem:[#allocation3 + $0x8] sm:$0xf] %vm812, %v804
      %v814 = vld [vmem:[#allocation2] sm:$0xff]
      %v815 = vld [vmem:[#allocation2 + $0x8] sm:$0xf]
      %818 = vrot.lane.b32.xlu0 %v814, 106
      %v819 = vpop.permute.xlu0 %818
      %820 = vrot.lane.b32.xlu0 %v815, 106
      %v821 = vpop.permute.xlu0 %820
      %v822 = vrot.slane %v819, 4
      %v823 = vrot.slane %v821, 4
      %v824 = vsel %vm294, %v822, %v823
      %v825 = vsel %vm334, %v819, %v824
      %828 = vst [vmem:[#allocation3 + $0xc] sm:$0xff] %v825
      %829 = vst.msk [vmem:[#allocation3 + $0x14] sm:$0xf] %vm812, %v821
      %v830 = vld [vmem:[#allocation2] sm:$0xff]
      %v831 = vld [vmem:[#allocation2 + $0x8] sm:$0xf]
      %834 = vrot.lane.b32.xlu0 %v830, 105
      %v835 = vpop.permute.xlu0 %834
      %836 = vrot.lane.b32.xlu0 %v831, 105
      %v837 = vpop.permute.xlu0 %836
      %v838 = vrot.slane %v835, 4
      %v839 = vrot.slane %v837, 4
      %v840 = vsel %vm294, %v838, %v839
      %v841 = vsel %vm373, %v835, %v840
      %844 = vst [vmem:[#allocation3 + $0x18] sm:$0xff] %v841
      %845 = vst.msk [vmem:[#allocation3 + $0x20] sm:$0xf] %vm812, %v837
      %v846 = vld [vmem:[#allocation2] sm:$0xff]
      %v847 = vld [vmem:[#allocation2 + $0x8] sm:$0xf]
      %850 = vrot.lane.b32.xlu0 %v846, 87
      %v851 = vpop.permute.xlu0 %850
      %852 = vrot.lane.b32.xlu0 %v847, 87
      %v853 = vpop.permute.xlu0 %852
      %v854 = vrot.slane %v851, 4
      %v855 = vrot.slane %v853, 4
      %v856 = vsel %vm294, %v854, %v855
      %v857 = vsel %vm412, %v851, %v856
      %860 = vst [vmem:[#allocation3 + $0x24] sm:$0xff] %v857
      %861 = vst.msk [vmem:[#allocation3 + $0x2c] sm:$0xf] %vm812, %v853
      %v862 = vld [vmem:[#allocation2] sm:$0xff]
      %v863 = vld [vmem:[#allocation2 + $0x8] sm:$0xf]
      %866 = vrot.lane.b32.xlu0 %v862, 86
      %v867 = vpop.permute.xlu0 %866
      %868 = vrot.lane.b32.xlu0 %v863, 86
      %v869 = vpop.permute.xlu0 %868
      %v870 = vrot.slane %v867, 4
      %v871 = vrot.slane %v869, 4
      %v872 = vsel %vm294, %v870, %v871
      %v873 = vsel %vm450, %v867, %v872
      %876 = vst [vmem:[#allocation3 + $0x30] sm:$0xff] %v873
      %877 = vst.msk [vmem:[#allocation3 + $0x38] sm:$0xf] %vm812, %v869
      %v878 = vld [vmem:[#allocation2] sm:$0xff]
      %v879 = vld [vmem:[#allocation2 + $0x8] sm:$0xf]
      %882 = vrot.lane.b32.xlu0 %v878, 85
      %v883 = vpop.permute.xlu0 %882
      %884 = vrot.lane.b32.xlu0 %v879, 85
      %v885 = vpop.permute.xlu0 %884
      %v886 = vrot.slane %v883, 4
      %v887 = vrot.slane %v885, 4
      %v888 = vsel %vm294, %v886, %v887
      %v889 = vsel %vm487, %v883, %v888
      %892 = vst [vmem:[#allocation3 + $0x3c] sm:$0xff] %v889
      %893 = vst.msk [vmem:[#allocation3 + $0x44] sm:$0xf] %vm812, %v885
      %v894 = vld [vmem:[#allocation2] sm:$0xff]
      %v895 = vld [vmem:[#allocation2 + $0x8] sm:$0xf]
      %898 = vrot.lane.b32.xlu0 %v894, 67
      %v899 = vpop.permute.xlu0 %898
      %900 = vrot.lane.b32.xlu0 %v895, 67
      %v901 = vpop.permute.xlu0 %900
      %v902 = vrot.slane %v899, 4
      %v903 = vrot.slane %v901, 4
      %v904 = vsel %vm294, %v902, %v903
      %v905 = vsel %vm525, %v899, %v904
      %908 = vst [vmem:[#allocation3 + $0x48] sm:$0xff] %v905
      %909 = vst.msk [vmem:[#allocation3 + $0x50] sm:$0xf] %vm812, %v901
      %v910 = vld [vmem:[#allocation2] sm:$0xff]
      %v911 = vld [vmem:[#allocation2 + $0x8] sm:$0xf]
      %914 = vrot.lane.b32.xlu0 %v910, 66
      %v915 = vpop.permute.xlu0 %914
      %916 = vrot.lane.b32.xlu0 %v911, 66
      %v917 = vpop.permute.xlu0 %916
      %v918 = vrot.slane %v915, 4
      %v919 = vrot.slane %v917, 4
      %v920 = vsel %vm294, %v918, %v919
      %v921 = vsel %vm563, %v915, %v920
      %924 = vst [vmem:[#allocation3 + $0x54] sm:$0xff] %v921
      %925 = vst.msk [vmem:[#allocation3 + $0x5c] sm:$0xf] %vm812, %v917
      %v926 = vld [vmem:[#allocation2] sm:$0xff]
      %v927 = vld [vmem:[#allocation2 + $0x8] sm:$0xf]
      %930 = vrot.lane.b32.xlu0 %v926, 65
      %v931 = vpop.permute.xlu0 %930
      %932 = vrot.lane.b32.xlu0 %v927, 65
      %v933 = vpop.permute.xlu0 %932
      %v934 = vrot.slane %v931, 4
      %v935 = vrot.slane %v933, 4
      %v936 = vsel %vm294, %v934, %v935
      %v937 = vsel %vm600, %v931, %v936
      %940 = vst [vmem:[#allocation3 + $0x60] sm:$0xff] %v937
      %941 = vst.msk [vmem:[#allocation3 + $0x68] sm:$0xf] %vm812, %v933
      %v942 = vld [vmem:[#allocation3] sm:$0xff]
      %v943 = vld [vmem:[#allocation3 + $0x8] sm:$0xf]
      %v944 = vld [vmem:[#allocation3 + $0xc] sm:$0xff]
      %v945 = vld [vmem:[#allocation3 + $0x14] sm:$0xf]
      %v946 = vld [vmem:[#allocation3 + $0x18] sm:$0xff]
      %v947 = vld [vmem:[#allocation3 + $0x20] sm:$0xf]
      %v948 = vld [vmem:[#allocation3 + $0x24] sm:$0xff]
      %v949 = vld [vmem:[#allocation3 + $0x2c] sm:$0xf]
      %v950 = vld [vmem:[#allocation3 + $0x30] sm:$0xff]
      %v951 = vld [vmem:[#allocation3 + $0x38] sm:$0xf]
      %v952 = vld [vmem:[#allocation3 + $0x3c] sm:$0xff]
      %v953 = vld [vmem:[#allocation3 + $0x44] sm:$0xf]
      %v954 = vld [vmem:[#allocation3 + $0x48] sm:$0xff]
      %v955 = vld [vmem:[#allocation3 + $0x50] sm:$0xf]
      %v956 = vld [vmem:[#allocation3 + $0x54] sm:$0xff]
      %v957 = vld [vmem:[#allocation3 + $0x5c] sm:$0xf]
      %v958 = vld [vmem:[#allocation3 + $0x60] sm:$0xff]
      %v959 = vld [vmem:[#allocation3 + $0x68] sm:$0xf]
      %961 = vset.pattern.permute.xlu0 0
      %962 = vperm.xlu0 %961, %v796
      %v963 = vpop.permute.xlu0 %962
      %v983 = vunpack.c.l.b16 %v942
      %v984 = vunpack.c.h.b16 %v942
      %v985 = vunpack.c.l.b16 %v943
      %v986 = vunpack.c.l.b16 %v944
      %v987 = vunpack.c.h.b16 %v944
      %v988 = vunpack.c.l.b16 %v945
      %v989 = vunpack.c.l.b16 %v946
      %v990 = vunpack.c.h.b16 %v946
      %v991 = vunpack.c.l.b16 %v947
      %v992 = vunpack.c.l.b16 %v948
      %v993 = vunpack.c.h.b16 %v948
      %v994 = vunpack.c.l.b16 %v949
      %v995 = vunpack.c.l.b16 %v950
      %v996 = vunpack.c.h.b16 %v950
      %v997 = vunpack.c.l.b16 %v951
      %v998 = vunpack.c.l.b16 %v952
      %v999 = vunpack.c.h.b16 %v952
      %v1000 = vunpack.c.l.b16 %v953
      %v1001 = vunpack.c.l.b16 %v954
      %v1002 = vunpack.c.h.b16 %v954
      %v1003 = vunpack.c.l.b16 %v955
      %v1004 = vunpack.c.l.b16 %v956
      %v1005 = vunpack.c.h.b16 %v956
      %v1006 = vunpack.c.l.b16 %v957
      %v1007 = vunpack.c.l.b16 %v958
      %v1008 = vunpack.c.h.b16 %v958
      %v1009 = vunpack.c.l.b16 %v959
      %v1010 = vpack.c.b16 %v986, %v983
      %v1011 = vpack.c.b16 %v987, %v984
      %v1012 = vpack.c.b16 %v988, %v985
      %v1013 = vpack.c.b16 %v992, %v989
      %v1014 = vpack.c.b16 %v993, %v990
      %v1015 = vpack.c.b16 %v994, %v991
      %v1016 = vpack.c.b16 %v998, %v995
      %v1017 = vpack.c.b16 %v999, %v996
      %v1018 = vpack.c.b16 %v1000, %v997
      %v1019 = vpack.c.b16 %v1004, %v1001
      %v1020 = vpack.c.b16 %v1005, %v1002
      %v1021 = vpack.c.b16 %v1006, %v1003
      %v1022 = vpack.c.b16 %v1007, %v1007
      %v1023 = vpack.c.b16 %v1008, %v1008
      %v1024 = vpack.c.b16 %v1009, %v1009
      %vm1037 = vcmask 588800
      %v1039 = vsel %vm1037, %v795, 0
      %vm1041 = vcmask 1043456
      %v1043 = vsel %vm1041, %v1022, 0
      %v1046 = vsel %vm1041, %v1023, 0
      %v1049 = vsel %vm1041, %v1024, 0
      %1051 = vmatprep.subr.bf16.mxu0 %v1011
      %1052 = vmatpush1.bf16.msra.mxu0 %v1010
      %1053 = vmatprep.subr.bf16.mxu0 %v1014
      %1054 = vmatpush1.bf16.msra.mxu0 %v1013
      %1055 = vmatprep.subr.bf16.mxu0 %v1017
      %1056 = vmatpush1.bf16.msra.mxu0 %v1016
      %1057 = vmatprep.subr.bf16.mxu0 %v1020
      %1058 = vmatpush1.bf16.msra.mxu0 %v1019
      %1059 = vmatprep.subr.bf16.mxu0 %v1046
      %1060 = vmatpush1.bf16.msra.mxu0 %v1043
      %1061 = vmatprep.subr.bf16.mxu0 0
      %1062 = vmatpush1.bf16.msra.mxu0 0
      %1063 = vmatprep.subr.bf16.mxu0 0
      %1064 = vmatpush1.bf16.msra.mxu0 0
      %1065 = vmatprep.subr.bf16.mxu0 0
      %1066 = vmatpush1.bf16.msra.mxu0 0
      %1067 = vmatprep.subr.bf16.mxu0 0
      %1068 = vmatpush1.bf16.msra.mxu0 0
      %1069 = vmatprep.subr.bf16.mxu0 0
      %1070 = vmatpush1.bf16.msra.mxu0 0
      %1071 = vmatprep.subr.bf16.mxu0 0
      %1072 = vmatpush1.bf16.msra.mxu0 0
      %1073 = vmatprep.subr.bf16.mxu0 0
      %1074 = vmatpush1.bf16.msra.mxu0 0
      %1075 = vmatprep.subr.bf16.mxu0 0
      %1076 = vmatpush1.bf16.msra.mxu0 0
      %1077 = vmatprep.subr.bf16.mxu0 0
      %1078 = vmatpush1.bf16.msra.mxu0 0
      %1079 = vmatprep.subr.bf16.mxu0 0
      %1080 = vmatpush1.bf16.msra.mxu0 0
      %1081 = vmatprep.subr.bf16.mxu0 0
      %1082 = vmatpush1.bf16.msra.mxu0 0
      %1083 = vmatprep.mubr.bf16.mxu0 0
      %1084 = vmatmul.mubr.bf16.gmra.mrb[0].mxu0 %v1039
      %v1085 = vpop.f32.mrb[0].mxu0
      %v1086 = vadd.f32 %v963, %v1085
      %v1087 = vpop.f32.mrb[0].mxu0
      %v1088 = vadd.f32 %v963, %v1087
      %v1089 = vpop.f32.mrb[0].mxu0
      %v1090 = vpop.f32.mrb[0].mxu0
      %1091 = vdwg.mxu0
      %1092 = vmatprep.subr.bf16.mxu0 0
      %1093 = vmatpush1.bf16.msra.mxu0 %v1012
      %1094 = vmatprep.subr.bf16.mxu0 0
      %1095 = vmatpush1.bf16.msra.mxu0 %v1015
      %1096 = vmatprep.subr.bf16.mxu0 0
      %1097 = vmatpush1.bf16.msra.mxu0 %v1018
      %1098 = vmatprep.subr.bf16.mxu0 0
      %1099 = vmatpush1.bf16.msra.mxu0 %v1021
      %1100 = vmatprep.subr.bf16.mxu0 0
      %1101 = vmatpush1.bf16.msra.mxu0 %v1049
      %1102 = vmatprep.subr.bf16.mxu0 0
      %1103 = vmatpush1.bf16.msra.mxu0 0
      %1104 = vmatprep.subr.bf16.mxu0 0
      %1105 = vmatpush1.bf16.msra.mxu0 0
      %1106 = vmatprep.subr.bf16.mxu0 0
      %1107 = vmatpush1.bf16.msra.mxu0 0
      %1108 = vmatprep.subr.bf16.mxu0 0
      %1109 = vmatpush1.bf16.msra.mxu0 0
      %1110 = vmatprep.subr.bf16.mxu0 0
      %1111 = vmatpush1.bf16.msra.mxu0 0
      %1112 = vmatprep.subr.bf16.mxu0 0
      %1113 = vmatpush1.bf16.msra.mxu0 0
      %1114 = vmatprep.subr.bf16.mxu0 0
      %1115 = vmatpush1.bf16.msra.mxu0 0
      %1116 = vmatprep.subr.bf16.mxu0 0
      %1117 = vmatpush1.bf16.msra.mxu0 0
      %1118 = vmatprep.subr.bf16.mxu0 0
      %1119 = vmatpush1.bf16.msra.mxu0 0
      %1120 = vmatprep.subr.bf16.mxu0 0
      %1121 = vmatpush1.bf16.msra.mxu0 0
      %1122 = vmatprep.subr.bf16.mxu0 0
      %1123 = vmatpush1.bf16.msra.mxu0 0
      %1124 = vmatprep.mubr.bf16.mxu0 0
      %1125 = vmatmul.mubr.bf16.gmra.mrb[0].mxu0 %v1039
      %v1126 = vpop.f32.mrb[0].mxu0
      %v1127 = vadd.f32 %v963, %v1126
      %v1128 = vpop.f32.mrb[0].mxu0
      %v1129 = vpop.f32.mrb[0].mxu0
      %v1130 = vpop.f32.mrb[0].mxu0
      %1131 = vdwg.mxu0
      %v1132 = vld [vmem:[%s1] sm:$0x7]
      %v1134 = vlaneseq
      %v1135 = vshrl.u32 %v1134, 7
      %v1136 = vsub.s32 0, %v1135
      %v1137 = vrot.slane %v1132, %v1136
      %v1138 = vlaneseq
      %v1139 = vshrl.u32 %v1138, 7
      %v1140 = vsub.s32 1, %v1139
      %v1141 = vrot.slane %v1132, %v1140
      %v1142 = vlaneseq
      %v1143 = vshrl.u32 %v1142, 7
      %v1144 = vsub.s32 2, %v1143
      %v1145 = vrot.slane %v1132, %v1144
      %1146 = vrot.lane.b32.xlu0 %v1137, 86
      %v1147 = vpop.permute.xlu0 %1146
      %1148 = vrot.lane.b32.xlu0 %v1141, 86
      %v1149 = vpop.permute.xlu0 %1148
      %1150 = vrot.lane.b32.xlu0 %v1145, 86
      %v1151 = vpop.permute.xlu0 %1150
      %v1152 = vsel %vm759, %v1147, %v1149
      %v1153 = vsel %vm759, %v1149, %v1151
      %v1157 = vmul.f32 %v1086, %v1152
      %v1158 = vmul.f32 %v1088, %v1153
      %v1159 = vmul.f32 %v1127, %v1151
      %v1160 = vpack.c.bf16 %v1157, %v1157
      %v1161 = vpack.c.bf16 %v1158, %v1158
      %v1162 = vpack.c.bf16 %v1159, %v1159
      %v1166 = vcombine.low %v1160, %v1161
      %v1168 = vunpack.c.l.s4 1983009808
      %v1169 = vunpack.c.0.s8 %v1168
      %v1170 = vlaneseq
      %v1171 = vshrl.u32 %v1170, 7
      %v1172 = vsub.s32 %v1169, %v1171
      %v1173 = vrot.slane %v1166, %v1172
      %v1175 = vunpack.c.l.s4 1983009808
      %v1176 = vunpack.c.0.s8 %v1175
      %v1177 = vlaneseq
      %v1178 = vshrl.u32 %v1177, 7
      %v1179 = vsub.s32 %v1176, %v1178
      %v1180 = vrot.slane %v1162, %v1179
      %v1181 = vcombine.low %v1173, %v1180
      %1182 = vrot.lane.b32.xlu0 %v1181, 42
      %v1183 = vpop.permute.xlu0 %1182
      %v1184 = vrot.slane %v1183, 6
      %v1185 = vsel %vm784, %v1184, %v1183
      %vm1187 = vcmask 1041744
      %vm1188 = vcmask 1043458
      %vm1189 = vmor %vm1188, %vm1187
      %vm1190 = vcmask 865284
      %vm1191 = vmor %vm1190, %vm1189
      %1192 = vst.msk [vmem:[%s248] sm:$0x3f] %vm1191, %v1185
      %p1193 = scmp.lt.s32.totalorder %s17, 5
      %s1194 = scalar_select %p1193, %s17, 5
      %s1195 = smul.addr %s1194, 4
      %s1196 = smul.addr %s1195, 2
      %s1197 = scalar_lea.vmem %s6, %s1196
      // Predicated region
      $region45: #{scandium_weather_forward.3} parent=43 // pred_check
        %p1198 = pneg %p166
      $region46: #{scandium_weather_forward.3} parent=43 // pred_check_branch
        %1200 = sbr.rel (%p1198) target = $region48
      $region47: #{scandium_weather_forward.3} parent=43 // pred_region
        _
      $region48: #{scandium_weather_forward.3} parent=43 // pred_fallthru
        _
    $region44: #{scandium_weather_forward.3} parent=5 // pred_fallthru
      _
    %p1201 = scmp.le.s32.totalorder 2, %s12
    // Predicated region
    $region49: #{scandium_weather_forward.3} parent=5 // pred_check
      %p1202 = pneg %p1201
    $region50: #{scandium_weather_forward.3} parent=5 // pred_check_branch
      %1204 = sbr.rel (%p1202) target = $region52
    $region51: #{scandium_weather_forward.3} parent=5 // pred_region
      %s1205 = ssub.s32 %s12, 2
      // Predicated region
      $region53: #{scandium_weather_forward.3} parent=51 // pred_check
        %p1206 = pneg %p172
      $region54: #{scandium_weather_forward.3} parent=51 // pred_check_branch
        %1208 = sbr.rel (%p1206) target = $region56
      $region55: #{scandium_weather_forward.3} parent=51 // pred_region
        %p1209 = scmp.lt.s32.totalorder %s18, 5
        %s1210 = scalar_select %p1209, %s18, 5
        %s1211 = smul.addr %s1210, 4
        %s1212 = smul.addr %s1211, 2
        %s1213 = scalar_lea.vmem %s6, %s1212
      $region56: #{scandium_weather_forward.3} parent=51 // pred_fallthru
        _
    $region52: #{scandium_weather_forward.3} parent=5 // pred_fallthru
      _
  $region6: #{scandium_weather_forward.3} parent=0 // loop_footer
    %s16 = sadd.s32 1, %s12
  $region7: #{scandium_weather_forward.3} parent=0 // loop_footer_branch
    %11 = sbr.rel target = $region3
  $region8: #{scandium_weather_forward.3} parent=0 // loop_exit
    _

// kernel: scandium_weather_forward.5
$region0: #{scandium_weather_forward.5}
  #allocation0 [shape = 'u32[]', space=smem, size = 0x4, offset = 0x4, fixed_abs, tag = 'smem constant byte address 0x4 - core index']
  #allocation1 [shape = 'u32[144,128]{1,0:T(1,128)}', space=vmem, size = 0x12000, scoped, tag = 'internal scratch']
  #allocation2 [shape = 'bf16[26,404]{1,0:T(8,128)(2,1)}', space=vmem, size = 0x8000, scoped, tag = 'scratch operand']
  #allocation3 [shape = 'bf16[18,404]{1,0:T(8,128)(2,1)}', space=vmem, size = 0x6000, scoped, tag = 'scratch operand']
  #allocation4 [shape = 'bf16[10,404]{1,0:T(8,128)(2,1)}', space=vmem, size = 0x4000, scoped, tag = 'scratch operand']
  #allocation5 [shape = 'bf16[234,320]{1,0:T(8,128)(2,1)}', space=vmem, size = 0x2d000, scoped, tag = 'scratch operand']
  #allocation6 [shape = 'f32[1,1]{1,0:T(1,128)S(1)}', space=vmem, size = 0x200, scoped, tag = 'scoped memory for scandium_weather_forward.5']
  %s0 = inlined_call_operand.vmem [shape: bf16[2,2,404], index: 0, kind: input, shape index: {}]
  %s1 = inlined_call_operand.vmem [shape: bf16[2,2,4,404], index: 1, kind: input, shape index: {}]
  %s2 = inlined_call_operand.vmem [shape: bf16[2,3,4,404], index: 2, kind: input, shape index: {}]
  %s3 = inlined_call_operand.vmem [shape: f32[2,4,1], index: 3, kind: input, shape index: {}]
  %s4 = inlined_call_operand.vmem [shape: f32[1,404], index: 4, kind: input, shape index: {}]
  %s5 = inlined_call_operand.vmem [shape: bf16[16,234], index: 5, kind: input, shape index: {}]
  %s6 = inlined_call_operand.vmem [shape: f32[16,1], index: 6, kind: input, shape index: {}]
  %s7 = inlined_call_operand.vmem [shape: bf16[8,162], index: 7, kind: input, shape index: {}]
  %s8 = inlined_call_operand.vmem [shape: f32[8,1], index: 8, kind: input, shape index: {}]
  %s9 = inlined_call_operand.vmem [shape: bf16[1,10], index: 9, kind: input, shape index: {}]
  %s10 = inlined_call_operand.<no memory space> [shape: f32[1,1], index: 10, kind: input, shape index: {}]
  %s11 = inlined_call_operand.vmem [shape: f32[2,1,404], index: 11, kind: output, shape index: {}]
  %s12 = sld [smem:[#allocation0]]
  $region77: #{scandium_weather_forward.5} parent=0
    _
  %s14 = ssub.s32 1, %s12
  %s15 = scalar_select 0, %s14, %s12
  %v16 = vstv %s10
  %17 = vst [vmem:[#allocation6] sm:$0x1] %v16
  loop: start=0, step=1, limit=4
  $region2: #{scandium_weather_forward.5} parent=0 // loop_pre_header
    _
  $region3: #{scandium_weather_forward.5} parent=0 // loop_header
    %s19 = sphi 0, %s23
    %p20 = scmp.ge.s32.totalorder %s19, 4
    %s29 = sphi 0, %s31
    %s32 = sphi 0, %s29
    %s33 = sphi 0, %s32
    %s49 = sphi 0, %s33
    %s55 = sphi 0, %s57
    %s58 = sphi 0, %s55
    %s59 = sphi 0, %s58
    %s75 = sphi 0, %s59
    %s81 = sphi 0, %s83
    %s84 = sphi 0, %s81
    %s85 = sphi 0, %s84
    %s101 = sphi 0, %s85
    %s107 = sphi 0, %s109
    %s110 = sphi 0, %s107
    %s111 = sphi 0, %s110
    %s127 = sphi 0, %s111
    %s131 = sphi 0, %s131
    %s133 = sphi 0, %s131
    %s134 = sphi 0, %s133
    %s148 = sphi 0, %s134
    %s152 = sphi 0, %s152
    %s154 = sphi 0, %s152
    %s155 = sphi 0, %s154
    %s169 = sphi 0, %s155
    %s173 = sphi 0, %s173
    %s175 = sphi 0, %s173
    %s176 = sphi 0, %s175
    %s190 = sphi 0, %s176
    %s194 = sphi 0, %s194
    %s196 = sphi 0, %s194
    %s197 = sphi 0, %s196
    %s211 = sphi 0, %s197
    %s215 = sphi 0, %s215
    %s217 = sphi 0, %s215
    %s218 = sphi 0, %s217
    %s232 = sphi 0, %s218
    %s236 = sphi 0, %s236
    %s238 = sphi 0, %s236
    %s239 = sphi 0, %s238
    %s253 = sphi 0, %s239
    %s257 = sphi 0, %s257
    %s259 = sphi 0, %s257
    %s260 = sphi 0, %s259
    %s274 = sphi 0, %s260
    %s280 = sphi 0, %s282
    %s283 = sphi 0, %s280
    %s284 = sphi 0, %s283
    %s300 = sphi 0, %s284
  $region4: #{scandium_weather_forward.5} parent=0 // loop_header_branch
    %22 = sbr.rel (%p20) target = $region8
  $region5: #{scandium_weather_forward.5} parent=0 // loop_body
    %s24 = ssub.s32 %s19, 1
    %s25 = ssub.s32 %s19, 2
    %s26 = sadd.s32 %s19, 1
    %s27 = ssub.s32 %s19, %s26
    %p28 = scmp.eq.s32.totalorder %s27, 0
    %s30 = sadd.s32 %s29, 1
    %s31 = scalar_select %p28, %s29, %s30
    %p34 = pneg %p28
    %p35 = scmp.eq.s32.totalorder %s19, 1
    %p36 = por %p34, %p35
    %p37 = scmp.ne.s32.totalorder %s29, %s32
    %p38 = scmp.eq.s32.totalorder %s19, 0
    %p39 = por %p37, %p38
    %p40 = scmp.ne.s32.totalorder %s29, %s32
    %p41 = scmp.eq.s32.totalorder %s24, 1
    %p42 = por %p40, %p41
    %p43 = scmp.ne.s32.totalorder %s32, %s33
    %p44 = scmp.eq.s32.totalorder %s24, 0
    %p45 = por %p43, %p44
    %p46 = scmp.ne.s32.totalorder %s32, %s33
    %p47 = scmp.eq.s32.totalorder %s25, 1
    %p48 = por %p46, %p47
    %p50 = scmp.ne.s32.totalorder %s33, %s49
    %p51 = scmp.eq.s32.totalorder %s25, 0
    %p52 = por %p50, %p51
    %s53 = ssub.s32 %s19, %s26
    %p54 = scmp.eq.s32.totalorder %s53, 0
    %s56 = sadd.s32 %s55, 1
    %s57 = scalar_select %p54, %s55, %s56
    %p60 = pneg %p54
    %p61 = scmp.eq.s32.totalorder %s19, 1
    %p62 = por %p60, %p61
    %p63 = scmp.ne.s32.totalorder %s55, %s58
    %p64 = scmp.eq.s32.totalorder %s19, 0
    %p65 = por %p63, %p64
    %p66 = scmp.ne.s32.totalorder %s55, %s58
    %p67 = scmp.eq.s32.totalorder %s24, 1
    %p68 = por %p66, %p67
    %p69 = scmp.ne.s32.totalorder %s58, %s59
    %p70 = scmp.eq.s32.totalorder %s24, 0
    %p71 = por %p69, %p70
    %p72 = scmp.ne.s32.totalorder %s58, %s59
    %p73 = scmp.eq.s32.totalorder %s25, 1
    %p74 = por %p72, %p73
    %p76 = scmp.ne.s32.totalorder %s59, %s75
    %p77 = scmp.eq.s32.totalorder %s25, 0
    %p78 = por %p76, %p77
    %s79 = ssub.s32 %s19, %s26
    %p80 = scmp.eq.s32.totalorder %s79, 0
    %s82 = sadd.s32 %s81, 1
    %s83 = scalar_select %p80, %s81, %s82
    %p86 = pneg %p80
    %p87 = scmp.eq.s32.totalorder %s19, 1
    %p88 = por %p86, %p87
    %p89 = scmp.ne.s32.totalorder %s81, %s84
    %p90 = scmp.eq.s32.totalorder %s19, 0
    %p91 = por %p89, %p90
    %p92 = scmp.ne.s32.totalorder %s81, %s84
    %p93 = scmp.eq.s32.totalorder %s24, 1
    %p94 = por %p92, %p93
    %p95 = scmp.ne.s32.totalorder %s84, %s85
    %p96 = scmp.eq.s32.totalorder %s24, 0
    %p97 = por %p95, %p96
    %p98 = scmp.ne.s32.totalorder %s84, %s85
    %p99 = scmp.eq.s32.totalorder %s25, 1
    %p100 = por %p98, %p99
    %p102 = scmp.ne.s32.totalorder %s85, %s101
    %p103 = scmp.eq.s32.totalorder %s25, 0
    %p104 = por %p102, %p103
    %s105 = ssub.s32 %s19, %s26
    %p106 = scmp.eq.s32.totalorder %s105, 0
    %s108 = sadd.s32 %s107, 1
    %s109 = scalar_select %p106, %s107, %s108
    %p112 = pneg %p106
    %p113 = scmp.eq.s32.totalorder %s19, 1
    %p114 = por %p112, %p113
    %p115 = scmp.ne.s32.totalorder %s107, %s110
    %p116 = scmp.eq.s32.totalorder %s19, 0
    %p117 = por %p115, %p116
    %p118 = scmp.ne.s32.totalorder %s107, %s110
    %p119 = scmp.eq.s32.totalorder %s24, 1
    %p120 = por %p118, %p119
    %p121 = scmp.ne.s32.totalorder %s110, %s111
    %p122 = scmp.eq.s32.totalorder %s24, 0
    %p123 = por %p121, %p122
    %p124 = scmp.ne.s32.totalorder %s110, %s111
    %p125 = scmp.eq.s32.totalorder %s25, 1
    %p126 = por %p124, %p125
    %p128 = scmp.ne.s32.totalorder %s111, %s127
    %p129 = scmp.eq.s32.totalorder %s25, 0
    %p130 = por %p128, %p129
    %s132 = sadd.s32 %s131, 1
    %p135 = scmp.eq.s32.totalorder %s19, 1
    %p136 = scmp.ne.s32.totalorder %s131, %s133
    %p137 = scmp.eq.s32.totalorder %s19, 0
    %p138 = por %p136, %p137
    %p139 = scmp.ne.s32.totalorder %s131, %s133
    %p140 = scmp.eq.s32.totalorder %s24, 1
    %p141 = por %p139, %p140
    %p142 = scmp.ne.s32.totalorder %s133, %s134
    %p143 = scmp.eq.s32.totalorder %s24, 0
    %p144 = por %p142, %p143
    %p145 = scmp.ne.s32.totalorder %s133, %s134
    %p146 = scmp.eq.s32.totalorder %s25, 1
    %p147 = por %p145, %p146
    %p149 = scmp.ne.s32.totalorder %s134, %s148
    %p150 = scmp.eq.s32.totalorder %s25, 0
    %p151 = por %p149, %p150
    %s153 = sadd.s32 %s152, 1
    %p156 = scmp.eq.s32.totalorder %s19, 1
    %p157 = scmp.ne.s32.totalorder %s152, %s154
    %p158 = scmp.eq.s32.totalorder %s19, 0
    %p159 = por %p157, %p158
    %p160 = scmp.ne.s32.totalorder %s152, %s154
    %p161 = scmp.eq.s32.totalorder %s24, 1
    %p162 = por %p160, %p161
    %p163 = scmp.ne.s32.totalorder %s154, %s155
    %p164 = scmp.eq.s32.totalorder %s24, 0
    %p165 = por %p163, %p164
    %p166 = scmp.ne.s32.totalorder %s154, %s155
    %p167 = scmp.eq.s32.totalorder %s25, 1
    %p168 = por %p166, %p167
    %p170 = scmp.ne.s32.totalorder %s155, %s169
    %p171 = scmp.eq.s32.totalorder %s25, 0
    %p172 = por %p170, %p171
    %s174 = sadd.s32 %s173, 1
    %p177 = scmp.eq.s32.totalorder %s19, 1
    %p178 = scmp.ne.s32.totalorder %s173, %s175
    %p179 = scmp.eq.s32.totalorder %s19, 0
    %p180 = por %p178, %p179
    %p181 = scmp.ne.s32.totalorder %s173, %s175
    %p182 = scmp.eq.s32.totalorder %s24, 1
    %p183 = por %p181, %p182
    %p184 = scmp.ne.s32.totalorder %s175, %s176
    %p185 = scmp.eq.s32.totalorder %s24, 0
    %p186 = por %p184, %p185
    %p187 = scmp.ne.s32.totalorder %s175, %s176
    %p188 = scmp.eq.s32.totalorder %s25, 1
    %p189 = por %p187, %p188
    %p191 = scmp.ne.s32.totalorder %s176, %s190
    %p192 = scmp.eq.s32.totalorder %s25, 0
    %p193 = por %p191, %p192
    %s195 = sadd.s32 %s194, 1
    %p198 = scmp.eq.s32.totalorder %s19, 1
    %p199 = scmp.ne.s32.totalorder %s194, %s196
    %p200 = scmp.eq.s32.totalorder %s19, 0
    %p201 = por %p199, %p200
    %p202 = scmp.ne.s32.totalorder %s194, %s196
    %p203 = scmp.eq.s32.totalorder %s24, 1
    %p204 = por %p202, %p203
    %p205 = scmp.ne.s32.totalorder %s196, %s197
    %p206 = scmp.eq.s32.totalorder %s24, 0
    %p207 = por %p205, %p206
    %p208 = scmp.ne.s32.totalorder %s196, %s197
    %p209 = scmp.eq.s32.totalorder %s25, 1
    %p210 = por %p208, %p209
    %p212 = scmp.ne.s32.totalorder %s197, %s211
    %p213 = scmp.eq.s32.totalorder %s25, 0
    %p214 = por %p212, %p213
    %s216 = sadd.s32 %s215, 1
    %p219 = scmp.eq.s32.totalorder %s19, 1
    %p220 = scmp.ne.s32.totalorder %s215, %s217
    %p221 = scmp.eq.s32.totalorder %s19, 0
    %p222 = por %p220, %p221
    %p223 = scmp.ne.s32.totalorder %s215, %s217
    %p224 = scmp.eq.s32.totalorder %s24, 1
    %p225 = por %p223, %p224
    %p226 = scmp.ne.s32.totalorder %s217, %s218
    %p227 = scmp.eq.s32.totalorder %s24, 0
    %p228 = por %p226, %p227
    %p229 = scmp.ne.s32.totalorder %s217, %s218
    %p230 = scmp.eq.s32.totalorder %s25, 1
    %p231 = por %p229, %p230
    %p233 = scmp.ne.s32.totalorder %s218, %s232
    %p234 = scmp.eq.s32.totalorder %s25, 0
    %p235 = por %p233, %p234
    %s237 = sadd.s32 %s236, 1
    %p240 = scmp.eq.s32.totalorder %s19, 1
    %p241 = scmp.ne.s32.totalorder %s236, %s238
    %p242 = scmp.eq.s32.totalorder %s19, 0
    %p243 = por %p241, %p242
    %p244 = scmp.ne.s32.totalorder %s236, %s238
    %p245 = scmp.eq.s32.totalorder %s24, 1
    %p246 = por %p244, %p245
    %p247 = scmp.ne.s32.totalorder %s238, %s239
    %p248 = scmp.eq.s32.totalorder %s24, 0
    %p249 = por %p247, %p248
    %p250 = scmp.ne.s32.totalorder %s238, %s239
    %p251 = scmp.eq.s32.totalorder %s25, 1
    %p252 = por %p250, %p251
    %p254 = scmp.ne.s32.totalorder %s239, %s253
    %p255 = scmp.eq.s32.totalorder %s25, 0
    %p256 = por %p254, %p255
    %s258 = sadd.s32 %s257, 1
    %p261 = scmp.eq.s32.totalorder %s19, 1
    %p262 = scmp.ne.s32.totalorder %s257, %s259
    %p263 = scmp.eq.s32.totalorder %s19, 0
    %p264 = por %p262, %p263
    %p265 = scmp.ne.s32.totalorder %s257, %s259
    %p266 = scmp.eq.s32.totalorder %s24, 1
    %p267 = por %p265, %p266
    %p268 = scmp.ne.s32.totalorder %s259, %s260
    %p269 = scmp.eq.s32.totalorder %s24, 0
    %p270 = por %p268, %p269
    %p271 = scmp.ne.s32.totalorder %s259, %s260
    %p272 = scmp.eq.s32.totalorder %s25, 1
    %p273 = por %p271, %p272
    %p275 = scmp.ne.s32.totalorder %s260, %s274
    %p276 = scmp.eq.s32.totalorder %s25, 0
    %p277 = por %p275, %p276
    %s278 = ssub.s32 %s19, %s26
    %p279 = scmp.eq.s32.totalorder %s278, 0
    %s281 = sadd.s32 %s280, 1
    %s282 = scalar_select %p279, %s280, %s281
    %p285 = pneg %p279
    %p286 = scmp.eq.s32.totalorder %s19, 1
    %p287 = por %p285, %p286
    %p288 = scmp.ne.s32.totalorder %s280, %s283
    %p289 = scmp.eq.s32.totalorder %s19, 0
    %p290 = por %p288, %p289
    %p291 = scmp.ne.s32.totalorder %s280, %s283
    %p292 = scmp.eq.s32.totalorder %s24, 1
    %p293 = por %p291, %p292
    %p294 = scmp.ne.s32.totalorder %s283, %s284
    %p295 = scmp.eq.s32.totalorder %s24, 0
    %p296 = por %p294, %p295
    %p297 = scmp.ne.s32.totalorder %s283, %s284
    %p298 = scmp.eq.s32.totalorder %s25, 1
    %p299 = por %p297, %p298
    %p301 = scmp.ne.s32.totalorder %s284, %s300
    %p302 = scmp.eq.s32.totalorder %s25, 0
    %p303 = por %p301, %p302
    %p304 = scmp.le.s32.totalorder 1, %s19
    %p305 = scmp.lt.s32.totalorder %s19, 3
    %p306 = pnand %p304, %p305
    %p307 = pneg %p306
    // Predicated region
    $region9: #{scandium_weather_forward.5} parent=5 // pred_check
      _
    $region10: #{scandium_weather_forward.5} parent=5 // pred_check_branch
      %309 = sbr.rel (%p306) target = $region12
    $region11: #{scandium_weather_forward.5} parent=5 // pred_region
      %s310 = ssub.s32 %s19, 1
      // Predicated region
      $region13: #{scandium_weather_forward.5} parent=11 // pred_check
        %p311 = pneg %p144
      $region14: #{scandium_weather_forward.5} parent=11 // pred_check_branch
        %313 = sbr.rel (%p311) target = $region16
      $region15: #{scandium_weather_forward.5} parent=11 // pred_region
        _
      $region16: #{scandium_weather_forward.5} parent=11 // pred_fallthru
        _
      // Predicated region
      $region17: #{scandium_weather_forward.5} parent=11 // pred_check
        %p314 = pneg %p165
      $region18: #{scandium_weather_forward.5} parent=11 // pred_check_branch
        %316 = sbr.rel (%p314) target = $region20
      $region19: #{scandium_weather_forward.5} parent=11 // pred_region
        _
      $region20: #{scandium_weather_forward.5} parent=11 // pred_fallthru
        _
      // Predicated region
      $region21: #{scandium_weather_forward.5} parent=11 // pred_check
        %p317 = pneg %p186
      $region22: #{scandium_weather_forward.5} parent=11 // pred_check_branch
        %319 = sbr.rel (%p317) target = $region24
      $region23: #{scandium_weather_forward.5} parent=11 // pred_region
        _
      $region24: #{scandium_weather_forward.5} parent=11 // pred_fallthru
        _
      // Predicated region
      $region25: #{scandium_weather_forward.5} parent=11 // pred_check
        %p320 = pneg %p207
      $region26: #{scandium_weather_forward.5} parent=11 // pred_check_branch
        %322 = sbr.rel (%p320) target = $region28
      $region27: #{scandium_weather_forward.5} parent=11 // pred_region
        _
      $region28: #{scandium_weather_forward.5} parent=11 // pred_fallthru
        _
      // Predicated region
      $region29: #{scandium_weather_forward.5} parent=11 // pred_check
        %p323 = pneg %p228
      $region30: #{scandium_weather_forward.5} parent=11 // pred_check_branch
        %325 = sbr.rel (%p323) target = $region32
      $region31: #{scandium_weather_forward.5} parent=11 // pred_region
        _
      $region32: #{scandium_weather_forward.5} parent=11 // pred_fallthru
        _
      // Predicated region
      $region33: #{scandium_weather_forward.5} parent=11 // pred_check
        %p326 = pneg %p249
      $region34: #{scandium_weather_forward.5} parent=11 // pred_check_branch
        %328 = sbr.rel (%p326) target = $region36
      $region35: #{scandium_weather_forward.5} parent=11 // pred_region
        _
      $region36: #{scandium_weather_forward.5} parent=11 // pred_fallthru
        _
      // Predicated region
      $region37: #{scandium_weather_forward.5} parent=11 // pred_check
        %p329 = pneg %p270
      $region38: #{scandium_weather_forward.5} parent=11 // pred_check_branch
        %331 = sbr.rel (%p329) target = $region40
      $region39: #{scandium_weather_forward.5} parent=11 // pred_region
        _
      $region40: #{scandium_weather_forward.5} parent=11 // pred_fallthru
        _
    $region12: #{scandium_weather_forward.5} parent=5 // pred_fallthru
      _
    %p332 = scmp.lt.s32.totalorder %s19, 2
    // Predicated region
    $region41: #{scandium_weather_forward.5} parent=5 // pred_check
      %p333 = pneg %p332
    $region42: #{scandium_weather_forward.5} parent=5 // pred_check_branch
      %335 = sbr.rel (%p333) target = $region44
    $region43: #{scandium_weather_forward.5} parent=5 // pred_region
      // Predicated region
      $region45: #{scandium_weather_forward.5} parent=43 // pred_check
        %p336 = pneg %p39
      $region46: #{scandium_weather_forward.5} parent=43 // pred_check_branch
        %338 = sbr.rel (%p336) target = $region48
      $region47: #{scandium_weather_forward.5} parent=43 // pred_region
        %p339 = scmp.lt.s32.totalorder %s19, 1
        %s340 = scalar_select %p339, %s19, 1
        %s341 = smul.addr %s340, 4
        %s342 = scalar_lea.vmem %s0, %s341
      $region48: #{scandium_weather_forward.5} parent=43 // pred_fallthru
        _
      // Predicated region
      $region49: #{scandium_weather_forward.5} parent=43 // pred_check
        %p343 = pneg %p65
      $region50: #{scandium_weather_forward.5} parent=43 // pred_check_branch
        %345 = sbr.rel (%p343) target = $region52
      $region51: #{scandium_weather_forward.5} parent=43 // pred_region
        %p346 = scmp.lt.s32.totalorder %s19, 1
        %s347 = scalar_select %p346, %s19, 1
        %s348 = smul.addr %s347, 8
        %s349 = smul.addr %s348, 2
        %s350 = scalar_lea.vmem %s1, %s349
      $region52: #{scandium_weather_forward.5} parent=43 // pred_fallthru
        _
      // Predicated region
      $region53: #{scandium_weather_forward.5} parent=43 // pred_check
        %p351 = pneg %p91
      $region54: #{scandium_weather_forward.5} parent=43 // pred_check_branch
        %353 = sbr.rel (%p351) target = $region56
      $region55: #{scandium_weather_forward.5} parent=43 // pred_region
        %p354 = scmp.lt.s32.totalorder %s19, 1
        %s355 = scalar_select %p354, %s19, 1
        %s356 = smul.addr %s355, 12
        %s357 = smul.addr %s356, 2
        %s358 = scalar_lea.vmem %s2, %s357
      $region56: #{scandium_weather_forward.5} parent=43 // pred_fallthru
        _
      // Predicated region
      $region57: #{scandium_weather_forward.5} parent=43 // pred_check
        %p359 = pneg %p117
      $region58: #{scandium_weather_forward.5} parent=43 // pred_check_branch
        %361 = sbr.rel (%p359) target = $region60
      $region59: #{scandium_weather_forward.5} parent=43 // pred_region
        %p362 = scmp.lt.s32.totalorder %s19, 1
        %s363 = scalar_select %p362, %s19, 1
        %s364 = smul.addr %s363, 4
        %s365 = scalar_lea.vmem %s3, %s364
      $region60: #{scandium_weather_forward.5} parent=43 // pred_fallthru
        _
    $region44: #{scandium_weather_forward.5} parent=5 // pred_fallthru
      _
    %p366 = scmp.le.s32.totalorder 1, %s19
    %p367 = scmp.lt.s32.totalorder %s19, 3
    %p368 = pnand %p366, %p367
    %p369 = pneg %p368
    // Predicated region
    $region61: #{scandium_weather_forward.5} parent=5 // pred_check
      _
    $region62: #{scandium_weather_forward.5} parent=5 // pred_check_branch
      %371 = sbr.rel (%p368) target = $region64
    $region63: #{scandium_weather_forward.5} parent=5 // pred_region
      %s372 = ssub.s32 %s19, 1
      %p373 = scmp.lt.s32.totalorder %s24, 1
      %s374 = scalar_select %p373, %s24, 1
      %s375 = smul.addr %s374, 4
      %s376 = scalar_lea.vmem %s0, %s375
      %p377 = pneg %p45
      %p378 = pneg %p42
      %p379 = scmp.lt.s32.totalorder %s24, 1
      %s380 = scalar_select %p379, %s24, 1
      %s381 = smul.addr %s380, 8
      %s382 = smul.addr %s381, 2
      %s383 = scalar_lea.vmem %s1, %s382
      %p384 = pneg %p71
      %p385 = pneg %p68
      %p386 = scmp.lt.s32.totalorder %s24, 1
      %s387 = scalar_select %p386, %s24, 1
      %s388 = smul.addr %s387, 12
      %s389 = smul.addr %s388, 2
      %s390 = scalar_lea.vmem %s2, %s389
      %p391 = pneg %p97
      %p392 = pneg %p94
      %p393 = scmp.lt.s32.totalorder %s24, 1
      %s394 = scalar_select %p393, %s24, 1
      %s395 = smul.addr %s394, 4
      %s396 = scalar_lea.vmem %s3, %s395
      %p397 = pneg %p123
      %p398 = pneg %p120
      %p399 = pneg %p144
      %p400 = pneg %p141
      %p401 = pneg %p165
      %p402 = pneg %p162
      %p403 = pneg %p186
      %p404 = pneg %p183
      %p405 = pneg %p207
      %p406 = pneg %p204
      %p407 = pneg %p228
      %p408 = pneg %p225
      %p409 = pneg %p249
      %p410 = pneg %p246
      %p411 = pneg %p270
      %p412 = pneg %p267
      %p413 = pneg %p296
      %p414 = pneg %p293
      %p415 = scmp.lt.s32.totalorder %s24, 1
      %s416 = scalar_select %p415, %s24, 1
      %s417 = smul.addr %s416, 4
      %s418 = scalar_lea.vmem %s11, %s417
      %p419 = scmp.lt.s32.totalorder %s24, 1
      %s420 = scalar_select %p419, %s24, 1
      %s421 = smul.addr %s420, 4
      %s422 = scalar_lea.vmem %s0, %s421
      %p423 = scmp.lt.s32.totalorder %s24, 1
      %s424 = scalar_select %p423, %s24, 1
      %s425 = smul.addr %s424, 8
      %s426 = smul.addr %s425, 2
      %s427 = scalar_lea.vmem %s1, %s426
      %p428 = scmp.lt.s32.totalorder %s24, 1
      %s429 = scalar_select %p428, %s24, 1
      %s430 = smul.addr %s429, 12
      %s431 = smul.addr %s430, 2
      %s432 = scalar_lea.vmem %s2, %s431
      %p433 = scmp.lt.s32.totalorder %s24, 1
      %s434 = scalar_select %p433, %s24, 1
      %s435 = smul.addr %s434, 4
      %s436 = scalar_lea.vmem %s3, %s435
      %p437 = scmp.lt.s32.totalorder %s24, 1
      %s438 = scalar_select %p437, %s24, 1
      %s439 = smul.addr %s438, 4
      %s440 = scalar_lea.vmem %s11, %s439
      %v442 = vld [vmem:[%s422] sm:$0xf]
      %v445 = vunpack.c.l.s4 1935823168
      %v446 = vunpack.c.0.s8 %v445
      %v447 = vlaneseq
      %v448 = vshrl.u32 %v447, 7
      %v449 = vsub.s32 %v446, %v448
      %v450 = vrot.slane %v442, %v449
      %v451 = vcombine.high %v450, %v450
      %v453 = vunpack.c.l.s4 1935823168
      %v454 = vunpack.c.0.s8 %v453
      %v455 = vlaneseq
      %v456 = vshrl.u32 %v455, 7
      %v457 = vsub.s32 %v454, %v456
      %v458 = vrot.slane %v450, %v457
      %v460 = vunpack.c.l.s4 1935823168
      %v461 = vunpack.c.0.s8 %v460
      %v462 = vlaneseq
      %v463 = vshrl.u32 %v462, 7
      %v464 = vsub.s32 %v461, %v463
      %v465 = vrot.slane %v451, %v464
      %468 = vst [vmem:[#allocation2] sm:$0x11] %v458
      %vm469 = vcmask 1040384
      %vm470 = vcmask 159748
      %vm471 = vmor %vm470, %vm469
      %472 = vst.msk [vmem:[#allocation2 + $0x8] sm:$0x11] %vm471, %v465
      %v473 = vld [vmem:[%s427] sm:$0xff]
      %v475 = vcombine.high %v473, %v473
      %v477 = vunpack.c.l.s4 1983009808
      %v478 = vunpack.c.0.s8 %v477
      %v479 = vlaneseq
      %v480 = vshrl.u32 %v479, 7
      %v481 = vsub.s32 %v478, %v480
      %v482 = vrot.slane %v473, %v481
      %v484 = vunpack.c.l.s4 1983009808
      %v485 = vunpack.c.0.s8 %v484
      %v486 = vlaneseq
      %v487 = vshrl.u32 %v486, 7
      %v488 = vsub.s32 %v485, %v487
      %v489 = vrot.slane %v475, %v488
      %v490 = vrot.slane %v482, 7
      %v491 = vrot.slane %v489, 7
      %494 = vst [vmem:[#allocation2] sm:$0x66] %v490
      %vm495 = vcmask 1042433
      %vm496 = vcmask 161797
      %vm497 = vmor %vm496, %vm495
      %498 = vst.msk [vmem:[#allocation2 + $0x8] sm:$0x66] %vm497, %v491
      %s499 = scalar_lea.vmem %s427, 8
      %v500 = vld [vmem:[%s499] sm:$0xff]
      %v502 = vcombine.high %v500, %v500
      %v504 = vunpack.c.l.s4 1983009808
      %v505 = vunpack.c.0.s8 %v504
      %v506 = vlaneseq
      %v507 = vshrl.u32 %v506, 7
      %v508 = vsub.s32 %v505, %v507
      %v509 = vrot.slane %v500, %v508
      %v511 = vunpack.c.l.s4 1983009808
      %v512 = vunpack.c.0.s8 %v511
      %v513 = vlaneseq
      %v514 = vshrl.u32 %v513, 7
      %v515 = vsub.s32 %v512, %v514
      %v516 = vrot.slane %v502, %v515
      %v517 = vrot.slane %v509, 5
      %v518 = vrot.slane %v516, 5
      %v519 = vrot.slane %v517, 4
      %v520 = vrot.slane %v518, 4
      %525 = vst [vmem:[#allocation2] sm:$0x88] %v517
      %vm526 = vcmask 1043459
      %vm527 = vcmask 162823
      %vm528 = vmor %vm527, %vm526
      %529 = vst.msk [vmem:[#allocation2 + $0x8] sm:$0x88] %vm528, %v518
      %530 = vst [vmem:[#allocation2 + $0x10] sm:$0x11] %v519
      %531 = vst.msk [vmem:[#allocation2 + $0x18] sm:$0x11] %vm471, %v520
      %v532 = vld [vmem:[%s432] sm:$0xff]
      %v534 = vcombine.high %v532, %v532
      %v536 = vunpack.c.l.s4 1983009808
      %v537 = vunpack.c.0.s8 %v536
      %v538 = vlaneseq
      %v539 = vshrl.u32 %v538, 7
      %v540 = vsub.s32 %v537, %v539
      %v541 = vrot.slane %v532, %v540
      %v543 = vunpack.c.l.s4 1983009808
      %v544 = vunpack.c.0.s8 %v543
      %v545 = vlaneseq
      %v546 = vshrl.u32 %v545, 7
      %v547 = vsub.s32 %v544, %v546
      %v548 = vrot.slane %v534, %v547
      %v549 = vrot.slane %v541, 7
      %v550 = vrot.slane %v548, 7
      %553 = vst [vmem:[#allocation2 + $0x10] sm:$0x66] %v549
      %554 = vst.msk [vmem:[#allocation2 + $0x18] sm:$0x66] %vm497, %v550
      %s555 = scalar_lea.vmem %s432, 8
      %v556 = vld [vmem:[%s555] sm:$0xff]
      %v558 = vcombine.high %v556, %v556
      %v560 = vunpack.c.l.s4 1983009808
      %v561 = vunpack.c.0.s8 %v560
      %v562 = vlaneseq
      %v563 = vshrl.u32 %v562, 7
      %v564 = vsub.s32 %v561, %v563
      %v565 = vrot.slane %v556, %v564
      %v567 = vunpack.c.l.s4 1983009808
      %v568 = vunpack.c.0.s8 %v567
      %v569 = vlaneseq
      %v570 = vshrl.u32 %v569, 7
      %v571 = vsub.s32 %v568, %v570
      %v572 = vrot.slane %v558, %v571
      %v573 = vrot.slane %v565, 5
      %v574 = vrot.slane %v572, 5
      %v575 = vrot.slane %v573, 4
      %v576 = vrot.slane %v574, 4
      %581 = vst [vmem:[#allocation2 + $0x10] sm:$0x88] %v573
      %582 = vst.msk [vmem:[#allocation2 + $0x18] sm:$0x88] %vm528, %v574
      %583 = vst [vmem:[#allocation2 + $0x20] sm:$0x11] %v575
      %584 = vst.msk [vmem:[#allocation2 + $0x28] sm:$0x11] %vm471, %v576
      %v585 = vld [vmem:[%s436] sm:$0xf]
      %v586 = vld [vmem:[%s4] sm:$0xf]
      %588 = vset.pattern.permute.xlu0 0
      %589 = vperm.xlu0 %588, %v585
      %v590 = vpop.permute.xlu0 %589
      %v593 = vlaneseq
      %v594 = vshrl.u32 %v593, 7
      %v595 = vsub.s32 0, %v594
      %v596 = vrot.slane %v586, %v595
      %v597 = vlaneseq
      %v598 = vshrl.u32 %v597, 7
      %v599 = vsub.s32 1, %v598
      %v600 = vrot.slane %v586, %v599
      %v601 = vlaneseq
      %v602 = vshrl.u32 %v601, 7
      %v603 = vsub.s32 2, %v602
      %v604 = vrot.slane %v586, %v603
      %v605 = vlaneseq
      %v606 = vshrl.u32 %v605, 7
      %v607 = vsub.s32 3, %v606
      %v608 = vrot.slane %v586, %v607
      %v613 = vmul.f32 %v590, %v596
      %v614 = vmul.f32 %v590, %v600
      %v615 = vmul.f32 %v590, %v604
      %v616 = vmul.f32 %v590, %v608
      %v617 = vpack.c.bf16 %v613, %v613
      %v618 = vpack.c.bf16 %v614, %v614
      %v619 = vpack.c.bf16 %v615, %v615
      %v620 = vpack.c.bf16 %v616, %v616
      %v625 = vunpack.c.l.b16 %v617
      %v626 = vunpack.c.l.b16 %v618
      %v627 = vunpack.c.l.b16 %v619
      %v628 = vunpack.c.l.b16 %v620
      %v629 = vpack.c.b16 %v626, %v625
      %v630 = vpack.c.b16 %v628, %v627
      %v631 = vrot.slane %v629, 7
      %v632 = vrot.slane %v630, 7
      %635 = vst [vmem:[#allocation2 + $0x20] sm:$0x66] %v631
      %636 = vst.msk [vmem:[#allocation2 + $0x28] sm:$0x66] %vm497, %v632
      %s637 = scalar_lea.vmem %s432, 16
      %v638 = vld [vmem:[%s637] sm:$0xff]
      %v640 = vcombine.high %v638, %v638
      %v642 = vunpack.c.l.s4 1983009808
      %v643 = vunpack.c.0.s8 %v642
      %v644 = vlaneseq
      %v645 = vshrl.u32 %v644, 7
      %v646 = vsub.s32 %v643, %v645
      %v647 = vrot.slane %v638, %v646
      %v649 = vunpack.c.l.s4 1983009808
      %v650 = vunpack.c.0.s8 %v649
      %v651 = vlaneseq
      %v652 = vshrl.u32 %v651, 7
      %v653 = vsub.s32 %v650, %v652
      %v654 = vrot.slane %v640, %v653
      %v655 = vrot.slane %v647, 5
      %v656 = vrot.slane %v654, 5
      %v657 = vrot.slane %v655, 4
      %v658 = vrot.slane %v656, 4
      %663 = vst [vmem:[#allocation2 + $0x20] sm:$0x88] %v655
      %664 = vst.msk [vmem:[#allocation2 + $0x28] sm:$0x88] %vm528, %v656
      %665 = vst [vmem:[#allocation2 + $0x30] sm:$0x11] %v657
      %666 = vst.msk [vmem:[#allocation2 + $0x38] sm:$0x11] %vm471, %v658
      %v667 = vld [vmem:[%s422] sm:$0xf]
      %v670 = vunpack.c.l.s4 1935823168
      %v671 = vunpack.c.0.s8 %v670
      %v672 = vlaneseq
      %v673 = vshrl.u32 %v672, 7
      %v674 = vsub.s32 %v671, %v673
      %v675 = vrot.slane %v667, %v674
      %v676 = vcombine.high %v675, %v675
      %v678 = vunpack.c.l.s4 1935823168
      %v679 = vunpack.c.0.s8 %v678
      %v680 = vlaneseq
      %v681 = vshrl.u32 %v680, 7
      %v682 = vsub.s32 %v679, %v681
      %v683 = vrot.slane %v675, %v682
      %v685 = vunpack.c.l.s4 1935823168
      %v686 = vunpack.c.0.s8 %v685
      %v687 = vlaneseq
      %v688 = vshrl.u32 %v687, 7
      %v689 = vsub.s32 %v686, %v688
      %v690 = vrot.slane %v676, %v689
      %693 = vst [vmem:[#allocation3 + $0x20] sm:$0x11] %v683
      %694 = vst.msk [vmem:[#allocation3 + $0x28] sm:$0x11] %vm471, %v690
      %vm695 = vcmask 338944
      %696 = vst.msk [vmem:[#allocation3] sm:$0xf] %vm695, 0
      %697 = vst.msk [vmem:[#allocation3 + $0x10] sm:$0xf] %vm695, 0
      %vm698 = vcmask 1044304
      %vm699 = vcmask 162820
      %vm700 = vmor %vm699, %vm698
      %701 = vst.msk [vmem:[#allocation3 + $0x8] sm:$0xff] %vm700, 0
      %702 = vst.msk [vmem:[#allocation3 + $0x18] sm:$0xff] %vm700, 0
      %v703 = vld [vmem:[%s422] sm:$0xf]
      %v706 = vunpack.c.l.s4 1935823168
      %v707 = vunpack.c.0.s8 %v706
      %v708 = vlaneseq
      %v709 = vshrl.u32 %v708, 7
      %v710 = vsub.s32 %v707, %v709
      %v711 = vrot.slane %v703, %v710
      %v712 = vcombine.high %v711, %v711
      %v714 = vunpack.c.l.s4 1935823168
      %v715 = vunpack.c.0.s8 %v714
      %v716 = vlaneseq
      %v717 = vshrl.u32 %v716, 7
      %v718 = vsub.s32 %v715, %v717
      %v719 = vrot.slane %v711, %v718
      %v721 = vunpack.c.l.s4 1935823168
      %v722 = vunpack.c.0.s8 %v721
      %v723 = vlaneseq
      %v724 = vshrl.u32 %v723, 7
      %v725 = vsub.s32 %v722, %v724
      %v726 = vrot.slane %v712, %v725
      %729 = vst [vmem:[#allocation4 + $0x10] sm:$0x11] %v719
      %730 = vst.msk [vmem:[#allocation4 + $0x18] sm:$0x11] %vm471, %v726
      %731 = vst.msk [vmem:[#allocation4] sm:$0xf] %vm695, 0
      %732 = vst.msk [vmem:[#allocation4 + $0x8] sm:$0xff] %vm700, 0
      %v733 = vlaneseq
      %vm734 = vcmp.ge.s32.totalorder %v733, 0
      %vm735 = vcmp.lt.s32.totalorder %v733, 42
      %vm736 = vmand %vm734, %vm735
      %737 = vst.msk [vmem:[%s440] sm:$0x1] %vm736, 0.0
      %vm738 = vcmp.ge.s32.totalorder %v733, 106
      %vm739 = vcmp.lt.s32.totalorder %v733, 148
      %vm740 = vmand %vm738, %vm739
      %741 = vst.msk [vmem:[%s440 + $0x2] sm:$0x3] %vm740, 0.0
      %v742 = vld [vmem:[%s5] sm:$0xff]
      %v743 = vld [vmem:[%s5 + $0x8] sm:$0xff]
      %v744 = vld [vmem:[%s6] sm:$0xff]
      %v745 = vld [vmem:[%s6 + $0x8] sm:$0xff]
      %v746 = vld [vmem:[#allocation2] sm:$0xff]
      %v747 = vld [vmem:[#allocation2 + $0x8] sm:$0xf]
      %v748 = vld [vmem:[#allocation2 + $0x10] sm:$0xff]
      %v749 = vld [vmem:[#allocation2 + $0x18] sm:$0xf]
      %v750 = vld [vmem:[#allocation2 + $0x20] sm:$0xff]
      %v751 = vld [vmem:[#allocation2 + $0x28] sm:$0xf]
      %v752 = vld [vmem:[#allocation2 + $0x30] sm:$0x11]
      %v753 = vld [vmem:[#allocation2 + $0x38] sm:$0x1]
      %762 = vrot.lane.b32.xlu0 %v746, 107
      %v763 = vpop.permute.xlu0 %762
      %764 = vrot.lane.b32.xlu0 %v747, 107
      %v765 = vpop.permute.xlu0 %764
      %766 = vrot.lane.b32.xlu0 %v748, 107
      %v767 = vpop.permute.xlu0 %766
      %768 = vrot.lane.b32.xlu0 %v749, 107
      %v769 = vpop.permute.xlu0 %768
      %770 = vrot.lane.b32.xlu0 %v750, 107
      %v771 = vpop.permute.xlu0 %770
      %772 = vrot.lane.b32.xlu0 %v751, 107
      %v773 = vpop.permute.xlu0 %772
      %774 = vrot.lane.b32.xlu0 %v752, 107
      %v775 = vpop.permute.xlu0 %774
      %776 = vrot.lane.b32.xlu0 %v753, 107
      %v777 = vpop.permute.xlu0 %776
      %v778 = vrot.slane %v763, 4
      %v779 = vrot.slane %v765, 4
      %v780 = vrot.slane %v767, 4
      %v781 = vrot.slane %v769, 4
      %v782 = vrot.slane %v771, 4
      %v783 = vrot.slane %v773, 4
      %v784 = vrot.slane %v775, 4
      %v785 = vrot.slane %v777, 4
      %vm786 = vcmask 1043456
      %v787 = vsel %vm786, %v778, %v779
      %vm788 = vcmask 875520
      %v789 = vsel %vm788, %v763, %v787
      %v790 = vsel %vm786, %v780, %v781
      %v791 = vsel %vm788, %v767, %v790
      %v792 = vsel %vm786, %v782, %v783
      %v793 = vsel %vm788, %v771, %v792
      %v794 = vsel %vm786, %v784, %v785
      %v795 = vsel %vm788, %v775, %v794
      %804 = vst [vmem:[#allocation5] sm:$0xff] %v789
      %vm805 = vcmask 519168
      %806 = vst.msk [vmem:[#allocation5 + $0x8] sm:$0xf] %vm805, %v765
      %807 = vst [vmem:[#allocation5 + $0xc] sm:$0xff] %v791
      %808 = vst.msk [vmem:[#allocation5 + $0x14] sm:$0xf] %vm805, %v769
      %809 = vst [vmem:[#allocation5 + $0x18] sm:$0xff] %v793
      %810 = vst.msk [vmem:[#allocation5 + $0x20] sm:$0xf] %vm805, %v773
      %811 = vst [vmem:[#allocation5 + $0x24] sm:$0x11] %v795
      %vm812 = vcmask 516096
      %813 = vst.msk [vmem:[#allocation5 + $0x2c] sm:$0x1] %vm812, %v777
      %v814 = vld [vmem:[#allocation2] sm:$0xff]
      %v815 = vld [vmem:[#allocation2 + $0x8] sm:$0xf]
      %v816 = vld [vmem:[#allocation2 + $0x10] sm:$0xff]
      %v817 = vld [vmem:[#allocation2 + $0x18] sm:$0xf]
      %v818 = vld [vmem:[#allocation2 + $0x20] sm:$0xff]
      %v819 = vld [vmem:[#allocation2 + $0x28] sm:$0xf]
      %v820 = vld [vmem:[#allocation2 + $0x30] sm:$0x11]
      %v821 = vld [vmem:[#allocation2 + $0x38] sm:$0x1]
      %vm830 = vcmask 1040384
      %vm831 = vcmask 1044484
      %vm832 = vmor %vm830, %vm831
      %v833 = vrot.slane %v814, 7
      %v834 = vrot.slane %v815, 7
      %v835 = vrot.slane %v833, 4
      %v836 = vrot.slane %v816, 7
      %v837 = vsel %vm832, %v835, %v836
      %v838 = vrot.slane %v834, 4
      %v839 = vrot.slane %v817, 7
      %v840 = vsel %vm832, %v838, %v839
      %v841 = vrot.slane %v836, 4
      %v842 = vrot.slane %v818, 7
      %v843 = vsel %vm832, %v841, %v842
      %v844 = vrot.slane %v839, 4
      %v845 = vrot.slane %v819, 7
      %v846 = vsel %vm832, %v844, %v845
      %v847 = vrot.slane %v842, 4
      %v848 = vrot.slane %v820, 7
      %v849 = vsel %vm832, %v847, %v848
      %v850 = vrot.slane %v845, 4
      %v851 = vrot.slane %v821, 7
      %v852 = vsel %vm832, %v850, %v851
      %853 = vrot.lane.b32.xlu0 %v833, 106
      %v854 = vpop.permute.xlu0 %853
      %855 = vrot.lane.b32.xlu0 %v834, 106
      %v856 = vpop.permute.xlu0 %855
      %857 = vrot.lane.b32.xlu0 %v837, 106
      %v858 = vpop.permute.xlu0 %857
      %859 = vrot.lane.b32.xlu0 %v840, 106
      %v860 = vpop.permute.xlu0 %859
      %861 = vrot.lane.b32.xlu0 %v843, 106
      %v862 = vpop.permute.xlu0 %861
      %863 = vrot.lane.b32.xlu0 %v846, 106
      %v864 = vpop.permute.xlu0 %863
      %865 = vrot.lane.b32.xlu0 %v849, 106
      %v866 = vpop.permute.xlu0 %865
      %867 = vrot.lane.b32.xlu0 %v852, 106
      %v868 = vpop.permute.xlu0 %867
      %v869 = vrot.slane %v854, 4
      %v870 = vrot.slane %v856, 4
      %v871 = vrot.slane %v858, 4
      %v872 = vrot.slane %v860, 4
      %v873 = vrot.slane %v862, 4
      %v874 = vrot.slane %v864, 4
      %v875 = vrot.slane %v866, 4
      %v876 = vrot.slane %v868, 4
      %v877 = vsel %vm786, %v869, %v870
      %vm878 = vcmask 867328
      %v879 = vsel %vm878, %v854, %v877
      %v880 = vsel %vm786, %v871, %v872
      %v881 = vsel %vm878, %v858, %v880
      %v882 = vsel %vm786, %v873, %v874
      %v883 = vsel %vm878, %v862, %v882
      %v884 = vsel %vm786, %v875, %v876
      %v885 = vsel %vm878, %v866, %v884
      %894 = vst [vmem:[#allocation5 + $0x24] sm:$0xee] %v879
      %vm895 = vcmask 519169
      %896 = vst.msk [vmem:[#allocation5 + $0x2c] sm:$0xe] %vm895, %v856
      %897 = vst [vmem:[#allocation5 + $0x30] sm:$0xff] %v881
      %898 = vst.msk [vmem:[#allocation5 + $0x38] sm:$0xf] %vm805, %v860
      %899 = vst [vmem:[#allocation5 + $0x3c] sm:$0xff] %v883
      %900 = vst.msk [vmem:[#allocation5 + $0x44] sm:$0xf] %vm805, %v864
      %901 = vst [vmem:[#allocation5 + $0x48] sm:$0x33] %v885
      %vm902 = vcmask 517120
      %903 = vst.msk [vmem:[#allocation5 + $0x50] sm:$0x3] %vm902, %v868
      %v904 = vld [vmem:[#allocation2] sm:$0xff]
      %v905 = vld [vmem:[#allocation2 + $0x8] sm:$0xf]
      %v906 = vld [vmem:[#allocation2 + $0x10] sm:$0xff]
      %v907 = vld [vmem:[#allocation2 + $0x18] sm:$0xf]
      %v908 = vld [vmem:[#allocation2 + $0x20] sm:$0xff]
      %v909 = vld [vmem:[#allocation2 + $0x28] sm:$0xf]
      %v910 = vld [vmem:[#allocation2 + $0x30] sm:$0x11]
      %v911 = vld [vmem:[#allocation2 + $0x38] sm:$0x1]
      %vm920 = vcmask 1041408
      %vm921 = vcmask 1045508
      %vm922 = vmor %vm920, %vm921
      %v923 = vrot.slane %v904, 6
      %v924 = vrot.slane %v905, 6
      %v925 = vrot.slane %v923, 4
      %v926 = vrot.slane %v906, 6
      %v927 = vsel %vm922, %v925, %v926
      %v928 = vrot.slane %v924, 4
      %v929 = vrot.slane %v907, 6
      %v930 = vsel %vm922, %v928, %v929
      %v931 = vrot.slane %v926, 4
      %v932 = vrot.slane %v908, 6
      %v933 = vsel %vm922, %v931, %v932
      %v934 = vrot.slane %v929, 4
      %v935 = vrot.slane %v909, 6
      %v936 = vsel %vm922, %v934, %v935
      %v937 = vrot.slane %v932, 4
      %v938 = vrot.slane %v910, 6
      %v939 = vsel %vm922, %v937, %v938
      %v940 = vrot.slane %v935, 4
      %v941 = vrot.slane %v911, 6
      %v942 = vsel %vm922, %v940, %v941
      %943 = vrot.lane.b32.xlu0 %v923, 105
      %v944 = vpop.permute.xlu0 %943
      %945 = vrot.lane.b32.xlu0 %v924, 105
      %v946 = vpop.permute.xlu0 %945
      %947 = vrot.lane.b32.xlu0 %v927, 105
      %v948 = vpop.permute.xlu0 %947
      %949 = vrot.lane.b32.xlu0 %v930, 105
      %v950 = vpop.permute.xlu0 %949
      %951 = vrot.lane.b32.xlu0 %v933, 105
      %v952 = vpop.permute.xlu0 %951
      %953 = vrot.lane.b32.xlu0 %v936, 105
      %v954 = vpop.permute.xlu0 %953
      %955 = vrot.lane.b32.xlu0 %v939, 105
      %v956 = vpop.permute.xlu0 %955
      %957 = vrot.lane.b32.xlu0 %v942, 105
      %v958 = vpop.permute.xlu0 %957
      %v959 = vrot.slane %v944, 4
      %v960 = vrot.slane %v946, 4
      %v961 = vrot.slane %v948, 4
      %v962 = vrot.slane %v950, 4
      %v963 = vrot.slane %v952, 4
      %v964 = vrot.slane %v954, 4
      %v965 = vrot.slane %v956, 4
      %v966 = vrot.slane %v958, 4
      %v967 = vsel %vm786, %v959, %v960
      %vm968 = vcmask 859136
      %v969 = vsel %vm968, %v944, %v967
      %v970 = vsel %vm786, %v961, %v962
      %v971 = vsel %vm968, %v948, %v970
      %v972 = vsel %vm786, %v963, %v964
      %v973 = vsel %vm968, %v952, %v972
      %v974 = vsel %vm786, %v965, %v966
      %v975 = vsel %vm968, %v956, %v974
      %984 = vst [vmem:[#allocation5 + $0x48] sm:$0xcc] %v969
      %vm985 = vcmask 519170
      %986 = vst.msk [vmem:[#allocation5 + $0x50] sm:$0xc] %vm985, %v946
      %987 = vst [vmem:[#allocation5 + $0x54] sm:$0xff] %v971
      %988 = vst.msk [vmem:[#allocation5 + $0x5c] sm:$0xf] %vm805, %v950
      %989 = vst [vmem:[#allocation5 + $0x60] sm:$0xff] %v973
      %990 = vst.msk [vmem:[#allocation5 + $0x68] sm:$0xf] %vm805, %v954
      %991 = vst [vmem:[#allocation5 + $0x6c] sm:$0x77] %v975
      %vm992 = vcmask 518144
      %993 = vst.msk [vmem:[#allocation5 + $0x74] sm:$0x7] %vm992, %v958
      %v994 = vld [vmem:[#allocation2] sm:$0xff]
      %v995 = vld [vmem:[#allocation2 + $0x8] sm:$0xf]
      %v996 = vld [vmem:[#allocation2 + $0x10] sm:$0xff]
      %v997 = vld [vmem:[#allocation2 + $0x18] sm:$0xf]
      %v998 = vld [vmem:[#allocation2 + $0x20] sm:$0xff]
      %v999 = vld [vmem:[#allocation2 + $0x28] sm:$0xf]
      %v1000 = vld [vmem:[#allocation2 + $0x30] sm:$0x11]
      %v1001 = vld [vmem:[#allocation2 + $0x38] sm:$0x1]
      %vm1010 = vcmask 1042432
      %vm1011 = vcmask 1046532
      %vm1012 = vmor %vm1010, %vm1011
      %v1013 = vrot.slane %v994, 5
      %v1014 = vrot.slane %v995, 5
      %v1015 = vrot.slane %v1013, 4
      %v1016 = vrot.slane %v996, 5
      %v1017 = vsel %vm1012, %v1015, %v1016
      %v1018 = vrot.slane %v1014, 4
      %v1019 = vrot.slane %v997, 5
      %v1020 = vsel %vm1012, %v1018, %v1019
      %v1021 = vrot.slane %v1016, 4
      %v1022 = vrot.slane %v998, 5
      %v1023 = vsel %vm1012, %v1021, %v1022
      %v1024 = vrot.slane %v1019, 4
      %v1025 = vrot.slane %v999, 5
      %v1026 = vsel %vm1012, %v1024, %v1025
      %v1027 = vrot.slane %v1022, 4
      %v1028 = vrot.slane %v1000, 5
      %v1029 = vsel %vm1012, %v1027, %v1028
      %v1030 = vrot.slane %v1025, 4
      %v1031 = vrot.slane %v1001, 5
      %v1032 = vsel %vm1012, %v1030, %v1031
      %1033 = vrot.lane.b32.xlu0 %v1013, 87
      %v1034 = vpop.permute.xlu0 %1033
      %1035 = vrot.lane.b32.xlu0 %v1014, 87
      %v1036 = vpop.permute.xlu0 %1035
      %1037 = vrot.lane.b32.xlu0 %v1017, 87
      %v1038 = vpop.permute.xlu0 %1037
      %1039 = vrot.lane.b32.xlu0 %v1020, 87
      %v1040 = vpop.permute.xlu0 %1039
      %1041 = vrot.lane.b32.xlu0 %v1023, 87
      %v1042 = vpop.permute.xlu0 %1041
      %1043 = vrot.lane.b32.xlu0 %v1026, 87
      %v1044 = vpop.permute.xlu0 %1043
      %1045 = vrot.lane.b32.xlu0 %v1029, 87
      %v1046 = vpop.permute.xlu0 %1045
      %1047 = vrot.lane.b32.xlu0 %v1032, 87
      %v1048 = vpop.permute.xlu0 %1047
      %v1049 = vrot.slane %v1034, 4
      %v1050 = vrot.slane %v1036, 4
      %v1051 = vrot.slane %v1038, 4
      %v1052 = vrot.slane %v1040, 4
      %v1053 = vrot.slane %v1042, 4
      %v1054 = vrot.slane %v1044, 4
      %v1055 = vrot.slane %v1046, 4
      %v1056 = vrot.slane %v1048, 4
      %v1057 = vsel %vm786, %v1049, %v1050
      %vm1058 = vcmask 711680
      %v1059 = vsel %vm1058, %v1034, %v1057
      %v1060 = vsel %vm786, %v1051, %v1052
      %v1061 = vsel %vm1058, %v1038, %v1060
      %v1062 = vsel %vm786, %v1053, %v1054
      %v1063 = vsel %vm1058, %v1042, %v1062
      %v1064 = vsel %vm786, %v1055, %v1056
      %v1065 = vsel %vm1058, %v1046, %v1064
      %1074 = vst [vmem:[#allocation5 + $0x6c] sm:$0x88] %v1059
      %vm1075 = vcmask 519171
      %1076 = vst.msk [vmem:[#allocation5 + $0x74] sm:$0x8] %vm1075, %v1036
      %1077 = vst [vmem:[#allocation5 + $0x78] sm:$0xff] %v1061
      %1078 = vst.msk [vmem:[#allocation5 + $0x80] sm:$0xf] %vm805, %v1040
      %1079 = vst [vmem:[#allocation5 + $0x84] sm:$0xff] %v1063
      %1080 = vst.msk [vmem:[#allocation5 + $0x8c] sm:$0xf] %vm805, %v1044
      %1081 = vst [vmem:[#allocation5 + $0x90] sm:$0xff] %v1065
      %1082 = vst.msk [vmem:[#allocation5 + $0x98] sm:$0xf] %vm805, %v1048
      %v1083 = vld [vmem:[#allocation2] sm:$0xff]
      %v1084 = vld [vmem:[#allocation2 + $0x8] sm:$0xf]
      %v1085 = vld [vmem:[#allocation2 + $0x10] sm:$0xff]
      %v1086 = vld [vmem:[#allocation2 + $0x18] sm:$0xf]
      %v1087 = vld [vmem:[#allocation2 + $0x20] sm:$0xff]
      %v1088 = vld [vmem:[#allocation2 + $0x28] sm:$0xf]
      %v1089 = vld [vmem:[#allocation2 + $0x30] sm:$0x11]
      %v1090 = vld [vmem:[#allocation2 + $0x38] sm:$0x1]
      %1099 = vrot.lane.b32.xlu0 %v1083, 86
      %v1100 = vpop.permute.xlu0 %1099
      %1101 = vrot.lane.b32.xlu0 %v1084, 86
      %v1102 = vpop.permute.xlu0 %1101
      %1103 = vrot.lane.b32.xlu0 %v1085, 86
      %v1104 = vpop.permute.xlu0 %1103
      %1105 = vrot.lane.b32.xlu0 %v1086, 86
      %v1106 = vpop.permute.xlu0 %1105
      %1107 = vrot.lane.b32.xlu0 %v1087, 86
      %v1108 = vpop.permute.xlu0 %1107
      %1109 = vrot.lane.b32.xlu0 %v1088, 86
      %v1110 = vpop.permute.xlu0 %1109
      %1111 = vrot.lane.b32.xlu0 %v1089, 86
      %v1112 = vpop.permute.xlu0 %1111
      %1113 = vrot.lane.b32.xlu0 %v1090, 86
      %v1114 = vpop.permute.xlu0 %1113
      %v1115 = vrot.slane %v1100, 4
      %v1116 = vrot.slane %v1102, 4
      %v1117 = vrot.slane %v1104, 4
      %v1118 = vrot.slane %v1106, 4
      %v1119 = vrot.slane %v1108, 4
      %v1120 = vrot.slane %v1110, 4
      %v1121 = vrot.slane %v1112, 4
      %v1122 = vrot.slane %v1114, 4
      %v1123 = vsel %vm786, %v1115, %v1116
      %vm1124 = vcmask 703488
      %v1125 = vsel %vm1124, %v1100, %v1123
      %v1126 = vsel %vm786, %v1117, %v1118
      %v1127 = vsel %vm1124, %v1104, %v1126
      %v1128 = vsel %vm786, %v1119, %v1120
      %v1129 = vsel %vm1124, %v1108, %v1128
      %v1130 = vsel %vm786, %v1121, %v1122
      %v1131 = vsel %vm1124, %v1112, %v1130
      %1140 = vst [vmem:[#allocation5 + $0x9c] sm:$0xff] %v1125
      %1141 = vst.msk [vmem:[#allocation5 + $0xa4] sm:$0xf] %vm805, %v1102
      %1142 = vst [vmem:[#allocation5 + $0xa8] sm:$0xff] %v1127
      %1143 = vst.msk [vmem:[#allocation5 + $0xb0] sm:$0xf] %vm805, %v1106
      %1144 = vst [vmem:[#allocation5 + $0xb4] sm:$0xff] %v1129
      %1145 = vst.msk [vmem:[#allocation5 + $0xbc] sm:$0xf] %vm805, %v1110
      %1146 = vst [vmem:[#allocation5 + $0xc0] sm:$0x11] %v1131
      %1147 = vst.msk [vmem:[#allocation5 + $0xc8] sm:$0x1] %vm812, %v1114
      %v1148 = vld [vmem:[#allocation2] sm:$0xff]
      %v1149 = vld [vmem:[#allocation2 + $0x8] sm:$0xf]
      %v1150 = vld [vmem:[#allocation2 + $0x10] sm:$0xff]
      %v1151 = vld [vmem:[#allocation2 + $0x18] sm:$0xf]
      %v1152 = vld [vmem:[#allocation2 + $0x20] sm:$0xff]
      %v1153 = vld [vmem:[#allocation2 + $0x28] sm:$0xf]
      %v1154 = vld [vmem:[#allocation2 + $0x30] sm:$0x11]
      %v1155 = vld [vmem:[#allocation2 + $0x38] sm:$0x1]
      %v1164 = vrot.slane %v1148, 7
      %v1165 = vrot.slane %v1149, 7
      %v1166 = vrot.slane %v1164, 4
      %v1167 = vrot.slane %v1150, 7
      %v1168 = vsel %vm832, %v1166, %v1167
      %v1169 = vrot.slane %v1165, 4
      %v1170 = vrot.slane %v1151, 7
      %v1171 = vsel %vm832, %v1169, %v1170
      %v1172 = vrot.slane %v1167, 4
      %v1173 = vrot.slane %v1152, 7
      %v1174 = vsel %vm832, %v1172, %v1173
      %v1175 = vrot.slane %v1170, 4
      %v1176 = vrot.slane %v1153, 7
      %v1177 = vsel %vm832, %v1175, %v1176
      %v1178 = vrot.slane %v1173, 4
      %v1179 = vrot.slane %v1154, 7
      %v1180 = vsel %vm832, %v1178, %v1179
      %v1181 = vrot.slane %v1176, 4
      %v1182 = vrot.slane %v1155, 7
      %v1183 = vsel %vm832, %v1181, %v1182
      %1184 = vrot.lane.b32.xlu0 %v1164, 85
      %v1185 = vpop.permute.xlu0 %1184
      %1186 = vrot.lane.b32.xlu0 %v1165, 85
      %v1187 = vpop.permute.xlu0 %1186
      %1188 = vrot.lane.b32.xlu0 %v1168, 85
      %v1189 = vpop.permute.xlu0 %1188
      %1190 = vrot.lane.b32.xlu0 %v1171, 85
      %v1191 = vpop.permute.xlu0 %1190
      %1192 = vrot.lane.b32.xlu0 %v1174, 85
      %v1193 = vpop.permute.xlu0 %1192
      %1194 = vrot.lane.b32.xlu0 %v1177, 85
      %v1195 = vpop.permute.xlu0 %1194
      %1196 = vrot.lane.b32.xlu0 %v1180, 85
      %v1197 = vpop.permute.xlu0 %1196
      %1198 = vrot.lane.b32.xlu0 %v1183, 85
      %v1199 = vpop.permute.xlu0 %1198
      %v1200 = vrot.slane %v1185, 4
      %v1201 = vrot.slane %v1187, 4
      %v1202 = vrot.slane %v1189, 4
      %v1203 = vrot.slane %v1191, 4
      %v1204 = vrot.slane %v1193, 4
      %v1205 = vrot.slane %v1195, 4
      %v1206 = vrot.slane %v1197, 4
      %v1207 = vrot.slane %v1199, 4
      %v1208 = vsel %vm786, %v1200, %v1201
      %vm1209 = vcmask 695296
      %v1210 = vsel %vm1209, %v1185, %v1208
      %v1211 = vsel %vm786, %v1202, %v1203
      %v1212 = vsel %vm1209, %v1189, %v1211
      %v1213 = vsel %vm786, %v1204, %v1205
      %v1214 = vsel %vm1209, %v1193, %v1213
      %v1215 = vsel %vm786, %v1206, %v1207
      %v1216 = vsel %vm1209, %v1197, %v1215
      %1225 = vst [vmem:[#allocation5 + $0xc0] sm:$0xee] %v1210
      %1226 = vst.msk [vmem:[#allocation5 + $0xc8] sm:$0xe] %vm895, %v1187
      %1227 = vst [vmem:[#allocation5 + $0xcc] sm:$0xff] %v1212
      %1228 = vst.msk [vmem:[#allocation5 + $0xd4] sm:$0xf] %vm805, %v1191
      %1229 = vst [vmem:[#allocation5 + $0xd8] sm:$0xff] %v1214
      %1230 = vst.msk [vmem:[#allocation5 + $0xe0] sm:$0xf] %vm805, %v1195
      %1231 = vst [vmem:[#allocation5 + $0xe4] sm:$0x33] %v1216
      %1232 = vst.msk [vmem:[#allocation5 + $0xec] sm:$0x3] %vm902, %v1199
      %v1233 = vld [vmem:[#allocation2] sm:$0xff]
      %v1234 = vld [vmem:[#allocation2 + $0x8] sm:$0xf]
      %v1235 = vld [vmem:[#allocation2 + $0x10] sm:$0xff]
      %v1236 = vld [vmem:[#allocation2 + $0x18] sm:$0xf]
      %v1237 = vld [vmem:[#allocation2 + $0x20] sm:$0xff]
      %v1238 = vld [vmem:[#allocation2 + $0x28] sm:$0xf]
      %v1239 = vld [vmem:[#allocation2 + $0x30] sm:$0x11]
      %v1240 = vld [vmem:[#allocation2 + $0x38] sm:$0x1]
      %v1249 = vrot.slane %v1233, 6
      %v1250 = vrot.slane %v1234, 6
      %v1251 = vrot.slane %v1249, 4
      %v1252 = vrot.slane %v1235, 6
      %v1253 = vsel %vm922, %v1251, %v1252
      %v1254 = vrot.slane %v1250, 4
      %v1255 = vrot.slane %v1236, 6
      %v1256 = vsel %vm922, %v1254, %v1255
      %v1257 = vrot.slane %v1252, 4
      %v1258 = vrot.slane %v1237, 6
      %v1259 = vsel %vm922, %v1257, %v1258
      %v1260 = vrot.slane %v1255, 4
      %v1261 = vrot.slane %v1238, 6
      %v1262 = vsel %vm922, %v1260, %v1261
      %v1263 = vrot.slane %v1258, 4
      %v1264 = vrot.slane %v1239, 6
      %v1265 = vsel %vm922, %v1263, %v1264
      %v1266 = vrot.slane %v1261, 4
      %v1267 = vrot.slane %v1240, 6
      %v1268 = vsel %vm922, %v1266, %v1267
      %1269 = vrot.lane.b32.xlu0 %v1249, 67
      %v1270 = vpop.permute.xlu0 %1269
      %1271 = vrot.lane.b32.xlu0 %v1250, 67
      %v1272 = vpop.permute.xlu0 %1271
      %1273 = vrot.lane.b32.xlu0 %v1253, 67
      %v1274 = vpop.permute.xlu0 %1273
      %1275 = vrot.lane.b32.xlu0 %v1256, 67
      %v1276 = vpop.permute.xlu0 %1275
      %1277 = vrot.lane.b32.xlu0 %v1259, 67
      %v1278 = vpop.permute.xlu0 %1277
      %1279 = vrot.lane.b32.xlu0 %v1262, 67
      %v1280 = vpop.permute.xlu0 %1279
      %1281 = vrot.lane.b32.xlu0 %v1265, 67
      %v1282 = vpop.permute.xlu0 %1281
      %1283 = vrot.lane.b32.xlu0 %v1268, 67
      %v1284 = vpop.permute.xlu0 %1283
      %v1285 = vrot.slane %v1270, 4
      %v1286 = vrot.slane %v1272, 4
      %v1287 = vrot.slane %v1274, 4
      %v1288 = vrot.slane %v1276, 4
      %v1289 = vrot.slane %v1278, 4
      %v1290 = vrot.slane %v1280, 4
      %v1291 = vrot.slane %v1282, 4
      %v1292 = vrot.slane %v1284, 4
      %v1293 = vsel %vm786, %v1285, %v1286
      %vm1294 = vcmask 547840
      %v1295 = vsel %vm1294, %v1270, %v1293
      %v1296 = vsel %vm786, %v1287, %v1288
      %v1297 = vsel %vm1294, %v1274, %v1296
      %v1298 = vsel %vm786, %v1289, %v1290
      %v1299 = vsel %vm1294, %v1278, %v1298
      %v1300 = vsel %vm786, %v1291, %v1292
      %v1301 = vsel %vm1294, %v1282, %v1300
      %1310 = vst [vmem:[#allocation5 + $0xe4] sm:$0xcc] %v1295
      %1311 = vst.msk [vmem:[#allocation5 + $0xec] sm:$0xc] %vm985, %v1272
      %1312 = vst [vmem:[#allocation5 + $0xf0] sm:$0xff] %v1297
      %1313 = vst.msk [vmem:[#allocation5 + $0xf8] sm:$0xf] %vm805, %v1276
      %1314 = vst [vmem:[#allocation5 + $0xfc] sm:$0xff] %v1299
      %1315 = vst.msk [vmem:[#allocation5 + $0x104] sm:$0xf] %vm805, %v1280
      %1316 = vst [vmem:[#allocation5 + $0x108] sm:$0x77] %v1301
      %1317 = vst.msk [vmem:[#allocation5 + $0x110] sm:$0x7] %vm992, %v1284
      %v1318 = vld [vmem:[#allocation2] sm:$0xff]
      %v1319 = vld [vmem:[#allocation2 + $0x8] sm:$0xf]
      %v1320 = vld [vmem:[#allocation2 + $0x10] sm:$0xff]
      %v1321 = vld [vmem:[#allocation2 + $0x18] sm:$0xf]
      %v1322 = vld [vmem:[#allocation2 + $0x20] sm:$0xff]
      %v1323 = vld [vmem:[#allocation2 + $0x28] sm:$0xf]
      %v1324 = vld [vmem:[#allocation2 + $0x30] sm:$0x11]
      %v1325 = vld [vmem:[#allocation2 + $0x38] sm:$0x1]
      %v1334 = vrot.slane %v1318, 5
      %v1335 = vrot.slane %v1319, 5
      %v1336 = vrot.slane %v1334, 4
      %v1337 = vrot.slane %v1320, 5
      %v1338 = vsel %vm1012, %v1336, %v1337
      %v1339 = vrot.slane %v1335, 4
      %v1340 = vrot.slane %v1321, 5
      %v1341 = vsel %vm1012, %v1339, %v1340
      %v1342 = vrot.slane %v1337, 4
      %v1343 = vrot.slane %v1322, 5
      %v1344 = vsel %vm1012, %v1342, %v1343
      %v1345 = vrot.slane %v1340, 4
      %v1346 = vrot.slane %v1323, 5
      %v1347 = vsel %vm1012, %v1345, %v1346
      %v1348 = vrot.slane %v1343, 4
      %v1349 = vrot.slane %v1324, 5
      %v1350 = vsel %vm1012, %v1348, %v1349
      %v1351 = vrot.slane %v1346, 4
      %v1352 = vrot.slane %v1325, 5
      %v1353 = vsel %vm1012, %v1351, %v1352
      %1354 = vrot.lane.b32.xlu0 %v1334, 66
      %v1355 = vpop.permute.xlu0 %1354
      %1356 = vrot.lane.b32.xlu0 %v1335, 66
      %v1357 = vpop.permute.xlu0 %1356
      %1358 = vrot.lane.b32.xlu0 %v1338, 66
      %v1359 = vpop.permute.xlu0 %1358
      %1360 = vrot.lane.b32.xlu0 %v1341, 66
      %v1361 = vpop.permute.xlu0 %1360
      %1362 = vrot.lane.b32.xlu0 %v1344, 66
      %v1363 = vpop.permute.xlu0 %1362
      %1364 = vrot.lane.b32.xlu0 %v1347, 66
      %v1365 = vpop.permute.xlu0 %1364
      %1366 = vrot.lane.b32.xlu0 %v1350, 66
      %v1367 = vpop.permute.xlu0 %1366
      %1368 = vrot.lane.b32.xlu0 %v1353, 66
      %v1369 = vpop.permute.xlu0 %1368
      %v1370 = vrot.slane %v1355, 4
      %v1371 = vrot.slane %v1357, 4
      %v1372 = vrot.slane %v1359, 4
      %v1373 = vrot.slane %v1361, 4
      %v1374 = vrot.slane %v1363, 4
      %v1375 = vrot.slane %v1365, 4
      %v1376 = vrot.slane %v1367, 4
      %v1377 = vrot.slane %v1369, 4
      %v1378 = vsel %vm786, %v1370, %v1371
      %vm1379 = vcmask 539648
      %v1380 = vsel %vm1379, %v1355, %v1378
      %v1381 = vsel %vm786, %v1372, %v1373
      %v1382 = vsel %vm1379, %v1359, %v1381
      %v1383 = vsel %vm786, %v1374, %v1375
      %v1384 = vsel %vm1379, %v1363, %v1383
      %v1385 = vsel %vm786, %v1376, %v1377
      %v1386 = vsel %vm1379, %v1367, %v1385
      %1395 = vst [vmem:[#allocation5 + $0x108] sm:$0x88] %v1380
      %1396 = vst.msk [vmem:[#allocation5 + $0x110] sm:$0x8] %vm1075, %v1357
      %1397 = vst [vmem:[#allocation5 + $0x114] sm:$0xff] %v1382
      %1398 = vst.msk [vmem:[#allocation5 + $0x11c] sm:$0xf] %vm805, %v1361
      %1399 = vst [vmem:[#allocation5 + $0x120] sm:$0xff] %v1384
      %1400 = vst.msk [vmem:[#allocation5 + $0x128] sm:$0xf] %vm805, %v1365
      %1401 = vst [vmem:[#allocation5 + $0x12c] sm:$0xff] %v1386
      %1402 = vst.msk [vmem:[#allocation5 + $0x134] sm:$0xf] %vm805, %v1369
      %v1403 = vld [vmem:[#allocation2] sm:$0xff]
      %v1404 = vld [vmem:[#allocation2 + $0x8] sm:$0xf]
      %v1405 = vld [vmem:[#allocation2 + $0x10] sm:$0xff]
      %v1406 = vld [vmem:[#allocation2 + $0x18] sm:$0xf]
      %v1407 = vld [vmem:[#allocation2 + $0x20] sm:$0xff]
      %v1408 = vld [vmem:[#allocation2 + $0x28] sm:$0xf]
      %v1409 = vld [vmem:[#allocation2 + $0x30] sm:$0x11]
      %v1410 = vld [vmem:[#allocation2 + $0x38] sm:$0x1]
      %1419 = vrot.lane.b32.xlu0 %v1403, 65
      %v1420 = vpop.permute.xlu0 %1419
      %1421 = vrot.lane.b32.xlu0 %v1404, 65
      %v1422 = vpop.permute.xlu0 %1421
      %1423 = vrot.lane.b32.xlu0 %v1405, 65
      %v1424 = vpop.permute.xlu0 %1423
      %1425 = vrot.lane.b32.xlu0 %v1406, 65
      %v1426 = vpop.permute.xlu0 %1425
      %1427 = vrot.lane.b32.xlu0 %v1407, 65
      %v1428 = vpop.permute.xlu0 %1427
      %1429 = vrot.lane.b32.xlu0 %v1408, 65
      %v1430 = vpop.permute.xlu0 %1429
      %1431 = vrot.lane.b32.xlu0 %v1409, 65
      %v1432 = vpop.permute.xlu0 %1431
      %1433 = vrot.lane.b32.xlu0 %v1410, 65
      %v1434 = vpop.permute.xlu0 %1433
      %v1435 = vrot.slane %v1420, 4
      %v1436 = vrot.slane %v1422, 4
      %v1437 = vrot.slane %v1424, 4
      %v1438 = vrot.slane %v1426, 4
      %v1439 = vrot.slane %v1428, 4
      %v1440 = vrot.slane %v1430, 4
      %v1441 = vrot.slane %v1432, 4
      %v1442 = vrot.slane %v1434, 4
      %v1443 = vsel %vm786, %v1435, %v1436
      %vm1444 = vcmask 531456
      %v1445 = vsel %vm1444, %v1420, %v1443
      %v1446 = vsel %vm786, %v1437, %v1438
      %v1447 = vsel %vm1444, %v1424, %v1446
      %v1448 = vsel %vm786, %v1439, %v1440
      %v1449 = vsel %vm1444, %v1428, %v1448
      %v1450 = vsel %vm786, %v1441, %v1442
      %v1451 = vsel %vm1444, %v1432, %v1450
      %1460 = vst [vmem:[#allocation5 + $0x138] sm:$0xff] %v1445
      %1461 = vst.msk [vmem:[#allocation5 + $0x140] sm:$0xf] %vm805, %v1422
      %1462 = vst [vmem:[#allocation5 + $0x144] sm:$0xff] %v1447
      %1463 = vst.msk [vmem:[#allocation5 + $0x14c] sm:$0xf] %vm805, %v1426
      %1464 = vst [vmem:[#allocation5 + $0x150] sm:$0xff] %v1449
      %1465 = vst.msk [vmem:[#allocation5 + $0x158] sm:$0xf] %vm805, %v1430
      %1466 = vst [vmem:[#allocation5 + $0x15c] sm:$0x11] %v1451
      %1467 = vst.msk [vmem:[#allocation5 + $0x164] sm:$0x1] %vm812, %v1434
      %v1468 = vld [vmem:[#allocation5] sm:$0xff]
      %v1469 = vld [vmem:[#allocation5 + $0x8] sm:$0xf]
      %v1470 = vld [vmem:[#allocation5 + $0xc] sm:$0xff]
      %v1471 = vld [vmem:[#allocation5 + $0x14] sm:$0xf]
      %v1472 = vld [vmem:[#allocation5 + $0x18] sm:$0xff]
      %v1473 = vld [vmem:[#allocation5 + $0x20] sm:$0xf]
      %v1474 = vld [vmem:[#allocation5 + $0x24] sm:$0xff]
      %v1475 = vld [vmem:[#allocation5 + $0x2c] sm:$0xf]
      %v1476 = vld [vmem:[#allocation5 + $0x30] sm:$0xff]
      %v1477 = vld [vmem:[#allocation5 + $0x38] sm:$0xf]
      %v1478 = vld [vmem:[#allocation5 + $0x3c] sm:$0xff]
      %v1479 = vld [vmem:[#allocation5 + $0x44] sm:$0xf]
      %v1480 = vld [vmem:[#allocation5 + $0x48] sm:$0xff]
      %v1481 = vld [vmem:[#allocation5 + $0x50] sm:$0xf]
      %v1482 = vld [vmem:[#allocation5 + $0x54] sm:$0xff]
      %v1483 = vld [vmem:[#allocation5 + $0x5c] sm:$0xf]
      %v1484 = vld [vmem:[#allocation5 + $0x60] sm:$0xff]
      %v1485 = vld [vmem:[#allocation5 + $0x68] sm:$0xf]
      %v1486 = vld [vmem:[#allocation5 + $0x6c] sm:$0xff]
      %v1487 = vld [vmem:[#allocation5 + $0x74] sm:$0xf]
      %v1488 = vld [vmem:[#allocation5 + $0x78] sm:$0xff]
      %v1489 = vld [vmem:[#allocation5 + $0x80] sm:$0xf]
      %v1490 = vld [vmem:[#allocation5 + $0x84] sm:$0xff]
      %v1491 = vld [vmem:[#allocation5 + $0x8c] sm:$0xf]
      %v1492 = vld [vmem:[#allocation5 + $0x90] sm:$0xff]
      %v1493 = vld [vmem:[#allocation5 + $0x98] sm:$0xf]
      %v1494 = vld [vmem:[#allocation5 + $0x9c] sm:$0xff]
      %v1495 = vld [vmem:[#allocation5 + $0xa4] sm:$0xf]
      %v1496 = vld [vmem:[#allocation5 + $0xa8] sm:$0xff]
      %v1497 = vld [vmem:[#allocation5 + $0xb0] sm:$0xf]
      %v1498 = vld [vmem:[#allocation5 + $0xb4] sm:$0xff]
      %v1499 = vld [vmem:[#allocation5 + $0xbc] sm:$0xf]
      %v1500 = vld [vmem:[#allocation5 + $0xc0] sm:$0xff]
      %v1501 = vld [vmem:[#allocation5 + $0xc8] sm:$0xf]
      %v1502 = vld [vmem:[#allocation5 + $0xcc] sm:$0xff]
      %v1503 = vld [vmem:[#allocation5 + $0xd4] sm:$0xf]
      %v1504 = vld [vmem:[#allocation5 + $0xd8] sm:$0xff]
      %v1505 = vld [vmem:[#allocation5 + $0xe0] sm:$0xf]
      %v1506 = vld [vmem:[#allocation5 + $0xe4] sm:$0xff]
      %v1507 = vld [vmem:[#allocation5 + $0xec] sm:$0xf]
      %v1508 = vld [vmem:[#allocation5 + $0xf0] sm:$0xff]
      %v1509 = vld [vmem:[#allocation5 + $0xf8] sm:$0xf]
      %v1510 = vld [vmem:[#allocation5 + $0xfc] sm:$0xff]
      %v1511 = vld [vmem:[#allocation5 + $0x104] sm:$0xf]
      %v1512 = vld [vmem:[#allocation5 + $0x108] sm:$0xff]
      %v1513 = vld [vmem:[#allocation5 + $0x110] sm:$0xf]
      %v1514 = vld [vmem:[#allocation5 + $0x114] sm:$0xff]
      %v1515 = vld [vmem:[#allocation5 + $0x11c] sm:$0xf]
      %v1516 = vld [vmem:[#allocation5 + $0x120] sm:$0xff]
      %v1517 = vld [vmem:[#allocation5 + $0x128] sm:$0xf]
      %v1518 = vld [vmem:[#allocation5 + $0x12c] sm:$0xff]
      %v1519 = vld [vmem:[#allocation5 + $0x134] sm:$0xf]
      %v1520 = vld [vmem:[#allocation5 + $0x138] sm:$0xff]
      %v1521 = vld [vmem:[#allocation5 + $0x140] sm:$0xf]
      %v1522 = vld [vmem:[#allocation5 + $0x144] sm:$0xff]
      %v1523 = vld [vmem:[#allocation5 + $0x14c] sm:$0xf]
      %v1524 = vld [vmem:[#allocation5 + $0x150] sm:$0xff]
      %v1525 = vld [vmem:[#allocation5 + $0x158] sm:$0xf]
      %v1526 = vld [vmem:[#allocation5 + $0x15c] sm:$0x11]
      %v1527 = vld [vmem:[#allocation5 + $0x164] sm:$0x1]
      %1529 = vset.pattern.permute.xlu0 0
      %1530 = vperm.xlu0 %1529, %v744
      %v1531 = vpop.permute.xlu0 %1530
      %1534 = vset.pattern.permute.xlu0 0
      %1535 = vperm.xlu0 %1534, %v745
      %v1536 = vpop.permute.xlu0 %1535
      %v1540 = vunpack.c.l.b16 %v742
      %v1541 = vunpack.c.h.b16 %v742
      %v1542 = vunpack.c.l.b16 %v743
      %v1543 = vunpack.c.h.b16 %v743
      %v1544 = vpack.c.b16 %v1542, %v1540
      %v1545 = vpack.c.b16 %v1543, %v1541
      %v1607 = vunpack.c.l.b16 %v1468
      %v1608 = vunpack.c.h.b16 %v1468
      %v1609 = vunpack.c.l.b16 %v1469
      %v1610 = vunpack.c.l.b16 %v1470
      %v1611 = vunpack.c.h.b16 %v1470
      %v1612 = vunpack.c.l.b16 %v1471
      %v1613 = vunpack.c.l.b16 %v1472
      %v1614 = vunpack.c.h.b16 %v1472
      %v1615 = vunpack.c.l.b16 %v1473
      %v1616 = vunpack.c.l.b16 %v1474
      %v1617 = vunpack.c.h.b16 %v1474
      %v1618 = vunpack.c.l.b16 %v1475
      %v1619 = vunpack.c.l.b16 %v1476
      %v1620 = vunpack.c.h.b16 %v1476
      %v1621 = vunpack.c.l.b16 %v1477
      %v1622 = vunpack.c.l.b16 %v1478
      %v1623 = vunpack.c.h.b16 %v1478
      %v1624 = vunpack.c.l.b16 %v1479
      %v1625 = vunpack.c.l.b16 %v1480
      %v1626 = vunpack.c.h.b16 %v1480
      %v1627 = vunpack.c.l.b16 %v1481
      %v1628 = vunpack.c.l.b16 %v1482
      %v1629 = vunpack.c.h.b16 %v1482
      %v1630 = vunpack.c.l.b16 %v1483
      %v1631 = vunpack.c.l.b16 %v1484
      %v1632 = vunpack.c.h.b16 %v1484
      %v1633 = vunpack.c.l.b16 %v1485
      %v1634 = vunpack.c.l.b16 %v1486
      %v1635 = vunpack.c.h.b16 %v1486
      %v1636 = vunpack.c.l.b16 %v1487
      %v1637 = vunpack.c.l.b16 %v1488
      %v1638 = vunpack.c.h.b16 %v1488
      %v1639 = vunpack.c.l.b16 %v1489
      %v1640 = vunpack.c.l.b16 %v1490
      %v1641 = vunpack.c.h.b16 %v1490
      %v1642 = vunpack.c.l.b16 %v1491
      %v1643 = vunpack.c.l.b16 %v1492
      %v1644 = vunpack.c.h.b16 %v1492
      %v1645 = vunpack.c.l.b16 %v1493
      %v1646 = vunpack.c.l.b16 %v1494
      %v1647 = vunpack.c.h.b16 %v1494
      %v1648 = vunpack.c.l.b16 %v1495
      %v1649 = vunpack.c.l.b16 %v1496
      %v1650 = vunpack.c.h.b16 %v1496
      %v1651 = vunpack.c.l.b16 %v1497
      %v1652 = vunpack.c.l.b16 %v1498
      %v1653 = vunpack.c.h.b16 %v1498
      %v1654 = vunpack.c.l.b16 %v1499
      %v1655 = vunpack.c.l.b16 %v1500
      %v1656 = vunpack.c.h.b16 %v1500
      %v1657 = vunpack.c.l.b16 %v1501
      %v1658 = vunpack.c.l.b16 %v1502
      %v1659 = vunpack.c.h.b16 %v1502
      %v1660 = vunpack.c.l.b16 %v1503
      %v1661 = vunpack.c.l.b16 %v1504
      %v1662 = vunpack.c.h.b16 %v1504
      %v1663 = vunpack.c.l.b16 %v1505
      %v1664 = vunpack.c.l.b16 %v1506
      %v1665 = vunpack.c.h.b16 %v1506
      %v1666 = vunpack.c.l.b16 %v1507
      %v1667 = vunpack.c.l.b16 %v1508
      %v1668 = vunpack.c.h.b16 %v1508
      %v1669 = vunpack.c.l.b16 %v1509
      %v1670 = vunpack.c.l.b16 %v1510
      %v1671 = vunpack.c.h.b16 %v1510
      %v1672 = vunpack.c.l.b16 %v1511
      %v1673 = vunpack.c.l.b16 %v1512
      %v1674 = vunpack.c.h.b16 %v1512
      %v1675 = vunpack.c.l.b16 %v1513
      %v1676 = vunpack.c.l.b16 %v1514
      %v1677 = vunpack.c.h.b16 %v1514
      %v1678 = vunpack.c.l.b16 %v1515
      %v1679 = vunpack.c.l.b16 %v1516
      %v1680 = vunpack.c.h.b16 %v1516
      %v1681 = vunpack.c.l.b16 %v1517
      %v1682 = vunpack.c.l.b16 %v1518
      %v1683 = vunpack.c.h.b16 %v1518
      %v1684 = vunpack.c.l.b16 %v1519
      %v1685 = vunpack.c.l.b16 %v1520
      %v1686 = vunpack.c.h.b16 %v1520
      %v1687 = vunpack.c.l.b16 %v1521
      %v1688 = vunpack.c.l.b16 %v1522
      %v1689 = vunpack.c.h.b16 %v1522
      %v1690 = vunpack.c.l.b16 %v1523
      %v1691 = vunpack.c.l.b16 %v1524
      %v1692 = vunpack.c.h.b16 %v1524
      %v1693 = vunpack.c.l.b16 %v1525
      %v1694 = vunpack.c.l.b16 %v1526
      %v1695 = vunpack.c.h.b16 %v1526
      %v1696 = vunpack.c.l.b16 %v1527
      %v1697 = vpack.c.b16 %v1610, %v1607
      %v1698 = vpack.c.b16 %v1611, %v1608
      %v1699 = vpack.c.b16 %v1612, %v1609
      %v1700 = vpack.c.b16 %v1616, %v1613
      %v1701 = vpack.c.b16 %v1617, %v1614
      %v1702 = vpack.c.b16 %v1618, %v1615
      %v1703 = vpack.c.b16 %v1622, %v1619
      %v1704 = vpack.c.b16 %v1623, %v1620
      %v1705 = vpack.c.b16 %v1624, %v1621
      %v1706 = vpack.c.b16 %v1628, %v1625
      %v1707 = vpack.c.b16 %v1629, %v1626
      %v1708 = vpack.c.b16 %v1630, %v1627
      %v1709 = vpack.c.b16 %v1634, %v1631
      %v1710 = vpack.c.b16 %v1635, %v1632
      %v1711 = vpack.c.b16 %v1636, %v1633
      %v1712 = vpack.c.b16 %v1640, %v1637
      %v1713 = vpack.c.b16 %v1641, %v1638
      %v1714 = vpack.c.b16 %v1642, %v1639
      %v1715 = vpack.c.b16 %v1646, %v1643
      %v1716 = vpack.c.b16 %v1647, %v1644
      %v1717 = vpack.c.b16 %v1648, %v1645
      %v1718 = vpack.c.b16 %v1652, %v1649
      %v1719 = vpack.c.b16 %v1653, %v1650
      %v1720 = vpack.c.b16 %v1654, %v1651
      %v1721 = vpack.c.b16 %v1658, %v1655
      %v1722 = vpack.c.b16 %v1659, %v1656
      %v1723 = vpack.c.b16 %v1660, %v1657
      %v1724 = vpack.c.b16 %v1664, %v1661
      %v1725 = vpack.c.b16 %v1665, %v1662
      %v1726 = vpack.c.b16 %v1666, %v1663
      %v1727 = vpack.c.b16 %v1670, %v1667
      %v1728 = vpack.c.b16 %v1671, %v1668
      %v1729 = vpack.c.b16 %v1672, %v1669
      %v1730 = vpack.c.b16 %v1676, %v1673
      %v1731 = vpack.c.b16 %v1677, %v1674
      %v1732 = vpack.c.b16 %v1678, %v1675
      %v1733 = vpack.c.b16 %v1682, %v1679
      %v1734 = vpack.c.b16 %v1683, %v1680
      %v1735 = vpack.c.b16 %v1684, %v1681
      %v1736 = vpack.c.b16 %v1688, %v1685
      %v1737 = vpack.c.b16 %v1689, %v1686
      %v1738 = vpack.c.b16 %v1690, %v1687
      %v1739 = vpack.c.b16 %v1694, %v1691
      %v1740 = vpack.c.b16 %v1695, %v1692
      %v1741 = vpack.c.b16 %v1696, %v1693
      %vm1784 = vcmask 867328
      %v1786 = vsel %vm1784, %v1545, 0
      %vm1788 = vcmask 1044480
      %v1790 = vsel %vm1788, %v1739, 0
      %v1793 = vsel %vm1788, %v1740, 0
      %v1796 = vsel %vm1788, %v1741, 0
      %1798 = vmatprep.subr.bf16.mxu0 %v1698
      %1799 = vmatpush1.bf16.msra.mxu0 %v1697
      %1800 = vmatprep.subr.bf16.mxu0 %v1701
      %1801 = vmatpush1.bf16.msra.mxu0 %v1700
      %1802 = vmatprep.subr.bf16.mxu0 %v1704
      %1803 = vmatpush1.bf16.msra.mxu0 %v1703
      %1804 = vmatprep.subr.bf16.mxu0 %v1707
      %1805 = vmatpush1.bf16.msra.mxu0 %v1706
      %1806 = vmatprep.subr.bf16.mxu0 %v1710
      %1807 = vmatpush1.bf16.msra.mxu0 %v1709
      %1808 = vmatprep.subr.bf16.mxu0 %v1713
      %1809 = vmatpush1.bf16.msra.mxu0 %v1712
      %1810 = vmatprep.subr.bf16.mxu0 %v1716
      %1811 = vmatpush1.bf16.msra.mxu0 %v1715
      %1812 = vmatprep.subr.bf16.mxu0 %v1719
      %1813 = vmatpush1.bf16.msra.mxu0 %v1718
      %1814 = vmatprep.subr.bf16.mxu0 %v1722
      %1815 = vmatpush1.bf16.msra.mxu0 %v1721
      %1816 = vmatprep.subr.bf16.mxu0 %v1725
      %1817 = vmatpush1.bf16.msra.mxu0 %v1724
      %1818 = vmatprep.subr.bf16.mxu0 %v1728
      %1819 = vmatpush1.bf16.msra.mxu0 %v1727
      %1820 = vmatprep.subr.bf16.mxu0 %v1731
      %1821 = vmatpush1.bf16.msra.mxu0 %v1730
      %1822 = vmatprep.subr.bf16.mxu0 %v1734
      %1823 = vmatpush1.bf16.msra.mxu0 %v1733
      %1824 = vmatprep.subr.bf16.mxu0 %v1737
      %1825 = vmatpush1.bf16.msra.mxu0 %v1736
      %1826 = vmatprep.subr.bf16.mxu0 %v1793
      %1827 = vmatpush1.bf16.msra.mxu0 %v1790
      %1828 = vmatprep.subr.bf16.mxu0 0
      %1829 = vmatpush1.bf16.msra.mxu0 0
      %1830 = vmatprep.mubr.bf16.mxu0 %v1786
      %1831 = vmatmul.mubr.bf16.gmra.mrb[0].mxu0 %v1544
      %v1832 = vpop.f32.mrb[0].mxu0
      %v1833 = vadd.f32 %v1531, %v1832
      %v1834 = vpop.f32.mrb[0].mxu0
      %v1835 = vadd.f32 %v1531, %v1834
      %v1836 = vpop.f32.mrb[0].mxu0
      %v1837 = vadd.f32 %v1536, %v1836
      %v1838 = vpop.f32.mrb[0].mxu0
      %v1839 = vadd.f32 %v1536, %v1838
      %1840 = vdwg.mxu0
      %1841 = vmatprep.subr.bf16.mxu0 0
      %1842 = vmatpush1.bf16.msra.mxu0 %v1699
      %1843 = vmatprep.subr.bf16.mxu0 0
      %1844 = vmatpush1.bf16.msra.mxu0 %v1702
      %1845 = vmatprep.subr.bf16.mxu0 0
      %1846 = vmatpush1.bf16.msra.mxu0 %v1705
      %1847 = vmatprep.subr.bf16.mxu0 0
      %1848 = vmatpush1.bf16.msra.mxu0 %v1708
      %1849 = vmatprep.subr.bf16.mxu0 0
      %1850 = vmatpush1.bf16.msra.mxu0 %v1711
      %1851 = vmatprep.subr.bf16.mxu0 0
      %1852 = vmatpush1.bf16.msra.mxu0 %v1714
      %1853 = vmatprep.subr.bf16.mxu0 0
      %1854 = vmatpush1.bf16.msra.mxu0 %v1717
      %1855 = vmatprep.subr.bf16.mxu0 0
      %1856 = vmatpush1.bf16.msra.mxu0 %v1720
      %1857 = vmatprep.subr.bf16.mxu0 0
      %1858 = vmatpush1.bf16.msra.mxu0 %v1723
      %1859 = vmatprep.subr.bf16.mxu0 0
      %1860 = vmatpush1.bf16.msra.mxu0 %v1726
      %1861 = vmatprep.subr.bf16.mxu0 0
      %1862 = vmatpush1.bf16.msra.mxu0 %v1729
      %1863 = vmatprep.subr.bf16.mxu0 0
      %1864 = vmatpush1.bf16.msra.mxu0 %v1732
      %1865 = vmatprep.subr.bf16.mxu0 0
      %1866 = vmatpush1.bf16.msra.mxu0 %v1735
      %1867 = vmatprep.subr.bf16.mxu0 0
      %1868 = vmatpush1.bf16.msra.mxu0 %v1738
      %1869 = vmatprep.subr.bf16.mxu0 0
      %1870 = vmatpush1.bf16.msra.mxu0 %v1796
      %1871 = vmatprep.subr.bf16.mxu0 0
      %1872 = vmatpush1.bf16.msra.mxu0 0
      %1873 = vmatprep.mubr.bf16.mxu0 %v1786
      %1874 = vmatmul.mubr.bf16.gmra.mrb[0].mxu0 %v1544
      %v1875 = vpop.f32.mrb[0].mxu0
      %v1876 = vadd.f32 %v1531, %v1875
      %v1877 = vpop.f32.mrb[0].mxu0
      %v1878 = vpop.f32.mrb[0].mxu0
      %v1879 = vadd.f32 %v1536, %v1878
      %v1880 = vpop.f32.mrb[0].mxu0
      %1881 = vdwg.mxu0
      %v1882 = vmax.f32 %v1833, 0.0
      %v1883 = vmax.f32 %v1835, 0.0
      %v1884 = vmax.f32 %v1876, 0.0
      %v1885 = vmax.f32 %v1837, 0.0
      %v1886 = vmax.f32 %v1839, 0.0
      %v1887 = vmax.f32 %v1879, 0.0
      %v1888 = vld [vmem:[%s4] sm:$0x7]
      %v1890 = vlaneseq
      %v1891 = vshrl.u32 %v1890, 7
      %v1892 = vsub.s32 0, %v1891
      %v1893 = vrot.slane %v1888, %v1892
      %v1894 = vlaneseq
      %v1895 = vshrl.u32 %v1894, 7
      %v1896 = vsub.s32 1, %v1895
      %v1897 = vrot.slane %v1888, %v1896
      %v1898 = vlaneseq
      %v1899 = vshrl.u32 %v1898, 7
      %v1900 = vsub.s32 2, %v1899
      %v1901 = vrot.slane %v1888, %v1900
      %1902 = vrot.lane.b32.xlu0 %v1893, 86
      %v1903 = vpop.permute.xlu0 %1902
      %1904 = vrot.lane.b32.xlu0 %v1897, 86
      %v1905 = vpop.permute.xlu0 %1904
      %1906 = vrot.lane.b32.xlu0 %v1901, 86
      %v1907 = vpop.permute.xlu0 %1906
      %vm1908 = vcmask 703488
      %v1909 = vsel %vm1908, %v1903, %v1905
      %v1910 = vsel %vm1908, %v1905, %v1907
      %v1914 = vmul.f32 %v1882, %v1909
      %v1915 = vmul.f32 %v1883, %v1910
      %v1916 = vmul.f32 %v1884, %v1907
      %v1917 = vmul.f32 %v1885, %v1909
      %v1918 = vmul.f32 %v1886, %v1910
      %v1919 = vmul.f32 %v1887, %v1907
      %v1920 = vpack.c.bf16 %v1917, %v1914
      %v1921 = vpack.c.bf16 %v1918, %v1915
      %v1922 = vpack.c.bf16 %v1919, %v1916
      %v1926 = vunpack.c.l.b16 %v1920
      %v1927 = vunpack.c.l.b16 %v1921
      %v1928 = vunpack.c.l.b16 %v1922
      %v1929 = vunpack.c.h.b16 %v1920
      %v1930 = vunpack.c.h.b16 %v1921
      %v1931 = vunpack.c.h.b16 %v1922
      %v1932 = vpack.c.b16 %v1927, %v1926
      %v1933 = vpack.c.b16 %v1928, %v1928
      %v1934 = vpack.c.b16 %v1930, %v1929
      %v1935 = vpack.c.b16 %v1931, %v1931
      %1936 = vrot.lane.b32.xlu0 %v1932, 42
      %v1937 = vpop.permute.xlu0 %1936
      %1938 = vrot.lane.b32.xlu0 %v1933, 42
      %v1939 = vpop.permute.xlu0 %1938
      %1940 = vrot.lane.b32.xlu0 %v1934, 42
      %v1941 = vpop.permute.xlu0 %1940
      %1942 = vrot.lane.b32.xlu0 %v1935, 42
      %v1943 = vpop.permute.xlu0 %1942
      %v1944 = vrot.slane %v1937, 4
      %v1945 = vrot.slane %v1941, 4
      %vm1946 = vcmask 343040
      %v1947 = vsel %vm1946, %v1944, %v1937
      %v1948 = vsel %vm1946, %v1944, %v1939
      %v1949 = vsel %vm1946, %v1945, %v1941
      %v1950 = vsel %vm1946, %v1945, %v1943
      %vm1955 = vcmask 1043792
      %vm1956 = vcmask 1047556
      %vm1957 = vmor %vm1956, %vm1955
      %1958 = vst.msk [vmem:[#allocation3] sm:$0xff] %vm1957, %v1947
      %vm1959 = vcmask 863232
      %1960 = vst.msk [vmem:[#allocation3 + $0x8] sm:$0xf] %vm1959, %v1948
      %1961 = vst.msk [vmem:[#allocation3 + $0x10] sm:$0xff] %vm1957, %v1949
      %1962 = vst.msk [vmem:[#allocation3 + $0x18] sm:$0xf] %vm1959, %v1950
      %v1963 = vld [vmem:[%s7] sm:$0xff]
      %v1964 = vld [vmem:[%s8] sm:$0xff]
      %v1965 = vld [vmem:[#allocation3] sm:$0xff]
      %v1966 = vld [vmem:[#allocation3 + $0x8] sm:$0xf]
      %v1967 = vld [vmem:[#allocation3 + $0x10] sm:$0xff]
      %v1968 = vld [vmem:[#allocation3 + $0x18] sm:$0xf]
      %v1969 = vld [vmem:[#allocation3 + $0x20] sm:$0x11]
      %v1970 = vld [vmem:[#allocation3 + $0x28] sm:$0x1]
      %1977 = vrot.lane.b32.xlu0 %v1965, 107
      %v1978 = vpop.permute.xlu0 %1977
      %1979 = vrot.lane.b32.xlu0 %v1966, 107
      %v1980 = vpop.permute.xlu0 %1979
      %1981 = vrot.lane.b32.xlu0 %v1967, 107
      %v1982 = vpop.permute.xlu0 %1981
      %1983 = vrot.lane.b32.xlu0 %v1968, 107
      %v1984 = vpop.permute.xlu0 %1983
      %1985 = vrot.lane.b32.xlu0 %v1969, 107
      %v1986 = vpop.permute.xlu0 %1985
      %1987 = vrot.lane.b32.xlu0 %v1970, 107
      %v1988 = vpop.permute.xlu0 %1987
      %v1989 = vrot.slane %v1978, 4
      %v1990 = vrot.slane %v1980, 4
      %v1991 = vrot.slane %v1982, 4
      %v1992 = vrot.slane %v1984, 4
      %v1993 = vrot.slane %v1986, 4
      %v1994 = vrot.slane %v1988, 4
      %v1995 = vsel %vm786, %v1989, %v1990
      %v1996 = vsel %vm788, %v1978, %v1995
      %v1997 = vsel %vm786, %v1991, %v1992
      %v1998 = vsel %vm788, %v1982, %v1997
      %v1999 = vsel %vm786, %v1993, %v1994
      %v2000 = vsel %vm788, %v1986, %v1999
      %2007 = vst [vmem:[#allocation5] sm:$0xff] %v1996
      %2008 = vst.msk [vmem:[#allocation5 + $0x8] sm:$0xf] %vm805, %v1980
      %2009 = vst [vmem:[#allocation5 + $0xc] sm:$0xff] %v1998
      %2010 = vst.msk [vmem:[#allocation5 + $0x14] sm:$0xf] %vm805, %v1984
      %2011 = vst [vmem:[#allocation5 + $0x18] sm:$0x11] %v2000
      %2012 = vst.msk [vmem:[#allocation5 + $0x20] sm:$0x1] %vm812, %v1988
      %v2013 = vld [vmem:[#allocation3] sm:$0xff]
      %v2014 = vld [vmem:[#allocation3 + $0x8] sm:$0xf]
      %v2015 = vld [vmem:[#allocation3 + $0x10] sm:$0xff]
      %v2016 = vld [vmem:[#allocation3 + $0x18] sm:$0xf]
      %v2017 = vld [vmem:[#allocation3 + $0x20] sm:$0x11]
      %v2018 = vld [vmem:[#allocation3 + $0x28] sm:$0x1]
      %v2025 = vrot.slane %v2013, 7
      %v2026 = vrot.slane %v2014, 7
      %v2027 = vrot.slane %v2025, 4
      %v2028 = vrot.slane %v2015, 7
      %v2029 = vsel %vm832, %v2027, %v2028
      %v2030 = vrot.slane %v2026, 4
      %v2031 = vrot.slane %v2016, 7
      %v2032 = vsel %vm832, %v2030, %v2031
      %v2033 = vrot.slane %v2028, 4
      %v2034 = vrot.slane %v2017, 7
      %v2035 = vsel %vm832, %v2033, %v2034
      %v2036 = vrot.slane %v2031, 4
      %v2037 = vrot.slane %v2018, 7
      %v2038 = vsel %vm832, %v2036, %v2037
      %2039 = vrot.lane.b32.xlu0 %v2025, 106
      %v2040 = vpop.permute.xlu0 %2039
      %2041 = vrot.lane.b32.xlu0 %v2026, 106
      %v2042 = vpop.permute.xlu0 %2041
      %2043 = vrot.lane.b32.xlu0 %v2029, 106
      %v2044 = vpop.permute.xlu0 %2043
      %2045 = vrot.lane.b32.xlu0 %v2032, 106
      %v2046 = vpop.permute.xlu0 %2045
      %2047 = vrot.lane.b32.xlu0 %v2035, 106
      %v2048 = vpop.permute.xlu0 %2047
      %2049 = vrot.lane.b32.xlu0 %v2038, 106
      %v2050 = vpop.permute.xlu0 %2049
      %v2051 = vrot.slane %v2040, 4
      %v2052 = vrot.slane %v2042, 4
      %v2053 = vrot.slane %v2044, 4
      %v2054 = vrot.slane %v2046, 4
      %v2055 = vrot.slane %v2048, 4
      %v2056 = vrot.slane %v2050, 4
      %v2057 = vsel %vm786, %v2051, %v2052
      %v2058 = vsel %vm878, %v2040, %v2057
      %v2059 = vsel %vm786, %v2053, %v2054
      %v2060 = vsel %vm878, %v2044, %v2059
      %v2061 = vsel %vm786, %v2055, %v2056
      %v2062 = vsel %vm878, %v2048, %v2061
      %2069 = vst [vmem:[#allocation5 + $0x18] sm:$0xee] %v2058
      %2070 = vst.msk [vmem:[#allocation5 + $0x20] sm:$0xe] %vm895, %v2042
      %2071 = vst [vmem:[#allocation5 + $0x24] sm:$0xff] %v2060
      %2072 = vst.msk [vmem:[#allocation5 + $0x2c] sm:$0xf] %vm805, %v2046
      %2073 = vst [vmem:[#allocation5 + $0x30] sm:$0x33] %v2062
      %2074 = vst.msk [vmem:[#allocation5 + $0x38] sm:$0x3] %vm902, %v2050
      %v2075 = vld [vmem:[#allocation3] sm:$0xff]
      %v2076 = vld [vmem:[#allocation3 + $0x8] sm:$0xf]
      %v2077 = vld [vmem:[#allocation3 + $0x10] sm:$0xff]
      %v2078 = vld [vmem:[#allocation3 + $0x18] sm:$0xf]
      %v2079 = vld [vmem:[#allocation3 + $0x20] sm:$0x11]
      %v2080 = vld [vmem:[#allocation3 + $0x28] sm:$0x1]
      %v2087 = vrot.slane %v2075, 6
      %v2088 = vrot.slane %v2076, 6
      %v2089 = vrot.slane %v2087, 4
      %v2090 = vrot.slane %v2077, 6
      %v2091 = vsel %vm922, %v2089, %v2090
      %v2092 = vrot.slane %v2088, 4
      %v2093 = vrot.slane %v2078, 6
      %v2094 = vsel %vm922, %v2092, %v2093
      %v2095 = vrot.slane %v2090, 4
      %v2096 = vrot.slane %v2079, 6
      %v2097 = vsel %vm922, %v2095, %v2096
      %v2098 = vrot.slane %v2093, 4
      %v2099 = vrot.slane %v2080, 6
      %v2100 = vsel %vm922, %v2098, %v2099
      %2101 = vrot.lane.b32.xlu0 %v2087, 105
      %v2102 = vpop.permute.xlu0 %2101
      %2103 = vrot.lane.b32.xlu0 %v2088, 105
      %v2104 = vpop.permute.xlu0 %2103
      %2105 = vrot.lane.b32.xlu0 %v2091, 105
      %v2106 = vpop.permute.xlu0 %2105
      %2107 = vrot.lane.b32.xlu0 %v2094, 105
      %v2108 = vpop.permute.xlu0 %2107
      %2109 = vrot.lane.b32.xlu0 %v2097, 105
      %v2110 = vpop.permute.xlu0 %2109
      %2111 = vrot.lane.b32.xlu0 %v2100, 105
      %v2112 = vpop.permute.xlu0 %2111
      %v2113 = vrot.slane %v2102, 4
      %v2114 = vrot.slane %v2104, 4
      %v2115 = vrot.slane %v2106, 4
      %v2116 = vrot.slane %v2108, 4
      %v2117 = vrot.slane %v2110, 4
      %v2118 = vrot.slane %v2112, 4
      %v2119 = vsel %vm786, %v2113, %v2114
      %v2120 = vsel %vm968, %v2102, %v2119
      %v2121 = vsel %vm786, %v2115, %v2116
      %v2122 = vsel %vm968, %v2106, %v2121
      %v2123 = vsel %vm786, %v2117, %v2118
      %v2124 = vsel %vm968, %v2110, %v2123
      %2131 = vst [vmem:[#allocation5 + $0x30] sm:$0xcc] %v2120
      %2132 = vst.msk [vmem:[#allocation5 + $0x38] sm:$0xc] %vm985, %v2104
      %2133 = vst [vmem:[#allocation5 + $0x3c] sm:$0xff] %v2122
      %2134 = vst.msk [vmem:[#allocation5 + $0x44] sm:$0xf] %vm805, %v2108
      %2135 = vst [vmem:[#allocation5 + $0x48] sm:$0x77] %v2124
      %2136 = vst.msk [vmem:[#allocation5 + $0x50] sm:$0x7] %vm992, %v2112
      %v2137 = vld [vmem:[#allocation3] sm:$0xff]
      %v2138 = vld [vmem:[#allocation3 + $0x8] sm:$0xf]
      %v2139 = vld [vmem:[#allocation3 + $0x10] sm:$0xff]
      %v2140 = vld [vmem:[#allocation3 + $0x18] sm:$0xf]
      %v2141 = vld [vmem:[#allocation3 + $0x20] sm:$0x11]
      %v2142 = vld [vmem:[#allocation3 + $0x28] sm:$0x1]
      %v2149 = vrot.slane %v2137, 5
      %v2150 = vrot.slane %v2138, 5
      %v2151 = vrot.slane %v2149, 4
      %v2152 = vrot.slane %v2139, 5
      %v2153 = vsel %vm1012, %v2151, %v2152
      %v2154 = vrot.slane %v2150, 4
      %v2155 = vrot.slane %v2140, 5
      %v2156 = vsel %vm1012, %v2154, %v2155
      %v2157 = vrot.slane %v2152, 4
      %v2158 = vrot.slane %v2141, 5
      %v2159 = vsel %vm1012, %v2157, %v2158
      %v2160 = vrot.slane %v2155, 4
      %v2161 = vrot.slane %v2142, 5
      %v2162 = vsel %vm1012, %v2160, %v2161
      %2163 = vrot.lane.b32.xlu0 %v2149, 87
      %v2164 = vpop.permute.xlu0 %2163
      %2165 = vrot.lane.b32.xlu0 %v2150, 87
      %v2166 = vpop.permute.xlu0 %2165
      %2167 = vrot.lane.b32.xlu0 %v2153, 87
      %v2168 = vpop.permute.xlu0 %2167
      %2169 = vrot.lane.b32.xlu0 %v2156, 87
      %v2170 = vpop.permute.xlu0 %2169
      %2171 = vrot.lane.b32.xlu0 %v2159, 87
      %v2172 = vpop.permute.xlu0 %2171
      %2173 = vrot.lane.b32.xlu0 %v2162, 87
      %v2174 = vpop.permute.xlu0 %2173
      %v2175 = vrot.slane %v2164, 4
      %v2176 = vrot.slane %v2166, 4
      %v2177 = vrot.slane %v2168, 4
      %v2178 = vrot.slane %v2170, 4
      %v2179 = vrot.slane %v2172, 4
      %v2180 = vrot.slane %v2174, 4
      %v2181 = vsel %vm786, %v2175, %v2176
      %v2182 = vsel %vm1058, %v2164, %v2181
      %v2183 = vsel %vm786, %v2177, %v2178
      %v2184 = vsel %vm1058, %v2168, %v2183
      %v2185 = vsel %vm786, %v2179, %v2180
      %v2186 = vsel %vm1058, %v2172, %v2185
      %2193 = vst [vmem:[#allocation5 + $0x48] sm:$0x88] %v2182
      %2194 = vst.msk [vmem:[#allocation5 + $0x50] sm:$0x8] %vm1075, %v2166
      %2195 = vst [vmem:[#allocation5 + $0x54] sm:$0xff] %v2184
      %2196 = vst.msk [vmem:[#allocation5 + $0x5c] sm:$0xf] %vm805, %v2170
      %2197 = vst [vmem:[#allocation5 + $0x60] sm:$0xff] %v2186
      %2198 = vst.msk [vmem:[#allocation5 + $0x68] sm:$0xf] %vm805, %v2174
      %v2199 = vld [vmem:[#allocation3] sm:$0xff]
      %v2200 = vld [vmem:[#allocation3 + $0x8] sm:$0xf]
      %v2201 = vld [vmem:[#allocation3 + $0x10] sm:$0xff]
      %v2202 = vld [vmem:[#allocation3 + $0x18] sm:$0xf]
      %v2203 = vld [vmem:[#allocation3 + $0x20] sm:$0x11]
      %v2204 = vld [vmem:[#allocation3 + $0x28] sm:$0x1]
      %2211 = vrot.lane.b32.xlu0 %v2199, 86
      %v2212 = vpop.permute.xlu0 %2211
      %2213 = vrot.lane.b32.xlu0 %v2200, 86
      %v2214 = vpop.permute.xlu0 %2213
      %2215 = vrot.lane.b32.xlu0 %v2201, 86
      %v2216 = vpop.permute.xlu0 %2215
      %2217 = vrot.lane.b32.xlu0 %v2202, 86
      %v2218 = vpop.permute.xlu0 %2217
      %2219 = vrot.lane.b32.xlu0 %v2203, 86
      %v2220 = vpop.permute.xlu0 %2219
      %2221 = vrot.lane.b32.xlu0 %v2204, 86
      %v2222 = vpop.permute.xlu0 %2221
      %v2223 = vrot.slane %v2212, 4
      %v2224 = vrot.slane %v2214, 4
      %v2225 = vrot.slane %v2216, 4
      %v2226 = vrot.slane %v2218, 4
      %v2227 = vrot.slane %v2220, 4
      %v2228 = vrot.slane %v2222, 4
      %v2229 = vsel %vm786, %v2223, %v2224
      %v2230 = vsel %vm1124, %v2212, %v2229
      %v2231 = vsel %vm786, %v2225, %v2226
      %v2232 = vsel %vm1124, %v2216, %v2231
      %v2233 = vsel %vm786, %v2227, %v2228
      %v2234 = vsel %vm1124, %v2220, %v2233
      %2241 = vst [vmem:[#allocation5 + $0x6c] sm:$0xff] %v2230
      %2242 = vst.msk [vmem:[#allocation5 + $0x74] sm:$0xf] %vm805, %v2214
      %2243 = vst [vmem:[#allocation5 + $0x78] sm:$0xff] %v2232
      %2244 = vst.msk [vmem:[#allocation5 + $0x80] sm:$0xf] %vm805, %v2218
      %2245 = vst [vmem:[#allocation5 + $0x84] sm:$0x11] %v2234
      %2246 = vst.msk [vmem:[#allocation5 + $0x8c] sm:$0x1] %vm812, %v2222
      %v2247 = vld [vmem:[#allocation3] sm:$0xff]
      %v2248 = vld [vmem:[#allocation3 + $0x8] sm:$0xf]
      %v2249 = vld [vmem:[#allocation3 + $0x10] sm:$0xff]
      %v2250 = vld [vmem:[#allocation3 + $0x18] sm:$0xf]
      %v2251 = vld [vmem:[#allocation3 + $0x20] sm:$0x11]
      %v2252 = vld [vmem:[#allocation3 + $0x28] sm:$0x1]
      %v2259 = vrot.slane %v2247, 7
      %v2260 = vrot.slane %v2248, 7
      %v2261 = vrot.slane %v2259, 4
      %v2262 = vrot.slane %v2249, 7
      %v2263 = vsel %vm832, %v2261, %v2262
      %v2264 = vrot.slane %v2260, 4
      %v2265 = vrot.slane %v2250, 7
      %v2266 = vsel %vm832, %v2264, %v2265
      %v2267 = vrot.slane %v2262, 4
      %v2268 = vrot.slane %v2251, 7
      %v2269 = vsel %vm832, %v2267, %v2268
      %v2270 = vrot.slane %v2265, 4
      %v2271 = vrot.slane %v2252, 7
      %v2272 = vsel %vm832, %v2270, %v2271
      %2273 = vrot.lane.b32.xlu0 %v2259, 85
      %v2274 = vpop.permute.xlu0 %2273
      %2275 = vrot.lane.b32.xlu0 %v2260, 85
      %v2276 = vpop.permute.xlu0 %2275
      %2277 = vrot.lane.b32.xlu0 %v2263, 85
      %v2278 = vpop.permute.xlu0 %2277
      %2279 = vrot.lane.b32.xlu0 %v2266, 85
      %v2280 = vpop.permute.xlu0 %2279
      %2281 = vrot.lane.b32.xlu0 %v2269, 85
      %v2282 = vpop.permute.xlu0 %2281
      %2283 = vrot.lane.b32.xlu0 %v2272, 85
      %v2284 = vpop.permute.xlu0 %2283
      %v2285 = vrot.slane %v2274, 4
      %v2286 = vrot.slane %v2276, 4
      %v2287 = vrot.slane %v2278, 4
      %v2288 = vrot.slane %v2280, 4
      %v2289 = vrot.slane %v2282, 4
      %v2290 = vrot.slane %v2284, 4
      %v2291 = vsel %vm786, %v2285, %v2286
      %v2292 = vsel %vm1209, %v2274, %v2291
      %v2293 = vsel %vm786, %v2287, %v2288
      %v2294 = vsel %vm1209, %v2278, %v2293
      %v2295 = vsel %vm786, %v2289, %v2290
      %v2296 = vsel %vm1209, %v2282, %v2295
      %2303 = vst [vmem:[#allocation5 + $0x84] sm:$0xee] %v2292
      %2304 = vst.msk [vmem:[#allocation5 + $0x8c] sm:$0xe] %vm895, %v2276
      %2305 = vst [vmem:[#allocation5 + $0x90] sm:$0xff] %v2294
      %2306 = vst.msk [vmem:[#allocation5 + $0x98] sm:$0xf] %vm805, %v2280
      %2307 = vst [vmem:[#allocation5 + $0x9c] sm:$0x33] %v2296
      %2308 = vst.msk [vmem:[#allocation5 + $0xa4] sm:$0x3] %vm902, %v2284
      %v2309 = vld [vmem:[#allocation3] sm:$0xff]
      %v2310 = vld [vmem:[#allocation3 + $0x8] sm:$0xf]
      %v2311 = vld [vmem:[#allocation3 + $0x10] sm:$0xff]
      %v2312 = vld [vmem:[#allocation3 + $0x18] sm:$0xf]
      %v2313 = vld [vmem:[#allocation3 + $0x20] sm:$0x11]
      %v2314 = vld [vmem:[#allocation3 + $0x28] sm:$0x1]
      %v2321 = vrot.slane %v2309, 6
      %v2322 = vrot.slane %v2310, 6
      %v2323 = vrot.slane %v2321, 4
      %v2324 = vrot.slane %v2311, 6
      %v2325 = vsel %vm922, %v2323, %v2324
      %v2326 = vrot.slane %v2322, 4
      %v2327 = vrot.slane %v2312, 6
      %v2328 = vsel %vm922, %v2326, %v2327
      %v2329 = vrot.slane %v2324, 4
      %v2330 = vrot.slane %v2313, 6
      %v2331 = vsel %vm922, %v2329, %v2330
      %v2332 = vrot.slane %v2327, 4
      %v2333 = vrot.slane %v2314, 6
      %v2334 = vsel %vm922, %v2332, %v2333
      %2335 = vrot.lane.b32.xlu0 %v2321, 67
      %v2336 = vpop.permute.xlu0 %2335
      %2337 = vrot.lane.b32.xlu0 %v2322, 67
      %v2338 = vpop.permute.xlu0 %2337
      %2339 = vrot.lane.b32.xlu0 %v2325, 67
      %v2340 = vpop.permute.xlu0 %2339
      %2341 = vrot.lane.b32.xlu0 %v2328, 67
      %v2342 = vpop.permute.xlu0 %2341
      %2343 = vrot.lane.b32.xlu0 %v2331, 67
      %v2344 = vpop.permute.xlu0 %2343
      %2345 = vrot.lane.b32.xlu0 %v2334, 67
      %v2346 = vpop.permute.xlu0 %2345
      %v2347 = vrot.slane %v2336, 4
      %v2348 = vrot.slane %v2338, 4
      %v2349 = vrot.slane %v2340, 4
      %v2350 = vrot.slane %v2342, 4
      %v2351 = vrot.slane %v2344, 4
      %v2352 = vrot.slane %v2346, 4
      %v2353 = vsel %vm786, %v2347, %v2348
      %v2354 = vsel %vm1294, %v2336, %v2353
      %v2355 = vsel %vm786, %v2349, %v2350
      %v2356 = vsel %vm1294, %v2340, %v2355
      %v2357 = vsel %vm786, %v2351, %v2352
      %v2358 = vsel %vm1294, %v2344, %v2357
      %2365 = vst [vmem:[#allocation5 + $0x9c] sm:$0xcc] %v2354
      %2366 = vst.msk [vmem:[#allocation5 + $0xa4] sm:$0xc] %vm985, %v2338
      %2367 = vst [vmem:[#allocation5 + $0xa8] sm:$0xff] %v2356
      %2368 = vst.msk [vmem:[#allocation5 + $0xb0] sm:$0xf] %vm805, %v2342
      %2369 = vst [vmem:[#allocation5 + $0xb4] sm:$0x77] %v2358
      %2370 = vst.msk [vmem:[#allocation5 + $0xbc] sm:$0x7] %vm992, %v2346
      %v2371 = vld [vmem:[#allocation3] sm:$0xff]
      %v2372 = vld [vmem:[#allocation3 + $0x8] sm:$0xf]
      %v2373 = vld [vmem:[#allocation3 + $0x10] sm:$0xff]
      %v2374 = vld [vmem:[#allocation3 + $0x18] sm:$0xf]
      %v2375 = vld [vmem:[#allocation3 + $0x20] sm:$0x11]
      %v2376 = vld [vmem:[#allocation3 + $0x28] sm:$0x1]
      %v2383 = vrot.slane %v2371, 5
      %v2384 = vrot.slane %v2372, 5
      %v2385 = vrot.slane %v2383, 4
      %v2386 = vrot.slane %v2373, 5
      %v2387 = vsel %vm1012, %v2385, %v2386
      %v2388 = vrot.slane %v2384, 4
      %v2389 = vrot.slane %v2374, 5
      %v2390 = vsel %vm1012, %v2388, %v2389
      %v2391 = vrot.slane %v2386, 4
      %v2392 = vrot.slane %v2375, 5
      %v2393 = vsel %vm1012, %v2391, %v2392
      %v2394 = vrot.slane %v2389, 4
      %v2395 = vrot.slane %v2376, 5
      %v2396 = vsel %vm1012, %v2394, %v2395
      %2397 = vrot.lane.b32.xlu0 %v2383, 66
      %v2398 = vpop.permute.xlu0 %2397
      %2399 = vrot.lane.b32.xlu0 %v2384, 66
      %v2400 = vpop.permute.xlu0 %2399
      %2401 = vrot.lane.b32.xlu0 %v2387, 66
      %v2402 = vpop.permute.xlu0 %2401
      %2403 = vrot.lane.b32.xlu0 %v2390, 66
      %v2404 = vpop.permute.xlu0 %2403
      %2405 = vrot.lane.b32.xlu0 %v2393, 66
      %v2406 = vpop.permute.xlu0 %2405
      %2407 = vrot.lane.b32.xlu0 %v2396, 66
      %v2408 = vpop.permute.xlu0 %2407
      %v2409 = vrot.slane %v2398, 4
      %v2410 = vrot.slane %v2400, 4
      %v2411 = vrot.slane %v2402, 4
      %v2412 = vrot.slane %v2404, 4
      %v2413 = vrot.slane %v2406, 4
      %v2414 = vrot.slane %v2408, 4
      %v2415 = vsel %vm786, %v2409, %v2410
      %v2416 = vsel %vm1379, %v2398, %v2415
      %v2417 = vsel %vm786, %v2411, %v2412
      %v2418 = vsel %vm1379, %v2402, %v2417
      %v2419 = vsel %vm786, %v2413, %v2414
      %v2420 = vsel %vm1379, %v2406, %v2419
      %2427 = vst [vmem:[#allocation5 + $0xb4] sm:$0x88] %v2416
      %2428 = vst.msk [vmem:[#allocation5 + $0xbc] sm:$0x8] %vm1075, %v2400
      %2429 = vst [vmem:[#allocation5 + $0xc0] sm:$0xff] %v2418
      %2430 = vst.msk [vmem:[#allocation5 + $0xc8] sm:$0xf] %vm805, %v2404
      %2431 = vst [vmem:[#allocation5 + $0xcc] sm:$0xff] %v2420
      %2432 = vst.msk [vmem:[#allocation5 + $0xd4] sm:$0xf] %vm805, %v2408
      %v2433 = vld [vmem:[#allocation3] sm:$0xff]
      %v2434 = vld [vmem:[#allocation3 + $0x8] sm:$0xf]
      %v2435 = vld [vmem:[#allocation3 + $0x10] sm:$0xff]
      %v2436 = vld [vmem:[#allocation3 + $0x18] sm:$0xf]
      %v2437 = vld [vmem:[#allocation3 + $0x20] sm:$0x11]
      %v2438 = vld [vmem:[#allocation3 + $0x28] sm:$0x1]
      %2445 = vrot.lane.b32.xlu0 %v2433, 65
      %v2446 = vpop.permute.xlu0 %2445
      %2447 = vrot.lane.b32.xlu0 %v2434, 65
      %v2448 = vpop.permute.xlu0 %2447
      %2449 = vrot.lane.b32.xlu0 %v2435, 65
      %v2450 = vpop.permute.xlu0 %2449
      %2451 = vrot.lane.b32.xlu0 %v2436, 65
      %v2452 = vpop.permute.xlu0 %2451
      %2453 = vrot.lane.b32.xlu0 %v2437, 65
      %v2454 = vpop.permute.xlu0 %2453
      %2455 = vrot.lane.b32.xlu0 %v2438, 65
      %v2456 = vpop.permute.xlu0 %2455
      %v2457 = vrot.slane %v2446, 4
      %v2458 = vrot.slane %v2448, 4
      %v2459 = vrot.slane %v2450, 4
      %v2460 = vrot.slane %v2452, 4
      %v2461 = vrot.slane %v2454, 4
      %v2462 = vrot.slane %v2456, 4
      %v2463 = vsel %vm786, %v2457, %v2458
      %v2464 = vsel %vm1444, %v2446, %v2463
      %v2465 = vsel %vm786, %v2459, %v2460
      %v2466 = vsel %vm1444, %v2450, %v2465
      %v2467 = vsel %vm786, %v2461, %v2462
      %v2468 = vsel %vm1444, %v2454, %v2467
      %2475 = vst [vmem:[#allocation5 + $0xd8] sm:$0xff] %v2464
      %2476 = vst.msk [vmem:[#allocation5 + $0xe0] sm:$0xf] %vm805, %v2448
      %2477 = vst [vmem:[#allocation5 + $0xe4] sm:$0xff] %v2466
      %2478 = vst.msk [vmem:[#allocation5 + $0xec] sm:$0xf] %vm805, %v2452
      %2479 = vst [vmem:[#allocation5 + $0xf0] sm:$0x11] %v2468
      %2480 = vst.msk [vmem:[#allocation5 + $0xf8] sm:$0x1] %vm812, %v2456
      %v2481 = vld [vmem:[#allocation5] sm:$0xff]
      %v2482 = vld [vmem:[#allocation5 + $0x8] sm:$0xf]
      %v2483 = vld [vmem:[#allocation5 + $0xc] sm:$0xff]
      %v2484 = vld [vmem:[#allocation5 + $0x14] sm:$0xf]
      %v2485 = vld [vmem:[#allocation5 + $0x18] sm:$0xff]
      %v2486 = vld [vmem:[#allocation5 + $0x20] sm:$0xf]
      %v2487 = vld [vmem:[#allocation5 + $0x24] sm:$0xff]
      %v2488 = vld [vmem:[#allocation5 + $0x2c] sm:$0xf]
      %v2489 = vld [vmem:[#allocation5 + $0x30] sm:$0xff]
      %v2490 = vld [vmem:[#allocation5 + $0x38] sm:$0xf]
      %v2491 = vld [vmem:[#allocation5 + $0x3c] sm:$0xff]
      %v2492 = vld [vmem:[#allocation5 + $0x44] sm:$0xf]
      %v2493 = vld [vmem:[#allocation5 + $0x48] sm:$0xff]
      %v2494 = vld [vmem:[#allocation5 + $0x50] sm:$0xf]
      %v2495 = vld [vmem:[#allocation5 + $0x54] sm:$0xff]
      %v2496 = vld [vmem:[#allocation5 + $0x5c] sm:$0xf]
      %v2497 = vld [vmem:[#allocation5 + $0x60] sm:$0xff]
      %v2498 = vld [vmem:[#allocation5 + $0x68] sm:$0xf]
      %v2499 = vld [vmem:[#allocation5 + $0x6c] sm:$0xff]
      %v2500 = vld [vmem:[#allocation5 + $0x74] sm:$0xf]
      %v2501 = vld [vmem:[#allocation5 + $0x78] sm:$0xff]
      %v2502 = vld [vmem:[#allocation5 + $0x80] sm:$0xf]
      %v2503 = vld [vmem:[#allocation5 + $0x84] sm:$0xff]
      %v2504 = vld [vmem:[#allocation5 + $0x8c] sm:$0xf]
      %v2505 = vld [vmem:[#allocation5 + $0x90] sm:$0xff]
      %v2506 = vld [vmem:[#allocation5 + $0x98] sm:$0xf]
      %v2507 = vld [vmem:[#allocation5 + $0x9c] sm:$0xff]
      %v2508 = vld [vmem:[#allocation5 + $0xa4] sm:$0xf]
      %v2509 = vld [vmem:[#allocation5 + $0xa8] sm:$0xff]
      %v2510 = vld [vmem:[#allocation5 + $0xb0] sm:$0xf]
      %v2511 = vld [vmem:[#allocation5 + $0xb4] sm:$0xff]
      %v2512 = vld [vmem:[#allocation5 + $0xbc] sm:$0xf]
      %v2513 = vld [vmem:[#allocation5 + $0xc0] sm:$0xff]
      %v2514 = vld [vmem:[#allocation5 + $0xc8] sm:$0xf]
      %v2515 = vld [vmem:[#allocation5 + $0xcc] sm:$0xff]
      %v2516 = vld [vmem:[#allocation5 + $0xd4] sm:$0xf]
      %v2517 = vld [vmem:[#allocation5 + $0xd8] sm:$0xff]
      %v2518 = vld [vmem:[#allocation5 + $0xe0] sm:$0xf]
      %v2519 = vld [vmem:[#allocation5 + $0xe4] sm:$0xff]
      %v2520 = vld [vmem:[#allocation5 + $0xec] sm:$0xf]
      %v2521 = vld [vmem:[#allocation5 + $0xf0] sm:$0x11]
      %v2522 = vld [vmem:[#allocation5 + $0xf8] sm:$0x1]
      %2524 = vset.pattern.permute.xlu0 0
      %2525 = vperm.xlu0 %2524, %v1964
      %v2526 = vpop.permute.xlu0 %2525
      %v2529 = vunpack.c.l.b16 %v1963
      %v2530 = vunpack.c.h.b16 %v1963
      %v2531 = vpack.c.b16 %v2529, %v2529
      %v2532 = vpack.c.b16 %v2530, %v2530
      %v2576 = vunpack.c.l.b16 %v2481
      %v2577 = vunpack.c.h.b16 %v2481
      %v2578 = vunpack.c.l.b16 %v2482
      %v2579 = vunpack.c.l.b16 %v2483
      %v2580 = vunpack.c.h.b16 %v2483
      %v2581 = vunpack.c.l.b16 %v2484
      %v2582 = vunpack.c.l.b16 %v2485
      %v2583 = vunpack.c.h.b16 %v2485
      %v2584 = vunpack.c.l.b16 %v2486
      %v2585 = vunpack.c.l.b16 %v2487
      %v2586 = vunpack.c.h.b16 %v2487
      %v2587 = vunpack.c.l.b16 %v2488
      %v2588 = vunpack.c.l.b16 %v2489
      %v2589 = vunpack.c.h.b16 %v2489
      %v2590 = vunpack.c.l.b16 %v2490
      %v2591 = vunpack.c.l.b16 %v2491
      %v2592 = vunpack.c.h.b16 %v2491
      %v2593 = vunpack.c.l.b16 %v2492
      %v2594 = vunpack.c.l.b16 %v2493
      %v2595 = vunpack.c.h.b16 %v2493
      %v2596 = vunpack.c.l.b16 %v2494
      %v2597 = vunpack.c.l.b16 %v2495
      %v2598 = vunpack.c.h.b16 %v2495
      %v2599 = vunpack.c.l.b16 %v2496
      %v2600 = vunpack.c.l.b16 %v2497
      %v2601 = vunpack.c.h.b16 %v2497
      %v2602 = vunpack.c.l.b16 %v2498
      %v2603 = vunpack.c.l.b16 %v2499
      %v2604 = vunpack.c.h.b16 %v2499
      %v2605 = vunpack.c.l.b16 %v2500
      %v2606 = vunpack.c.l.b16 %v2501
      %v2607 = vunpack.c.h.b16 %v2501
      %v2608 = vunpack.c.l.b16 %v2502
      %v2609 = vunpack.c.l.b16 %v2503
      %v2610 = vunpack.c.h.b16 %v2503
      %v2611 = vunpack.c.l.b16 %v2504
      %v2612 = vunpack.c.l.b16 %v2505
      %v2613 = vunpack.c.h.b16 %v2505
      %v2614 = vunpack.c.l.b16 %v2506
      %v2615 = vunpack.c.l.b16 %v2507
      %v2616 = vunpack.c.h.b16 %v2507
      %v2617 = vunpack.c.l.b16 %v2508
      %v2618 = vunpack.c.l.b16 %v2509
      %v2619 = vunpack.c.h.b16 %v2509
      %v2620 = vunpack.c.l.b16 %v2510
      %v2621 = vunpack.c.l.b16 %v2511
      %v2622 = vunpack.c.h.b16 %v2511
      %v2623 = vunpack.c.l.b16 %v2512
      %v2624 = vunpack.c.l.b16 %v2513
      %v2625 = vunpack.c.h.b16 %v2513
      %v2626 = vunpack.c.l.b16 %v2514
      %v2627 = vunpack.c.l.b16 %v2515
      %v2628 = vunpack.c.h.b16 %v2515
      %v2629 = vunpack.c.l.b16 %v2516
      %v2630 = vunpack.c.l.b16 %v2517
      %v2631 = vunpack.c.h.b16 %v2517
      %v2632 = vunpack.c.l.b16 %v2518
      %v2633 = vunpack.c.l.b16 %v2519
      %v2634 = vunpack.c.h.b16 %v2519
      %v2635 = vunpack.c.l.b16 %v2520
      %v2636 = vunpack.c.l.b16 %v2521
      %v2637 = vunpack.c.h.b16 %v2521
      %v2638 = vunpack.c.l.b16 %v2522
      %v2639 = vpack.c.b16 %v2579, %v2576
      %v2640 = vpack.c.b16 %v2580, %v2577
      %v2641 = vpack.c.b16 %v2581, %v2578
      %v2642 = vpack.c.b16 %v2585, %v2582
      %v2643 = vpack.c.b16 %v2586, %v2583
      %v2644 = vpack.c.b16 %v2587, %v2584
      %v2645 = vpack.c.b16 %v2591, %v2588
      %v2646 = vpack.c.b16 %v2592, %v2589
      %v2647 = vpack.c.b16 %v2593, %v2590
      %v2648 = vpack.c.b16 %v2597, %v2594
      %v2649 = vpack.c.b16 %v2598, %v2595
      %v2650 = vpack.c.b16 %v2599, %v2596
      %v2651 = vpack.c.b16 %v2603, %v2600
      %v2652 = vpack.c.b16 %v2604, %v2601
      %v2653 = vpack.c.b16 %v2605, %v2602
      %v2654 = vpack.c.b16 %v2609, %v2606
      %v2655 = vpack.c.b16 %v2610, %v2607
      %v2656 = vpack.c.b16 %v2611, %v2608
      %v2657 = vpack.c.b16 %v2615, %v2612
      %v2658 = vpack.c.b16 %v2616, %v2613
      %v2659 = vpack.c.b16 %v2617, %v2614
      %v2660 = vpack.c.b16 %v2621, %v2618
      %v2661 = vpack.c.b16 %v2622, %v2619
      %v2662 = vpack.c.b16 %v2623, %v2620
      %v2663 = vpack.c.b16 %v2627, %v2624
      %v2664 = vpack.c.b16 %v2628, %v2625
      %v2665 = vpack.c.b16 %v2629, %v2626
      %v2666 = vpack.c.b16 %v2633, %v2630
      %v2667 = vpack.c.b16 %v2634, %v2631
      %v2668 = vpack.c.b16 %v2635, %v2632
      %v2669 = vpack.c.b16 %v2636, %v2636
      %v2670 = vpack.c.b16 %v2637, %v2637
      %v2671 = vpack.c.b16 %v2638, %v2638
      %vm2702 = vcmask 277504
      %v2704 = vsel %vm2702, %v2532, 0
      %v2707 = vsel %vm469, %v2669, 0
      %v2710 = vsel %vm469, %v2670, 0
      %v2713 = vsel %vm469, %v2671, 0
      %2715 = vmatprep.subr.bf16.mxu0 %v2640
      %2716 = vmatpush1.bf16.msra.mxu0 %v2639
      %2717 = vmatprep.subr.bf16.mxu0 %v2643
      %2718 = vmatpush1.bf16.msra.mxu0 %v2642
      %2719 = vmatprep.subr.bf16.mxu0 %v2646
      %2720 = vmatpush1.bf16.msra.mxu0 %v2645
      %2721 = vmatprep.subr.bf16.mxu0 %v2649
      %2722 = vmatpush1.bf16.msra.mxu0 %v2648
      %2723 = vmatprep.subr.bf16.mxu0 %v2652
      %2724 = vmatpush1.bf16.msra.mxu0 %v2651
      %2725 = vmatprep.subr.bf16.mxu0 %v2655
      %2726 = vmatpush1.bf16.msra.mxu0 %v2654
      %2727 = vmatprep.subr.bf16.mxu0 %v2658
      %2728 = vmatpush1.bf16.msra.mxu0 %v2657
      %2729 = vmatprep.subr.bf16.mxu0 %v2661
      %2730 = vmatpush1.bf16.msra.mxu0 %v2660
      %2731 = vmatprep.subr.bf16.mxu0 %v2664
      %2732 = vmatpush1.bf16.msra.mxu0 %v2663
      %2733 = vmatprep.subr.bf16.mxu0 %v2667
      %2734 = vmatpush1.bf16.msra.mxu0 %v2666
      %2735 = vmatprep.subr.bf16.mxu0 %v2710
      %2736 = vmatpush1.bf16.msra.mxu0 %v2707
      %2737 = vmatprep.subr.bf16.mxu0 0
      %2738 = vmatpush1.bf16.msra.mxu0 0
      %2739 = vmatprep.subr.bf16.mxu0 0
      %2740 = vmatpush1.bf16.msra.mxu0 0
      %2741 = vmatprep.subr.bf16.mxu0 0
      %2742 = vmatpush1.bf16.msra.mxu0 0
      %2743 = vmatprep.subr.bf16.mxu0 0
      %2744 = vmatpush1.bf16.msra.mxu0 0
      %2745 = vmatprep.subr.bf16.mxu0 0
      %2746 = vmatpush1.bf16.msra.mxu0 0
      %2747 = vmatprep.mubr.bf16.mxu0 %v2704
      %2748 = vmatmul.mubr.bf16.gmra.mrb[0].mxu0 %v2531
      %v2749 = vpop.f32.mrb[0].mxu0
      %v2750 = vadd.f32 %v2526, %v2749
      %v2751 = vpop.f32.mrb[0].mxu0
      %v2752 = vadd.f32 %v2526, %v2751
      %v2753 = vpop.f32.mrb[0].mxu0
      %v2754 = vpop.f32.mrb[0].mxu0
      %2755 = vdwg.mxu0
      %2756 = vmatprep.subr.bf16.mxu0 0
      %2757 = vmatpush1.bf16.msra.mxu0 %v2641
      %2758 = vmatprep.subr.bf16.mxu0 0
      %2759 = vmatpush1.bf16.msra.mxu0 %v2644
      %2760 = vmatprep.subr.bf16.mxu0 0
      %2761 = vmatpush1.bf16.msra.mxu0 %v2647
      %2762 = vmatprep.subr.bf16.mxu0 0
      %2763 = vmatpush1.bf16.msra.mxu0 %v2650
      %2764 = vmatprep.subr.bf16.mxu0 0
      %2765 = vmatpush1.bf16.msra.mxu0 %v2653
      %2766 = vmatprep.subr.bf16.mxu0 0
      %2767 = vmatpush1.bf16.msra.mxu0 %v2656
      %2768 = vmatprep.subr.bf16.mxu0 0
      %2769 = vmatpush1.bf16.msra.mxu0 %v2659
      %2770 = vmatprep.subr.bf16.mxu0 0
      %2771 = vmatpush1.bf16.msra.mxu0 %v2662
      %2772 = vmatprep.subr.bf16.mxu0 0
      %2773 = vmatpush1.bf16.msra.mxu0 %v2665
      %2774 = vmatprep.subr.bf16.mxu0 0
      %2775 = vmatpush1.bf16.msra.mxu0 %v2668
      %2776 = vmatprep.subr.bf16.mxu0 0
      %2777 = vmatpush1.bf16.msra.mxu0 %v2713
      %2778 = vmatprep.subr.bf16.mxu0 0
      %2779 = vmatpush1.bf16.msra.mxu0 0
      %2780 = vmatprep.subr.bf16.mxu0 0
      %2781 = vmatpush1.bf16.msra.mxu0 0
      %2782 = vmatprep.subr.bf16.mxu0 0
      %2783 = vmatpush1.bf16.msra.mxu0 0
      %2784 = vmatprep.subr.bf16.mxu0 0
      %2785 = vmatpush1.bf16.msra.mxu0 0
      %2786 = vmatprep.subr.bf16.mxu0 0
      %2787 = vmatpush1.bf16.msra.mxu0 0
      %2788 = vmatprep.mubr.bf16.mxu0 %v2704
      %2789 = vmatmul.mubr.bf16.gmra.mrb[0].mxu0 %v2531
      %v2790 = vpop.f32.mrb[0].mxu0
      %v2791 = vadd.f32 %v2526, %v2790
      %v2792 = vpop.f32.mrb[0].mxu0
      %v2793 = vpop.f32.mrb[0].mxu0
      %v2794 = vpop.f32.mrb[0].mxu0
      %2795 = vdwg.mxu0
      %v2796 = vmax.f32 %v2750, 0.0
      %v2797 = vmax.f32 %v2752, 0.0
      %v2798 = vmax.f32 %v2791, 0.0
      %v2799 = vld [vmem:[%s4] sm:$0x7]
      %v2801 = vlaneseq
      %v2802 = vshrl.u32 %v2801, 7
      %v2803 = vsub.s32 0, %v2802
      %v2804 = vrot.slane %v2799, %v2803
      %v2805 = vlaneseq
      %v2806 = vshrl.u32 %v2805, 7
      %v2807 = vsub.s32 1, %v2806
      %v2808 = vrot.slane %v2799, %v2807
      %v2809 = vlaneseq
      %v2810 = vshrl.u32 %v2809, 7
      %v2811 = vsub.s32 2, %v2810
      %v2812 = vrot.slane %v2799, %v2811
      %2813 = vrot.lane.b32.xlu0 %v2804, 86
      %v2814 = vpop.permute.xlu0 %2813
      %2815 = vrot.lane.b32.xlu0 %v2808, 86
      %v2816 = vpop.permute.xlu0 %2815
      %2817 = vrot.lane.b32.xlu0 %v2812, 86
      %v2818 = vpop.permute.xlu0 %2817
      %v2819 = vsel %vm1908, %v2814, %v2816
      %v2820 = vsel %vm1908, %v2816, %v2818
      %v2824 = vmul.f32 %v2796, %v2819
      %v2825 = vmul.f32 %v2797, %v2820
      %v2826 = vmul.f32 %v2798, %v2818
      %v2827 = vpack.c.bf16 %v2824, %v2824
      %v2828 = vpack.c.bf16 %v2825, %v2825
      %v2829 = vpack.c.bf16 %v2826, %v2826
      %v2833 = vunpack.c.l.b16 %v2827
      %v2834 = vunpack.c.l.b16 %v2828
      %v2835 = vunpack.c.l.b16 %v2829
      %v2836 = vpack.c.b16 %v2834, %v2833
      %v2837 = vpack.c.b16 %v2835, %v2835
      %2838 = vrot.lane.b32.xlu0 %v2836, 42
      %v2839 = vpop.permute.xlu0 %2838
      %2840 = vrot.lane.b32.xlu0 %v2837, 42
      %v2841 = vpop.permute.xlu0 %2840
      %v2842 = vrot.slane %v2839, 4
      %v2843 = vsel %vm1946, %v2842, %v2839
      %v2844 = vsel %vm1946, %v2842, %v2841
      %2847 = vst.msk [vmem:[#allocation4] sm:$0xff] %vm1957, %v2843
      %2848 = vst.msk [vmem:[#allocation4 + $0x8] sm:$0xf] %vm1959, %v2844
      %v2849 = vld [vmem:[%s9] sm:$0x1]
      %v2850 = vld [vmem:[#allocation6] sm:$0x1]
      %v2851 = vld [vmem:[#allocation4] sm:$0xff]
      %v2852 = vld [vmem:[#allocation4 + $0x8] sm:$0xf]
      %v2853 = vld [vmem:[#allocation4 + $0x10] sm:$0x11]
      %v2854 = vld [vmem:[#allocation4 + $0x18] sm:$0x1]
      %2856 = vset.pattern.permute.xlu0 0
      %2857 = vperm.xlu0 %2856, %v2850
      %v2858 = vpop.permute.xlu0 %2857
      %v2860 = vlaneseq
      %v2861 = vshrl.u32 %v2860, 7
      %v2862 = vsub.s32 0, %v2861
      %v2863 = vrot.slane %v2858, %v2862
      %v2868 = vunpack.c.l.b16 %v2851
      %v2869 = vunpack.c.h.b16 %v2851
      %v2870 = vunpack.c.l.b16 %v2852
      %v2871 = vunpack.c.l.b16 %v2853
      %v2872 = vunpack.c.h.b16 %v2853
      %v2873 = vunpack.c.l.b16 %v2854
      %v2874 = vpack.c.b16 %v2871, %v2868
      %v2875 = vpack.c.b16 %v2872, %v2869
      %v2876 = vpack.c.b16 %v2873, %v2870
      %2877 = vrot.lane.b32.xlu0 %v2874, 86
      %v2878 = vpop.permute.xlu0 %2877
      %2879 = vrot.lane.b32.xlu0 %v2875, 86
      %v2880 = vpop.permute.xlu0 %2879
      %2881 = vrot.lane.b32.xlu0 %v2876, 86
      %v2882 = vpop.permute.xlu0 %2881
      %v2883 = vsel %vm1124, %v2878, %v2880
      %v2884 = vsel %vm1124, %v2880, %v2882
      %vm2885 = vcmask 80896
      %v2887 = vsel %vm2885, %v2849, 0
      %v2890 = vsel %vm1788, %v2883, 0
      %v2893 = vsel %vm1788, %v2884, 0
      %v2896 = vsel %vm1788, %v2882, 0
      %2898 = vmatprep.subr.bf16.mxu0 %v2893
      %2899 = vmatpush1.bf16.msra.mxu0 %v2890
      %2900 = vmatprep.subr.bf16.mxu0 0
      %2901 = vmatpush1.bf16.msra.mxu0 0
      %2902 = vmatprep.subr.bf16.mxu0 0
      %2903 = vmatpush1.bf16.msra.mxu0 0
      %2904 = vmatprep.subr.bf16.mxu0 0
      %2905 = vmatpush1.bf16.msra.mxu0 0
      %2906 = vmatprep.subr.bf16.mxu0 0
      %2907 = vmatpush1.bf16.msra.mxu0 0
      %2908 = vmatprep.subr.bf16.mxu0 0
      %2909 = vmatpush1.bf16.msra.mxu0 0
      %2910 = vmatprep.subr.bf16.mxu0 0
      %2911 = vmatpush1.bf16.msra.mxu0 0
      %2912 = vmatprep.subr.bf16.mxu0 0
      %2913 = vmatpush1.bf16.msra.mxu0 0
      %2914 = vmatprep.subr.bf16.mxu0 0
      %2915 = vmatpush1.bf16.msra.mxu0 0
      %2916 = vmatprep.subr.bf16.mxu0 0
      %2917 = vmatpush1.bf16.msra.mxu0 0
      %2918 = vmatprep.subr.bf16.mxu0 0
      %2919 = vmatpush1.bf16.msra.mxu0 0
      %2920 = vmatprep.subr.bf16.mxu0 0
      %2921 = vmatpush1.bf16.msra.mxu0 0
      %2922 = vmatprep.subr.bf16.mxu0 0
      %2923 = vmatpush1.bf16.msra.mxu0 0
      %2924 = vmatprep.subr.bf16.mxu0 0
      %2925 = vmatpush1.bf16.msra.mxu0 0
      %2926 = vmatprep.subr.bf16.mxu0 0
      %2927 = vmatpush1.bf16.msra.mxu0 0
      %2928 = vmatprep.subr.bf16.mxu0 0
      %2929 = vmatpush1.bf16.msra.mxu0 0
      %2930 = vmatprep.mubr.bf16.mxu0 0
      %2931 = vmatmul.mubr.bf16.gmra.mrb[0].mxu0 %v2887
      %v2932 = vpop.f32.mrb[0].mxu0
      %v2933 = vadd.f32 %v2863, %v2932
      %v2934 = vpop.f32.mrb[0].mxu0
      %v2935 = vadd.f32 %v2863, %v2934
      %v2936 = vpop.f32.mrb[0].mxu0
      %v2937 = vpop.f32.mrb[0].mxu0
      %2938 = vdwg.mxu0
      %2939 = vmatprep.subr.bf16.mxu0 0
      %2940 = vmatpush1.bf16.msra.mxu0 %v2896
      %2941 = vmatprep.subr.bf16.mxu0 0
      %2942 = vmatpush1.bf16.msra.mxu0 0
      %2943 = vmatprep.subr.bf16.mxu0 0
      %2944 = vmatpush1.bf16.msra.mxu0 0
      %2945 = vmatprep.subr.bf16.mxu0 0
      %2946 = vmatpush1.bf16.msra.mxu0 0
      %2947 = vmatprep.subr.bf16.mxu0 0
      %2948 = vmatpush1.bf16.msra.mxu0 0
      %2949 = vmatprep.subr.bf16.mxu0 0
      %2950 = vmatpush1.bf16.msra.mxu0 0
      %2951 = vmatprep.subr.bf16.mxu0 0
      %2952 = vmatpush1.bf16.msra.mxu0 0
      %2953 = vmatprep.subr.bf16.mxu0 0
      %2954 = vmatpush1.bf16.msra.mxu0 0
      %2955 = vmatprep.subr.bf16.mxu0 0
      %2956 = vmatpush1.bf16.msra.mxu0 0
      %2957 = vmatprep.subr.bf16.mxu0 0
      %2958 = vmatpush1.bf16.msra.mxu0 0
      %2959 = vmatprep.subr.bf16.mxu0 0
      %2960 = vmatpush1.bf16.msra.mxu0 0
      %2961 = vmatprep.subr.bf16.mxu0 0
      %2962 = vmatpush1.bf16.msra.mxu0 0
      %2963 = vmatprep.subr.bf16.mxu0 0
      %2964 = vmatpush1.bf16.msra.mxu0 0
      %2965 = vmatprep.subr.bf16.mxu0 0
      %2966 = vmatpush1.bf16.msra.mxu0 0
      %2967 = vmatprep.subr.bf16.mxu0 0
      %2968 = vmatpush1.bf16.msra.mxu0 0
      %2969 = vmatprep.subr.bf16.mxu0 0
      %2970 = vmatpush1.bf16.msra.mxu0 0
      %2971 = vmatprep.mubr.bf16.mxu0 0
      %2972 = vmatmul.mubr.bf16.gmra.mrb[0].mxu0 %v2887
      %v2973 = vpop.f32.mrb[0].mxu0
      %v2974 = vadd.f32 %v2863, %v2973
      %v2975 = vpop.f32.mrb[0].mxu0
      %v2976 = vpop.f32.mrb[0].mxu0
      %v2977 = vpop.f32.mrb[0].mxu0
      %2978 = vdwg.mxu0
      %v2979 = vld [vmem:[%s4] sm:$0x7]
      %v2981 = vlaneseq
      %v2982 = vshrl.u32 %v2981, 7
      %v2983 = vsub.s32 0, %v2982
      %v2984 = vrot.slane %v2979, %v2983
      %v2985 = vlaneseq
      %v2986 = vshrl.u32 %v2985, 7
      %v2987 = vsub.s32 1, %v2986
      %v2988 = vrot.slane %v2979, %v2987
      %v2989 = vlaneseq
      %v2990 = vshrl.u32 %v2989, 7
      %v2991 = vsub.s32 2, %v2990
      %v2992 = vrot.slane %v2979, %v2991
      %2993 = vrot.lane.b32.xlu0 %v2984, 86
      %v2994 = vpop.permute.xlu0 %2993
      %2995 = vrot.lane.b32.xlu0 %v2988, 86
      %v2996 = vpop.permute.xlu0 %2995
      %2997 = vrot.lane.b32.xlu0 %v2992, 86
      %v2998 = vpop.permute.xlu0 %2997
      %v2999 = vsel %vm1908, %v2994, %v2996
      %v3000 = vsel %vm1908, %v2996, %v2998
      %v3004 = vmul.f32 %v2933, %v2999
      %v3005 = vmul.f32 %v2935, %v3000
      %v3006 = vmul.f32 %v2974, %v2998
      %v3010 = vcombine.low %v3004, %v3005
      %v3012 = vunpack.c.l.s4 1966171168
      %v3013 = vunpack.c.0.s8 %v3012
      %v3014 = vlaneseq
      %v3015 = vshrl.u32 %v3014, 7
      %v3016 = vsub.s32 %v3013, %v3015
      %v3017 = vrot.slane %v3010, %v3016
      %v3019 = vunpack.c.l.s4 1966171168
      %v3020 = vunpack.c.0.s8 %v3019
      %v3021 = vlaneseq
      %v3022 = vshrl.u32 %v3021, 7
      %v3023 = vsub.s32 %v3020, %v3022
      %v3024 = vrot.slane %v3006, %v3023
      %v3025 = vcombine.low %v3017, %v3024
      %v3027 = vunpack.c.l.s4 1966171168
      %v3028 = vunpack.c.0.s8 %v3027
      %v3029 = vlaneseq
      %v3030 = vshrl.u32 %v3029, 7
      %v3031 = vsub.s32 %v3028, %v3030
      %v3032 = vrot.slane %v3025, %v3031
      %3033 = vrot.lane.b32.xlu0 %v3032, 42
      %v3034 = vpop.permute.xlu0 %3033
      %v3035 = vrot.slane %v3034, 7
      %vm3036 = vcmask 343040
      %v3037 = vsel %vm3036, %v3035, %v3034
      %vm3039 = vcmp.ge.s32.totalorder %v733, 42
      %vm3040 = vcmp.lt.s32.totalorder %v733, 362
      %vm3041 = vmand %vm3039, %vm3040
      %3042 = vst.msk [vmem:[%s440] sm:$0x7] %vm3041, %v3037
      %p3043 = scmp.lt.s32.totalorder %s24, 1
      %s3044 = scalar_select %p3043, %s24, 1
      %s3045 = smul.addr %s3044, 4
      %s3046 = scalar_lea.vmem %s11, %s3045
      // Predicated region
      $region65: #{scandium_weather_forward.5} parent=63 // pred_check
        %p3047 = pneg %p293
      $region66: #{scandium_weather_forward.5} parent=63 // pred_check_branch
        %3049 = sbr.rel (%p3047) target = $region68
      $region67: #{scandium_weather_forward.5} parent=63 // pred_region
        _
      $region68: #{scandium_weather_forward.5} parent=63 // pred_fallthru
        _
    $region64: #{scandium_weather_forward.5} parent=5 // pred_fallthru
      _
    %p3050 = scmp.le.s32.totalorder 2, %s19
    // Predicated region
    $region69: #{scandium_weather_forward.5} parent=5 // pred_check
      %p3051 = pneg %p3050
    $region70: #{scandium_weather_forward.5} parent=5 // pred_check_branch
      %3053 = sbr.rel (%p3051) target = $region72
    $region71: #{scandium_weather_forward.5} parent=5 // pred_region
      %s3054 = ssub.s32 %s19, 2
      // Predicated region
      $region73: #{scandium_weather_forward.5} parent=71 // pred_check
        %p3055 = pneg %p299
      $region74: #{scandium_weather_forward.5} parent=71 // pred_check_branch
        %3057 = sbr.rel (%p3055) target = $region76
      $region75: #{scandium_weather_forward.5} parent=71 // pred_region
        %p3058 = scmp.lt.s32.totalorder %s25, 1
        %s3059 = scalar_select %p3058, %s25, 1
        %s3060 = smul.addr %s3059, 4
        %s3061 = scalar_lea.vmem %s11, %s3060
      $region76: #{scandium_weather_forward.5} parent=71 // pred_fallthru
        _
    $region72: #{scandium_weather_forward.5} parent=5 // pred_fallthru
      _
  $region6: #{scandium_weather_forward.5} parent=0 // loop_footer
    %s23 = sadd.s32 1, %s19
  $region7: #{scandium_weather_forward.5} parent=0 // loop_footer_branch
    %18 = sbr.rel target = $region3
  $region8: #{scandium_weather_forward.5} parent=0 // loop_exit
    _

</llo_original>
